<compile_context>
chip_gen: v7x
topology: tpu7x:2x2x1
jax: 0.10.0
libtpu: 0.0.40
codegen_flags: <defaults>
</compile_context>

<pallas_src>
import jax
import jax.numpy as jnp
from jax.experimental import pallas as pl
from jax.experimental.pallas import tpu as pltpu


def _decoder_kernel(emb_ref, hid_ref, enc_ref,
                    wa_h_ref, wa_e_ref, attn_b_ref, v_ref,
                    wl_e_ref, wl_c_ref, lstm_b_ref,
                    wf_h_ref, wf_c_ref, fc_b_ref,
                    pred_ref, hout_ref,
                    hid_proj_sc, m_sc, l_sc, ctx_sc, gate_sc):
    t = pl.program_id(0)
    n_t = pl.num_programs(0)
    cdt = wa_e_ref.dtype                       # matmul compute dtype (bf16 or f32)
    approx_recip = jnp.dtype(cdt) != jnp.dtype(jnp.float32)
    H = hid_proj_sc.shape[1]

    # ---- init (first T tile): hidden projection, emb gate partial, softmax state ----
    @pl.when(t == 0)
    def _init():
        hid_proj_sc[...] = (
            jnp.dot(hid_ref[...].astype(cdt), wa_h_ref[...],
                    preferred_element_type=jnp.float32)
            + attn_b_ref[...])                                   # (B, H) f32
        # emb-dependent LSTM partial done up front: overlaps with the encoder
        # streaming instead of sitting on the last grid step's critical tail.
        gate_sc[...] = (
            jnp.dot(emb_ref[...].astype(cdt), wl_e_ref[...],
                    preferred_element_type=jnp.float32)
            + lstm_b_ref[...])                                   # (B, 3H) f32
        m_sc[...] = jnp.full_like(m_sc, -jnp.inf)
        l_sc[...] = jnp.zeros_like(l_sc)
        ctx_sc[...] = jnp.zeros_like(ctx_sc)

    enc = enc_ref[...]                                           # (B, Tt, 2H), cdt
    B, Tt, H2 = enc.shape

    # ---- attention energy for this T tile (split-weight form, no concat) ----
    e_part = jnp.dot(enc.reshape(B * Tt, H2), wa_e_ref[...],
                     preferred_element_type=jnp.float32).reshape(B, Tt, H)
    energy = jnp.tanh(e_part + hid_proj_sc[...][:, None, :])     # (B, Tt, H) f32

    # scores = energy . v as a VPU multiply + lane reduce (no N=1 MXU matmul)
    scores = jnp.sum(energy * v_ref[...], axis=-1)               # (B, Tt) f32

    # ---- online softmax + streamed (unnormalized) context accumulation ----
    m_prev = m_sc[...]                                           # (B, 1)
    m_new = jnp.maximum(m_prev, jnp.max(scores, axis=-1, keepdims=True))
    alpha = jnp.exp(m_prev - m_new)                              # (B, 1)
    p = jnp.exp(scores - m_new)                                  # (B, Tt) f32
    l_sc[...] = alpha * l_sc[...] + jnp.sum(p, axis=-1, keepdims=True)
    # Tt-reduction of the context on the MXU: enc stays in the compute dtype,
    # accumulation in f32; no (B, Tt, 2H) f32 intermediate.
    ctx_part = jax.lax.dot_general(
        p.astype(cdt)[:, None, :], enc,
        dimension_numbers=(((2,), (1,)), ((0,), (0,))),
        preferred_element_type=jnp.float32)[:, 0, :]             # (B, 2H) f32
    ctx_sc[...] = alpha * ctx_sc[...] + ctx_part
    m_sc[...] = m_new

    # ---- finalize (last T tile): single-step LSTM + output projection ----
    @pl.when(t == n_t - 1)
    def _finalize():
        inv_l = pl.reciprocal(l_sc[...], approx=approx_recip)
        ctx = ctx_sc[...] * inv_l                                # (B, 2H) f32

        # Forget gate dropped (c0 == 0). Gate column order after pruning: [i | g | o].
        gates = gate_sc[...] + jnp.dot(ctx.astype(cdt), wl_c_ref[...],
                                       preferred_element_type=jnp.float32)  # (B, 3H)
        i = jax.nn.sigmoid(gates[:, 0 * H:1 * H])
        g = jnp.tanh(gates[:, 1 * H:2 * H])
        o = jax.nn.sigmoid(gates[:, 2 * H:3 * H])
        h = o * jnp.tanh(i * g)                                  # (B, H)
        hout_ref[...] = h

        pred_ref[...] = (jnp.dot(h.astype(cdt), wf_h_ref[...],
                                 preferred_element_type=jnp.float32)
                         + jnp.dot(ctx.astype(cdt), wf_c_ref[...],
                                   preferred_element_type=jnp.float32)
                         + fc_b_ref[...])                        # (B, O)


def prepare_params(params, compute_dtype=jnp.bfloat16):
    """One-time weight prep: transpose to (in, out), split concat-weights, drop the
    dead forget-gate block, fold the two LSTM biases, cast matmul weights to the
    compute dtype. Call once outside the per-token decode loop."""
    H = params["attn_b"].shape[0]
    E = params["embedding"].shape[1]
    O = params["fc_b"].shape[0]
    cdt = compute_dtype

    attn_wT = params["attn_w"].T                               # (3H, H): rows [hid|enc]
    w_ih = params["w_ih"]                                      # (4H, E+2H): rows i,f,g,o
    b = params["b_ih"] + params["b_hh"]
    w_keep = jnp.concatenate([w_ih[0:H], w_ih[2 * H:4 * H]], axis=0)     # drop f gate
    b_keep = jnp.concatenate([b[0:H], b[2 * H:4 * H]])
    w_ihT = w_keep.T                                           # (E+2H, 3H): [emb | ctx]
    fc_wT = params["fc_w"].T                                   # (3H, O):    [h | ctx]

    return {
        "embedding": params["embedding"],                      # gather stays f32
        "wa_h": attn_wT[:H].astype(cdt),                       # (H, H)
        "wa_e": attn_wT[H:].astype(cdt),                       # (2H, H)
        "attn_b": params["attn_b"].reshape(1, H).astype(jnp.float32),
        "v": params["v"].reshape(1, 1, H).astype(jnp.float32),
        "wl_e": w_ihT[:E].astype(cdt),                         # (E, 3H)
        "wl_c": w_ihT[E:].astype(cdt),                         # (2H, 3H)
        "lstm_b": b_keep.reshape(1, 3 * H).astype(jnp.float32),
        "wf_h": fc_wT[:H].astype(cdt),                         # (H, O)
        "wf_c": fc_wT[H:].astype(cdt),                         # (2H, O)
        "fc_b": params["fc_b"].reshape(1, O).astype(jnp.float32),
    }


def prepare_encoder_outputs(encoder_outputs, prep):
    """Cast the encoder memory to the matmul compute dtype ONCE, outside the
    per-token decode loop, so the dominant HBM stream is read at 2 B/elt."""
    return encoder_outputs.astype(prep["wa_e"].dtype)


def decoder_forward(x, hidden, encoder_outputs, prep, *, t_tile=128):
    """Pallas Decoder.forward. Returns (prediction (B, O), hidden (1, B, H))."""
    B, T, H2 = encoder_outputs.shape
    H = H2 // 2
    O = prep["fc_b"].shape[1]
    cdt = prep["wa_e"].dtype
    item_c = jnp.dtype(cdt).itemsize

    # bf16 packs (16,128) per vreg -> keep partial T tiles 16-sublane aligned.
    sub = 16 if item_c < 4 else 8

    # Per-core VMEM capacity (v7x: 64 MiB, v5e/v6e: 128 MiB) for tile/limit budgeting.
    try:
        vmem_cap = int(pltpu.get_tpu_info().vmem_capacity_bytes)
    except Exception:
        vmem_cap = 64 * 1024 * 1024            # conservative default (v7x per-TC)

    t_tile = min(t_tile, T)
    # Shrink tile if the double-buffered encoder stream alone would eat > half VMEM.
    while (2 * B * t_tile * H2 * item_c > vmem_cap // 2
           and (t_tile // 2) >= sub and (t_tile // 2) % sub == 0
           and T % (t_tile // 2) == 0):
        t_tile //= 2
    assert T % t_tile == 0, "T must be divisible by t_tile"
    assert t_tile == T or t_tile % sub == 0, "partial T tiles must be sublane-aligned"
    n_t = T // t_tile

    # Glue: embedding gather; dropout == identity in eval mode.
    emb = jnp.take(prep["embedding"], x, axis=0)               # (B, E) f32
    if encoder_outputs.dtype != cdt:
        # Fallback only: pre-cast once via prepare_encoder_outputs() outside the
        # per-token decode loop to avoid re-reading/writing the f32 tensor per token.
        encoder_outputs = encoder_outputs.astype(cdt)

    def full_spec(arr):
        nd = arr.ndim
        return pl.BlockSpec(arr.shape, lambda t, _nd=nd: (0,) * _nd)

    in_specs = [
        full_spec(emb),                                        # (B, E)
        full_spec(hidden),                                     # (B, H)
        pl.BlockSpec((B, t_tile, H2), lambda t: (0, t, 0)),    # encoder_outputs tile
        full_spec(prep["wa_h"]),
        full_spec(prep["wa_e"]),
        full_spec(prep["attn_b"]),
        full_spec(prep["v"]),
        full_spec(prep["wl_e"]),
        full_spec(prep["wl_c"]),
        full_spec(prep["lstm_b"]),
        full_spec(prep["wf_h"]),
        full_spec(prep["wf_c"]),
        full_spec(prep["fc_b"]),
    ]

    # VMEM budget: double-buffered enc tile + (default) double-buffered constants +
    # outputs + scratch, with headroom; capped at 3/4 of the per-core capacity.
    def _nbytes(a):
        return int(a.size) * jnp.dtype(a.dtype).itemsize

    const_inputs = (emb, hidden, prep["wa_h"], prep["wa_e"], prep["attn_b"], prep["v"],
                    prep["wl_e"], prep["wl_c"], prep["lstm_b"],
                    prep["wf_h"], prep["wf_c"], prep["fc_b"])
    needed = (2 * B * t_tile * H2 * item_c
              + 2 * sum(_nbytes(a) for a in const_inputs)
              + 2 * (B * O + B * H) * 4
              + (B * H + 2 * B + B * H2 + 3 * B * H) * 4)
    vmem_limit = int(max(32 * 1024 * 1024,
                         min(int(needed * 1.5) + (1 << 20), (vmem_cap * 3) // 4)))

    grid_spec = pltpu.PrefetchScalarGridSpec(
        num_scalar_prefetch=0,
        grid=(n_t,),
        in_specs=in_specs,
        out_specs=(
            pl.BlockSpec((B, O), lambda t: (0, 0)),
            pl.BlockSpec((B, H), lambda t: (0, 0)),
        ),
        scratch_shapes=[
            pltpu.VMEM((B, H), jnp.float32),      # hid_proj (attention hidden term)
            pltpu.VMEM((B, 1), jnp.float32),      # running max
            pltpu.VMEM((B, 1), jnp.float32),      # running sum
            pltpu.VMEM((B, H2), jnp.float32),     # unnormalized context accumulator
            pltpu.VMEM((B, 3 * H), jnp.float32),  # emb-dependent LSTM gate partial
        ],
    )

    pred, h = pl.pallas_call(
        _decoder_kernel,
        out_shape=(
            jax.ShapeDtypeStruct((B, O), jnp.float32),
            jax.ShapeDtypeStruct((B, H), jnp.float32),
        ),
        grid_spec=grid_spec,
        compiler_params=pltpu.CompilerParams(
            dimension_semantics=("arbitrary",),   # T is a carried reduction axis
            vmem_limit_bytes=vmem_limit,
        ),
    )(emb, hidden, encoder_outputs,
      prep["wa_h"], prep["wa_e"], prep["attn_b"], prep["v"],
      prep["wl_e"], prep["wl_c"], prep["lstm_b"],
      prep["wf_h"], prep["wf_c"], prep["fc_b"])

    return pred, h[None, :, :]                                  # hidden: (1, B, H)


def _reference_forward(x, hidden, encoder_outputs, params):
    """Pure-JAX f32 reference mirroring the PyTorch module (eval mode)."""
    B, T, H2 = encoder_outputs.shape
    H = hidden.shape[1]
    embedded = jnp.take(params["embedding"], x, axis=0)
    hid_rep = jnp.broadcast_to(hidden[:, None, :], (B, T, H))
    cat3 = jnp.concatenate([hid_rep, encoder_outputs], axis=-1)
    energy = jnp.tanh(cat3 @ params["attn_w"].T + params["attn_b"])
    scores = jnp.einsum("bth,h->bt", energy, params["v"])
    attn = jax.nn.softmax(scores, axis=1)
    ctx = jnp.einsum("bt,btd->bd", attn, encoder_outputs)
    lstm_in = jnp.concatenate([embedded, ctx], axis=-1)
    gates = lstm_in @ params["w_ih"].T + params["b_ih"] + params["b_hh"]
    i, f, g, o = jnp.split(gates, 4, axis=-1)
    c = jax.nn.sigmoid(i) * jnp.tanh(g)                          # c0 == 0
    h = jax.nn.sigmoid(o) * jnp.tanh(c)
    out = jnp.concatenate([h, ctx], axis=-1)
    pred = out @ params["fc_w"].T + params["fc_b"]
    return pred, h[None, :, :]


def init_params(key, output_dim, embed_dim, hidden_dim):
    ks = jax.random.split(key, 10)
    H, E, O = hidden_dim, embed_dim, output_dim
    s = 0.1
    return {
        "embedding": s * jax.random.normal(ks[0], (O, E), jnp.float32),
        "attn_w":    s * jax.random.normal(ks[1], (H, 3 * H), jnp.float32),
        "attn_b":    s * jax.random.normal(ks[2], (H,), jnp.float32),
        "v":         jax.random.uniform(ks[3], (H,), jnp.float32),
        "w_ih":      s * jax.random.normal(ks[4], (4 * H, E + 2 * H), jnp.float32),
        "b_ih":      s * jax.random.normal(ks[5], (4 * H,), jnp.float32),
        "b_hh":      s * jax.random.normal(ks[6], (4 * H,), jnp.float32),
        "fc_w":      s * jax.random.normal(ks[7], (O, 3 * H), jnp.float32),
        "fc_b":      s * jax.random.normal(ks[8], (O,), jnp.float32),
    }


if __name__ == "__main__":
    # Small, lane/sublane-friendly shapes. T = 256 with t_tile = 128 exercises the
    # streamed T reduction with lane-dense score tiles and 2 grid steps.
    B, T = 8, 256
    output_dim, embed_dim, hidden_dim = 256, 32, 128

    key = jax.random.PRNGKey(0)
    k_param, k_x, k_h, k_e = jax.random.split(key, 4)

    params = init_params(k_param, output_dim, embed_dim, hidden_dim)
    x = jax.random.randint(k_x, (B,), 0, output_dim, dtype=jnp.int32)
    hidden = jax.random.normal(k_h, (B, hidden_dim), jnp.float32)
    encoder_outputs = jax.random.normal(k_e, (B, T, 2 * hidden_dim), jnp.float32)

    pred_ref, h_ref = _reference_forward(x, hidden, encoder_outputs, params)
    pred_scale = float(jnp.max(jnp.abs(pred_ref)))
    h_scale = float(jnp.max(jnp.abs(h_ref)))

    fwd = jax.jit(decoder_forward, static_argnames=("t_tile",))

    ok = True
    # f32 path: tight correctness gate.  bf16 path: performance dtype, loose sanity.
    for cdt, tol in ((jnp.float32, 0.02), (jnp.bfloat16, 0.2)):
        prep = prepare_params(params, compute_dtype=cdt)
        # Cast hoisted out of the (per-token) decode path: done once here.
        enc_c = prepare_encoder_outputs(encoder_outputs, prep)
        pred, h_out = fwd(x, hidden, enc_c, prep, t_tile=128)
        pred = jax.block_until_ready(pred)
        h_out = jax.block_until_ready(h_out)
        assert pred.shape == (B, output_dim) and h_out.shape == (1, B, hidden_dim)
        p_err = float(jnp.max(jnp.abs(pred - pred_ref))) / pred_scale
        h_err = float(jnp.max(jnp.abs(h_out - h_ref))) / h_scale
        ok = ok and (p_err < tol) and (h_err < tol)

    assert ok
    print("KERNEL_OK")
</pallas_src>

<mosaic_0001>
module attributes {stable_mosaic.version = 11 : i64} {
  func.func @_decoder_kernel(%arg0: i32, %arg1: memref<8x32xf32, #tpu.memory_space<vmem>>, %arg2: memref<8x128xf32, #tpu.memory_space<vmem>>, %arg3: memref<8x128x256xf32, #tpu.memory_space<vmem>>, %arg4: memref<128x128xf32, #tpu.memory_space<vmem>>, %arg5: memref<256x128xf32, #tpu.memory_space<vmem>>, %arg6: memref<1x128xf32, #tpu.memory_space<vmem>>, %arg7: memref<1x1x128xf32, #tpu.memory_space<vmem>>, %arg8: memref<32x384xf32, #tpu.memory_space<vmem>>, %arg9: memref<256x384xf32, #tpu.memory_space<vmem>>, %arg10: memref<1x384xf32, #tpu.memory_space<vmem>>, %arg11: memref<128x256xf32, #tpu.memory_space<vmem>>, %arg12: memref<256x256xf32, #tpu.memory_space<vmem>>, %arg13: memref<1x256xf32, #tpu.memory_space<vmem>>, %arg14: memref<8x256xf32, #tpu.memory_space<vmem>>, %arg15: memref<8x128xf32, #tpu.memory_space<vmem>>, %arg16: memref<8x128xf32, #tpu.memory_space<vmem>>, %arg17: memref<8x1xf32, #tpu.memory_space<vmem>>, %arg18: memref<8x1xf32, #tpu.memory_space<vmem>>, %arg19: memref<8x256xf32, #tpu.memory_space<vmem>>, %arg20: memref<8x384xf32, #tpu.memory_space<vmem>>) attributes {dimension_semantics = [#tpu.dimension_semantics<arbitrary>], iteration_bounds = array<i64: 2>, scalar_prefetch = 0 : i64, scratch_operands = 5 : i64, tpu.core_type = #tpu.core_type<tc>, window_params = [{pipeline_mode = #tpu.pipeline_mode<synchronous>, transform_indices = @transform_0, window_bounds = array<i64: 8, 32>}, {pipeline_mode = #tpu.pipeline_mode<synchronous>, transform_indices = @transform_1, window_bounds = array<i64: 8, 128>}, {transform_indices = @transform_2, window_bounds = array<i64: 8, 128, 256>}, {pipeline_mode = #tpu.pipeline_mode<synchronous>, transform_indices = @transform_3, window_bounds = array<i64: 128, 128>}, {pipeline_mode = #tpu.pipeline_mode<synchronous>, transform_indices = @transform_4, window_bounds = array<i64: 256, 128>}, {pipeline_mode = #tpu.pipeline_mode<synchronous>, transform_indices = @transform_5, window_bounds = array<i64: 1, 128>}, {pipeline_mode = #tpu.pipeline_mode<synchronous>, transform_indices = @transform_6, window_bounds = array<i64: 1, 1, 128>}, {pipeline_mode = #tpu.pipeline_mode<synchronous>, transform_indices = @transform_7, window_bounds = array<i64: 32, 384>}, {pipeline_mode = #tpu.pipeline_mode<synchronous>, transform_indices = @transform_8, window_bounds = array<i64: 256, 384>}, {pipeline_mode = #tpu.pipeline_mode<synchronous>, transform_indices = @transform_9, window_bounds = array<i64: 1, 384>}, {pipeline_mode = #tpu.pipeline_mode<synchronous>, transform_indices = @transform_10, window_bounds = array<i64: 128, 256>}, {pipeline_mode = #tpu.pipeline_mode<synchronous>, transform_indices = @transform_11, window_bounds = array<i64: 256, 256>}, {pipeline_mode = #tpu.pipeline_mode<synchronous>, transform_indices = @transform_12, window_bounds = array<i64: 1, 256>}, {pipeline_mode = #tpu.pipeline_mode<synchronous>, transform_indices = @transform_13, window_bounds = array<i64: 8, 256>}, {pipeline_mode = #tpu.pipeline_mode<synchronous>, transform_indices = @transform_14, window_bounds = array<i64: 8, 128>}]} {
    %c0_i32 = arith.constant 0 : i32
    %0 = arith.cmpi eq, %arg0, %c0_i32 : i32
    %1 = arith.extui %0 : i1 to i32
    %c0_i32_0 = arith.constant 0 : i32
    %2 = arith.cmpi ne, %1, %c0_i32_0 : i32
    scf.if %2 {
      %c0_27 = arith.constant 0 : index
      %c0_28 = arith.constant 0 : index
      %44 = vector.load %arg2[%c0_27, %c0_28] : memref<8x128xf32, #tpu.memory_space<vmem>>, vector<8x128xf32>
      %c0_29 = arith.constant 0 : index
      %c0_30 = arith.constant 0 : index
      %45 = vector.load %arg4[%c0_29, %c0_30] : memref<128x128xf32, #tpu.memory_space<vmem>>, vector<128x128xf32>
      %cst_31 = arith.constant dense<0.000000e+00> : vector<8x128xf32>
      %46 = tpu.matmul %44, %45, %cst_31 {dimension_numbers = #tpu.dot_dimension_numbers<[1], [0], [0], [1], [0, 0, 1, 1], [], []>} : vector<8x128xf32>, vector<128x128xf32>, vector<8x128xf32> -> vector<8x128xf32>
      %c0_32 = arith.constant 0 : index
      %c0_33 = arith.constant 0 : index
      %47 = vector.load %arg6[%c0_32, %c0_33] : memref<1x128xf32, #tpu.memory_space<vmem>>, vector<1x128xf32>
      %48 = vector.broadcast %47 : vector<1x128xf32> to vector<8x128xf32>
      %49 = arith.addf %46, %48 : vector<8x128xf32>
      %c0_34 = arith.constant 0 : index
      %c0_35 = arith.constant 0 : index
      %50 = vector.load %arg16[%c0_34, %c0_35] : memref<8x128xf32, #tpu.memory_space<vmem>>, vector<8x128xf32>
      tpu.vector_store %arg16[%c0_34, %c0_35], %49 {strides = array<i32>} : memref<8x128xf32, #tpu.memory_space<vmem>>, vector<8x128xf32>,
      %c0_36 = arith.constant 0 : index
      %c0_37 = arith.constant 0 : index
      %51 = vector.load %arg1[%c0_36, %c0_37] : memref<8x32xf32, #tpu.memory_space<vmem>>, vector<8x32xf32>
      %c0_38 = arith.constant 0 : index
      %c0_39 = arith.constant 0 : index
      %52 = vector.load %arg8[%c0_38, %c0_39] : memref<32x384xf32, #tpu.memory_space<vmem>>, vector<32x384xf32>
      %cst_40 = arith.constant dense<0.000000e+00> : vector<8x384xf32>
      %53 = tpu.matmul %51, %52, %cst_40 {dimension_numbers = #tpu.dot_dimension_numbers<[1], [0], [0], [1], [0, 0, 1, 1], [], []>} : vector<8x32xf32>, vector<32x384xf32>, vector<8x384xf32> -> vector<8x384xf32>
      %c0_41 = arith.constant 0 : index
      %c0_42 = arith.constant 0 : index
      %54 = vector.load %arg10[%c0_41, %c0_42] : memref<1x384xf32, #tpu.memory_space<vmem>>, vector<1x384xf32>
      %55 = vector.broadcast %54 : vector<1x384xf32> to vector<8x384xf32>
      %56 = arith.addf %53, %55 : vector<8x384xf32>
      %c0_43 = arith.constant 0 : index
      %c0_44 = arith.constant 0 : index
      %57 = vector.load %arg20[%c0_43, %c0_44] : memref<8x384xf32, #tpu.memory_space<vmem>>, vector<8x384xf32>
      tpu.vector_store %arg20[%c0_43, %c0_44], %56 {strides = array<i32>} : memref<8x384xf32, #tpu.memory_space<vmem>>, vector<8x384xf32>,
      %cst_45 = arith.constant 0xFF800000 : f32
      %58 = vector.broadcast %cst_45 : f32 to vector<8x1xf32>
      %c0_46 = arith.constant 0 : index
      %c0_47 = arith.constant 0 : index
      %59 = vector.load %arg17[%c0_46, %c0_47] : memref<8x1xf32, #tpu.memory_space<vmem>>, vector<8x1xf32>
      tpu.vector_store %arg17[%c0_46, %c0_47], %58 {strides = array<i32>} : memref<8x1xf32, #tpu.memory_space<vmem>>, vector<8x1xf32>,
      %cst_48 = arith.constant 0.000000e+00 : f32
      %60 = vector.broadcast %cst_48 : f32 to vector<8x1xf32>
      %c0_49 = arith.constant 0 : index
      %c0_50 = arith.constant 0 : index
      %61 = vector.load %arg18[%c0_49, %c0_50] : memref<8x1xf32, #tpu.memory_space<vmem>>, vector<8x1xf32>
      tpu.vector_store %arg18[%c0_49, %c0_50], %60 {strides = array<i32>} : memref<8x1xf32, #tpu.memory_space<vmem>>, vector<8x1xf32>,
      %cst_51 = arith.constant 0.000000e+00 : f32
      %62 = vector.broadcast %cst_51 : f32 to vector<8x256xf32>
      %c0_52 = arith.constant 0 : index
      %c0_53 = arith.constant 0 : index
      %63 = vector.load %arg19[%c0_52, %c0_53] : memref<8x256xf32, #tpu.memory_space<vmem>>, vector<8x256xf32>
      tpu.vector_store %arg19[%c0_52, %c0_53], %62 {strides = array<i32>} : memref<8x256xf32, #tpu.memory_space<vmem>>, vector<8x256xf32>,
    } else {
    }
    %c0 = arith.constant 0 : index
    %c0_1 = arith.constant 0 : index
    %c0_2 = arith.constant 0 : index
    %3 = vector.load %arg3[%c0, %c0_1, %c0_2] : memref<8x128x256xf32, #tpu.memory_space<vmem>>, vector<8x128x256xf32>
    %4 = vector.shape_cast %3 : vector<8x128x256xf32> to vector<1024x256xf32>
    %c0_3 = arith.constant 0 : index
    %c0_4 = arith.constant 0 : index
    %5 = vector.load %arg5[%c0_3, %c0_4] : memref<256x128xf32, #tpu.memory_space<vmem>>, vector<256x128xf32>
    %cst = arith.constant dense<0.000000e+00> : vector<1024x128xf32>
    %6 = tpu.matmul %4, %5, %cst {dimension_numbers = #tpu.dot_dimension_numbers<[1], [0], [0], [1], [0, 0, 1, 1], [], []>} : vector<1024x256xf32>, vector<256x128xf32>, vector<1024x128xf32> -> vector<1024x128xf32>
    %7 = vector.shape_cast %6 : vector<1024x128xf32> to vector<8x128x128xf32>
    %c0_5 = arith.constant 0 : index
    %c0_6 = arith.constant 0 : index
    %8 = vector.load %arg16[%c0_5, %c0_6] : memref<8x128xf32, #tpu.memory_space<vmem>>, vector<8x128xf32>
    %9 = vector.shape_cast %8 : vector<8x128xf32> to vector<8x1x128xf32>
    %10 = vector.broadcast %9 : vector<8x1x128xf32> to vector<8x128x128xf32>
    %11 = arith.addf %7, %10 : vector<8x128x128xf32>
    %12 = math.tanh %11 : vector<8x128x128xf32>
    %c0_7 = arith.constant 0 : index
    %c0_8 = arith.constant 0 : index
    %c0_9 = arith.constant 0 : index
    %13 = vector.load %arg7[%c0_7, %c0_8, %c0_9] : memref<1x1x128xf32, #tpu.memory_space<vmem>>, vector<1x1x128xf32>
    %14 = vector.broadcast %13 : vector<1x1x128xf32> to vector<8x128x128xf32>
    %15 = arith.mulf %12, %14 : vector<8x128x128xf32>
    %cst_10 = arith.constant dense<0.000000e+00> : vector<8x128xf32>
    %16 = vector.multi_reduction <add>, %15, %cst_10 [2] : vector<8x128x128xf32> to vector<8x128xf32>
    %c0_11 = arith.constant 0 : index
    %c0_12 = arith.constant 0 : index
    %17 = vector.load %arg17[%c0_11, %c0_12] : memref<8x1xf32, #tpu.memory_space<vmem>>, vector<8x1xf32>
    %cst_13 = arith.constant dense<0xFF800000> : vector<8xf32>
    %18 = vector.multi_reduction <maximumf>, %16, %cst_13 [1] : vector<8x128xf32> to vector<8xf32>
    %19 = vector.shape_cast %18 : vector<8xf32> to vector<8x1xf32>
    %20 = arith.maximumf %17, %19 : vector<8x1xf32>
    %21 = arith.subf %17, %20 : vector<8x1xf32>
    %22 = math.exp %21 : vector<8x1xf32>
    %23 = vector.broadcast %20 : vector<8x1xf32> to vector<8x128xf32>
    %24 = arith.subf %16, %23 : vector<8x128xf32>
    %25 = math.exp %24 : vector<8x128xf32>
    %c0_14 = arith.constant 0 : index
    %c0_15 = arith.constant 0 : index
    %26 = vector.load %arg18[%c0_14, %c0_15] : memref<8x1xf32, #tpu.memory_space<vmem>>, vector<8x1xf32>
    %27 = arith.mulf %22, %26 : vector<8x1xf32>
    %cst_16 = arith.constant dense<0.000000e+00> : vector<8xf32>
    %28 = vector.multi_reduction <add>, %25, %cst_16 [1] : vector<8x128xf32> to vector<8xf32>
    %29 = vector.shape_cast %28 : vector<8xf32> to vector<8x1xf32>
    %30 = arith.addf %27, %29 : vector<8x1xf32>
    %c0_17 = arith.constant 0 : index
    %c0_18 = arith.constant 0 : index
    %31 = vector.load %arg18[%c0_17, %c0_18] : memref<8x1xf32, #tpu.memory_space<vmem>>, vector<8x1xf32>
    tpu.vector_store %arg18[%c0_17, %c0_18], %30 {strides = array<i32>} : memref<8x1xf32, #tpu.memory_space<vmem>>, vector<8x1xf32>,
    %32 = vector.shape_cast %25 : vector<8x128xf32> to vector<8x1x128xf32>
    %cst_19 = arith.constant dense<0.000000e+00> : vector<8x1x256xf32>
    %33 = tpu.matmul %32, %3, %cst_19 {dimension_numbers = #tpu.dot_dimension_numbers<[2], [1], [1], [2], [0, 0, 0, 1, 1, 2], [0], [0]>} : vector<8x1x128xf32>, vector<8x128x256xf32>, vector<8x1x256xf32> -> vector<8x1x256xf32>
    %34 = vector.shape_cast %33 : vector<8x1x256xf32> to vector<8x256xf32>
    %c0_20 = arith.constant 0 : index
    %c0_21 = arith.constant 0 : index
    %35 = vector.load %arg19[%c0_20, %c0_21] : memref<8x256xf32, #tpu.memory_space<vmem>>, vector<8x256xf32>
    %36 = vector.broadcast %22 : vector<8x1xf32> to vector<8x256xf32>
    %37 = arith.mulf %36, %35 : vector<8x256xf32>
    %38 = arith.addf %37, %34 : vector<8x256xf32>
    %c0_22 = arith.constant 0 : index
    %c0_23 = arith.constant 0 : index
    %39 = vector.load %arg19[%c0_22, %c0_23] : memref<8x256xf32, #tpu.memory_space<vmem>>, vector<8x256xf32>
    tpu.vector_store %arg19[%c0_22, %c0_23], %38 {strides = array<i32>} : memref<8x256xf32, #tpu.memory_space<vmem>>, vector<8x256xf32>,
    %c0_24 = arith.constant 0 : index
    %c0_25 = arith.constant 0 : index
    %40 = vector.load %arg17[%c0_24, %c0_25] : memref<8x1xf32, #tpu.memory_space<vmem>>, vector<8x1xf32>
    tpu.vector_store %arg17[%c0_24, %c0_25], %20 {strides = array<i32>} : memref<8x1xf32, #tpu.memory_space<vmem>>, vector<8x1xf32>,
    %c1_i32 = arith.constant 1 : i32
    %41 = arith.cmpi eq, %arg0, %c1_i32 : i32
    %42 = arith.extui %41 : i1 to i32
    %c0_i32_26 = arith.constant 0 : i32
    %43 = arith.cmpi ne, %42, %c0_i32_26 : i32
    scf.if %43 {
      %c0_27 = arith.constant 0 : index
      %c0_28 = arith.constant 0 : index
      %44 = vector.load %arg18[%c0_27, %c0_28] : memref<8x1xf32, #tpu.memory_space<vmem>>, vector<8x1xf32>
      %45 = tpu.reciprocal %44 : vector<8x1xf32> -> vector<8x1xf32>
      %c0_29 = arith.constant 0 : index
      %c0_30 = arith.constant 0 : index
      %46 = vector.load %arg19[%c0_29, %c0_30] : memref<8x256xf32, #tpu.memory_space<vmem>>, vector<8x256xf32>
      %47 = vector.broadcast %45 : vector<8x1xf32> to vector<8x256xf32>
      %48 = arith.mulf %46, %47 : vector<8x256xf32>
      %c0_31 = arith.constant 0 : index
      %c0_32 = arith.constant 0 : index
      %49 = vector.load %arg20[%c0_31, %c0_32] : memref<8x384xf32, #tpu.memory_space<vmem>>, vector<8x384xf32>
      %c0_33 = arith.constant 0 : index
      %c0_34 = arith.constant 0 : index
      %50 = vector.load %arg9[%c0_33, %c0_34] : memref<256x384xf32, #tpu.memory_space<vmem>>, vector<256x384xf32>
      %cst_35 = arith.constant dense<0.000000e+00> : vector<8x384xf32>
      %51 = tpu.matmul %48, %50, %cst_35 {dimension_numbers = #tpu.dot_dimension_numbers<[1], [0], [0], [1], [0, 0, 1, 1], [], []>} : vector<8x256xf32>, vector<256x384xf32>, vector<8x384xf32> -> vector<8x384xf32>
      %52 = arith.addf %49, %51 : vector<8x384xf32>
      %53 = vector.extract_strided_slice %52 {offsets = [0, 0], sizes = [8, 128], strides = [1, 1]} : vector<8x384xf32> to vector<8x128xf32>
      %54 = arith.negf %53 : vector<8x128xf32>
      %55 = math.exp %54 : vector<8x128xf32>
      %cst_36 = arith.constant 1.000000e+00 : f32
      %56 = vector.broadcast %cst_36 : f32 to vector<8x128xf32>
      %57 = arith.addf %56, %55 : vector<8x128xf32>
      %58 = arith.divf %56, %57 : vector<8x128xf32>
      %59 = vector.extract_strided_slice %52 {offsets = [0, 128], sizes = [8, 128], strides = [1, 1]} : vector<8x384xf32> to vector<8x128xf32>
      %60 = math.tanh %59 : vector<8x128xf32>
      %61 = vector.extract_strided_slice %52 {offsets = [0, 256], sizes = [8, 128], strides = [1, 1]} : vector<8x384xf32> to vector<8x128xf32>
      %62 = arith.negf %61 : vector<8x128xf32>
      %63 = math.exp %62 : vector<8x128xf32>
      %cst_37 = arith.constant 1.000000e+00 : f32
      %64 = vector.broadcast %cst_37 : f32 to vector<8x128xf32>
      %65 = arith.addf %64, %63 : vector<8x128xf32>
      %66 = arith.divf %64, %65 : vector<8x128xf32>
      %67 = arith.mulf %58, %60 : vector<8x128xf32>
      %68 = math.tanh %67 : vector<8x128xf32>
      %69 = arith.mulf %66, %68 : vector<8x128xf32>
      %c0_38 = arith.constant 0 : index
      %c0_39 = arith.constant 0 : index
      %70 = vector.load %arg15[%c0_38, %c0_39] : memref<8x128xf32, #tpu.memory_space<vmem>>, vector<8x128xf32>
      tpu.vector_store %arg15[%c0_38, %c0_39], %69 {strides = array<i32>} : memref<8x128xf32, #tpu.memory_space<vmem>>, vector<8x128xf32>,
      %c0_40 = arith.constant 0 : index
      %c0_41 = arith.constant 0 : index
      %71 = vector.load %arg11[%c0_40, %c0_41] : memref<128x256xf32, #tpu.memory_space<vmem>>, vector<128x256xf32>
      %cst_42 = arith.constant dense<0.000000e+00> : vector<8x256xf32>
      %72 = tpu.matmul %69, %71, %cst_42 {dimension_numbers = #tpu.dot_dimension_numbers<[1], [0], [0], [1], [0, 0, 1, 1], [], []>} : vector<8x128xf32>, vector<128x256xf32>, vector<8x256xf32> -> vector<8x256xf32>
      %c0_43 = arith.constant 0 : index
      %c0_44 = arith.constant 0 : index
      %73 = vector.load %arg12[%c0_43, %c0_44] : memref<256x256xf32, #tpu.memory_space<vmem>>, vector<256x256xf32>
      %cst_45 = arith.constant dense<0.000000e+00> : vector<8x256xf32>
      %74 = tpu.matmul %48, %73, %cst_45 {dimension_numbers = #tpu.dot_dimension_numbers<[1], [0], [0], [1], [0, 0, 1, 1], [], []>} : vector<8x256xf32>, vector<256x256xf32>, vector<8x256xf32> -> vector<8x256xf32>
      %75 = arith.addf %72, %74 : vector<8x256xf32>
      %c0_46 = arith.constant 0 : index
      %c0_47 = arith.constant 0 : index
      %76 = vector.load %arg13[%c0_46, %c0_47] : memref<1x256xf32, #tpu.memory_space<vmem>>, vector<1x256xf32>
      %77 = vector.broadcast %76 : vector<1x256xf32> to vector<8x256xf32>
      %78 = arith.addf %75, %77 : vector<8x256xf32>
      %c0_48 = arith.constant 0 : index
      %c0_49 = arith.constant 0 : index
      %79 = vector.load %arg14[%c0_48, %c0_49] : memref<8x256xf32, #tpu.memory_space<vmem>>, vector<8x256xf32>
      tpu.vector_store %arg14[%c0_48, %c0_49], %78 {strides = array<i32>} : memref<8x256xf32, #tpu.memory_space<vmem>>, vector<8x256xf32>,
    } else {
    }
    return
  }
  func.func @transform_0(%arg0: i32) -> (i32, i32) {
    %c0_i32 = arith.constant 0 : i32
    %c0_i32_0 = arith.constant 0 : i32
    %c0_i32_1 = arith.constant 0 : i32
    return %c0_i32, %c0_i32_0 : i32, i32
  }
  func.func @transform_1(%arg0: i32) -> (i32, i32) {
    %c0_i32 = arith.constant 0 : i32
    %c0_i32_0 = arith.constant 0 : i32
    %c0_i32_1 = arith.constant 0 : i32
    return %c0_i32, %c0_i32_0 : i32, i32
  }
  func.func @transform_2(%arg0: i32) -> (i32, i32, i32) {
    %c0_i32 = arith.constant 0 : i32
    %c0_i32_0 = arith.constant 0 : i32
    %c0_i32_1 = arith.constant 0 : i32
    return %c0_i32, %arg0, %c0_i32_0 : i32, i32, i32
  }
  func.func @transform_3(%arg0: i32) -> (i32, i32) {
    %c0_i32 = arith.constant 0 : i32
    %c0_i32_0 = arith.constant 0 : i32
    %c0_i32_1 = arith.constant 0 : i32
    return %c0_i32, %c0_i32_0 : i32, i32
  }
  func.func @transform_4(%arg0: i32) -> (i32, i32) {
    %c0_i32 = arith.constant 0 : i32
    %c0_i32_0 = arith.constant 0 : i32
    %c0_i32_1 = arith.constant 0 : i32
    return %c0_i32, %c0_i32_0 : i32, i32
  }
  func.func @transform_5(%arg0: i32) -> (i32, i32) {
    %c0_i32 = arith.constant 0 : i32
    %c0_i32_0 = arith.constant 0 : i32
    %c0_i32_1 = arith.constant 0 : i32
    return %c0_i32, %c0_i32_0 : i32, i32
  }
  func.func @transform_6(%arg0: i32) -> (i32, i32, i32) {
    %c0_i32 = arith.constant 0 : i32
    %c0_i32_0 = arith.constant 0 : i32
    %c0_i32_1 = arith.constant 0 : i32
    %c0_i32_2 = arith.constant 0 : i32
    return %c0_i32, %c0_i32_0, %c0_i32_1 : i32, i32, i32
  }
  func.func @transform_7(%arg0: i32) -> (i32, i32) {
    %c0_i32 = arith.constant 0 : i32
    %c0_i32_0 = arith.constant 0 : i32
    %c0_i32_1 = arith.constant 0 : i32
    return %c0_i32, %c0_i32_0 : i32, i32
  }
  func.func @transform_8(%arg0: i32) -> (i32, i32) {
    %c0_i32 = arith.constant 0 : i32
    %c0_i32_0 = arith.constant 0 : i32
    %c0_i32_1 = arith.constant 0 : i32
    return %c0_i32, %c0_i32_0 : i32, i32
  }
  func.func @transform_9(%arg0: i32) -> (i32, i32) {
    %c0_i32 = arith.constant 0 : i32
    %c0_i32_0 = arith.constant 0 : i32
    %c0_i32_1 = arith.constant 0 : i32
    return %c0_i32, %c0_i32_0 : i32, i32
  }
  func.func @transform_10(%arg0: i32) -> (i32, i32) {
    %c0_i32 = arith.constant 0 : i32
    %c0_i32_0 = arith.constant 0 : i32
    %c0_i32_1 = arith.constant 0 : i32
    return %c0_i32, %c0_i32_0 : i32, i32
  }
  func.func @transform_11(%arg0: i32) -> (i32, i32) {
    %c0_i32 = arith.constant 0 : i32
    %c0_i32_0 = arith.constant 0 : i32
    %c0_i32_1 = arith.constant 0 : i32
    return %c0_i32, %c0_i32_0 : i32, i32
  }
  func.func @transform_12(%arg0: i32) -> (i32, i32) {
    %c0_i32 = arith.constant 0 : i32
    %c0_i32_0 = arith.constant 0 : i32
    %c0_i32_1 = arith.constant 0 : i32
    return %c0_i32, %c0_i32_0 : i32, i32
  }
  func.func @transform_13(%arg0: i32) -> (i32, i32) {
    %c0_i32 = arith.constant 0 : i32
    %c0_i32_0 = arith.constant 0 : i32
    %c0_i32_1 = arith.constant 0 : i32
    return %c0_i32, %c0_i32_0 : i32, i32
  }
  func.func @transform_14(%arg0: i32) -> (i32, i32) {
    %c0_i32 = arith.constant 0 : i32
    %c0_i32_0 = arith.constant 0 : i32
    %c0_i32_1 = arith.constant 0 : i32
    return %c0_i32, %c0_i32_0 : i32, i32
  }
}

</mosaic_0001>

<llo_original>
// kernel: decoder_forward.1
$region0: #{decoder_forward.1}
  #allocation0 [shape = 'u32[]', space=smem, size = 0x4, offset = 0x4, fixed_abs, tag = 'smem constant byte address 0x4 - core index']
  #allocation1 [shape = 'u32[144,128]{1,0:T(1,128)}', space=vmem, size = 0x12000, scoped, tag = 'internal scratch']
  #allocation2 [shape = 'f32[8,128]{1,0:T(8,128)}', space=vmem, size = 0x1000, scoped, tag = 'scratch operand']
  #allocation3 [shape = 'f32[8,1]{1,0:T(8,128)}', space=vmem, size = 0x1000, scoped, tag = 'scratch operand']
  #allocation4 [shape = 'f32[8,1]{1,0:T(8,128)}', space=vmem, size = 0x1000, scoped, tag = 'scratch operand']
  #allocation5 [shape = 'f32[8,256]{1,0:T(8,128)}', space=vmem, size = 0x2000, scoped, tag = 'scratch operand']
  #allocation6 [shape = 'f32[8,384]{1,0:T(8,128)}', space=vmem, size = 0x3000, scoped, tag = 'scratch operand']
  #allocation30 [shape = 's32[]', space=sflag, size = 0x4, offset = 0, fixed_abs, tag = 'sflag constant byte address 0x0 - dummy sync flag']
  %s0 = inlined_call_operand.vmem [shape: f32[8,32], index: 0, kind: input, shape index: {}]
  %s1 = inlined_call_operand.hbm [shape: f32[8,128], index: 1, kind: input, shape index: {}]
  %s2 = inlined_call_operand.hbm [shape: f32[8,256,256], index: 2, kind: input, shape index: {}]
  %s3 = inlined_call_operand.hbm [shape: f32[128,128], index: 3, kind: input, shape index: {}]
  %s4 = inlined_call_operand.hbm [shape: f32[256,128], index: 4, kind: input, shape index: {}]
  %s5 = inlined_call_operand.hbm [shape: f32[1,128], index: 5, kind: input, shape index: {}]
  %s6 = inlined_call_operand.hbm [shape: f32[1,1,128], index: 6, kind: input, shape index: {}]
  %s7 = inlined_call_operand.hbm [shape: f32[32,384], index: 7, kind: input, shape index: {}]
  %s8 = inlined_call_operand.hbm [shape: f32[256,384], index: 8, kind: input, shape index: {}]
  %s9 = inlined_call_operand.hbm [shape: f32[1,384], index: 9, kind: input, shape index: {}]
  %s10 = inlined_call_operand.hbm [shape: f32[128,256], index: 10, kind: input, shape index: {}]
  %s11 = inlined_call_operand.hbm [shape: f32[256,256], index: 11, kind: input, shape index: {}]
  %s12 = inlined_call_operand.hbm [shape: f32[1,256], index: 12, kind: input, shape index: {}]
  %s13 = inlined_call_operand.hbm [shape: f32[8,256], index: 13, kind: output, shape index: {0}]
  %s14 = inlined_call_operand.hbm [shape: f32[8,128], index: 14, kind: output, shape index: {1}]
  %15 = xla_tuple %s13, %s14
  %s16 = sld [smem:[#allocation0]]
  $region149: #{decoder_forward.1} parent=0
    _
  %s18 = ssub.s32 1, %s16
  %s19 = scalar_select 0, %s18, %s16
  $region1: #{decoder_forward.1} parent=0
    #allocation7 [shape = 'u8[4096]{0}', space=vmem, size = 0x1000, scoped, tag = 'input window, operand 1, single buffered']
    #allocation8 [shape = 's32[2]{0}', space=sflag, size = 0x8, scoped, tag = 'scoped memory for decoder_forward.1']
    #allocation9 [shape = 's32[2]{0}', space=sflag, size = 0x8, scoped, tag = 'scoped memory for decoder_forward.1']
    #allocation10 [shape = 'u8[2097152]{0}', space=vmem, size = 0x200000, scoped, tag = 'input window, operand 2']
    #allocation11 [shape = 's32[2]{0}', space=sflag, size = 0x8, scoped, tag = 'scoped memory for decoder_forward.1']
    #allocation12 [shape = 'u8[65536]{0}', space=vmem, size = 0x10000, scoped, tag = 'input window, operand 3, single buffered']
    #allocation13 [shape = 'u8[131072]{0}', space=vmem, size = 0x20000, scoped, tag = 'input window, operand 4, single buffered']
    #allocation14 [shape = 's32[1]{0}', space=sflag, size = 0x4, scoped, tag = 'scoped memory for decoder_forward.1']
    #allocation15 [shape = 'u8[512]{0}', space=vmem, size = 0x400, scoped, tag = 'input window, operand 5, single buffered']
    #allocation16 [shape = 'u8[512]{0}', space=vmem, size = 0x400, scoped, tag = 'input window, operand 6, single buffered']
    #allocation17 [shape = 's32[1]{0}', space=sflag, size = 0x4, scoped, tag = 'scoped memory for decoder_forward.1']
    #allocation18 [shape = 'u8[49152]{0}', space=vmem, size = 0xc000, scoped, tag = 'input window, operand 7, single buffered']
    #allocation19 [shape = 'u8[393216]{0}', space=vmem, size = 0x60000, scoped, tag = 'input window, operand 8, single buffered']
    #allocation20 [shape = 's32[1]{0}', space=sflag, size = 0x4, scoped, tag = 'scoped memory for decoder_forward.1']
    #allocation21 [shape = 'u8[1536]{0}', space=vmem, size = 0x800, scoped, tag = 'input window, operand 9, single buffered']
    #allocation22 [shape = 'u8[131072]{0}', space=vmem, size = 0x20000, scoped, tag = 'input window, operand 10, single buffered']
    #allocation23 [shape = 's32[1]{0}', space=sflag, size = 0x4, scoped, tag = 'scoped memory for decoder_forward.1']
    #allocation24 [shape = 'u8[262144]{0}', space=vmem, size = 0x40000, scoped, tag = 'input window, operand 11, single buffered']
    #allocation25 [shape = 'u8[1024]{0}', space=vmem, size = 0x400, scoped, tag = 'input window, operand 12, single buffered']
    #allocation26 [shape = 's32[1]{0}', space=sflag, size = 0x4, scoped, tag = 'scoped memory for decoder_forward.1']
    #allocation27 [shape = 'u8[8192]{0}', space=vmem, size = 0x2000, scoped, tag = 'output window, operand 0, single buffered']
    #allocation28 [shape = 'u8[4096]{0}', space=vmem, size = 0x1000, scoped, tag = 'output window, operand 1, single buffered']
    #allocation29 [shape = 's32[1]{0}', space=sflag, size = 0x4, scoped, tag = 'scoped memory for decoder_forward.1']
    %20 = vsyncpa [#allocation8], 0
    %21 = vsyncpa [#allocation11], 0
    %s22 = scalar_lea.sflag [#allocation11], 1
    %23 = vsyncpa %s22, 0
    %24 = vsyncpa [#allocation14], 0
    %25 = vsyncpa [#allocation17], 0
    %26 = vsyncpa [#allocation20], 0
    %27 = vsyncpa [#allocation23], 0
    %28 = vsyncpa [#allocation26], 0
    %29 = vsyncpa [#allocation9], 0
    %30 = vsyncpa [#allocation29], 0
    loop: start=0, step=1, limit=4
    $region2: #{decoder_forward.1} parent=1 // loop_pre_header
      _
    $region3: #{decoder_forward.1} parent=1 // loop_header
      %s32 = sphi 0, %s36
      %p33 = scmp.ge.s32.totalorder %s32, 4
      %s40 = sphi 0, %s40
      %s42 = sphi 0, %s40
      %s43 = sphi 0, %s42
      %s57 = sphi 0, %s43
      %s61 = sphi 0, %s61
      %s63 = sphi 0, %s61
      %s64 = sphi 0, %s63
      %s78 = sphi 0, %s64
      %s84 = sphi 0, %s86
      %s87 = sphi 0, %s84
      %s88 = sphi 0, %s87
      %s104 = sphi 0, %s88
      %s108 = sphi 0, %s108
      %s110 = sphi 0, %s108
      %s111 = sphi 0, %s110
      %s125 = sphi 0, %s111
      %s129 = sphi 0, %s129
      %s131 = sphi 0, %s129
      %s132 = sphi 0, %s131
      %s146 = sphi 0, %s132
      %s150 = sphi 0, %s150
      %s152 = sphi 0, %s150
      %s153 = sphi 0, %s152
      %s167 = sphi 0, %s153
      %s171 = sphi 0, %s171
      %s173 = sphi 0, %s171
      %s174 = sphi 0, %s173
      %s188 = sphi 0, %s174
      %s192 = sphi 0, %s192
      %s194 = sphi 0, %s192
      %s195 = sphi 0, %s194
      %s209 = sphi 0, %s195
      %s213 = sphi 0, %s213
      %s215 = sphi 0, %s213
      %s216 = sphi 0, %s215
      %s230 = sphi 0, %s216
      %s234 = sphi 0, %s234
      %s236 = sphi 0, %s234
      %s237 = sphi 0, %s236
      %s251 = sphi 0, %s237
      %s255 = sphi 0, %s255
      %s257 = sphi 0, %s255
      %s258 = sphi 0, %s257
      %s272 = sphi 0, %s258
      %s276 = sphi 0, %s276
      %s278 = sphi 0, %s276
      %s279 = sphi 0, %s278
      %s293 = sphi 0, %s279
      %s297 = sphi 0, %s297
      %s299 = sphi 0, %s297
      %s300 = sphi 0, %s299
      %s314 = sphi 0, %s300
      %s318 = sphi 0, %s318
      %s320 = sphi 0, %s318
      %s321 = sphi 0, %s320
      %s335 = sphi 0, %s321
      %s339 = sphi 0, %s339
      %s341 = sphi 0, %s339
      %s342 = sphi 0, %s341
      %s356 = sphi 0, %s342
    $region4: #{decoder_forward.1} parent=1 // loop_header_branch
      %35 = sbr.rel (%p33) target = $region8
    $region5: #{decoder_forward.1} parent=1 // loop_body
      %s37 = ssub.s32 %s32, 1
      %s38 = ssub.s32 %s32, 2
      %s39 = sadd.s32 %s32, 1
      %s41 = sadd.s32 %s40, 1
      %p44 = scmp.eq.s32.totalorder %s32, 1
      %p45 = scmp.ne.s32.totalorder %s40, %s42
      %p46 = scmp.eq.s32.totalorder %s32, 0
      %p47 = por %p45, %p46
      %p48 = scmp.ne.s32.totalorder %s40, %s42
      %p49 = scmp.eq.s32.totalorder %s37, 1
      %p50 = por %p48, %p49
      %p51 = scmp.ne.s32.totalorder %s42, %s43
      %p52 = scmp.eq.s32.totalorder %s37, 0
      %p53 = por %p51, %p52
      %p54 = scmp.ne.s32.totalorder %s42, %s43
      %p55 = scmp.eq.s32.totalorder %s38, 1
      %p56 = por %p54, %p55
      %p58 = scmp.ne.s32.totalorder %s43, %s57
      %p59 = scmp.eq.s32.totalorder %s38, 0
      %p60 = por %p58, %p59
      %s62 = sadd.s32 %s61, 1
      %p65 = scmp.eq.s32.totalorder %s32, 1
      %p66 = scmp.ne.s32.totalorder %s61, %s63
      %p67 = scmp.eq.s32.totalorder %s32, 0
      %p68 = por %p66, %p67
      %p69 = scmp.ne.s32.totalorder %s61, %s63
      %p70 = scmp.eq.s32.totalorder %s37, 1
      %p71 = por %p69, %p70
      %p72 = scmp.ne.s32.totalorder %s63, %s64
      %p73 = scmp.eq.s32.totalorder %s37, 0
      %p74 = por %p72, %p73
      %p75 = scmp.ne.s32.totalorder %s63, %s64
      %p76 = scmp.eq.s32.totalorder %s38, 1
      %p77 = por %p75, %p76
      %p79 = scmp.ne.s32.totalorder %s64, %s78
      %p80 = scmp.eq.s32.totalorder %s38, 0
      %p81 = por %p79, %p80
      %s82 = ssub.s32 %s32, %s39
      %p83 = scmp.eq.s32.totalorder %s82, 0
      %s85 = sadd.s32 %s84, 1
      %s86 = scalar_select %p83, %s84, %s85
      %p89 = pneg %p83
      %p90 = scmp.eq.s32.totalorder %s32, 1
      %p91 = por %p89, %p90
      %p92 = scmp.ne.s32.totalorder %s84, %s87
      %p93 = scmp.eq.s32.totalorder %s32, 0
      %p94 = por %p92, %p93
      %p95 = scmp.ne.s32.totalorder %s84, %s87
      %p96 = scmp.eq.s32.totalorder %s37, 1
      %p97 = por %p95, %p96
      %p98 = scmp.ne.s32.totalorder %s87, %s88
      %p99 = scmp.eq.s32.totalorder %s37, 0
      %p100 = por %p98, %p99
      %p101 = scmp.ne.s32.totalorder %s87, %s88
      %p102 = scmp.eq.s32.totalorder %s38, 1
      %p103 = por %p101, %p102
      %p105 = scmp.ne.s32.totalorder %s88, %s104
      %p106 = scmp.eq.s32.totalorder %s38, 0
      %p107 = por %p105, %p106
      %s109 = sadd.s32 %s108, 1
      %p112 = scmp.eq.s32.totalorder %s32, 1
      %p113 = scmp.ne.s32.totalorder %s108, %s110
      %p114 = scmp.eq.s32.totalorder %s32, 0
      %p115 = por %p113, %p114
      %p116 = scmp.ne.s32.totalorder %s108, %s110
      %p117 = scmp.eq.s32.totalorder %s37, 1
      %p118 = por %p116, %p117
      %p119 = scmp.ne.s32.totalorder %s110, %s111
      %p120 = scmp.eq.s32.totalorder %s37, 0
      %p121 = por %p119, %p120
      %p122 = scmp.ne.s32.totalorder %s110, %s111
      %p123 = scmp.eq.s32.totalorder %s38, 1
      %p124 = por %p122, %p123
      %p126 = scmp.ne.s32.totalorder %s111, %s125
      %p127 = scmp.eq.s32.totalorder %s38, 0
      %p128 = por %p126, %p127
      %s130 = sadd.s32 %s129, 1
      %p133 = scmp.eq.s32.totalorder %s32, 1
      %p134 = scmp.ne.s32.totalorder %s129, %s131
      %p135 = scmp.eq.s32.totalorder %s32, 0
      %p136 = por %p134, %p135
      %p137 = scmp.ne.s32.totalorder %s129, %s131
      %p138 = scmp.eq.s32.totalorder %s37, 1
      %p139 = por %p137, %p138
      %p140 = scmp.ne.s32.totalorder %s131, %s132
      %p141 = scmp.eq.s32.totalorder %s37, 0
      %p142 = por %p140, %p141
      %p143 = scmp.ne.s32.totalorder %s131, %s132
      %p144 = scmp.eq.s32.totalorder %s38, 1
      %p145 = por %p143, %p144
      %p147 = scmp.ne.s32.totalorder %s132, %s146
      %p148 = scmp.eq.s32.totalorder %s38, 0
      %p149 = por %p147, %p148
      %s151 = sadd.s32 %s150, 1
      %p154 = scmp.eq.s32.totalorder %s32, 1
      %p155 = scmp.ne.s32.totalorder %s150, %s152
      %p156 = scmp.eq.s32.totalorder %s32, 0
      %p157 = por %p155, %p156
      %p158 = scmp.ne.s32.totalorder %s150, %s152
      %p159 = scmp.eq.s32.totalorder %s37, 1
      %p160 = por %p158, %p159
      %p161 = scmp.ne.s32.totalorder %s152, %s153
      %p162 = scmp.eq.s32.totalorder %s37, 0
      %p163 = por %p161, %p162
      %p164 = scmp.ne.s32.totalorder %s152, %s153
      %p165 = scmp.eq.s32.totalorder %s38, 1
      %p166 = por %p164, %p165
      %p168 = scmp.ne.s32.totalorder %s153, %s167
      %p169 = scmp.eq.s32.totalorder %s38, 0
      %p170 = por %p168, %p169
      %s172 = sadd.s32 %s171, 1
      %p175 = scmp.eq.s32.totalorder %s32, 1
      %p176 = scmp.ne.s32.totalorder %s171, %s173
      %p177 = scmp.eq.s32.totalorder %s32, 0
      %p178 = por %p176, %p177
      %p179 = scmp.ne.s32.totalorder %s171, %s173
      %p180 = scmp.eq.s32.totalorder %s37, 1
      %p181 = por %p179, %p180
      %p182 = scmp.ne.s32.totalorder %s173, %s174
      %p183 = scmp.eq.s32.totalorder %s37, 0
      %p184 = por %p182, %p183
      %p185 = scmp.ne.s32.totalorder %s173, %s174
      %p186 = scmp.eq.s32.totalorder %s38, 1
      %p187 = por %p185, %p186
      %p189 = scmp.ne.s32.totalorder %s174, %s188
      %p190 = scmp.eq.s32.totalorder %s38, 0
      %p191 = por %p189, %p190
      %s193 = sadd.s32 %s192, 1
      %p196 = scmp.eq.s32.totalorder %s32, 1
      %p197 = scmp.ne.s32.totalorder %s192, %s194
      %p198 = scmp.eq.s32.totalorder %s32, 0
      %p199 = por %p197, %p198
      %p200 = scmp.ne.s32.totalorder %s192, %s194
      %p201 = scmp.eq.s32.totalorder %s37, 1
      %p202 = por %p200, %p201
      %p203 = scmp.ne.s32.totalorder %s194, %s195
      %p204 = scmp.eq.s32.totalorder %s37, 0
      %p205 = por %p203, %p204
      %p206 = scmp.ne.s32.totalorder %s194, %s195
      %p207 = scmp.eq.s32.totalorder %s38, 1
      %p208 = por %p206, %p207
      %p210 = scmp.ne.s32.totalorder %s195, %s209
      %p211 = scmp.eq.s32.totalorder %s38, 0
      %p212 = por %p210, %p211
      %s214 = sadd.s32 %s213, 1
      %p217 = scmp.eq.s32.totalorder %s32, 1
      %p218 = scmp.ne.s32.totalorder %s213, %s215
      %p219 = scmp.eq.s32.totalorder %s32, 0
      %p220 = por %p218, %p219
      %p221 = scmp.ne.s32.totalorder %s213, %s215
      %p222 = scmp.eq.s32.totalorder %s37, 1
      %p223 = por %p221, %p222
      %p224 = scmp.ne.s32.totalorder %s215, %s216
      %p225 = scmp.eq.s32.totalorder %s37, 0
      %p226 = por %p224, %p225
      %p227 = scmp.ne.s32.totalorder %s215, %s216
      %p228 = scmp.eq.s32.totalorder %s38, 1
      %p229 = por %p227, %p228
      %p231 = scmp.ne.s32.totalorder %s216, %s230
      %p232 = scmp.eq.s32.totalorder %s38, 0
      %p233 = por %p231, %p232
      %s235 = sadd.s32 %s234, 1
      %p238 = scmp.eq.s32.totalorder %s32, 1
      %p239 = scmp.ne.s32.totalorder %s234, %s236
      %p240 = scmp.eq.s32.totalorder %s32, 0
      %p241 = por %p239, %p240
      %p242 = scmp.ne.s32.totalorder %s234, %s236
      %p243 = scmp.eq.s32.totalorder %s37, 1
      %p244 = por %p242, %p243
      %p245 = scmp.ne.s32.totalorder %s236, %s237
      %p246 = scmp.eq.s32.totalorder %s37, 0
      %p247 = por %p245, %p246
      %p248 = scmp.ne.s32.totalorder %s236, %s237
      %p249 = scmp.eq.s32.totalorder %s38, 1
      %p250 = por %p248, %p249
      %p252 = scmp.ne.s32.totalorder %s237, %s251
      %p253 = scmp.eq.s32.totalorder %s38, 0
      %p254 = por %p252, %p253
      %s256 = sadd.s32 %s255, 1
      %p259 = scmp.eq.s32.totalorder %s32, 1
      %p260 = scmp.ne.s32.totalorder %s255, %s257
      %p261 = scmp.eq.s32.totalorder %s32, 0
      %p262 = por %p260, %p261
      %p263 = scmp.ne.s32.totalorder %s255, %s257
      %p264 = scmp.eq.s32.totalorder %s37, 1
      %p265 = por %p263, %p264
      %p266 = scmp.ne.s32.totalorder %s257, %s258
      %p267 = scmp.eq.s32.totalorder %s37, 0
      %p268 = por %p266, %p267
      %p269 = scmp.ne.s32.totalorder %s257, %s258
      %p270 = scmp.eq.s32.totalorder %s38, 1
      %p271 = por %p269, %p270
      %p273 = scmp.ne.s32.totalorder %s258, %s272
      %p274 = scmp.eq.s32.totalorder %s38, 0
      %p275 = por %p273, %p274
      %s277 = sadd.s32 %s276, 1
      %p280 = scmp.eq.s32.totalorder %s32, 1
      %p281 = scmp.ne.s32.totalorder %s276, %s278
      %p282 = scmp.eq.s32.totalorder %s32, 0
      %p283 = por %p281, %p282
      %p284 = scmp.ne.s32.totalorder %s276, %s278
      %p285 = scmp.eq.s32.totalorder %s37, 1
      %p286 = por %p284, %p285
      %p287 = scmp.ne.s32.totalorder %s278, %s279
      %p288 = scmp.eq.s32.totalorder %s37, 0
      %p289 = por %p287, %p288
      %p290 = scmp.ne.s32.totalorder %s278, %s279
      %p291 = scmp.eq.s32.totalorder %s38, 1
      %p292 = por %p290, %p291
      %p294 = scmp.ne.s32.totalorder %s279, %s293
      %p295 = scmp.eq.s32.totalorder %s38, 0
      %p296 = por %p294, %p295
      %s298 = sadd.s32 %s297, 1
      %p301 = scmp.eq.s32.totalorder %s32, 1
      %p302 = scmp.ne.s32.totalorder %s297, %s299
      %p303 = scmp.eq.s32.totalorder %s32, 0
      %p304 = por %p302, %p303
      %p305 = scmp.ne.s32.totalorder %s297, %s299
      %p306 = scmp.eq.s32.totalorder %s37, 1
      %p307 = por %p305, %p306
      %p308 = scmp.ne.s32.totalorder %s299, %s300
      %p309 = scmp.eq.s32.totalorder %s37, 0
      %p310 = por %p308, %p309
      %p311 = scmp.ne.s32.totalorder %s299, %s300
      %p312 = scmp.eq.s32.totalorder %s38, 1
      %p313 = por %p311, %p312
      %p315 = scmp.ne.s32.totalorder %s300, %s314
      %p316 = scmp.eq.s32.totalorder %s38, 0
      %p317 = por %p315, %p316
      %s319 = sadd.s32 %s318, 1
      %p322 = scmp.eq.s32.totalorder %s32, 1
      %p323 = scmp.ne.s32.totalorder %s318, %s320
      %p324 = scmp.eq.s32.totalorder %s32, 0
      %p325 = por %p323, %p324
      %p326 = scmp.ne.s32.totalorder %s318, %s320
      %p327 = scmp.eq.s32.totalorder %s37, 1
      %p328 = por %p326, %p327
      %p329 = scmp.ne.s32.totalorder %s320, %s321
      %p330 = scmp.eq.s32.totalorder %s37, 0
      %p331 = por %p329, %p330
      %p332 = scmp.ne.s32.totalorder %s320, %s321
      %p333 = scmp.eq.s32.totalorder %s38, 1
      %p334 = por %p332, %p333
      %p336 = scmp.ne.s32.totalorder %s321, %s335
      %p337 = scmp.eq.s32.totalorder %s38, 0
      %p338 = por %p336, %p337
      %s340 = sadd.s32 %s339, 1
      %p343 = scmp.eq.s32.totalorder %s32, 1
      %p344 = scmp.ne.s32.totalorder %s339, %s341
      %p345 = scmp.eq.s32.totalorder %s32, 0
      %p346 = por %p344, %p345
      %p347 = scmp.ne.s32.totalorder %s339, %s341
      %p348 = scmp.eq.s32.totalorder %s37, 1
      %p349 = por %p347, %p348
      %p350 = scmp.ne.s32.totalorder %s341, %s342
      %p351 = scmp.eq.s32.totalorder %s37, 0
      %p352 = por %p350, %p351
      %p353 = scmp.ne.s32.totalorder %s341, %s342
      %p354 = scmp.eq.s32.totalorder %s38, 1
      %p355 = por %p353, %p354
      %p357 = scmp.ne.s32.totalorder %s342, %s356
      %p358 = scmp.eq.s32.totalorder %s38, 0
      %p359 = por %p357, %p358
      %p360 = scmp.le.s32.totalorder 1, %s32
      %p361 = scmp.lt.s32.totalorder %s32, 3
      %p362 = pnand %p360, %p361
      %p363 = pneg %p362
      // Predicated region
      $region9: #{decoder_forward.1} parent=5 // pred_check
        _
      $region10: #{decoder_forward.1} parent=5 // pred_check_branch
        %365 = sbr.rel (%p362) target = $region12
      $region11: #{decoder_forward.1} parent=5 // pred_region
        %s366 = ssub.s32 %s32, 1
        // Predicated region
        $region13: #{decoder_forward.1} parent=11 // pred_check
          %p367 = pneg %p53
        $region14: #{decoder_forward.1} parent=11 // pred_check_branch
          %369 = sbr.rel (%p367) target = $region16
        $region15: #{decoder_forward.1} parent=11 // pred_region
          _
        $region16: #{decoder_forward.1} parent=11 // pred_fallthru
          _
        // Predicated region
        $region17: #{decoder_forward.1} parent=11 // pred_check
          %p370 = pneg %p74
        $region18: #{decoder_forward.1} parent=11 // pred_check_branch
          %372 = sbr.rel (%p370) target = $region20
        $region19: #{decoder_forward.1} parent=11 // pred_region
          %s374 = ssub.s32 128, 128
          %375 = vsyncadd [#allocation8], %s374
          %s377 = sshll.u32 [#allocation7], 4
          %s378 = int_to_ptr.vmem [resolvable:$true] %s377
          %380 = dma.hbm_to_vmem [thread:$0]  %s1, 128, %s378, [#allocation8]
        $region20: #{decoder_forward.1} parent=11 // pred_fallthru
          _
        // Predicated region
        $region21: #{decoder_forward.1} parent=11 // pred_check
          %p381 = pneg %p121
        $region22: #{decoder_forward.1} parent=11 // pred_check_branch
          %383 = sbr.rel (%p381) target = $region24
        $region23: #{decoder_forward.1} parent=11 // pred_region
          %s385 = ssub.s32 2048, 2048
          %386 = vsyncadd [#allocation11], %s385
          %s387 = sshll.u32 [#allocation12], 4
          %s388 = int_to_ptr.vmem [resolvable:$true] %s387
          %393 = dma.hbm_to_vmem [thread:$0]  %s3, 2048, %s388, [#allocation11], 128, 128, 8
        $region24: #{decoder_forward.1} parent=11 // pred_fallthru
          _
        // Predicated region
        $region25: #{decoder_forward.1} parent=11 // pred_check
          %p394 = pneg %p142
        $region26: #{decoder_forward.1} parent=11 // pred_check_branch
          %396 = sbr.rel (%p394) target = $region28
        $region27: #{decoder_forward.1} parent=11 // pred_region
          %s398 = ssub.s32 4096, 4096
          %399 = vsyncadd [#allocation14], %s398
          %s400 = sshll.u32 [#allocation13], 4
          %s401 = int_to_ptr.vmem [resolvable:$true] %s400
          %406 = dma.hbm_to_vmem [thread:$0]  %s4, 4096, %s401, [#allocation14], 128, 128, 8
        $region28: #{decoder_forward.1} parent=11 // pred_fallthru
          _
        // Predicated region
        $region29: #{decoder_forward.1} parent=11 // pred_check
          %p407 = pneg %p163
        $region30: #{decoder_forward.1} parent=11 // pred_check_branch
          %409 = sbr.rel (%p407) target = $region32
        $region31: #{decoder_forward.1} parent=11 // pred_region
          %s411 = ssub.s32 16, 16
          %412 = vsyncadd [#allocation14], %s411
          %s414 = sshll.u32 [#allocation15], 4
          %s415 = int_to_ptr.vmem [resolvable:$true] %s414
          %417 = dma.hbm_to_vmem [thread:$0]  %s5, 16, %s415, [#allocation14]
        $region32: #{decoder_forward.1} parent=11 // pred_fallthru
          _
        // Predicated region
        $region33: #{decoder_forward.1} parent=11 // pred_check
          %p418 = pneg %p184
        $region34: #{decoder_forward.1} parent=11 // pred_check_branch
          %420 = sbr.rel (%p418) target = $region36
        $region35: #{decoder_forward.1} parent=11 // pred_region
          %s422 = ssub.s32 16, 16
          %423 = vsyncadd [#allocation17], %s422
          %s425 = sshll.u32 [#allocation16], 4
          %s426 = int_to_ptr.vmem [resolvable:$true] %s425
          %428 = dma.hbm_to_vmem [thread:$0]  %s6, 16, %s426, [#allocation17]
        $region36: #{decoder_forward.1} parent=11 // pred_fallthru
          _
        // Predicated region
        $region37: #{decoder_forward.1} parent=11 // pred_check
          %p429 = pneg %p205
        $region38: #{decoder_forward.1} parent=11 // pred_check_branch
          %431 = sbr.rel (%p429) target = $region40
        $region39: #{decoder_forward.1} parent=11 // pred_region
          %s433 = ssub.s32 1536, 1536
          %434 = vsyncadd [#allocation17], %s433
          %s435 = sshll.u32 [#allocation18], 4
          %s436 = int_to_ptr.vmem [resolvable:$true] %s435
          %441 = dma.hbm_to_vmem [thread:$0]  %s7, 1536, %s436, [#allocation17], 384, 384, 24
        $region40: #{decoder_forward.1} parent=11 // pred_fallthru
          _
        // Predicated region
        $region41: #{decoder_forward.1} parent=11 // pred_check
          %p442 = pneg %p226
        $region42: #{decoder_forward.1} parent=11 // pred_check_branch
          %444 = sbr.rel (%p442) target = $region44
        $region43: #{decoder_forward.1} parent=11 // pred_region
          %s446 = ssub.s32 12288, 12288
          %447 = vsyncadd [#allocation20], %s446
          %s448 = sshll.u32 [#allocation19], 4
          %s449 = int_to_ptr.vmem [resolvable:$true] %s448
          %454 = dma.hbm_to_vmem [thread:$0]  %s8, 12288, %s449, [#allocation20], 384, 384, 24
        $region44: #{decoder_forward.1} parent=11 // pred_fallthru
          _
        // Predicated region
        $region45: #{decoder_forward.1} parent=11 // pred_check
          %p455 = pneg %p247
        $region46: #{decoder_forward.1} parent=11 // pred_check_branch
          %457 = sbr.rel (%p455) target = $region48
        $region47: #{decoder_forward.1} parent=11 // pred_region
          %s459 = ssub.s32 48, 48
          %460 = vsyncadd [#allocation20], %s459
          %s462 = sshll.u32 [#allocation21], 4
          %s463 = int_to_ptr.vmem [resolvable:$true] %s462
          %465 = dma.hbm_to_vmem [thread:$0]  %s9, 48, %s463, [#allocation20]
        $region48: #{decoder_forward.1} parent=11 // pred_fallthru
          _
        // Predicated region
        $region49: #{decoder_forward.1} parent=11 // pred_check
          %p466 = pneg %p268
        $region50: #{decoder_forward.1} parent=11 // pred_check_branch
          %468 = sbr.rel (%p466) target = $region52
        $region51: #{decoder_forward.1} parent=11 // pred_region
          %s470 = ssub.s32 4096, 4096
          %471 = vsyncadd [#allocation23], %s470
          %s472 = sshll.u32 [#allocation22], 4
          %s473 = int_to_ptr.vmem [resolvable:$true] %s472
          %478 = dma.hbm_to_vmem [thread:$0]  %s10, 4096, %s473, [#allocation23], 256, 256, 16
        $region52: #{decoder_forward.1} parent=11 // pred_fallthru
          _
        // Predicated region
        $region53: #{decoder_forward.1} parent=11 // pred_check
          %p479 = pneg %p289
        $region54: #{decoder_forward.1} parent=11 // pred_check_branch
          %481 = sbr.rel (%p479) target = $region56
        $region55: #{decoder_forward.1} parent=11 // pred_region
          %s483 = ssub.s32 8192, 8192
          %484 = vsyncadd [#allocation23], %s483
          %s485 = sshll.u32 [#allocation24], 4
          %s486 = int_to_ptr.vmem [resolvable:$true] %s485
          %491 = dma.hbm_to_vmem [thread:$0]  %s11, 8192, %s486, [#allocation23], 256, 256, 16
        $region56: #{decoder_forward.1} parent=11 // pred_fallthru
          _
        // Predicated region
        $region57: #{decoder_forward.1} parent=11 // pred_check
          %p492 = pneg %p310
        $region58: #{decoder_forward.1} parent=11 // pred_check_branch
          %494 = sbr.rel (%p492) target = $region60
        $region59: #{decoder_forward.1} parent=11 // pred_region
          %s496 = ssub.s32 32, 32
          %497 = vsyncadd [#allocation26], %s496
          %s499 = sshll.u32 [#allocation25], 4
          %s500 = int_to_ptr.vmem [resolvable:$true] %s499
          %502 = dma.hbm_to_vmem [thread:$0]  %s12, 32, %s500, [#allocation26]
        $region60: #{decoder_forward.1} parent=11 // pred_fallthru
          _
      $region12: #{decoder_forward.1} parent=5 // pred_fallthru
        _
      %p503 = scmp.lt.s32.totalorder %s32, 2
      // Predicated region
      $region61: #{decoder_forward.1} parent=5 // pred_check
        %p504 = pneg %p503
      $region62: #{decoder_forward.1} parent=5 // pred_check_branch
        %506 = sbr.rel (%p504) target = $region64
      $region63: #{decoder_forward.1} parent=5 // pred_region
        // Predicated region
        $region65: #{decoder_forward.1} parent=63 // pred_check
          %p507 = pneg %p94
        $region66: #{decoder_forward.1} parent=63 // pred_check_branch
          %509 = sbr.rel (%p507) target = $region68
        $region67: #{decoder_forward.1} parent=63 // pred_region
          #allocation31 [shape = 'u32[6]{0}', space=smem, size = 0x18, scoped, tag = 'DMA stride descriptor']
          %s510 = sand.u32 %s32, 1
          %s511 = scalar_lea.sflag [#allocation11], %s510
          %s512 = sand.u32 %s84, 1
          %s513 = smul.addr %s512, 2048
          %s514 = scalar_lea.vmem [#allocation10], %s513
          %s515 = smul.u32 16, %s32
          %s517 = ssub.s32 32768, 32768
          %518 = vsyncadd %s511, %s517
          %s519 = smul.addr %s515, 2
          %s520 = smul.addr %s519, 128
          %s521 = scalar_lea.hbm %s2, %s520
          %s523 = sshll.u32 1, 14
          %s524 = sxor.u32 4294967295, %s523
          %s526 = sld [smem:[#allocation0]]
          %s527 = sadd.s32 2, %s526
          %s529 = sshll.u32 7, 26
          %s530 = sxor.u32 4294967295, %s529
          %s531 = sand.u32 0, %s530
          %s532 = sshll.u32 %s527, 26
          %s533 = sor.u32 %s531, %s532
          %s534 = sshll.u32 %s514, 4
          %s535 = int_to_ptr.vmem [resolvable:$true] %s534
          %541 = sst [smem:[#allocation31]] 8192
          %s542 = scalar_lea.smem [#allocation31], 1
          %543 = sst [smem:[%s542]] 4096
          %s544 = scalar_lea.smem [#allocation31], 2
          %545 = sst [smem:[%s544]] 16
          %s546 = scalar_lea.smem [#allocation31], 3
          %547 = sst [smem:[%s546]] 256
          %s548 = scalar_lea.smem [#allocation31], 4
          %549 = sst [smem:[%s548]] 256
          %s550 = scalar_lea.smem [#allocation31], 5
          %551 = sst [smem:[%s550]] 16
          %553 = dma.general %s521, 32768, %s535, %s511, [#allocation30], [#allocation31], %s533, 0
        $region68: #{decoder_forward.1} parent=63 // pred_fallthru
          _
      $region64: #{decoder_forward.1} parent=5 // pred_fallthru
        _
      %p554 = scmp.le.s32.totalorder 1, %s32
      %p555 = scmp.lt.s32.totalorder %s32, 3
      %p556 = pnand %p554, %p555
      %p557 = pneg %p556
      // Predicated region
      $region69: #{decoder_forward.1} parent=5 // pred_check
        _
      $region70: #{decoder_forward.1} parent=5 // pred_check_branch
        %559 = sbr.rel (%p556) target = $region72
      $region71: #{decoder_forward.1} parent=5 // pred_region
        %s560 = ssub.s32 %s32, 1
        // Predicated region
        $region73: #{decoder_forward.1} parent=71 // pred_check
          %p561 = pneg %p74
        $region74: #{decoder_forward.1} parent=71 // pred_check_branch
          %563 = sbr.rel (%p561) target = $region76
        $region75: #{decoder_forward.1} parent=71 // pred_region
          %564 = dma.done [#allocation8], 128
        $region76: #{decoder_forward.1} parent=71 // pred_fallthru
          _
        %s565 = sand.u32 %s37, 1
        %s566 = scalar_lea.sflag [#allocation11], %s565
        %s567 = sand.u32 %s87, 1
        %s568 = smul.addr %s567, 2048
        %s569 = scalar_lea.vmem [#allocation10], %s568
        // Predicated region
        $region77: #{decoder_forward.1} parent=71 // pred_check
          %p570 = pneg %p100
        $region78: #{decoder_forward.1} parent=71 // pred_check_branch
          %572 = sbr.rel (%p570) target = $region80
        $region79: #{decoder_forward.1} parent=71 // pred_region
          %573 = dma.done %s566, 32768
        $region80: #{decoder_forward.1} parent=71 // pred_fallthru
          _
        // Predicated region
        $region81: #{decoder_forward.1} parent=71 // pred_check
          %p574 = pneg %p121
        $region82: #{decoder_forward.1} parent=71 // pred_check_branch
          %576 = sbr.rel (%p574) target = $region84
        $region83: #{decoder_forward.1} parent=71 // pred_region
          %577 = dma.done [#allocation11], 2048
        $region84: #{decoder_forward.1} parent=71 // pred_fallthru
          _
        // Predicated region
        $region85: #{decoder_forward.1} parent=71 // pred_check
          %p578 = pneg %p142
        $region86: #{decoder_forward.1} parent=71 // pred_check_branch
          %580 = sbr.rel (%p578) target = $region88
        $region87: #{decoder_forward.1} parent=71 // pred_region
          %581 = dma.done [#allocation14], 4096
        $region88: #{decoder_forward.1} parent=71 // pred_fallthru
          _
        // Predicated region
        $region89: #{decoder_forward.1} parent=71 // pred_check
          %p582 = pneg %p163
        $region90: #{decoder_forward.1} parent=71 // pred_check_branch
          %584 = sbr.rel (%p582) target = $region92
        $region91: #{decoder_forward.1} parent=71 // pred_region
          %585 = dma.done [#allocation14], 16
        $region92: #{decoder_forward.1} parent=71 // pred_fallthru
          _
        // Predicated region
        $region93: #{decoder_forward.1} parent=71 // pred_check
          %p586 = pneg %p184
        $region94: #{decoder_forward.1} parent=71 // pred_check_branch
          %588 = sbr.rel (%p586) target = $region96
        $region95: #{decoder_forward.1} parent=71 // pred_region
          %589 = dma.done [#allocation17], 16
        $region96: #{decoder_forward.1} parent=71 // pred_fallthru
          _
        // Predicated region
        $region97: #{decoder_forward.1} parent=71 // pred_check
          %p590 = pneg %p205
        $region98: #{decoder_forward.1} parent=71 // pred_check_branch
          %592 = sbr.rel (%p590) target = $region100
        $region99: #{decoder_forward.1} parent=71 // pred_region
          %593 = dma.done [#allocation17], 1536
        $region100: #{decoder_forward.1} parent=71 // pred_fallthru
          _
        // Predicated region
        $region101: #{decoder_forward.1} parent=71 // pred_check
          %p594 = pneg %p226
        $region102: #{decoder_forward.1} parent=71 // pred_check_branch
          %596 = sbr.rel (%p594) target = $region104
        $region103: #{decoder_forward.1} parent=71 // pred_region
          %597 = dma.done [#allocation20], 12288
        $region104: #{decoder_forward.1} parent=71 // pred_fallthru
          _
        // Predicated region
        $region105: #{decoder_forward.1} parent=71 // pred_check
          %p598 = pneg %p247
        $region106: #{decoder_forward.1} parent=71 // pred_check_branch
          %600 = sbr.rel (%p598) target = $region108
        $region107: #{decoder_forward.1} parent=71 // pred_region
          %601 = dma.done [#allocation20], 48
        $region108: #{decoder_forward.1} parent=71 // pred_fallthru
          _
        // Predicated region
        $region109: #{decoder_forward.1} parent=71 // pred_check
          %p602 = pneg %p268
        $region110: #{decoder_forward.1} parent=71 // pred_check_branch
          %604 = sbr.rel (%p602) target = $region112
        $region111: #{decoder_forward.1} parent=71 // pred_region
          %605 = dma.done [#allocation23], 4096
        $region112: #{decoder_forward.1} parent=71 // pred_fallthru
          _
        // Predicated region
        $region113: #{decoder_forward.1} parent=71 // pred_check
          %p606 = pneg %p289
        $region114: #{decoder_forward.1} parent=71 // pred_check_branch
          %608 = sbr.rel (%p606) target = $region116
        $region115: #{decoder_forward.1} parent=71 // pred_region
          %609 = dma.done [#allocation23], 8192
        $region116: #{decoder_forward.1} parent=71 // pred_fallthru
          _
        // Predicated region
        $region117: #{decoder_forward.1} parent=71 // pred_check
          %p610 = pneg %p310
        $region118: #{decoder_forward.1} parent=71 // pred_check_branch
          %612 = sbr.rel (%p610) target = $region120
        $region119: #{decoder_forward.1} parent=71 // pred_region
          %613 = dma.done [#allocation26], 32
        $region120: #{decoder_forward.1} parent=71 // pred_fallthru
          _
        %p614 = pneg %p53
        %p615 = pneg %p50
        %p616 = pneg %p74
        %p617 = pneg %p71
        %s618 = sand.u32 %s37, 1
        %s619 = scalar_lea.sflag [#allocation11], %s618
        %s620 = sand.u32 %s87, 1
        %s621 = smul.addr %s620, 2048
        %s622 = scalar_lea.vmem [#allocation10], %s621
        %p623 = pneg %p100
        %p624 = pneg %p97
        %p625 = pneg %p121
        %p626 = pneg %p118
        %p627 = pneg %p142
        %p628 = pneg %p139
        %p629 = pneg %p163
        %p630 = pneg %p160
        %p631 = pneg %p184
        %p632 = pneg %p181
        %p633 = pneg %p205
        %p634 = pneg %p202
        %p635 = pneg %p226
        %p636 = pneg %p223
        %p637 = pneg %p247
        %p638 = pneg %p244
        %p639 = pneg %p268
        %p640 = pneg %p265
        %p641 = pneg %p289
        %p642 = pneg %p286
        %p643 = pneg %p310
        %p644 = pneg %p307
        %p645 = pneg %p331
        %p646 = pneg %p328
        %p647 = pneg %p352
        %p648 = pneg %p349
        %s649 = smul.u32 16, %s37
        %p650 = scmp.eq.s32.totalorder %s37, 0
        // Predicated region
        $region121: #{decoder_forward.1} parent=71 // pred_check
          %p651 = pneg %p650
        $region122: #{decoder_forward.1} parent=71 // pred_check_branch
          %653 = sbr.rel (%p651) target = $region124
        $region123: #{decoder_forward.1} parent=71 // pred_region
          %v654 = vld [vmem:[#allocation7] sm:$0xff]
          %v655 = vld [vmem:[#allocation12] sm:$0xff]
          %v656 = vld [vmem:[#allocation12 + $0x8] sm:$0xff]
          %v657 = vld [vmem:[#allocation12 + $0x10] sm:$0xff]
          %v658 = vld [vmem:[#allocation12 + $0x18] sm:$0xff]
          %v659 = vld [vmem:[#allocation12 + $0x20] sm:$0xff]
          %v660 = vld [vmem:[#allocation12 + $0x28] sm:$0xff]
          %v661 = vld [vmem:[#allocation12 + $0x30] sm:$0xff]
          %v662 = vld [vmem:[#allocation12 + $0x38] sm:$0xff]
          %v663 = vld [vmem:[#allocation12 + $0x40] sm:$0xff]
          %v664 = vld [vmem:[#allocation12 + $0x48] sm:$0xff]
          %v665 = vld [vmem:[#allocation12 + $0x50] sm:$0xff]
          %v666 = vld [vmem:[#allocation12 + $0x58] sm:$0xff]
          %v667 = vld [vmem:[#allocation12 + $0x60] sm:$0xff]
          %v668 = vld [vmem:[#allocation12 + $0x68] sm:$0xff]
          %v669 = vld [vmem:[#allocation12 + $0x70] sm:$0xff]
          %v670 = vld [vmem:[#allocation12 + $0x78] sm:$0xff]
          %v671 = vld [vmem:[#allocation15] sm:$0x1]
          %v673 = vlaneseq
          %v674 = vshrl.u32 %v673, 7
          %v675 = vsub.s32 0, %v674
          %v676 = vrot.slane %v671, %v675
          %678 = vmatprep.subr.mxu0 0.0
          %679 = vmatpush1.msra.mxu0 %v655
          %680 = vmatprep.subr.mxu0 0.0
          %681 = vmatpush1.msra.mxu0 %v656
          %682 = vmatprep.subr.mxu0 0.0
          %683 = vmatpush1.msra.mxu0 %v657
          %684 = vmatprep.subr.mxu0 0.0
          %685 = vmatpush1.msra.mxu0 %v658
          %686 = vmatprep.subr.mxu0 0.0
          %687 = vmatpush1.msra.mxu0 %v659
          %688 = vmatprep.subr.mxu0 0.0
          %689 = vmatpush1.msra.mxu0 %v660
          %690 = vmatprep.subr.mxu0 0.0
          %691 = vmatpush1.msra.mxu0 %v661
          %692 = vmatprep.subr.mxu0 0.0
          %693 = vmatpush1.msra.mxu0 %v662
          %694 = vmatprep.subr.mxu0 0.0
          %695 = vmatpush1.msra.mxu0 %v663
          %696 = vmatprep.subr.mxu0 0.0
          %697 = vmatpush1.msra.mxu0 %v664
          %698 = vmatprep.subr.mxu0 0.0
          %699 = vmatpush1.msra.mxu0 %v665
          %700 = vmatprep.subr.mxu0 0.0
          %701 = vmatpush1.msra.mxu0 %v666
          %702 = vmatprep.subr.mxu0 0.0
          %703 = vmatpush1.msra.mxu0 %v667
          %704 = vmatprep.subr.mxu0 0.0
          %705 = vmatpush1.msra.mxu0 %v668
          %706 = vmatprep.subr.mxu0 0.0
          %707 = vmatpush1.msra.mxu0 %v669
          %708 = vmatprep.subr.mxu0 0.0
          %709 = vmatpush1.msra.mxu0 %v670
          %710 = vmatprep.subr.mxu0 0.0
          %711 = vmatpush1.msra.mxu0 0.0
          %712 = vmatprep.subr.mxu0 0.0
          %713 = vmatpush1.msra.mxu0 0.0
          %714 = vmatprep.subr.mxu0 0.0
          %715 = vmatpush1.msra.mxu0 0.0
          %716 = vmatprep.subr.mxu0 0.0
          %717 = vmatpush1.msra.mxu0 0.0
          %718 = vmatprep.subr.mxu0 0.0
          %719 = vmatpush1.msra.mxu0 0.0
          %720 = vmatprep.subr.mxu0 0.0
          %721 = vmatpush1.msra.mxu0 0.0
          %722 = vmatprep.subr.mxu0 0.0
          %723 = vmatpush1.msra.mxu0 0.0
          %724 = vmatprep.subr.mxu0 0.0
          %725 = vmatpush1.msra.mxu0 0.0
          %726 = vmatprep.subr.mxu0 0.0
          %727 = vmatpush1.msra.mxu0 0.0
          %728 = vmatprep.subr.mxu0 0.0
          %729 = vmatpush1.msra.mxu0 0.0
          %730 = vmatprep.subr.mxu0 0.0
          %731 = vmatpush1.msra.mxu0 0.0
          %732 = vmatprep.subr.mxu0 0.0
          %733 = vmatpush1.msra.mxu0 0.0
          %734 = vmatprep.subr.mxu0 0.0
          %735 = vmatpush1.msra.mxu0 0.0
          %736 = vmatprep.subr.mxu0 0.0
          %737 = vmatpush1.msra.mxu0 0.0
          %738 = vmatprep.subr.mxu0 0.0
          %739 = vmatpush1.msra.mxu0 0.0
          %740 = vmatprep.subr.mxu0 0.0
          %741 = vmatpush1.msra.mxu0 0.0
          %742 = vmatprep.mubr.f32.mxu0 0.0
          %743 = vmatmul.mubr.f32.gmra.mrb[0].mxu0 %v654
          %v744 = vpop.f32.mrb[0].mxu0
          %v745 = vadd.f32 %v676, %v744
          %v746 = vpop.f32.mrb[0].mxu0
          %747 = vdwg.mxu0
          %748 = vst [vmem:[#allocation2] sm:$0xff] %v745
          %v749 = vld [vmem:[%s0] sm:$0xff]
          %v750 = vld [vmem:[#allocation18] sm:$0xff]
          %v751 = vld [vmem:[#allocation18 + $0x8] sm:$0xff]
          %v752 = vld [vmem:[#allocation18 + $0x10] sm:$0xff]
          %v753 = vld [vmem:[#allocation18 + $0x18] sm:$0xff]
          %v754 = vld [vmem:[#allocation18 + $0x20] sm:$0xff]
          %v755 = vld [vmem:[#allocation18 + $0x28] sm:$0xff]
          %v756 = vld [vmem:[#allocation18 + $0x30] sm:$0xff]
          %v757 = vld [vmem:[#allocation18 + $0x38] sm:$0xff]
          %v758 = vld [vmem:[#allocation18 + $0x40] sm:$0xff]
          %v759 = vld [vmem:[#allocation18 + $0x48] sm:$0xff]
          %v760 = vld [vmem:[#allocation18 + $0x50] sm:$0xff]
          %v761 = vld [vmem:[#allocation18 + $0x58] sm:$0xff]
          %v762 = vld [vmem:[#allocation21] sm:$0x7]
          %v764 = vlaneseq
          %v765 = vshrl.u32 %v764, 7
          %v766 = vsub.s32 0, %v765
          %v767 = vrot.slane %v762, %v766
          %v768 = vlaneseq
          %v769 = vshrl.u32 %v768, 7
          %v770 = vsub.s32 1, %v769
          %v771 = vrot.slane %v762, %v770
          %v772 = vlaneseq
          %v773 = vshrl.u32 %v772, 7
          %v774 = vsub.s32 2, %v773
          %v775 = vrot.slane %v762, %v774
          %vm779 = vcmask 261120
          %v781 = vsel %vm779, %v749, 0
          %783 = vmatprep.subr.mxu0 %v751
          %784 = vmatpush1.msra.mxu0 %v750
          %785 = vmatprep.subr.mxu0 %v754
          %786 = vmatpush1.msra.mxu0 %v753
          %787 = vmatprep.subr.mxu0 %v757
          %788 = vmatpush1.msra.mxu0 %v756
          %789 = vmatprep.subr.mxu0 %v760
          %790 = vmatpush1.msra.mxu0 %v759
          %791 = vmatprep.subr.mxu0 0.0
          %792 = vmatpush1.msra.mxu0 0.0
          %793 = vmatprep.subr.mxu0 0.0
          %794 = vmatpush1.msra.mxu0 0.0
          %795 = vmatprep.subr.mxu0 0.0
          %796 = vmatpush1.msra.mxu0 0.0
          %797 = vmatprep.subr.mxu0 0.0
          %798 = vmatpush1.msra.mxu0 0.0
          %799 = vmatprep.subr.mxu0 0.0
          %800 = vmatpush1.msra.mxu0 0.0
          %801 = vmatprep.subr.mxu0 0.0
          %802 = vmatpush1.msra.mxu0 0.0
          %803 = vmatprep.subr.mxu0 0.0
          %804 = vmatpush1.msra.mxu0 0.0
          %805 = vmatprep.subr.mxu0 0.0
          %806 = vmatpush1.msra.mxu0 0.0
          %807 = vmatprep.subr.mxu0 0.0
          %808 = vmatpush1.msra.mxu0 0.0
          %809 = vmatprep.subr.mxu0 0.0
          %810 = vmatpush1.msra.mxu0 0.0
          %811 = vmatprep.subr.mxu0 0.0
          %812 = vmatpush1.msra.mxu0 0.0
          %813 = vmatprep.subr.mxu0 0.0
          %814 = vmatpush1.msra.mxu0 0.0
          %815 = vmatprep.subr.mxu0 0.0
          %816 = vmatpush1.msra.mxu0 0.0
          %817 = vmatprep.subr.mxu0 0.0
          %818 = vmatpush1.msra.mxu0 0.0
          %819 = vmatprep.subr.mxu0 0.0
          %820 = vmatpush1.msra.mxu0 0.0
          %821 = vmatprep.subr.mxu0 0.0
          %822 = vmatpush1.msra.mxu0 0.0
          %823 = vmatprep.subr.mxu0 0.0
          %824 = vmatpush1.msra.mxu0 0.0
          %825 = vmatprep.subr.mxu0 0.0
          %826 = vmatpush1.msra.mxu0 0.0
          %827 = vmatprep.subr.mxu0 0.0
          %828 = vmatpush1.msra.mxu0 0.0
          %829 = vmatprep.subr.mxu0 0.0
          %830 = vmatpush1.msra.mxu0 0.0
          %831 = vmatprep.subr.mxu0 0.0
          %832 = vmatpush1.msra.mxu0 0.0
          %833 = vmatprep.subr.mxu0 0.0
          %834 = vmatpush1.msra.mxu0 0.0
          %835 = vmatprep.subr.mxu0 0.0
          %836 = vmatpush1.msra.mxu0 0.0
          %837 = vmatprep.subr.mxu0 0.0
          %838 = vmatpush1.msra.mxu0 0.0
          %839 = vmatprep.subr.mxu0 0.0
          %840 = vmatpush1.msra.mxu0 0.0
          %841 = vmatprep.subr.mxu0 0.0
          %842 = vmatpush1.msra.mxu0 0.0
          %843 = vmatprep.subr.mxu0 0.0
          %844 = vmatpush1.msra.mxu0 0.0
          %845 = vmatprep.subr.mxu0 0.0
          %846 = vmatpush1.msra.mxu0 0.0
          %847 = vmatprep.mubr.f32.mxu0 0.0
          %848 = vmatmul.mubr.f32.gmra.mrb[0].mxu0 %v781
          %v849 = vpop.f32.mrb[0].mxu0
          %v850 = vadd.f32 %v767, %v849
          %v851 = vpop.f32.mrb[0].mxu0
          %v852 = vadd.f32 %v771, %v851
          %853 = vdwg.mxu0
          %854 = vmatprep.subr.mxu0 0.0
          %855 = vmatpush1.msra.mxu0 %v752
          %856 = vmatprep.subr.mxu0 0.0
          %857 = vmatpush1.msra.mxu0 %v755
          %858 = vmatprep.subr.mxu0 0.0
          %859 = vmatpush1.msra.mxu0 %v758
          %860 = vmatprep.subr.mxu0 0.0
          %861 = vmatpush1.msra.mxu0 %v761
          %862 = vmatprep.subr.mxu0 0.0
          %863 = vmatpush1.msra.mxu0 0.0
          %864 = vmatprep.subr.mxu0 0.0
          %865 = vmatpush1.msra.mxu0 0.0
          %866 = vmatprep.subr.mxu0 0.0
          %867 = vmatpush1.msra.mxu0 0.0
          %868 = vmatprep.subr.mxu0 0.0
          %869 = vmatpush1.msra.mxu0 0.0
          %870 = vmatprep.subr.mxu0 0.0
          %871 = vmatpush1.msra.mxu0 0.0
          %872 = vmatprep.subr.mxu0 0.0
          %873 = vmatpush1.msra.mxu0 0.0
          %874 = vmatprep.subr.mxu0 0.0
          %875 = vmatpush1.msra.mxu0 0.0
          %876 = vmatprep.subr.mxu0 0.0
          %877 = vmatpush1.msra.mxu0 0.0
          %878 = vmatprep.subr.mxu0 0.0
          %879 = vmatpush1.msra.mxu0 0.0
          %880 = vmatprep.subr.mxu0 0.0
          %881 = vmatpush1.msra.mxu0 0.0
          %882 = vmatprep.subr.mxu0 0.0
          %883 = vmatpush1.msra.mxu0 0.0
          %884 = vmatprep.subr.mxu0 0.0
          %885 = vmatpush1.msra.mxu0 0.0
          %886 = vmatprep.subr.mxu0 0.0
          %887 = vmatpush1.msra.mxu0 0.0
          %888 = vmatprep.subr.mxu0 0.0
          %889 = vmatpush1.msra.mxu0 0.0
          %890 = vmatprep.subr.mxu0 0.0
          %891 = vmatpush1.msra.mxu0 0.0
          %892 = vmatprep.subr.mxu0 0.0
          %893 = vmatpush1.msra.mxu0 0.0
          %894 = vmatprep.subr.mxu0 0.0
          %895 = vmatpush1.msra.mxu0 0.0
          %896 = vmatprep.subr.mxu0 0.0
          %897 = vmatpush1.msra.mxu0 0.0
          %898 = vmatprep.subr.mxu0 0.0
          %899 = vmatpush1.msra.mxu0 0.0
          %900 = vmatprep.subr.mxu0 0.0
          %901 = vmatpush1.msra.mxu0 0.0
          %902 = vmatprep.subr.mxu0 0.0
          %903 = vmatpush1.msra.mxu0 0.0
          %904 = vmatprep.subr.mxu0 0.0
          %905 = vmatpush1.msra.mxu0 0.0
          %906 = vmatprep.subr.mxu0 0.0
          %907 = vmatpush1.msra.mxu0 0.0
          %908 = vmatprep.subr.mxu0 0.0
          %909 = vmatpush1.msra.mxu0 0.0
          %910 = vmatprep.subr.mxu0 0.0
          %911 = vmatpush1.msra.mxu0 0.0
          %912 = vmatprep.subr.mxu0 0.0
          %913 = vmatpush1.msra.mxu0 0.0
          %914 = vmatprep.subr.mxu0 0.0
          %915 = vmatpush1.msra.mxu0 0.0
          %916 = vmatprep.subr.mxu0 0.0
          %917 = vmatpush1.msra.mxu0 0.0
          %918 = vmatprep.mubr.f32.mxu0 0.0
          %919 = vmatmul.mubr.f32.gmra.mrb[0].mxu0 %v781
          %v920 = vpop.f32.mrb[0].mxu0
          %v921 = vadd.f32 %v775, %v920
          %v922 = vpop.f32.mrb[0].mxu0
          %923 = vdwg.mxu0
          %924 = vst [vmem:[#allocation6] sm:$0xff] %v850
          %925 = vst [vmem:[#allocation6 + $0x8] sm:$0xff] %v852
          %926 = vst [vmem:[#allocation6 + $0x10] sm:$0xff] %v921
          %vm927 = vcmask 7168
          %928 = vst.msk [vmem:[#allocation3] sm:$0xff] %vm927, -inf
          %929 = vst.msk [vmem:[#allocation4] sm:$0xff] %vm927, 0.0
          %930 = vst [vmem:[#allocation5] sm:$0xff] 0.0
          %931 = vst [vmem:[#allocation5 + $0x8] sm:$0xff] 0.0
        $region124: #{decoder_forward.1} parent=71 // pred_fallthru
          _
        %v932 = vld [vmem:[%s569] sm:$0xff]
        %v933 = vld [vmem:[%s569 + $0x8] sm:$0xff]
        %v934 = vld [vmem:[%s569 + $0x10] sm:$0xff]
        %v935 = vld [vmem:[%s569 + $0x18] sm:$0xff]
        %v936 = vld [vmem:[%s569 + $0x20] sm:$0xff]
        %v937 = vld [vmem:[%s569 + $0x28] sm:$0xff]
        %v938 = vld [vmem:[%s569 + $0x30] sm:$0xff]
        %v939 = vld [vmem:[%s569 + $0x38] sm:$0xff]
        %v940 = vld [vmem:[%s569 + $0x40] sm:$0xff]
        %v941 = vld [vmem:[%s569 + $0x48] sm:$0xff]
        %v942 = vld [vmem:[%s569 + $0x50] sm:$0xff]
        %v943 = vld [vmem:[%s569 + $0x58] sm:$0xff]
        %v944 = vld [vmem:[%s569 + $0x60] sm:$0xff]
        %v945 = vld [vmem:[%s569 + $0x68] sm:$0xff]
        %v946 = vld [vmem:[%s569 + $0x70] sm:$0xff]
        %v947 = vld [vmem:[%s569 + $0x78] sm:$0xff]
        %v948 = vld [vmem:[%s569 + $0x80] sm:$0xff]
        %v949 = vld [vmem:[%s569 + $0x88] sm:$0xff]
        %v950 = vld [vmem:[%s569 + $0x90] sm:$0xff]
        %v951 = vld [vmem:[%s569 + $0x98] sm:$0xff]
        %v952 = vld [vmem:[%s569 + $0xa0] sm:$0xff]
        %v953 = vld [vmem:[%s569 + $0xa8] sm:$0xff]
        %v954 = vld [vmem:[%s569 + $0xb0] sm:$0xff]
        %v955 = vld [vmem:[%s569 + $0xb8] sm:$0xff]
        %v956 = vld [vmem:[%s569 + $0xc0] sm:$0xff]
        %v957 = vld [vmem:[%s569 + $0xc8] sm:$0xff]
        %v958 = vld [vmem:[%s569 + $0xd0] sm:$0xff]
        %v959 = vld [vmem:[%s569 + $0xd8] sm:$0xff]
        %v960 = vld [vmem:[%s569 + $0xe0] sm:$0xff]
        %v961 = vld [vmem:[%s569 + $0xe8] sm:$0xff]
        %v962 = vld [vmem:[%s569 + $0xf0] sm:$0xff]
        %v963 = vld [vmem:[%s569 + $0xf8] sm:$0xff]
        %v964 = vld [vmem:[%s569 + $0x100] sm:$0xff]
        %v965 = vld [vmem:[%s569 + $0x108] sm:$0xff]
        %v966 = vld [vmem:[%s569 + $0x110] sm:$0xff]
        %v967 = vld [vmem:[%s569 + $0x118] sm:$0xff]
        %v968 = vld [vmem:[%s569 + $0x120] sm:$0xff]
        %v969 = vld [vmem:[%s569 + $0x128] sm:$0xff]
        %v970 = vld [vmem:[%s569 + $0x130] sm:$0xff]
        %v971 = vld [vmem:[%s569 + $0x138] sm:$0xff]
        %v972 = vld [vmem:[%s569 + $0x140] sm:$0xff]
        %v973 = vld [vmem:[%s569 + $0x148] sm:$0xff]
        %v974 = vld [vmem:[%s569 + $0x150] sm:$0xff]
        %v975 = vld [vmem:[%s569 + $0x158] sm:$0xff]
        %v976 = vld [vmem:[%s569 + $0x160] sm:$0xff]
        %v977 = vld [vmem:[%s569 + $0x168] sm:$0xff]
        %v978 = vld [vmem:[%s569 + $0x170] sm:$0xff]
        %v979 = vld [vmem:[%s569 + $0x178] sm:$0xff]
        %v980 = vld [vmem:[%s569 + $0x180] sm:$0xff]
        %v981 = vld [vmem:[%s569 + $0x188] sm:$0xff]
        %v982 = vld [vmem:[%s569 + $0x190] sm:$0xff]
        %v983 = vld [vmem:[%s569 + $0x198] sm:$0xff]
        %v984 = vld [vmem:[%s569 + $0x1a0] sm:$0xff]
        %v985 = vld [vmem:[%s569 + $0x1a8] sm:$0xff]
        %v986 = vld [vmem:[%s569 + $0x1b0] sm:$0xff]
        %v987 = vld [vmem:[%s569 + $0x1b8] sm:$0xff]
        %v988 = vld [vmem:[%s569 + $0x1c0] sm:$0xff]
        %v989 = vld [vmem:[%s569 + $0x1c8] sm:$0xff]
        %v990 = vld [vmem:[%s569 + $0x1d0] sm:$0xff]
        %v991 = vld [vmem:[%s569 + $0x1d8] sm:$0xff]
        %v992 = vld [vmem:[%s569 + $0x1e0] sm:$0xff]
        %v993 = vld [vmem:[%s569 + $0x1e8] sm:$0xff]
        %v994 = vld [vmem:[%s569 + $0x1f0] sm:$0xff]
        %v995 = vld [vmem:[%s569 + $0x1f8] sm:$0xff]
        %v996 = vld [vmem:[%s569 + $0x200] sm:$0xff]
        %v997 = vld [vmem:[%s569 + $0x208] sm:$0xff]
        %v998 = vld [vmem:[%s569 + $0x210] sm:$0xff]
        %v999 = vld [vmem:[%s569 + $0x218] sm:$0xff]
        %v1000 = vld [vmem:[%s569 + $0x220] sm:$0xff]
        %v1001 = vld [vmem:[%s569 + $0x228] sm:$0xff]
        %v1002 = vld [vmem:[%s569 + $0x230] sm:$0xff]
        %v1003 = vld [vmem:[%s569 + $0x238] sm:$0xff]
        %v1004 = vld [vmem:[%s569 + $0x240] sm:$0xff]
        %v1005 = vld [vmem:[%s569 + $0x248] sm:$0xff]
        %v1006 = vld [vmem:[%s569 + $0x250] sm:$0xff]
        %v1007 = vld [vmem:[%s569 + $0x258] sm:$0xff]
        %v1008 = vld [vmem:[%s569 + $0x260] sm:$0xff]
        %v1009 = vld [vmem:[%s569 + $0x268] sm:$0xff]
        %v1010 = vld [vmem:[%s569 + $0x270] sm:$0xff]
        %v1011 = vld [vmem:[%s569 + $0x278] sm:$0xff]
        %v1012 = vld [vmem:[%s569 + $0x280] sm:$0xff]
        %v1013 = vld [vmem:[%s569 + $0x288] sm:$0xff]
        %v1014 = vld [vmem:[%s569 + $0x290] sm:$0xff]
        %v1015 = vld [vmem:[%s569 + $0x298] sm:$0xff]
        %v1016 = vld [vmem:[%s569 + $0x2a0] sm:$0xff]
        %v1017 = vld [vmem:[%s569 + $0x2a8] sm:$0xff]
        %v1018 = vld [vmem:[%s569 + $0x2b0] sm:$0xff]
        %v1019 = vld [vmem:[%s569 + $0x2b8] sm:$0xff]
        %v1020 = vld [vmem:[%s569 + $0x2c0] sm:$0xff]
        %v1021 = vld [vmem:[%s569 + $0x2c8] sm:$0xff]
        %v1022 = vld [vmem:[%s569 + $0x2d0] sm:$0xff]
        %v1023 = vld [vmem:[%s569 + $0x2d8] sm:$0xff]
        %v1024 = vld [vmem:[%s569 + $0x2e0] sm:$0xff]
        %v1025 = vld [vmem:[%s569 + $0x2e8] sm:$0xff]
        %v1026 = vld [vmem:[%s569 + $0x2f0] sm:$0xff]
        %v1027 = vld [vmem:[%s569 + $0x2f8] sm:$0xff]
        %v1028 = vld [vmem:[%s569 + $0x300] sm:$0xff]
        %v1029 = vld [vmem:[%s569 + $0x308] sm:$0xff]
        %v1030 = vld [vmem:[%s569 + $0x310] sm:$0xff]
        %v1031 = vld [vmem:[%s569 + $0x318] sm:$0xff]
        %v1032 = vld [vmem:[%s569 + $0x320] sm:$0xff]
        %v1033 = vld [vmem:[%s569 + $0x328] sm:$0xff]
        %v1034 = vld [vmem:[%s569 + $0x330] sm:$0xff]
        %v1035 = vld [vmem:[%s569 + $0x338] sm:$0xff]
        %v1036 = vld [vmem:[%s569 + $0x340] sm:$0xff]
        %v1037 = vld [vmem:[%s569 + $0x348] sm:$0xff]
        %v1038 = vld [vmem:[%s569 + $0x350] sm:$0xff]
        %v1039 = vld [vmem:[%s569 + $0x358] sm:$0xff]
        %v1040 = vld [vmem:[%s569 + $0x360] sm:$0xff]
        %v1041 = vld [vmem:[%s569 + $0x368] sm:$0xff]
        %v1042 = vld [vmem:[%s569 + $0x370] sm:$0xff]
        %v1043 = vld [vmem:[%s569 + $0x378] sm:$0xff]
        %v1044 = vld [vmem:[%s569 + $0x380] sm:$0xff]
        %v1045 = vld [vmem:[%s569 + $0x388] sm:$0xff]
        %v1046 = vld [vmem:[%s569 + $0x390] sm:$0xff]
        %v1047 = vld [vmem:[%s569 + $0x398] sm:$0xff]
        %v1048 = vld [vmem:[%s569 + $0x3a0] sm:$0xff]
        %v1049 = vld [vmem:[%s569 + $0x3a8] sm:$0xff]
        %v1050 = vld [vmem:[%s569 + $0x3b0] sm:$0xff]
        %v1051 = vld [vmem:[%s569 + $0x3b8] sm:$0xff]
        %v1052 = vld [vmem:[%s569 + $0x3c0] sm:$0xff]
        %v1053 = vld [vmem:[%s569 + $0x3c8] sm:$0xff]
        %v1054 = vld [vmem:[%s569 + $0x3d0] sm:$0xff]
        %v1055 = vld [vmem:[%s569 + $0x3d8] sm:$0xff]
        %v1056 = vld [vmem:[%s569 + $0x3e0] sm:$0xff]
        %v1057 = vld [vmem:[%s569 + $0x3e8] sm:$0xff]
        %v1058 = vld [vmem:[%s569 + $0x3f0] sm:$0xff]
        %v1059 = vld [vmem:[%s569 + $0x3f8] sm:$0xff]
        %v1060 = vld [vmem:[%s569 + $0x400] sm:$0xff]
        %v1061 = vld [vmem:[%s569 + $0x408] sm:$0xff]
        %v1062 = vld [vmem:[%s569 + $0x410] sm:$0xff]
        %v1063 = vld [vmem:[%s569 + $0x418] sm:$0xff]
        %v1064 = vld [vmem:[%s569 + $0x420] sm:$0xff]
        %v1065 = vld [vmem:[%s569 + $0x428] sm:$0xff]
        %v1066 = vld [vmem:[%s569 + $0x430] sm:$0xff]
        %v1067 = vld [vmem:[%s569 + $0x438] sm:$0xff]
        %v1068 = vld [vmem:[%s569 + $0x440] sm:$0xff]
        %v1069 = vld [vmem:[%s569 + $0x448] sm:$0xff]
        %v1070 = vld [vmem:[%s569 + $0x450] sm:$0xff]
        %v1071 = vld [vmem:[%s569 + $0x458] sm:$0xff]
        %v1072 = vld [vmem:[%s569 + $0x460] sm:$0xff]
        %v1073 = vld [vmem:[%s569 + $0x468] sm:$0xff]
        %v1074 = vld [vmem:[%s569 + $0x470] sm:$0xff]
        %v1075 = vld [vmem:[%s569 + $0x478] sm:$0xff]
        %v1076 = vld [vmem:[%s569 + $0x480] sm:$0xff]
        %v1077 = vld [vmem:[%s569 + $0x488] sm:$0xff]
        %v1078 = vld [vmem:[%s569 + $0x490] sm:$0xff]
        %v1079 = vld [vmem:[%s569 + $0x498] sm:$0xff]
        %v1080 = vld [vmem:[%s569 + $0x4a0] sm:$0xff]
        %v1081 = vld [vmem:[%s569 + $0x4a8] sm:$0xff]
        %v1082 = vld [vmem:[%s569 + $0x4b0] sm:$0xff]
        %v1083 = vld [vmem:[%s569 + $0x4b8] sm:$0xff]
        %v1084 = vld [vmem:[%s569 + $0x4c0] sm:$0xff]
        %v1085 = vld [vmem:[%s569 + $0x4c8] sm:$0xff]
        %v1086 = vld [vmem:[%s569 + $0x4d0] sm:$0xff]
        %v1087 = vld [vmem:[%s569 + $0x4d8] sm:$0xff]
        %v1088 = vld [vmem:[%s569 + $0x4e0] sm:$0xff]
        %v1089 = vld [vmem:[%s569 + $0x4e8] sm:$0xff]
        %v1090 = vld [vmem:[%s569 + $0x4f0] sm:$0xff]
        %v1091 = vld [vmem:[%s569 + $0x4f8] sm:$0xff]
        %v1092 = vld [vmem:[%s569 + $0x500] sm:$0xff]
        %v1093 = vld [vmem:[%s569 + $0x508] sm:$0xff]
        %v1094 = vld [vmem:[%s569 + $0x510] sm:$0xff]
        %v1095 = vld [vmem:[%s569 + $0x518] sm:$0xff]
        %v1096 = vld [vmem:[%s569 + $0x520] sm:$0xff]
        %v1097 = vld [vmem:[%s569 + $0x528] sm:$0xff]
        %v1098 = vld [vmem:[%s569 + $0x530] sm:$0xff]
        %v1099 = vld [vmem:[%s569 + $0x538] sm:$0xff]
        %v1100 = vld [vmem:[%s569 + $0x540] sm:$0xff]
        %v1101 = vld [vmem:[%s569 + $0x548] sm:$0xff]
        %v1102 = vld [vmem:[%s569 + $0x550] sm:$0xff]
        %v1103 = vld [vmem:[%s569 + $0x558] sm:$0xff]
        %v1104 = vld [vmem:[%s569 + $0x560] sm:$0xff]
        %v1105 = vld [vmem:[%s569 + $0x568] sm:$0xff]
        %v1106 = vld [vmem:[%s569 + $0x570] sm:$0xff]
        %v1107 = vld [vmem:[%s569 + $0x578] sm:$0xff]
        %v1108 = vld [vmem:[%s569 + $0x580] sm:$0xff]
        %v1109 = vld [vmem:[%s569 + $0x588] sm:$0xff]
        %v1110 = vld [vmem:[%s569 + $0x590] sm:$0xff]
        %v1111 = vld [vmem:[%s569 + $0x598] sm:$0xff]
        %v1112 = vld [vmem:[%s569 + $0x5a0] sm:$0xff]
        %v1113 = vld [vmem:[%s569 + $0x5a8] sm:$0xff]
        %v1114 = vld [vmem:[%s569 + $0x5b0] sm:$0xff]
        %v1115 = vld [vmem:[%s569 + $0x5b8] sm:$0xff]
        %v1116 = vld [vmem:[%s569 + $0x5c0] sm:$0xff]
        %v1117 = vld [vmem:[%s569 + $0x5c8] sm:$0xff]
        %v1118 = vld [vmem:[%s569 + $0x5d0] sm:$0xff]
        %v1119 = vld [vmem:[%s569 + $0x5d8] sm:$0xff]
        %v1120 = vld [vmem:[%s569 + $0x5e0] sm:$0xff]
        %v1121 = vld [vmem:[%s569 + $0x5e8] sm:$0xff]
        %v1122 = vld [vmem:[%s569 + $0x5f0] sm:$0xff]
        %v1123 = vld [vmem:[%s569 + $0x5f8] sm:$0xff]
        %v1124 = vld [vmem:[%s569 + $0x600] sm:$0xff]
        %v1125 = vld [vmem:[%s569 + $0x608] sm:$0xff]
        %v1126 = vld [vmem:[%s569 + $0x610] sm:$0xff]
        %v1127 = vld [vmem:[%s569 + $0x618] sm:$0xff]
        %v1128 = vld [vmem:[%s569 + $0x620] sm:$0xff]
        %v1129 = vld [vmem:[%s569 + $0x628] sm:$0xff]
        %v1130 = vld [vmem:[%s569 + $0x630] sm:$0xff]
        %v1131 = vld [vmem:[%s569 + $0x638] sm:$0xff]
        %v1132 = vld [vmem:[%s569 + $0x640] sm:$0xff]
        %v1133 = vld [vmem:[%s569 + $0x648] sm:$0xff]
        %v1134 = vld [vmem:[%s569 + $0x650] sm:$0xff]
        %v1135 = vld [vmem:[%s569 + $0x658] sm:$0xff]
        %v1136 = vld [vmem:[%s569 + $0x660] sm:$0xff]
        %v1137 = vld [vmem:[%s569 + $0x668] sm:$0xff]
        %v1138 = vld [vmem:[%s569 + $0x670] sm:$0xff]
        %v1139 = vld [vmem:[%s569 + $0x678] sm:$0xff]
        %v1140 = vld [vmem:[%s569 + $0x680] sm:$0xff]
        %v1141 = vld [vmem:[%s569 + $0x688] sm:$0xff]
        %v1142 = vld [vmem:[%s569 + $0x690] sm:$0xff]
        %v1143 = vld [vmem:[%s569 + $0x698] sm:$0xff]
        %v1144 = vld [vmem:[%s569 + $0x6a0] sm:$0xff]
        %v1145 = vld [vmem:[%s569 + $0x6a8] sm:$0xff]
        %v1146 = vld [vmem:[%s569 + $0x6b0] sm:$0xff]
        %v1147 = vld [vmem:[%s569 + $0x6b8] sm:$0xff]
        %v1148 = vld [vmem:[%s569 + $0x6c0] sm:$0xff]
        %v1149 = vld [vmem:[%s569 + $0x6c8] sm:$0xff]
        %v1150 = vld [vmem:[%s569 + $0x6d0] sm:$0xff]
        %v1151 = vld [vmem:[%s569 + $0x6d8] sm:$0xff]
        %v1152 = vld [vmem:[%s569 + $0x6e0] sm:$0xff]
        %v1153 = vld [vmem:[%s569 + $0x6e8] sm:$0xff]
        %v1154 = vld [vmem:[%s569 + $0x6f0] sm:$0xff]
        %v1155 = vld [vmem:[%s569 + $0x6f8] sm:$0xff]
        %v1156 = vld [vmem:[%s569 + $0x700] sm:$0xff]
        %v1157 = vld [vmem:[%s569 + $0x708] sm:$0xff]
        %v1158 = vld [vmem:[%s569 + $0x710] sm:$0xff]
        %v1159 = vld [vmem:[%s569 + $0x718] sm:$0xff]
        %v1160 = vld [vmem:[%s569 + $0x720] sm:$0xff]
        %v1161 = vld [vmem:[%s569 + $0x728] sm:$0xff]
        %v1162 = vld [vmem:[%s569 + $0x730] sm:$0xff]
        %v1163 = vld [vmem:[%s569 + $0x738] sm:$0xff]
        %v1164 = vld [vmem:[%s569 + $0x740] sm:$0xff]
        %v1165 = vld [vmem:[%s569 + $0x748] sm:$0xff]
        %v1166 = vld [vmem:[%s569 + $0x750] sm:$0xff]
        %v1167 = vld [vmem:[%s569 + $0x758] sm:$0xff]
        %v1168 = vld [vmem:[%s569 + $0x760] sm:$0xff]
        %v1169 = vld [vmem:[%s569 + $0x768] sm:$0xff]
        %v1170 = vld [vmem:[%s569 + $0x770] sm:$0xff]
        %v1171 = vld [vmem:[%s569 + $0x778] sm:$0xff]
        %v1172 = vld [vmem:[%s569 + $0x780] sm:$0xff]
        %v1173 = vld [vmem:[%s569 + $0x788] sm:$0xff]
        %v1174 = vld [vmem:[%s569 + $0x790] sm:$0xff]
        %v1175 = vld [vmem:[%s569 + $0x798] sm:$0xff]
        %v1176 = vld [vmem:[%s569 + $0x7a0] sm:$0xff]
        %v1177 = vld [vmem:[%s569 + $0x7a8] sm:$0xff]
        %v1178 = vld [vmem:[%s569 + $0x7b0] sm:$0xff]
        %v1179 = vld [vmem:[%s569 + $0x7b8] sm:$0xff]
        %v1180 = vld [vmem:[%s569 + $0x7c0] sm:$0xff]
        %v1181 = vld [vmem:[%s569 + $0x7c8] sm:$0xff]
        %v1182 = vld [vmem:[%s569 + $0x7d0] sm:$0xff]
        %v1183 = vld [vmem:[%s569 + $0x7d8] sm:$0xff]
        %v1184 = vld [vmem:[%s569 + $0x7e0] sm:$0xff]
        %v1185 = vld [vmem:[%s569 + $0x7e8] sm:$0xff]
        %v1186 = vld [vmem:[%s569 + $0x7f0] sm:$0xff]
        %v1187 = vld [vmem:[%s569 + $0x7f8] sm:$0xff]
        %v1188 = vld [vmem:[#allocation13] sm:$0xff]
        %v1189 = vld [vmem:[#allocation13 + $0x8] sm:$0xff]
        %v1190 = vld [vmem:[#allocation13 + $0x10] sm:$0xff]
        %v1191 = vld [vmem:[#allocation13 + $0x18] sm:$0xff]
        %v1192 = vld [vmem:[#allocation13 + $0x20] sm:$0xff]
        %v1193 = vld [vmem:[#allocation13 + $0x28] sm:$0xff]
        %v1194 = vld [vmem:[#allocation13 + $0x30] sm:$0xff]
        %v1195 = vld [vmem:[#allocation13 + $0x38] sm:$0xff]
        %v1196 = vld [vmem:[#allocation13 + $0x40] sm:$0xff]
        %v1197 = vld [vmem:[#allocation13 + $0x48] sm:$0xff]
        %v1198 = vld [vmem:[#allocation13 + $0x50] sm:$0xff]
        %v1199 = vld [vmem:[#allocation13 + $0x58] sm:$0xff]
        %v1200 = vld [vmem:[#allocation13 + $0x60] sm:$0xff]
        %v1201 = vld [vmem:[#allocation13 + $0x68] sm:$0xff]
        %v1202 = vld [vmem:[#allocation13 + $0x70] sm:$0xff]
        %v1203 = vld [vmem:[#allocation13 + $0x78] sm:$0xff]
        %v1204 = vld [vmem:[#allocation13 + $0x80] sm:$0xff]
        %v1205 = vld [vmem:[#allocation13 + $0x88] sm:$0xff]
        %v1206 = vld [vmem:[#allocation13 + $0x90] sm:$0xff]
        %v1207 = vld [vmem:[#allocation13 + $0x98] sm:$0xff]
        %v1208 = vld [vmem:[#allocation13 + $0xa0] sm:$0xff]
        %v1209 = vld [vmem:[#allocation13 + $0xa8] sm:$0xff]
        %v1210 = vld [vmem:[#allocation13 + $0xb0] sm:$0xff]
        %v1211 = vld [vmem:[#allocation13 + $0xb8] sm:$0xff]
        %v1212 = vld [vmem:[#allocation13 + $0xc0] sm:$0xff]
        %v1213 = vld [vmem:[#allocation13 + $0xc8] sm:$0xff]
        %v1214 = vld [vmem:[#allocation13 + $0xd0] sm:$0xff]
        %v1215 = vld [vmem:[#allocation13 + $0xd8] sm:$0xff]
        %v1216 = vld [vmem:[#allocation13 + $0xe0] sm:$0xff]
        %v1217 = vld [vmem:[#allocation13 + $0xe8] sm:$0xff]
        %v1218 = vld [vmem:[#allocation13 + $0xf0] sm:$0xff]
        %v1219 = vld [vmem:[#allocation13 + $0xf8] sm:$0xff]
        %1220 = vmatprep.subr.mxu0 0.0
        %1221 = vmatpush1.msra.mxu0 %v1188
        %1222 = vmatprep.subr.mxu0 0.0
        %1223 = vmatpush1.msra.mxu0 %v1189
        %1224 = vmatprep.subr.mxu0 0.0
        %1225 = vmatpush1.msra.mxu0 %v1190
        %1226 = vmatprep.subr.mxu0 0.0
        %1227 = vmatpush1.msra.mxu0 %v1191
        %1228 = vmatprep.subr.mxu0 0.0
        %1229 = vmatpush1.msra.mxu0 %v1192
        %1230 = vmatprep.subr.mxu0 0.0
        %1231 = vmatpush1.msra.mxu0 %v1193
        %1232 = vmatprep.subr.mxu0 0.0
        %1233 = vmatpush1.msra.mxu0 %v1194
        %1234 = vmatprep.subr.mxu0 0.0
        %1235 = vmatpush1.msra.mxu0 %v1195
        %1236 = vmatprep.subr.mxu0 0.0
        %1237 = vmatpush1.msra.mxu0 %v1196
        %1238 = vmatprep.subr.mxu0 0.0
        %1239 = vmatpush1.msra.mxu0 %v1197
        %1240 = vmatprep.subr.mxu0 0.0
        %1241 = vmatpush1.msra.mxu0 %v1198
        %1242 = vmatprep.subr.mxu0 0.0
        %1243 = vmatpush1.msra.mxu0 %v1199
        %1244 = vmatprep.subr.mxu0 0.0
        %1245 = vmatpush1.msra.mxu0 %v1200
        %1246 = vmatprep.subr.mxu0 0.0
        %1247 = vmatpush1.msra.mxu0 %v1201
        %1248 = vmatprep.subr.mxu0 0.0
        %1249 = vmatpush1.msra.mxu0 %v1202
        %1250 = vmatprep.subr.mxu0 0.0
        %1251 = vmatpush1.msra.mxu0 %v1203
        %1252 = vmatprep.subr.mxu0 0.0
        %1253 = vmatpush1.msra.mxu0 %v1204
        %1254 = vmatprep.subr.mxu0 0.0
        %1255 = vmatpush1.msra.mxu0 %v1205
        %1256 = vmatprep.subr.mxu0 0.0
        %1257 = vmatpush1.msra.mxu0 %v1206
        %1258 = vmatprep.subr.mxu0 0.0
        %1259 = vmatpush1.msra.mxu0 %v1207
        %1260 = vmatprep.subr.mxu0 0.0
        %1261 = vmatpush1.msra.mxu0 %v1208
        %1262 = vmatprep.subr.mxu0 0.0
        %1263 = vmatpush1.msra.mxu0 %v1209
        %1264 = vmatprep.subr.mxu0 0.0
        %1265 = vmatpush1.msra.mxu0 %v1210
        %1266 = vmatprep.subr.mxu0 0.0
        %1267 = vmatpush1.msra.mxu0 %v1211
        %1268 = vmatprep.subr.mxu0 0.0
        %1269 = vmatpush1.msra.mxu0 %v1212
        %1270 = vmatprep.subr.mxu0 0.0
        %1271 = vmatpush1.msra.mxu0 %v1213
        %1272 = vmatprep.subr.mxu0 0.0
        %1273 = vmatpush1.msra.mxu0 %v1214
        %1274 = vmatprep.subr.mxu0 0.0
        %1275 = vmatpush1.msra.mxu0 %v1215
        %1276 = vmatprep.subr.mxu0 0.0
        %1277 = vmatpush1.msra.mxu0 %v1216
        %1278 = vmatprep.subr.mxu0 0.0
        %1279 = vmatpush1.msra.mxu0 %v1217
        %1280 = vmatprep.subr.mxu0 0.0
        %1281 = vmatpush1.msra.mxu0 %v1218
        %1282 = vmatprep.subr.mxu0 0.0
        %1283 = vmatpush1.msra.mxu0 %v1219
        %1284 = vmatprep.mubr.f32.mxu0 %v933
        %1285 = vmatmul.mubr.f32.gmra.mrb[0].mxu0 %v932
        %v1286 = vpop.f32.mrb[0].mxu0
        %v1287 = vadd.f32 0.0, %v1286
        %v1288 = vpop.f32.mrb[0].mxu0
        %1289 = vmatprep.mubr.f32.mxu0 %v935
        %1290 = vmatmul.mubr.f32.gmra.mrb[0].mxu0 %v934
        %v1291 = vpop.f32.mrb[0].mxu0
        %v1292 = vadd.f32 0.0, %v1291
        %v1293 = vpop.f32.mrb[0].mxu0
        %1294 = vmatprep.mubr.f32.mxu0 %v937
        %1295 = vmatmul.mubr.f32.gmra.mrb[0].mxu0 %v936
        %v1296 = vpop.f32.mrb[0].mxu0
        %v1297 = vadd.f32 0.0, %v1296
        %v1298 = vpop.f32.mrb[0].mxu0
        %1299 = vmatprep.mubr.f32.mxu0 %v939
        %1300 = vmatmul.mubr.f32.gmra.mrb[0].mxu0 %v938
        %v1301 = vpop.f32.mrb[0].mxu0
        %v1302 = vadd.f32 0.0, %v1301
        %v1303 = vpop.f32.mrb[0].mxu0
        %1304 = vmatprep.mubr.f32.mxu0 %v941
        %1305 = vmatmul.mubr.f32.gmra.mrb[0].mxu0 %v940
        %v1306 = vpop.f32.mrb[0].mxu0
        %v1307 = vadd.f32 0.0, %v1306
        %v1308 = vpop.f32.mrb[0].mxu0
        %1309 = vmatprep.mubr.f32.mxu0 %v943
        %1310 = vmatmul.mubr.f32.gmra.mrb[0].mxu0 %v942
        %v1311 = vpop.f32.mrb[0].mxu0
        %v1312 = vadd.f32 0.0, %v1311
        %v1313 = vpop.f32.mrb[0].mxu0
        %1314 = vmatprep.mubr.f32.mxu0 %v945
        %1315 = vmatmul.mubr.f32.gmra.mrb[0].mxu0 %v944
        %v1316 = vpop.f32.mrb[0].mxu0
        %v1317 = vadd.f32 0.0, %v1316
        %v1318 = vpop.f32.mrb[0].mxu0
        %1319 = vmatprep.mubr.f32.mxu0 %v947
        %1320 = vmatmul.mubr.f32.gmra.mrb[0].mxu0 %v946
        %v1321 = vpop.f32.mrb[0].mxu0
        %v1322 = vadd.f32 0.0, %v1321
        %v1323 = vpop.f32.mrb[0].mxu0
        %1324 = vmatprep.mubr.f32.mxu0 %v949
        %1325 = vmatmul.mubr.f32.gmra.mrb[0].mxu0 %v948
        %v1326 = vpop.f32.mrb[0].mxu0
        %v1327 = vadd.f32 0.0, %v1326
        %v1328 = vpop.f32.mrb[0].mxu0
        %1329 = vmatprep.mubr.f32.mxu0 %v951
        %1330 = vmatmul.mubr.f32.gmra.mrb[0].mxu0 %v950
        %v1331 = vpop.f32.mrb[0].mxu0
        %v1332 = vadd.f32 0.0, %v1331
        %v1333 = vpop.f32.mrb[0].mxu0
        %1334 = vmatprep.mubr.f32.mxu0 %v953
        %1335 = vmatmul.mubr.f32.gmra.mrb[0].mxu0 %v952
        %v1336 = vpop.f32.mrb[0].mxu0
        %v1337 = vadd.f32 0.0, %v1336
        %v1338 = vpop.f32.mrb[0].mxu0
        %1339 = vmatprep.mubr.f32.mxu0 %v955
        %1340 = vmatmul.mubr.f32.gmra.mrb[0].mxu0 %v954
        %v1341 = vpop.f32.mrb[0].mxu0
        %v1342 = vadd.f32 0.0, %v1341
        %v1343 = vpop.f32.mrb[0].mxu0
        %1344 = vmatprep.mubr.f32.mxu0 %v957
        %1345 = vmatmul.mubr.f32.gmra.mrb[0].mxu0 %v956
        %v1346 = vpop.f32.mrb[0].mxu0
        %v1347 = vadd.f32 0.0, %v1346
        %v1348 = vpop.f32.mrb[0].mxu0
        %1349 = vmatprep.mubr.f32.mxu0 %v959
        %1350 = vmatmul.mubr.f32.gmra.mrb[0].mxu0 %v958
        %v1351 = vpop.f32.mrb[0].mxu0
        %v1352 = vadd.f32 0.0, %v1351
        %v1353 = vpop.f32.mrb[0].mxu0
        %1354 = vmatprep.mubr.f32.mxu0 %v961
        %1355 = vmatmul.mubr.f32.gmra.mrb[0].mxu0 %v960
        %v1356 = vpop.f32.mrb[0].mxu0
        %v1357 = vadd.f32 0.0, %v1356
        %v1358 = vpop.f32.mrb[0].mxu0
        %1359 = vmatprep.mubr.f32.mxu0 %v963
        %1360 = vmatmul.mubr.f32.gmra.mrb[0].mxu0 %v962
        %v1361 = vpop.f32.mrb[0].mxu0
        %v1362 = vadd.f32 0.0, %v1361
        %v1363 = vpop.f32.mrb[0].mxu0
        %1364 = vmatprep.mubr.f32.mxu0 %v965
        %1365 = vmatmul.mubr.f32.gmra.mrb[0].mxu0 %v964
        %v1366 = vpop.f32.mrb[0].mxu0
        %v1367 = vadd.f32 0.0, %v1366
        %v1368 = vpop.f32.mrb[0].mxu0
        %1369 = vmatprep.mubr.f32.mxu0 %v967
        %1370 = vmatmul.mubr.f32.gmra.mrb[0].mxu0 %v966
        %v1371 = vpop.f32.mrb[0].mxu0
        %v1372 = vadd.f32 0.0, %v1371
        %v1373 = vpop.f32.mrb[0].mxu0
        %1374 = vmatprep.mubr.f32.mxu0 %v969
        %1375 = vmatmul.mubr.f32.gmra.mrb[0].mxu0 %v968
        %v1376 = vpop.f32.mrb[0].mxu0
        %v1377 = vadd.f32 0.0, %v1376
        %v1378 = vpop.f32.mrb[0].mxu0
        %1379 = vmatprep.mubr.f32.mxu0 %v971
        %1380 = vmatmul.mubr.f32.gmra.mrb[0].mxu0 %v970
        %v1381 = vpop.f32.mrb[0].mxu0
        %v1382 = vadd.f32 0.0, %v1381
        %v1383 = vpop.f32.mrb[0].mxu0
        %1384 = vmatprep.mubr.f32.mxu0 %v973
        %1385 = vmatmul.mubr.f32.gmra.mrb[0].mxu0 %v972
        %v1386 = vpop.f32.mrb[0].mxu0
        %v1387 = vadd.f32 0.0, %v1386
        %v1388 = vpop.f32.mrb[0].mxu0
        %1389 = vmatprep.mubr.f32.mxu0 %v975
        %1390 = vmatmul.mubr.f32.gmra.mrb[0].mxu0 %v974
        %v1391 = vpop.f32.mrb[0].mxu0
        %v1392 = vadd.f32 0.0, %v1391
        %v1393 = vpop.f32.mrb[0].mxu0
        %1394 = vmatprep.mubr.f32.mxu0 %v977
        %1395 = vmatmul.mubr.f32.gmra.mrb[0].mxu0 %v976
        %v1396 = vpop.f32.mrb[0].mxu0
        %v1397 = vadd.f32 0.0, %v1396
        %v1398 = vpop.f32.mrb[0].mxu0
        %1399 = vmatprep.mubr.f32.mxu0 %v979
        %1400 = vmatmul.mubr.f32.gmra.mrb[0].mxu0 %v978
        %v1401 = vpop.f32.mrb[0].mxu0
        %v1402 = vadd.f32 0.0, %v1401
        %v1403 = vpop.f32.mrb[0].mxu0
        %1404 = vmatprep.mubr.f32.mxu0 %v981
        %1405 = vmatmul.mubr.f32.gmra.mrb[0].mxu0 %v980
        %v1406 = vpop.f32.mrb[0].mxu0
        %v1407 = vadd.f32 0.0, %v1406
        %v1408 = vpop.f32.mrb[0].mxu0
        %1409 = vmatprep.mubr.f32.mxu0 %v983
        %1410 = vmatmul.mubr.f32.gmra.mrb[0].mxu0 %v982
        %v1411 = vpop.f32.mrb[0].mxu0
        %v1412 = vadd.f32 0.0, %v1411
        %v1413 = vpop.f32.mrb[0].mxu0
        %1414 = vmatprep.mubr.f32.mxu0 %v985
        %1415 = vmatmul.mubr.f32.gmra.mrb[0].mxu0 %v984
        %v1416 = vpop.f32.mrb[0].mxu0
        %v1417 = vadd.f32 0.0, %v1416
        %v1418 = vpop.f32.mrb[0].mxu0
        %1419 = vmatprep.mubr.f32.mxu0 %v987
        %1420 = vmatmul.mubr.f32.gmra.mrb[0].mxu0 %v986
        %v1421 = vpop.f32.mrb[0].mxu0
        %v1422 = vadd.f32 0.0, %v1421
        %v1423 = vpop.f32.mrb[0].mxu0
        %1424 = vmatprep.mubr.f32.mxu0 %v989
        %1425 = vmatmul.mubr.f32.gmra.mrb[0].mxu0 %v988
        %v1426 = vpop.f32.mrb[0].mxu0
        %v1427 = vadd.f32 0.0, %v1426
        %v1428 = vpop.f32.mrb[0].mxu0
        %1429 = vmatprep.mubr.f32.mxu0 %v991
        %1430 = vmatmul.mubr.f32.gmra.mrb[0].mxu0 %v990
        %v1431 = vpop.f32.mrb[0].mxu0
        %v1432 = vadd.f32 0.0, %v1431
        %v1433 = vpop.f32.mrb[0].mxu0
        %1434 = vmatprep.mubr.f32.mxu0 %v993
        %1435 = vmatmul.mubr.f32.gmra.mrb[0].mxu0 %v992
        %v1436 = vpop.f32.mrb[0].mxu0
        %v1437 = vadd.f32 0.0, %v1436
        %v1438 = vpop.f32.mrb[0].mxu0
        %1439 = vmatprep.mubr.f32.mxu0 %v995
        %1440 = vmatmul.mubr.f32.gmra.mrb[0].mxu0 %v994
        %v1441 = vpop.f32.mrb[0].mxu0
        %v1442 = vadd.f32 0.0, %v1441
        %v1443 = vpop.f32.mrb[0].mxu0
        %1444 = vmatprep.mubr.f32.mxu0 %v997
        %1445 = vmatmul.mubr.f32.gmra.mrb[0].mxu0 %v996
        %v1446 = vpop.f32.mrb[0].mxu0
        %v1447 = vadd.f32 0.0, %v1446
        %v1448 = vpop.f32.mrb[0].mxu0
        %1449 = vmatprep.mubr.f32.mxu0 %v999
        %1450 = vmatmul.mubr.f32.gmra.mrb[0].mxu0 %v998
        %v1451 = vpop.f32.mrb[0].mxu0
        %v1452 = vadd.f32 0.0, %v1451
        %v1453 = vpop.f32.mrb[0].mxu0
        %1454 = vmatprep.mubr.f32.mxu0 %v1001
        %1455 = vmatmul.mubr.f32.gmra.mrb[0].mxu0 %v1000
        %v1456 = vpop.f32.mrb[0].mxu0
        %v1457 = vadd.f32 0.0, %v1456
        %v1458 = vpop.f32.mrb[0].mxu0
        %1459 = vmatprep.mubr.f32.mxu0 %v1003
        %1460 = vmatmul.mubr.f32.gmra.mrb[0].mxu0 %v1002
        %v1461 = vpop.f32.mrb[0].mxu0
        %v1462 = vadd.f32 0.0, %v1461
        %v1463 = vpop.f32.mrb[0].mxu0
        %1464 = vmatprep.mubr.f32.mxu0 %v1005
        %1465 = vmatmul.mubr.f32.gmra.mrb[0].mxu0 %v1004
        %v1466 = vpop.f32.mrb[0].mxu0
        %v1467 = vadd.f32 0.0, %v1466
        %v1468 = vpop.f32.mrb[0].mxu0
        %1469 = vmatprep.mubr.f32.mxu0 %v1007
        %1470 = vmatmul.mubr.f32.gmra.mrb[0].mxu0 %v1006
        %v1471 = vpop.f32.mrb[0].mxu0
        %v1472 = vadd.f32 0.0, %v1471
        %v1473 = vpop.f32.mrb[0].mxu0
        %1474 = vmatprep.mubr.f32.mxu0 %v1009
        %1475 = vmatmul.mubr.f32.gmra.mrb[0].mxu0 %v1008
        %v1476 = vpop.f32.mrb[0].mxu0
        %v1477 = vadd.f32 0.0, %v1476
        %v1478 = vpop.f32.mrb[0].mxu0
        %1479 = vmatprep.mubr.f32.mxu0 %v1011
        %1480 = vmatmul.mubr.f32.gmra.mrb[0].mxu0 %v1010
        %v1481 = vpop.f32.mrb[0].mxu0
        %v1482 = vadd.f32 0.0, %v1481
        %v1483 = vpop.f32.mrb[0].mxu0
        %1484 = vmatprep.mubr.f32.mxu0 %v1013
        %1485 = vmatmul.mubr.f32.gmra.mrb[0].mxu0 %v1012
        %v1486 = vpop.f32.mrb[0].mxu0
        %v1487 = vadd.f32 0.0, %v1486
        %v1488 = vpop.f32.mrb[0].mxu0
        %1489 = vmatprep.mubr.f32.mxu0 %v1015
        %1490 = vmatmul.mubr.f32.gmra.mrb[0].mxu0 %v1014
        %v1491 = vpop.f32.mrb[0].mxu0
        %v1492 = vadd.f32 0.0, %v1491
        %v1493 = vpop.f32.mrb[0].mxu0
        %1494 = vmatprep.mubr.f32.mxu0 %v1017
        %1495 = vmatmul.mubr.f32.gmra.mrb[0].mxu0 %v1016
        %v1496 = vpop.f32.mrb[0].mxu0
        %v1497 = vadd.f32 0.0, %v1496
        %v1498 = vpop.f32.mrb[0].mxu0
        %1499 = vmatprep.mubr.f32.mxu0 %v1019
        %1500 = vmatmul.mubr.f32.gmra.mrb[0].mxu0 %v1018
        %v1501 = vpop.f32.mrb[0].mxu0
        %v1502 = vadd.f32 0.0, %v1501
        %v1503 = vpop.f32.mrb[0].mxu0
        %1504 = vmatprep.mubr.f32.mxu0 %v1021
        %1505 = vmatmul.mubr.f32.gmra.mrb[0].mxu0 %v1020
        %v1506 = vpop.f32.mrb[0].mxu0
        %v1507 = vadd.f32 0.0, %v1506
        %v1508 = vpop.f32.mrb[0].mxu0
        %1509 = vmatprep.mubr.f32.mxu0 %v1023
        %1510 = vmatmul.mubr.f32.gmra.mrb[0].mxu0 %v1022
        %v1511 = vpop.f32.mrb[0].mxu0
        %v1512 = vadd.f32 0.0, %v1511
        %v1513 = vpop.f32.mrb[0].mxu0
        %1514 = vmatprep.mubr.f32.mxu0 %v1025
        %1515 = vmatmul.mubr.f32.gmra.mrb[0].mxu0 %v1024
        %v1516 = vpop.f32.mrb[0].mxu0
        %v1517 = vadd.f32 0.0, %v1516
        %v1518 = vpop.f32.mrb[0].mxu0
        %1519 = vmatprep.mubr.f32.mxu0 %v1027
        %1520 = vmatmul.mubr.f32.gmra.mrb[0].mxu0 %v1026
        %v1521 = vpop.f32.mrb[0].mxu0
        %v1522 = vadd.f32 0.0, %v1521
        %v1523 = vpop.f32.mrb[0].mxu0
        %1524 = vmatprep.mubr.f32.mxu0 %v1029
        %1525 = vmatmul.mubr.f32.gmra.mrb[0].mxu0 %v1028
        %v1526 = vpop.f32.mrb[0].mxu0
        %v1527 = vadd.f32 0.0, %v1526
        %v1528 = vpop.f32.mrb[0].mxu0
        %1529 = vmatprep.mubr.f32.mxu0 %v1031
        %1530 = vmatmul.mubr.f32.gmra.mrb[0].mxu0 %v1030
        %v1531 = vpop.f32.mrb[0].mxu0
        %v1532 = vadd.f32 0.0, %v1531
        %v1533 = vpop.f32.mrb[0].mxu0
        %1534 = vmatprep.mubr.f32.mxu0 %v1033
        %1535 = vmatmul.mubr.f32.gmra.mrb[0].mxu0 %v1032
        %v1536 = vpop.f32.mrb[0].mxu0
        %v1537 = vadd.f32 0.0, %v1536
        %v1538 = vpop.f32.mrb[0].mxu0
        %1539 = vmatprep.mubr.f32.mxu0 %v1035
        %1540 = vmatmul.mubr.f32.gmra.mrb[0].mxu0 %v1034
        %v1541 = vpop.f32.mrb[0].mxu0
        %v1542 = vadd.f32 0.0, %v1541
        %v1543 = vpop.f32.mrb[0].mxu0
        %1544 = vmatprep.mubr.f32.mxu0 %v1037
        %1545 = vmatmul.mubr.f32.gmra.mrb[0].mxu0 %v1036
        %v1546 = vpop.f32.mrb[0].mxu0
        %v1547 = vadd.f32 0.0, %v1546
        %v1548 = vpop.f32.mrb[0].mxu0
        %1549 = vmatprep.mubr.f32.mxu0 %v1039
        %1550 = vmatmul.mubr.f32.gmra.mrb[0].mxu0 %v1038
        %v1551 = vpop.f32.mrb[0].mxu0
        %v1552 = vadd.f32 0.0, %v1551
        %v1553 = vpop.f32.mrb[0].mxu0
        %1554 = vmatprep.mubr.f32.mxu0 %v1041
        %1555 = vmatmul.mubr.f32.gmra.mrb[0].mxu0 %v1040
        %v1556 = vpop.f32.mrb[0].mxu0
        %v1557 = vadd.f32 0.0, %v1556
        %v1558 = vpop.f32.mrb[0].mxu0
        %1559 = vmatprep.mubr.f32.mxu0 %v1043
        %1560 = vmatmul.mubr.f32.gmra.mrb[0].mxu0 %v1042
        %v1561 = vpop.f32.mrb[0].mxu0
        %v1562 = vadd.f32 0.0, %v1561
        %v1563 = vpop.f32.mrb[0].mxu0
        %1564 = vmatprep.mubr.f32.mxu0 %v1045
        %1565 = vmatmul.mubr.f32.gmra.mrb[0].mxu0 %v1044
        %v1566 = vpop.f32.mrb[0].mxu0
        %v1567 = vadd.f32 0.0, %v1566
        %v1568 = vpop.f32.mrb[0].mxu0
        %1569 = vmatprep.mubr.f32.mxu0 %v1047
        %1570 = vmatmul.mubr.f32.gmra.mrb[0].mxu0 %v1046
        %v1571 = vpop.f32.mrb[0].mxu0
        %v1572 = vadd.f32 0.0, %v1571
        %v1573 = vpop.f32.mrb[0].mxu0
        %1574 = vmatprep.mubr.f32.mxu0 %v1049
        %1575 = vmatmul.mubr.f32.gmra.mrb[0].mxu0 %v1048
        %v1576 = vpop.f32.mrb[0].mxu0
        %v1577 = vadd.f32 0.0, %v1576
        %v1578 = vpop.f32.mrb[0].mxu0
        %1579 = vmatprep.mubr.f32.mxu0 %v1051
        %1580 = vmatmul.mubr.f32.gmra.mrb[0].mxu0 %v1050
        %v1581 = vpop.f32.mrb[0].mxu0
        %v1582 = vadd.f32 0.0, %v1581
        %v1583 = vpop.f32.mrb[0].mxu0
        %1584 = vmatprep.mubr.f32.mxu0 %v1053
        %1585 = vmatmul.mubr.f32.gmra.mrb[0].mxu0 %v1052
        %v1586 = vpop.f32.mrb[0].mxu0
        %v1587 = vadd.f32 0.0, %v1586
        %v1588 = vpop.f32.mrb[0].mxu0
        %1589 = vmatprep.mubr.f32.mxu0 %v1055
        %1590 = vmatmul.mubr.f32.gmra.mrb[0].mxu0 %v1054
        %v1591 = vpop.f32.mrb[0].mxu0
        %v1592 = vadd.f32 0.0, %v1591
        %v1593 = vpop.f32.mrb[0].mxu0
        %1594 = vmatprep.mubr.f32.mxu0 %v1057
        %1595 = vmatmul.mubr.f32.gmra.mrb[0].mxu0 %v1056
        %v1596 = vpop.f32.mrb[0].mxu0
        %v1597 = vadd.f32 0.0, %v1596
        %v1598 = vpop.f32.mrb[0].mxu0
        %1599 = vmatprep.mubr.f32.mxu0 %v1059
        %1600 = vmatmul.mubr.f32.gmra.mrb[0].mxu0 %v1058
        %v1601 = vpop.f32.mrb[0].mxu0
        %v1602 = vadd.f32 0.0, %v1601
        %v1603 = vpop.f32.mrb[0].mxu0
        %1604 = vmatprep.mubr.f32.mxu0 %v1061
        %1605 = vmatmul.mubr.f32.gmra.mrb[0].mxu0 %v1060
        %v1606 = vpop.f32.mrb[0].mxu0
        %v1607 = vadd.f32 0.0, %v1606
        %v1608 = vpop.f32.mrb[0].mxu0
        %1609 = vmatprep.mubr.f32.mxu0 %v1063
        %1610 = vmatmul.mubr.f32.gmra.mrb[0].mxu0 %v1062
        %v1611 = vpop.f32.mrb[0].mxu0
        %v1612 = vadd.f32 0.0, %v1611
        %v1613 = vpop.f32.mrb[0].mxu0
        %1614 = vmatprep.mubr.f32.mxu0 %v1065
        %1615 = vmatmul.mubr.f32.gmra.mrb[0].mxu0 %v1064
        %v1616 = vpop.f32.mrb[0].mxu0
        %v1617 = vadd.f32 0.0, %v1616
        %v1618 = vpop.f32.mrb[0].mxu0
        %1619 = vmatprep.mubr.f32.mxu0 %v1067
        %1620 = vmatmul.mubr.f32.gmra.mrb[0].mxu0 %v1066
        %v1621 = vpop.f32.mrb[0].mxu0
        %v1622 = vadd.f32 0.0, %v1621
        %v1623 = vpop.f32.mrb[0].mxu0
        %1624 = vmatprep.mubr.f32.mxu0 %v1069
        %1625 = vmatmul.mubr.f32.gmra.mrb[0].mxu0 %v1068
        %v1626 = vpop.f32.mrb[0].mxu0
        %v1627 = vadd.f32 0.0, %v1626
        %v1628 = vpop.f32.mrb[0].mxu0
        %1629 = vmatprep.mubr.f32.mxu0 %v1071
        %1630 = vmatmul.mubr.f32.gmra.mrb[0].mxu0 %v1070
        %v1631 = vpop.f32.mrb[0].mxu0
        %v1632 = vadd.f32 0.0, %v1631
        %v1633 = vpop.f32.mrb[0].mxu0
        %1634 = vmatprep.mubr.f32.mxu0 %v1073
        %1635 = vmatmul.mubr.f32.gmra.mrb[0].mxu0 %v1072
        %v1636 = vpop.f32.mrb[0].mxu0
        %v1637 = vadd.f32 0.0, %v1636
        %v1638 = vpop.f32.mrb[0].mxu0
        %1639 = vmatprep.mubr.f32.mxu0 %v1075
        %1640 = vmatmul.mubr.f32.gmra.mrb[0].mxu0 %v1074
        %v1641 = vpop.f32.mrb[0].mxu0
        %v1642 = vadd.f32 0.0, %v1641
        %v1643 = vpop.f32.mrb[0].mxu0
        %1644 = vmatprep.mubr.f32.mxu0 %v1077
        %1645 = vmatmul.mubr.f32.gmra.mrb[0].mxu0 %v1076
        %v1646 = vpop.f32.mrb[0].mxu0
        %v1647 = vadd.f32 0.0, %v1646
        %v1648 = vpop.f32.mrb[0].mxu0
        %1649 = vmatprep.mubr.f32.mxu0 %v1079
        %1650 = vmatmul.mubr.f32.gmra.mrb[0].mxu0 %v1078
        %v1651 = vpop.f32.mrb[0].mxu0
        %v1652 = vadd.f32 0.0, %v1651
        %v1653 = vpop.f32.mrb[0].mxu0
        %1654 = vmatprep.mubr.f32.mxu0 %v1081
        %1655 = vmatmul.mubr.f32.gmra.mrb[0].mxu0 %v1080
        %v1656 = vpop.f32.mrb[0].mxu0
        %v1657 = vadd.f32 0.0, %v1656
        %v1658 = vpop.f32.mrb[0].mxu0
        %1659 = vmatprep.mubr.f32.mxu0 %v1083
        %1660 = vmatmul.mubr.f32.gmra.mrb[0].mxu0 %v1082
        %v1661 = vpop.f32.mrb[0].mxu0
        %v1662 = vadd.f32 0.0, %v1661
        %v1663 = vpop.f32.mrb[0].mxu0
        %1664 = vmatprep.mubr.f32.mxu0 %v1085
        %1665 = vmatmul.mubr.f32.gmra.mrb[0].mxu0 %v1084
        %v1666 = vpop.f32.mrb[0].mxu0
        %v1667 = vadd.f32 0.0, %v1666
        %v1668 = vpop.f32.mrb[0].mxu0
        %1669 = vmatprep.mubr.f32.mxu0 %v1087
        %1670 = vmatmul.mubr.f32.gmra.mrb[0].mxu0 %v1086
        %v1671 = vpop.f32.mrb[0].mxu0
        %v1672 = vadd.f32 0.0, %v1671
        %v1673 = vpop.f32.mrb[0].mxu0
        %1674 = vmatprep.mubr.f32.mxu0 %v1089
        %1675 = vmatmul.mubr.f32.gmra.mrb[0].mxu0 %v1088
        %v1676 = vpop.f32.mrb[0].mxu0
        %v1677 = vadd.f32 0.0, %v1676
        %v1678 = vpop.f32.mrb[0].mxu0
        %1679 = vmatprep.mubr.f32.mxu0 %v1091
        %1680 = vmatmul.mubr.f32.gmra.mrb[0].mxu0 %v1090
        %v1681 = vpop.f32.mrb[0].mxu0
        %v1682 = vadd.f32 0.0, %v1681
        %v1683 = vpop.f32.mrb[0].mxu0
        %1684 = vmatprep.mubr.f32.mxu0 %v1093
        %1685 = vmatmul.mubr.f32.gmra.mrb[0].mxu0 %v1092
        %v1686 = vpop.f32.mrb[0].mxu0
        %v1687 = vadd.f32 0.0, %v1686
        %v1688 = vpop.f32.mrb[0].mxu0
        %1689 = vmatprep.mubr.f32.mxu0 %v1095
        %1690 = vmatmul.mubr.f32.gmra.mrb[0].mxu0 %v1094
        %v1691 = vpop.f32.mrb[0].mxu0
        %v1692 = vadd.f32 0.0, %v1691
        %v1693 = vpop.f32.mrb[0].mxu0
        %1694 = vmatprep.mubr.f32.mxu0 %v1097
        %1695 = vmatmul.mubr.f32.gmra.mrb[0].mxu0 %v1096
        %v1696 = vpop.f32.mrb[0].mxu0
        %v1697 = vadd.f32 0.0, %v1696
        %v1698 = vpop.f32.mrb[0].mxu0
        %1699 = vmatprep.mubr.f32.mxu0 %v1099
        %1700 = vmatmul.mubr.f32.gmra.mrb[0].mxu0 %v1098
        %v1701 = vpop.f32.mrb[0].mxu0
        %v1702 = vadd.f32 0.0, %v1701
        %v1703 = vpop.f32.mrb[0].mxu0
        %1704 = vmatprep.mubr.f32.mxu0 %v1101
        %1705 = vmatmul.mubr.f32.gmra.mrb[0].mxu0 %v1100
        %v1706 = vpop.f32.mrb[0].mxu0
        %v1707 = vadd.f32 0.0, %v1706
        %v1708 = vpop.f32.mrb[0].mxu0
        %1709 = vmatprep.mubr.f32.mxu0 %v1103
        %1710 = vmatmul.mubr.f32.gmra.mrb[0].mxu0 %v1102
        %v1711 = vpop.f32.mrb[0].mxu0
        %v1712 = vadd.f32 0.0, %v1711
        %v1713 = vpop.f32.mrb[0].mxu0
        %1714 = vmatprep.mubr.f32.mxu0 %v1105
        %1715 = vmatmul.mubr.f32.gmra.mrb[0].mxu0 %v1104
        %v1716 = vpop.f32.mrb[0].mxu0
        %v1717 = vadd.f32 0.0, %v1716
        %v1718 = vpop.f32.mrb[0].mxu0
        %1719 = vmatprep.mubr.f32.mxu0 %v1107
        %1720 = vmatmul.mubr.f32.gmra.mrb[0].mxu0 %v1106
        %v1721 = vpop.f32.mrb[0].mxu0
        %v1722 = vadd.f32 0.0, %v1721
        %v1723 = vpop.f32.mrb[0].mxu0
        %1724 = vmatprep.mubr.f32.mxu0 %v1109
        %1725 = vmatmul.mubr.f32.gmra.mrb[0].mxu0 %v1108
        %v1726 = vpop.f32.mrb[0].mxu0
        %v1727 = vadd.f32 0.0, %v1726
        %v1728 = vpop.f32.mrb[0].mxu0
        %1729 = vmatprep.mubr.f32.mxu0 %v1111
        %1730 = vmatmul.mubr.f32.gmra.mrb[0].mxu0 %v1110
        %v1731 = vpop.f32.mrb[0].mxu0
        %v1732 = vadd.f32 0.0, %v1731
        %v1733 = vpop.f32.mrb[0].mxu0
        %1734 = vmatprep.mubr.f32.mxu0 %v1113
        %1735 = vmatmul.mubr.f32.gmra.mrb[0].mxu0 %v1112
        %v1736 = vpop.f32.mrb[0].mxu0
        %v1737 = vadd.f32 0.0, %v1736
        %v1738 = vpop.f32.mrb[0].mxu0
        %1739 = vmatprep.mubr.f32.mxu0 %v1115
        %1740 = vmatmul.mubr.f32.gmra.mrb[0].mxu0 %v1114
        %v1741 = vpop.f32.mrb[0].mxu0
        %v1742 = vadd.f32 0.0, %v1741
        %v1743 = vpop.f32.mrb[0].mxu0
        %1744 = vmatprep.mubr.f32.mxu0 %v1117
        %1745 = vmatmul.mubr.f32.gmra.mrb[0].mxu0 %v1116
        %v1746 = vpop.f32.mrb[0].mxu0
        %v1747 = vadd.f32 0.0, %v1746
        %v1748 = vpop.f32.mrb[0].mxu0
        %1749 = vmatprep.mubr.f32.mxu0 %v1119
        %1750 = vmatmul.mubr.f32.gmra.mrb[0].mxu0 %v1118
        %v1751 = vpop.f32.mrb[0].mxu0
        %v1752 = vadd.f32 0.0, %v1751
        %v1753 = vpop.f32.mrb[0].mxu0
        %1754 = vmatprep.mubr.f32.mxu0 %v1121
        %1755 = vmatmul.mubr.f32.gmra.mrb[0].mxu0 %v1120
        %v1756 = vpop.f32.mrb[0].mxu0
        %v1757 = vadd.f32 0.0, %v1756
        %v1758 = vpop.f32.mrb[0].mxu0
        %1759 = vmatprep.mubr.f32.mxu0 %v1123
        %1760 = vmatmul.mubr.f32.gmra.mrb[0].mxu0 %v1122
        %v1761 = vpop.f32.mrb[0].mxu0
        %v1762 = vadd.f32 0.0, %v1761
        %v1763 = vpop.f32.mrb[0].mxu0
        %1764 = vmatprep.mubr.f32.mxu0 %v1125
        %1765 = vmatmul.mubr.f32.gmra.mrb[0].mxu0 %v1124
        %v1766 = vpop.f32.mrb[0].mxu0
        %v1767 = vadd.f32 0.0, %v1766
        %v1768 = vpop.f32.mrb[0].mxu0
        %1769 = vmatprep.mubr.f32.mxu0 %v1127
        %1770 = vmatmul.mubr.f32.gmra.mrb[0].mxu0 %v1126
        %v1771 = vpop.f32.mrb[0].mxu0
        %v1772 = vadd.f32 0.0, %v1771
        %v1773 = vpop.f32.mrb[0].mxu0
        %1774 = vmatprep.mubr.f32.mxu0 %v1129
        %1775 = vmatmul.mubr.f32.gmra.mrb[0].mxu0 %v1128
        %v1776 = vpop.f32.mrb[0].mxu0
        %v1777 = vadd.f32 0.0, %v1776
        %v1778 = vpop.f32.mrb[0].mxu0
        %1779 = vmatprep.mubr.f32.mxu0 %v1131
        %1780 = vmatmul.mubr.f32.gmra.mrb[0].mxu0 %v1130
        %v1781 = vpop.f32.mrb[0].mxu0
        %v1782 = vadd.f32 0.0, %v1781
        %v1783 = vpop.f32.mrb[0].mxu0
        %1784 = vmatprep.mubr.f32.mxu0 %v1133
        %1785 = vmatmul.mubr.f32.gmra.mrb[0].mxu0 %v1132
        %v1786 = vpop.f32.mrb[0].mxu0
        %v1787 = vadd.f32 0.0, %v1786
        %v1788 = vpop.f32.mrb[0].mxu0
        %1789 = vmatprep.mubr.f32.mxu0 %v1135
        %1790 = vmatmul.mubr.f32.gmra.mrb[0].mxu0 %v1134
        %v1791 = vpop.f32.mrb[0].mxu0
        %v1792 = vadd.f32 0.0, %v1791
        %v1793 = vpop.f32.mrb[0].mxu0
        %1794 = vmatprep.mubr.f32.mxu0 %v1137
        %1795 = vmatmul.mubr.f32.gmra.mrb[0].mxu0 %v1136
        %v1796 = vpop.f32.mrb[0].mxu0
        %v1797 = vadd.f32 0.0, %v1796
        %v1798 = vpop.f32.mrb[0].mxu0
        %1799 = vmatprep.mubr.f32.mxu0 %v1139
        %1800 = vmatmul.mubr.f32.gmra.mrb[0].mxu0 %v1138
        %v1801 = vpop.f32.mrb[0].mxu0
        %v1802 = vadd.f32 0.0, %v1801
        %v1803 = vpop.f32.mrb[0].mxu0
        %1804 = vmatprep.mubr.f32.mxu0 %v1141
        %1805 = vmatmul.mubr.f32.gmra.mrb[0].mxu0 %v1140
        %v1806 = vpop.f32.mrb[0].mxu0
        %v1807 = vadd.f32 0.0, %v1806
        %v1808 = vpop.f32.mrb[0].mxu0
        %1809 = vmatprep.mubr.f32.mxu0 %v1143
        %1810 = vmatmul.mubr.f32.gmra.mrb[0].mxu0 %v1142
        %v1811 = vpop.f32.mrb[0].mxu0
        %v1812 = vadd.f32 0.0, %v1811
        %v1813 = vpop.f32.mrb[0].mxu0
        %1814 = vmatprep.mubr.f32.mxu0 %v1145
        %1815 = vmatmul.mubr.f32.gmra.mrb[0].mxu0 %v1144
        %v1816 = vpop.f32.mrb[0].mxu0
        %v1817 = vadd.f32 0.0, %v1816
        %v1818 = vpop.f32.mrb[0].mxu0
        %1819 = vmatprep.mubr.f32.mxu0 %v1147
        %1820 = vmatmul.mubr.f32.gmra.mrb[0].mxu0 %v1146
        %v1821 = vpop.f32.mrb[0].mxu0
        %v1822 = vadd.f32 0.0, %v1821
        %v1823 = vpop.f32.mrb[0].mxu0
        %1824 = vmatprep.mubr.f32.mxu0 %v1149
        %1825 = vmatmul.mubr.f32.gmra.mrb[0].mxu0 %v1148
        %v1826 = vpop.f32.mrb[0].mxu0
        %v1827 = vadd.f32 0.0, %v1826
        %v1828 = vpop.f32.mrb[0].mxu0
        %1829 = vmatprep.mubr.f32.mxu0 %v1151
        %1830 = vmatmul.mubr.f32.gmra.mrb[0].mxu0 %v1150
        %v1831 = vpop.f32.mrb[0].mxu0
        %v1832 = vadd.f32 0.0, %v1831
        %v1833 = vpop.f32.mrb[0].mxu0
        %1834 = vmatprep.mubr.f32.mxu0 %v1153
        %1835 = vmatmul.mubr.f32.gmra.mrb[0].mxu0 %v1152
        %v1836 = vpop.f32.mrb[0].mxu0
        %v1837 = vadd.f32 0.0, %v1836
        %v1838 = vpop.f32.mrb[0].mxu0
        %1839 = vmatprep.mubr.f32.mxu0 %v1155
        %1840 = vmatmul.mubr.f32.gmra.mrb[0].mxu0 %v1154
        %v1841 = vpop.f32.mrb[0].mxu0
        %v1842 = vadd.f32 0.0, %v1841
        %v1843 = vpop.f32.mrb[0].mxu0
        %1844 = vmatprep.mubr.f32.mxu0 %v1157
        %1845 = vmatmul.mubr.f32.gmra.mrb[0].mxu0 %v1156
        %v1846 = vpop.f32.mrb[0].mxu0
        %v1847 = vadd.f32 0.0, %v1846
        %v1848 = vpop.f32.mrb[0].mxu0
        %1849 = vmatprep.mubr.f32.mxu0 %v1159
        %1850 = vmatmul.mubr.f32.gmra.mrb[0].mxu0 %v1158
        %v1851 = vpop.f32.mrb[0].mxu0
        %v1852 = vadd.f32 0.0, %v1851
        %v1853 = vpop.f32.mrb[0].mxu0
        %1854 = vmatprep.mubr.f32.mxu0 %v1161
        %1855 = vmatmul.mubr.f32.gmra.mrb[0].mxu0 %v1160
        %v1856 = vpop.f32.mrb[0].mxu0
        %v1857 = vadd.f32 0.0, %v1856
        %v1858 = vpop.f32.mrb[0].mxu0
        %1859 = vmatprep.mubr.f32.mxu0 %v1163
        %1860 = vmatmul.mubr.f32.gmra.mrb[0].mxu0 %v1162
        %v1861 = vpop.f32.mrb[0].mxu0
        %v1862 = vadd.f32 0.0, %v1861
        %v1863 = vpop.f32.mrb[0].mxu0
        %1864 = vmatprep.mubr.f32.mxu0 %v1165
        %1865 = vmatmul.mubr.f32.gmra.mrb[0].mxu0 %v1164
        %v1866 = vpop.f32.mrb[0].mxu0
        %v1867 = vadd.f32 0.0, %v1866
        %v1868 = vpop.f32.mrb[0].mxu0
        %1869 = vmatprep.mubr.f32.mxu0 %v1167
        %1870 = vmatmul.mubr.f32.gmra.mrb[0].mxu0 %v1166
        %v1871 = vpop.f32.mrb[0].mxu0
        %v1872 = vadd.f32 0.0, %v1871
        %v1873 = vpop.f32.mrb[0].mxu0
        %1874 = vmatprep.mubr.f32.mxu0 %v1169
        %1875 = vmatmul.mubr.f32.gmra.mrb[0].mxu0 %v1168
        %v1876 = vpop.f32.mrb[0].mxu0
        %v1877 = vadd.f32 0.0, %v1876
        %v1878 = vpop.f32.mrb[0].mxu0
        %1879 = vmatprep.mubr.f32.mxu0 %v1171
        %1880 = vmatmul.mubr.f32.gmra.mrb[0].mxu0 %v1170
        %v1881 = vpop.f32.mrb[0].mxu0
        %v1882 = vadd.f32 0.0, %v1881
        %v1883 = vpop.f32.mrb[0].mxu0
        %1884 = vmatprep.mubr.f32.mxu0 %v1173
        %1885 = vmatmul.mubr.f32.gmra.mrb[0].mxu0 %v1172
        %v1886 = vpop.f32.mrb[0].mxu0
        %v1887 = vadd.f32 0.0, %v1886
        %v1888 = vpop.f32.mrb[0].mxu0
        %1889 = vmatprep.mubr.f32.mxu0 %v1175
        %1890 = vmatmul.mubr.f32.gmra.mrb[0].mxu0 %v1174
        %v1891 = vpop.f32.mrb[0].mxu0
        %v1892 = vadd.f32 0.0, %v1891
        %v1893 = vpop.f32.mrb[0].mxu0
        %1894 = vmatprep.mubr.f32.mxu0 %v1177
        %1895 = vmatmul.mubr.f32.gmra.mrb[0].mxu0 %v1176
        %v1896 = vpop.f32.mrb[0].mxu0
        %v1897 = vadd.f32 0.0, %v1896
        %v1898 = vpop.f32.mrb[0].mxu0
        %1899 = vmatprep.mubr.f32.mxu0 %v1179
        %1900 = vmatmul.mubr.f32.gmra.mrb[0].mxu0 %v1178
        %v1901 = vpop.f32.mrb[0].mxu0
        %v1902 = vadd.f32 0.0, %v1901
        %v1903 = vpop.f32.mrb[0].mxu0
        %1904 = vmatprep.mubr.f32.mxu0 %v1181
        %1905 = vmatmul.mubr.f32.gmra.mrb[0].mxu0 %v1180
        %v1906 = vpop.f32.mrb[0].mxu0
        %v1907 = vadd.f32 0.0, %v1906
        %v1908 = vpop.f32.mrb[0].mxu0
        %1909 = vmatprep.mubr.f32.mxu0 %v1183
        %1910 = vmatmul.mubr.f32.gmra.mrb[0].mxu0 %v1182
        %v1911 = vpop.f32.mrb[0].mxu0
        %v1912 = vadd.f32 0.0, %v1911
        %v1913 = vpop.f32.mrb[0].mxu0
        %1914 = vmatprep.mubr.f32.mxu0 %v1185
        %1915 = vmatmul.mubr.f32.gmra.mrb[0].mxu0 %v1184
        %v1916 = vpop.f32.mrb[0].mxu0
        %v1917 = vadd.f32 0.0, %v1916
        %v1918 = vpop.f32.mrb[0].mxu0
        %1919 = vmatprep.mubr.f32.mxu0 %v1187
        %1920 = vmatmul.mubr.f32.gmra.mrb[0].mxu0 %v1186
        %v1921 = vpop.f32.mrb[0].mxu0
        %v1922 = vadd.f32 0.0, %v1921
        %v1923 = vpop.f32.mrb[0].mxu0
        %1924 = vdwg.mxu0
        %v1925 = vld [vmem:[#allocation2] sm:$0xff]
        %v1927 = vcombine.high %v1925, %v1925
        %v1929 = vunpack.c.l.s4 1966171168
        %v1930 = vunpack.c.0.s8 %v1929
        %v1931 = vlaneseq
        %v1932 = vshrl.u32 %v1931, 7
        %v1933 = vsub.s32 %v1930, %v1932
        %v1934 = vrot.slane %v1925, %v1933
        %v1936 = vunpack.c.l.s4 1966171168
        %v1937 = vunpack.c.0.s8 %v1936
        %v1938 = vlaneseq
        %v1939 = vshrl.u32 %v1938, 7
        %v1940 = vsub.s32 %v1937, %v1939
        %v1941 = vrot.slane %v1927, %v1940
        %v1942 = vcombine.high %v1934, %v1934
        %v1943 = vcombine.high %v1941, %v1941
        %v1945 = vunpack.c.l.s4 1966171168
        %v1946 = vunpack.c.0.s8 %v1945
        %v1947 = vlaneseq
        %v1948 = vshrl.u32 %v1947, 7
        %v1949 = vsub.s32 %v1946, %v1948
        %v1950 = vrot.slane %v1934, %v1949
        %v1952 = vunpack.c.l.s4 1966171168
        %v1953 = vunpack.c.0.s8 %v1952
        %v1954 = vlaneseq
        %v1955 = vshrl.u32 %v1954, 7
        %v1956 = vsub.s32 %v1953, %v1955
        %v1957 = vrot.slane %v1941, %v1956
        %v1959 = vunpack.c.l.s4 1966171168
        %v1960 = vunpack.c.0.s8 %v1959
        %v1961 = vlaneseq
        %v1962 = vshrl.u32 %v1961, 7
        %v1963 = vsub.s32 %v1960, %v1962
        %v1964 = vrot.slane %v1942, %v1963
        %v1966 = vunpack.c.l.s4 1966171168
        %v1967 = vunpack.c.0.s8 %v1966
        %v1968 = vlaneseq
        %v1969 = vshrl.u32 %v1968, 7
        %v1970 = vsub.s32 %v1967, %v1969
        %v1971 = vrot.slane %v1943, %v1970
        %v1972 = vcombine.high %v1950, %v1950
        %v1973 = vcombine.high %v1957, %v1957
        %v1974 = vcombine.high %v1964, %v1964
        %v1975 = vcombine.high %v1971, %v1971
        %v1976 = vlaneseq
        %v1977 = vshrl.u32 %v1976, 7
        %v1978 = vsub.s32 0, %v1977
        %v1979 = vrot.slane %v1950, %v1978
        %v1980 = vlaneseq
        %v1981 = vshrl.u32 %v1980, 7
        %v1982 = vsub.s32 0, %v1981
        %v1983 = vrot.slane %v1964, %v1982
        %v1984 = vlaneseq
        %v1985 = vshrl.u32 %v1984, 7
        %v1986 = vsub.s32 0, %v1985
        %v1987 = vrot.slane %v1972, %v1986
        %v1988 = vlaneseq
        %v1989 = vshrl.u32 %v1988, 7
        %v1990 = vsub.s32 0, %v1989
        %v1991 = vrot.slane %v1974, %v1990
        %v1992 = vlaneseq
        %v1993 = vshrl.u32 %v1992, 7
        %v1994 = vsub.s32 0, %v1993
        %v1995 = vrot.slane %v1957, %v1994
        %v1996 = vlaneseq
        %v1997 = vshrl.u32 %v1996, 7
        %v1998 = vsub.s32 0, %v1997
        %v1999 = vrot.slane %v1971, %v1998
        %v2000 = vlaneseq
        %v2001 = vshrl.u32 %v2000, 7
        %v2002 = vsub.s32 0, %v2001
        %v2003 = vrot.slane %v1973, %v2002
        %v2004 = vlaneseq
        %v2005 = vshrl.u32 %v2004, 7
        %v2006 = vsub.s32 0, %v2005
        %v2007 = vrot.slane %v1975, %v2006
        %v2016 = vadd.f32 %v1287, %v1979
        %v2017 = vadd.f32 %v1292, %v1979
        %v2018 = vadd.f32 %v1297, %v1979
        %v2019 = vadd.f32 %v1302, %v1979
        %v2020 = vadd.f32 %v1307, %v1979
        %v2021 = vadd.f32 %v1312, %v1979
        %v2022 = vadd.f32 %v1317, %v1979
        %v2023 = vadd.f32 %v1322, %v1979
        %v2024 = vadd.f32 %v1327, %v1979
        %v2025 = vadd.f32 %v1332, %v1979
        %v2026 = vadd.f32 %v1337, %v1979
        %v2027 = vadd.f32 %v1342, %v1979
        %v2028 = vadd.f32 %v1347, %v1979
        %v2029 = vadd.f32 %v1352, %v1979
        %v2030 = vadd.f32 %v1357, %v1979
        %v2031 = vadd.f32 %v1362, %v1979
        %v2032 = vadd.f32 %v1367, %v1983
        %v2033 = vadd.f32 %v1372, %v1983
        %v2034 = vadd.f32 %v1377, %v1983
        %v2035 = vadd.f32 %v1382, %v1983
        %v2036 = vadd.f32 %v1387, %v1983
        %v2037 = vadd.f32 %v1392, %v1983
        %v2038 = vadd.f32 %v1397, %v1983
        %v2039 = vadd.f32 %v1402, %v1983
        %v2040 = vadd.f32 %v1407, %v1983
        %v2041 = vadd.f32 %v1412, %v1983
        %v2042 = vadd.f32 %v1417, %v1983
        %v2043 = vadd.f32 %v1422, %v1983
        %v2044 = vadd.f32 %v1427, %v1983
        %v2045 = vadd.f32 %v1432, %v1983
        %v2046 = vadd.f32 %v1437, %v1983
        %v2047 = vadd.f32 %v1442, %v1983
        %v2048 = vadd.f32 %v1447, %v1987
        %v2049 = vadd.f32 %v1452, %v1987
        %v2050 = vadd.f32 %v1457, %v1987
        %v2051 = vadd.f32 %v1462, %v1987
        %v2052 = vadd.f32 %v1467, %v1987
        %v2053 = vadd.f32 %v1472, %v1987
        %v2054 = vadd.f32 %v1477, %v1987
        %v2055 = vadd.f32 %v1482, %v1987
        %v2056 = vadd.f32 %v1487, %v1987
        %v2057 = vadd.f32 %v1492, %v1987
        %v2058 = vadd.f32 %v1497, %v1987
        %v2059 = vadd.f32 %v1502, %v1987
        %v2060 = vadd.f32 %v1507, %v1987
        %v2061 = vadd.f32 %v1512, %v1987
        %v2062 = vadd.f32 %v1517, %v1987
        %v2063 = vadd.f32 %v1522, %v1987
        %v2064 = vadd.f32 %v1527, %v1991
        %v2065 = vadd.f32 %v1532, %v1991
        %v2066 = vadd.f32 %v1537, %v1991
        %v2067 = vadd.f32 %v1542, %v1991
        %v2068 = vadd.f32 %v1547, %v1991
        %v2069 = vadd.f32 %v1552, %v1991
        %v2070 = vadd.f32 %v1557, %v1991
        %v2071 = vadd.f32 %v1562, %v1991
        %v2072 = vadd.f32 %v1567, %v1991
        %v2073 = vadd.f32 %v1572, %v1991
        %v2074 = vadd.f32 %v1577, %v1991
        %v2075 = vadd.f32 %v1582, %v1991
        %v2076 = vadd.f32 %v1587, %v1991
        %v2077 = vadd.f32 %v1592, %v1991
        %v2078 = vadd.f32 %v1597, %v1991
        %v2079 = vadd.f32 %v1602, %v1991
        %v2080 = vadd.f32 %v1607, %v1995
        %v2081 = vadd.f32 %v1612, %v1995
        %v2082 = vadd.f32 %v1617, %v1995
        %v2083 = vadd.f32 %v1622, %v1995
        %v2084 = vadd.f32 %v1627, %v1995
        %v2085 = vadd.f32 %v1632, %v1995
        %v2086 = vadd.f32 %v1637, %v1995
        %v2087 = vadd.f32 %v1642, %v1995
        %v2088 = vadd.f32 %v1647, %v1995
        %v2089 = vadd.f32 %v1652, %v1995
        %v2090 = vadd.f32 %v1657, %v1995
        %v2091 = vadd.f32 %v1662, %v1995
        %v2092 = vadd.f32 %v1667, %v1995
        %v2093 = vadd.f32 %v1672, %v1995
        %v2094 = vadd.f32 %v1677, %v1995
        %v2095 = vadd.f32 %v1682, %v1995
        %v2096 = vadd.f32 %v1687, %v1999
        %v2097 = vadd.f32 %v1692, %v1999
        %v2098 = vadd.f32 %v1697, %v1999
        %v2099 = vadd.f32 %v1702, %v1999
        %v2100 = vadd.f32 %v1707, %v1999
        %v2101 = vadd.f32 %v1712, %v1999
        %v2102 = vadd.f32 %v1717, %v1999
        %v2103 = vadd.f32 %v1722, %v1999
        %v2104 = vadd.f32 %v1727, %v1999
        %v2105 = vadd.f32 %v1732, %v1999
        %v2106 = vadd.f32 %v1737, %v1999
        %v2107 = vadd.f32 %v1742, %v1999
        %v2108 = vadd.f32 %v1747, %v1999
        %v2109 = vadd.f32 %v1752, %v1999
        %v2110 = vadd.f32 %v1757, %v1999
        %v2111 = vadd.f32 %v1762, %v1999
        %v2112 = vadd.f32 %v1767, %v2003
        %v2113 = vadd.f32 %v1772, %v2003
        %v2114 = vadd.f32 %v1777, %v2003
        %v2115 = vadd.f32 %v1782, %v2003
        %v2116 = vadd.f32 %v1787, %v2003
        %v2117 = vadd.f32 %v1792, %v2003
        %v2118 = vadd.f32 %v1797, %v2003
        %v2119 = vadd.f32 %v1802, %v2003
        %v2120 = vadd.f32 %v1807, %v2003
        %v2121 = vadd.f32 %v1812, %v2003
        %v2122 = vadd.f32 %v1817, %v2003
        %v2123 = vadd.f32 %v1822, %v2003
        %v2124 = vadd.f32 %v1827, %v2003
        %v2125 = vadd.f32 %v1832, %v2003
        %v2126 = vadd.f32 %v1837, %v2003
        %v2127 = vadd.f32 %v1842, %v2003
        %v2128 = vadd.f32 %v1847, %v2007
        %v2129 = vadd.f32 %v1852, %v2007
        %v2130 = vadd.f32 %v1857, %v2007
        %v2131 = vadd.f32 %v1862, %v2007
        %v2132 = vadd.f32 %v1867, %v2007
        %v2133 = vadd.f32 %v1872, %v2007
        %v2134 = vadd.f32 %v1877, %v2007
        %v2135 = vadd.f32 %v1882, %v2007
        %v2136 = vadd.f32 %v1887, %v2007
        %v2137 = vadd.f32 %v1892, %v2007
        %v2138 = vadd.f32 %v1897, %v2007
        %v2139 = vadd.f32 %v1902, %v2007
        %v2140 = vadd.f32 %v1907, %v2007
        %v2141 = vadd.f32 %v1912, %v2007
        %v2142 = vadd.f32 %v1917, %v2007
        %v2143 = vadd.f32 %v1922, %v2007
        %v2144 = vtanh.pop %v2016
        %v2145 = vtanh.pop %v2017
        %v2146 = vtanh.pop %v2018
        %v2147 = vtanh.pop %v2019
        %v2148 = vtanh.pop %v2020
        %v2149 = vtanh.pop %v2021
        %v2150 = vtanh.pop %v2022
        %v2151 = vtanh.pop %v2023
        %v2152 = vtanh.pop %v2024
        %v2153 = vtanh.pop %v2025
        %v2154 = vtanh.pop %v2026
        %v2155 = vtanh.pop %v2027
        %v2156 = vtanh.pop %v2028
        %v2157 = vtanh.pop %v2029
        %v2158 = vtanh.pop %v2030
        %v2159 = vtanh.pop %v2031
        %v2160 = vtanh.pop %v2032
        %v2161 = vtanh.pop %v2033
        %v2162 = vtanh.pop %v2034
        %v2163 = vtanh.pop %v2035
        %v2164 = vtanh.pop %v2036
        %v2165 = vtanh.pop %v2037
        %v2166 = vtanh.pop %v2038
        %v2167 = vtanh.pop %v2039
        %v2168 = vtanh.pop %v2040
        %v2169 = vtanh.pop %v2041
        %v2170 = vtanh.pop %v2042
        %v2171 = vtanh.pop %v2043
        %v2172 = vtanh.pop %v2044
        %v2173 = vtanh.pop %v2045
        %v2174 = vtanh.pop %v2046
        %v2175 = vtanh.pop %v2047
        %v2176 = vtanh.pop %v2048
        %v2177 = vtanh.pop %v2049
        %v2178 = vtanh.pop %v2050
        %v2179 = vtanh.pop %v2051
        %v2180 = vtanh.pop %v2052
        %v2181 = vtanh.pop %v2053
        %v2182 = vtanh.pop %v2054
        %v2183 = vtanh.pop %v2055
        %v2184 = vtanh.pop %v2056
        %v2185 = vtanh.pop %v2057
        %v2186 = vtanh.pop %v2058
        %v2187 = vtanh.pop %v2059
        %v2188 = vtanh.pop %v2060
        %v2189 = vtanh.pop %v2061
        %v2190 = vtanh.pop %v2062
        %v2191 = vtanh.pop %v2063
        %v2192 = vtanh.pop %v2064
        %v2193 = vtanh.pop %v2065
        %v2194 = vtanh.pop %v2066
        %v2195 = vtanh.pop %v2067
        %v2196 = vtanh.pop %v2068
        %v2197 = vtanh.pop %v2069
        %v2198 = vtanh.pop %v2070
        %v2199 = vtanh.pop %v2071
        %v2200 = vtanh.pop %v2072
        %v2201 = vtanh.pop %v2073
        %v2202 = vtanh.pop %v2074
        %v2203 = vtanh.pop %v2075
        %v2204 = vtanh.pop %v2076
        %v2205 = vtanh.pop %v2077
        %v2206 = vtanh.pop %v2078
        %v2207 = vtanh.pop %v2079
        %v2208 = vtanh.pop %v2080
        %v2209 = vtanh.pop %v2081
        %v2210 = vtanh.pop %v2082
        %v2211 = vtanh.pop %v2083
        %v2212 = vtanh.pop %v2084
        %v2213 = vtanh.pop %v2085
        %v2214 = vtanh.pop %v2086
        %v2215 = vtanh.pop %v2087
        %v2216 = vtanh.pop %v2088
        %v2217 = vtanh.pop %v2089
        %v2218 = vtanh.pop %v2090
        %v2219 = vtanh.pop %v2091
        %v2220 = vtanh.pop %v2092
        %v2221 = vtanh.pop %v2093
        %v2222 = vtanh.pop %v2094
        %v2223 = vtanh.pop %v2095
        %v2224 = vtanh.pop %v2096
        %v2225 = vtanh.pop %v2097
        %v2226 = vtanh.pop %v2098
        %v2227 = vtanh.pop %v2099
        %v2228 = vtanh.pop %v2100
        %v2229 = vtanh.pop %v2101
        %v2230 = vtanh.pop %v2102
        %v2231 = vtanh.pop %v2103
        %v2232 = vtanh.pop %v2104
        %v2233 = vtanh.pop %v2105
        %v2234 = vtanh.pop %v2106
        %v2235 = vtanh.pop %v2107
        %v2236 = vtanh.pop %v2108
        %v2237 = vtanh.pop %v2109
        %v2238 = vtanh.pop %v2110
        %v2239 = vtanh.pop %v2111
        %v2240 = vtanh.pop %v2112
        %v2241 = vtanh.pop %v2113
        %v2242 = vtanh.pop %v2114
        %v2243 = vtanh.pop %v2115
        %v2244 = vtanh.pop %v2116
        %v2245 = vtanh.pop %v2117
        %v2246 = vtanh.pop %v2118
        %v2247 = vtanh.pop %v2119
        %v2248 = vtanh.pop %v2120
        %v2249 = vtanh.pop %v2121
        %v2250 = vtanh.pop %v2122
        %v2251 = vtanh.pop %v2123
        %v2252 = vtanh.pop %v2124
        %v2253 = vtanh.pop %v2125
        %v2254 = vtanh.pop %v2126
        %v2255 = vtanh.pop %v2127
        %v2256 = vtanh.pop %v2128
        %v2257 = vtanh.pop %v2129
        %v2258 = vtanh.pop %v2130
        %v2259 = vtanh.pop %v2131
        %v2260 = vtanh.pop %v2132
        %v2261 = vtanh.pop %v2133
        %v2262 = vtanh.pop %v2134
        %v2263 = vtanh.pop %v2135
        %v2264 = vtanh.pop %v2136
        %v2265 = vtanh.pop %v2137
        %v2266 = vtanh.pop %v2138
        %v2267 = vtanh.pop %v2139
        %v2268 = vtanh.pop %v2140
        %v2269 = vtanh.pop %v2141
        %v2270 = vtanh.pop %v2142
        %v2271 = vtanh.pop %v2143
        %v2272 = vld [vmem:[#allocation16] sm:$0x1]
        %v2274 = vlaneseq
        %v2275 = vshrl.u32 %v2274, 7
        %v2276 = vsub.s32 0, %v2275
        %v2277 = vrot.slane %v2272, %v2276
        %v2279 = vmul.f32 %v2144, %v2277
        %v2280 = vmul.f32 %v2145, %v2277
        %v2281 = vmul.f32 %v2146, %v2277
        %v2282 = vmul.f32 %v2147, %v2277
        %v2283 = vmul.f32 %v2148, %v2277
        %v2284 = vmul.f32 %v2149, %v2277
        %v2285 = vmul.f32 %v2150, %v2277
        %v2286 = vmul.f32 %v2151, %v2277
        %v2287 = vmul.f32 %v2152, %v2277
        %v2288 = vmul.f32 %v2153, %v2277
        %v2289 = vmul.f32 %v2154, %v2277
        %v2290 = vmul.f32 %v2155, %v2277
        %v2291 = vmul.f32 %v2156, %v2277
        %v2292 = vmul.f32 %v2157, %v2277
        %v2293 = vmul.f32 %v2158, %v2277
        %v2294 = vmul.f32 %v2159, %v2277
        %v2295 = vmul.f32 %v2160, %v2277
        %v2296 = vmul.f32 %v2161, %v2277
        %v2297 = vmul.f32 %v2162, %v2277
        %v2298 = vmul.f32 %v2163, %v2277
        %v2299 = vmul.f32 %v2164, %v2277
        %v2300 = vmul.f32 %v2165, %v2277
        %v2301 = vmul.f32 %v2166, %v2277
        %v2302 = vmul.f32 %v2167, %v2277
        %v2303 = vmul.f32 %v2168, %v2277
        %v2304 = vmul.f32 %v2169, %v2277
        %v2305 = vmul.f32 %v2170, %v2277
        %v2306 = vmul.f32 %v2171, %v2277
        %v2307 = vmul.f32 %v2172, %v2277
        %v2308 = vmul.f32 %v2173, %v2277
        %v2309 = vmul.f32 %v2174, %v2277
        %v2310 = vmul.f32 %v2175, %v2277
        %v2311 = vmul.f32 %v2176, %v2277
        %v2312 = vmul.f32 %v2177, %v2277
        %v2313 = vmul.f32 %v2178, %v2277
        %v2314 = vmul.f32 %v2179, %v2277
        %v2315 = vmul.f32 %v2180, %v2277
        %v2316 = vmul.f32 %v2181, %v2277
        %v2317 = vmul.f32 %v2182, %v2277
        %v2318 = vmul.f32 %v2183, %v2277
        %v2319 = vmul.f32 %v2184, %v2277
        %v2320 = vmul.f32 %v2185, %v2277
        %v2321 = vmul.f32 %v2186, %v2277
        %v2322 = vmul.f32 %v2187, %v2277
        %v2323 = vmul.f32 %v2188, %v2277
        %v2324 = vmul.f32 %v2189, %v2277
        %v2325 = vmul.f32 %v2190, %v2277
        %v2326 = vmul.f32 %v2191, %v2277
        %v2327 = vmul.f32 %v2192, %v2277
        %v2328 = vmul.f32 %v2193, %v2277
        %v2329 = vmul.f32 %v2194, %v2277
        %v2330 = vmul.f32 %v2195, %v2277
        %v2331 = vmul.f32 %v2196, %v2277
        %v2332 = vmul.f32 %v2197, %v2277
        %v2333 = vmul.f32 %v2198, %v2277
        %v2334 = vmul.f32 %v2199, %v2277
        %v2335 = vmul.f32 %v2200, %v2277
        %v2336 = vmul.f32 %v2201, %v2277
        %v2337 = vmul.f32 %v2202, %v2277
        %v2338 = vmul.f32 %v2203, %v2277
        %v2339 = vmul.f32 %v2204, %v2277
        %v2340 = vmul.f32 %v2205, %v2277
        %v2341 = vmul.f32 %v2206, %v2277
        %v2342 = vmul.f32 %v2207, %v2277
        %v2343 = vmul.f32 %v2208, %v2277
        %v2344 = vmul.f32 %v2209, %v2277
        %v2345 = vmul.f32 %v2210, %v2277
        %v2346 = vmul.f32 %v2211, %v2277
        %v2347 = vmul.f32 %v2212, %v2277
        %v2348 = vmul.f32 %v2213, %v2277
        %v2349 = vmul.f32 %v2214, %v2277
        %v2350 = vmul.f32 %v2215, %v2277
        %v2351 = vmul.f32 %v2216, %v2277
        %v2352 = vmul.f32 %v2217, %v2277
        %v2353 = vmul.f32 %v2218, %v2277
        %v2354 = vmul.f32 %v2219, %v2277
        %v2355 = vmul.f32 %v2220, %v2277
        %v2356 = vmul.f32 %v2221, %v2277
        %v2357 = vmul.f32 %v2222, %v2277
        %v2358 = vmul.f32 %v2223, %v2277
        %v2359 = vmul.f32 %v2224, %v2277
        %v2360 = vmul.f32 %v2225, %v2277
        %v2361 = vmul.f32 %v2226, %v2277
        %v2362 = vmul.f32 %v2227, %v2277
        %v2363 = vmul.f32 %v2228, %v2277
        %v2364 = vmul.f32 %v2229, %v2277
        %v2365 = vmul.f32 %v2230, %v2277
        %v2366 = vmul.f32 %v2231, %v2277
        %v2367 = vmul.f32 %v2232, %v2277
        %v2368 = vmul.f32 %v2233, %v2277
        %v2369 = vmul.f32 %v2234, %v2277
        %v2370 = vmul.f32 %v2235, %v2277
        %v2371 = vmul.f32 %v2236, %v2277
        %v2372 = vmul.f32 %v2237, %v2277
        %v2373 = vmul.f32 %v2238, %v2277
        %v2374 = vmul.f32 %v2239, %v2277
        %v2375 = vmul.f32 %v2240, %v2277
        %v2376 = vmul.f32 %v2241, %v2277
        %v2377 = vmul.f32 %v2242, %v2277
        %v2378 = vmul.f32 %v2243, %v2277
        %v2379 = vmul.f32 %v2244, %v2277
        %v2380 = vmul.f32 %v2245, %v2277
        %v2381 = vmul.f32 %v2246, %v2277
        %v2382 = vmul.f32 %v2247, %v2277
        %v2383 = vmul.f32 %v2248, %v2277
        %v2384 = vmul.f32 %v2249, %v2277
        %v2385 = vmul.f32 %v2250, %v2277
        %v2386 = vmul.f32 %v2251, %v2277
        %v2387 = vmul.f32 %v2252, %v2277
        %v2388 = vmul.f32 %v2253, %v2277
        %v2389 = vmul.f32 %v2254, %v2277
        %v2390 = vmul.f32 %v2255, %v2277
        %v2391 = vmul.f32 %v2256, %v2277
        %v2392 = vmul.f32 %v2257, %v2277
        %v2393 = vmul.f32 %v2258, %v2277
        %v2394 = vmul.f32 %v2259, %v2277
        %v2395 = vmul.f32 %v2260, %v2277
        %v2396 = vmul.f32 %v2261, %v2277
        %v2397 = vmul.f32 %v2262, %v2277
        %v2398 = vmul.f32 %v2263, %v2277
        %v2399 = vmul.f32 %v2264, %v2277
        %v2400 = vmul.f32 %v2265, %v2277
        %v2401 = vmul.f32 %v2266, %v2277
        %v2402 = vmul.f32 %v2267, %v2277
        %v2403 = vmul.f32 %v2268, %v2277
        %v2404 = vmul.f32 %v2269, %v2277
        %v2405 = vmul.f32 %v2270, %v2277
        %v2406 = vmul.f32 %v2271, %v2277
        %2407 = vadd.xlane.f32.xlu0 %v2279
        %v2408 = vpop.xlane.xlu0 %2407
        %2409 = vadd.xlane.f32.xlu0 %v2280
        %v2410 = vpop.xlane.xlu0 %2409
        %2411 = vadd.xlane.f32.xlu0 %v2281
        %v2412 = vpop.xlane.xlu0 %2411
        %2413 = vadd.xlane.f32.xlu0 %v2282
        %v2414 = vpop.xlane.xlu0 %2413
        %2415 = vadd.xlane.f32.xlu0 %v2283
        %v2416 = vpop.xlane.xlu0 %2415
        %2417 = vadd.xlane.f32.xlu0 %v2284
        %v2418 = vpop.xlane.xlu0 %2417
        %2419 = vadd.xlane.f32.xlu0 %v2285
        %v2420 = vpop.xlane.xlu0 %2419
        %2421 = vadd.xlane.f32.xlu0 %v2286
        %v2422 = vpop.xlane.xlu0 %2421
        %2423 = vadd.xlane.f32.xlu0 %v2287
        %v2424 = vpop.xlane.xlu0 %2423
        %2425 = vadd.xlane.f32.xlu0 %v2288
        %v2426 = vpop.xlane.xlu0 %2425
        %2427 = vadd.xlane.f32.xlu0 %v2289
        %v2428 = vpop.xlane.xlu0 %2427
        %2429 = vadd.xlane.f32.xlu0 %v2290
        %v2430 = vpop.xlane.xlu0 %2429
        %2431 = vadd.xlane.f32.xlu0 %v2291
        %v2432 = vpop.xlane.xlu0 %2431
        %2433 = vadd.xlane.f32.xlu0 %v2292
        %v2434 = vpop.xlane.xlu0 %2433
        %2435 = vadd.xlane.f32.xlu0 %v2293
        %v2436 = vpop.xlane.xlu0 %2435
        %2437 = vadd.xlane.f32.xlu0 %v2294
        %v2438 = vpop.xlane.xlu0 %2437
        %2439 = vadd.xlane.f32.xlu0 %v2295
        %v2440 = vpop.xlane.xlu0 %2439
        %2441 = vadd.xlane.f32.xlu0 %v2296
        %v2442 = vpop.xlane.xlu0 %2441
        %2443 = vadd.xlane.f32.xlu0 %v2297
        %v2444 = vpop.xlane.xlu0 %2443
        %2445 = vadd.xlane.f32.xlu0 %v2298
        %v2446 = vpop.xlane.xlu0 %2445
        %2447 = vadd.xlane.f32.xlu0 %v2299
        %v2448 = vpop.xlane.xlu0 %2447
        %2449 = vadd.xlane.f32.xlu0 %v2300
        %v2450 = vpop.xlane.xlu0 %2449
        %2451 = vadd.xlane.f32.xlu0 %v2301
        %v2452 = vpop.xlane.xlu0 %2451
        %2453 = vadd.xlane.f32.xlu0 %v2302
        %v2454 = vpop.xlane.xlu0 %2453
        %2455 = vadd.xlane.f32.xlu0 %v2303
        %v2456 = vpop.xlane.xlu0 %2455
        %2457 = vadd.xlane.f32.xlu0 %v2304
        %v2458 = vpop.xlane.xlu0 %2457
        %2459 = vadd.xlane.f32.xlu0 %v2305
        %v2460 = vpop.xlane.xlu0 %2459
        %2461 = vadd.xlane.f32.xlu0 %v2306
        %v2462 = vpop.xlane.xlu0 %2461
        %2463 = vadd.xlane.f32.xlu0 %v2307
        %v2464 = vpop.xlane.xlu0 %2463
        %2465 = vadd.xlane.f32.xlu0 %v2308
        %v2466 = vpop.xlane.xlu0 %2465
        %2467 = vadd.xlane.f32.xlu0 %v2309
        %v2468 = vpop.xlane.xlu0 %2467
        %2469 = vadd.xlane.f32.xlu0 %v2310
        %v2470 = vpop.xlane.xlu0 %2469
        %2471 = vadd.xlane.f32.xlu0 %v2311
        %v2472 = vpop.xlane.xlu0 %2471
        %2473 = vadd.xlane.f32.xlu0 %v2312
        %v2474 = vpop.xlane.xlu0 %2473
        %2475 = vadd.xlane.f32.xlu0 %v2313
        %v2476 = vpop.xlane.xlu0 %2475
        %2477 = vadd.xlane.f32.xlu0 %v2314
        %v2478 = vpop.xlane.xlu0 %2477
        %2479 = vadd.xlane.f32.xlu0 %v2315
        %v2480 = vpop.xlane.xlu0 %2479
        %2481 = vadd.xlane.f32.xlu0 %v2316
        %v2482 = vpop.xlane.xlu0 %2481
        %2483 = vadd.xlane.f32.xlu0 %v2317
        %v2484 = vpop.xlane.xlu0 %2483
        %2485 = vadd.xlane.f32.xlu0 %v2318
        %v2486 = vpop.xlane.xlu0 %2485
        %2487 = vadd.xlane.f32.xlu0 %v2319
        %v2488 = vpop.xlane.xlu0 %2487
        %2489 = vadd.xlane.f32.xlu0 %v2320
        %v2490 = vpop.xlane.xlu0 %2489
        %2491 = vadd.xlane.f32.xlu0 %v2321
        %v2492 = vpop.xlane.xlu0 %2491
        %2493 = vadd.xlane.f32.xlu0 %v2322
        %v2494 = vpop.xlane.xlu0 %2493
        %2495 = vadd.xlane.f32.xlu0 %v2323
        %v2496 = vpop.xlane.xlu0 %2495
        %2497 = vadd.xlane.f32.xlu0 %v2324
        %v2498 = vpop.xlane.xlu0 %2497
        %2499 = vadd.xlane.f32.xlu0 %v2325
        %v2500 = vpop.xlane.xlu0 %2499
        %2501 = vadd.xlane.f32.xlu0 %v2326
        %v2502 = vpop.xlane.xlu0 %2501
        %2503 = vadd.xlane.f32.xlu0 %v2327
        %v2504 = vpop.xlane.xlu0 %2503
        %2505 = vadd.xlane.f32.xlu0 %v2328
        %v2506 = vpop.xlane.xlu0 %2505
        %2507 = vadd.xlane.f32.xlu0 %v2329
        %v2508 = vpop.xlane.xlu0 %2507
        %2509 = vadd.xlane.f32.xlu0 %v2330
        %v2510 = vpop.xlane.xlu0 %2509
        %2511 = vadd.xlane.f32.xlu0 %v2331
        %v2512 = vpop.xlane.xlu0 %2511
        %2513 = vadd.xlane.f32.xlu0 %v2332
        %v2514 = vpop.xlane.xlu0 %2513
        %2515 = vadd.xlane.f32.xlu0 %v2333
        %v2516 = vpop.xlane.xlu0 %2515
        %2517 = vadd.xlane.f32.xlu0 %v2334
        %v2518 = vpop.xlane.xlu0 %2517
        %2519 = vadd.xlane.f32.xlu0 %v2335
        %v2520 = vpop.xlane.xlu0 %2519
        %2521 = vadd.xlane.f32.xlu0 %v2336
        %v2522 = vpop.xlane.xlu0 %2521
        %2523 = vadd.xlane.f32.xlu0 %v2337
        %v2524 = vpop.xlane.xlu0 %2523
        %2525 = vadd.xlane.f32.xlu0 %v2338
        %v2526 = vpop.xlane.xlu0 %2525
        %2527 = vadd.xlane.f32.xlu0 %v2339
        %v2528 = vpop.xlane.xlu0 %2527
        %2529 = vadd.xlane.f32.xlu0 %v2340
        %v2530 = vpop.xlane.xlu0 %2529
        %2531 = vadd.xlane.f32.xlu0 %v2341
        %v2532 = vpop.xlane.xlu0 %2531
        %2533 = vadd.xlane.f32.xlu0 %v2342
        %v2534 = vpop.xlane.xlu0 %2533
        %2535 = vadd.xlane.f32.xlu0 %v2343
        %v2536 = vpop.xlane.xlu0 %2535
        %2537 = vadd.xlane.f32.xlu0 %v2344
        %v2538 = vpop.xlane.xlu0 %2537
        %2539 = vadd.xlane.f32.xlu0 %v2345
        %v2540 = vpop.xlane.xlu0 %2539
        %2541 = vadd.xlane.f32.xlu0 %v2346
        %v2542 = vpop.xlane.xlu0 %2541
        %2543 = vadd.xlane.f32.xlu0 %v2347
        %v2544 = vpop.xlane.xlu0 %2543
        %2545 = vadd.xlane.f32.xlu0 %v2348
        %v2546 = vpop.xlane.xlu0 %2545
        %2547 = vadd.xlane.f32.xlu0 %v2349
        %v2548 = vpop.xlane.xlu0 %2547
        %2549 = vadd.xlane.f32.xlu0 %v2350
        %v2550 = vpop.xlane.xlu0 %2549
        %2551 = vadd.xlane.f32.xlu0 %v2351
        %v2552 = vpop.xlane.xlu0 %2551
        %2553 = vadd.xlane.f32.xlu0 %v2352
        %v2554 = vpop.xlane.xlu0 %2553
        %2555 = vadd.xlane.f32.xlu0 %v2353
        %v2556 = vpop.xlane.xlu0 %2555
        %2557 = vadd.xlane.f32.xlu0 %v2354
        %v2558 = vpop.xlane.xlu0 %2557
        %2559 = vadd.xlane.f32.xlu0 %v2355
        %v2560 = vpop.xlane.xlu0 %2559
        %2561 = vadd.xlane.f32.xlu0 %v2356
        %v2562 = vpop.xlane.xlu0 %2561
        %2563 = vadd.xlane.f32.xlu0 %v2357
        %v2564 = vpop.xlane.xlu0 %2563
        %2565 = vadd.xlane.f32.xlu0 %v2358
        %v2566 = vpop.xlane.xlu0 %2565
        %2567 = vadd.xlane.f32.xlu0 %v2359
        %v2568 = vpop.xlane.xlu0 %2567
        %2569 = vadd.xlane.f32.xlu0 %v2360
        %v2570 = vpop.xlane.xlu0 %2569
        %2571 = vadd.xlane.f32.xlu0 %v2361
        %v2572 = vpop.xlane.xlu0 %2571
        %2573 = vadd.xlane.f32.xlu0 %v2362
        %v2574 = vpop.xlane.xlu0 %2573
        %2575 = vadd.xlane.f32.xlu0 %v2363
        %v2576 = vpop.xlane.xlu0 %2575
        %2577 = vadd.xlane.f32.xlu0 %v2364
        %v2578 = vpop.xlane.xlu0 %2577
        %2579 = vadd.xlane.f32.xlu0 %v2365
        %v2580 = vpop.xlane.xlu0 %2579
        %2581 = vadd.xlane.f32.xlu0 %v2366
        %v2582 = vpop.xlane.xlu0 %2581
        %2583 = vadd.xlane.f32.xlu0 %v2367
        %v2584 = vpop.xlane.xlu0 %2583
        %2585 = vadd.xlane.f32.xlu0 %v2368
        %v2586 = vpop.xlane.xlu0 %2585
        %2587 = vadd.xlane.f32.xlu0 %v2369
        %v2588 = vpop.xlane.xlu0 %2587
        %2589 = vadd.xlane.f32.xlu0 %v2370
        %v2590 = vpop.xlane.xlu0 %2589
        %2591 = vadd.xlane.f32.xlu0 %v2371
        %v2592 = vpop.xlane.xlu0 %2591
        %2593 = vadd.xlane.f32.xlu0 %v2372
        %v2594 = vpop.xlane.xlu0 %2593
        %2595 = vadd.xlane.f32.xlu0 %v2373
        %v2596 = vpop.xlane.xlu0 %2595
        %2597 = vadd.xlane.f32.xlu0 %v2374
        %v2598 = vpop.xlane.xlu0 %2597
        %2599 = vadd.xlane.f32.xlu0 %v2375
        %v2600 = vpop.xlane.xlu0 %2599
        %2601 = vadd.xlane.f32.xlu0 %v2376
        %v2602 = vpop.xlane.xlu0 %2601
        %2603 = vadd.xlane.f32.xlu0 %v2377
        %v2604 = vpop.xlane.xlu0 %2603
        %2605 = vadd.xlane.f32.xlu0 %v2378
        %v2606 = vpop.xlane.xlu0 %2605
        %2607 = vadd.xlane.f32.xlu0 %v2379
        %v2608 = vpop.xlane.xlu0 %2607
        %2609 = vadd.xlane.f32.xlu0 %v2380
        %v2610 = vpop.xlane.xlu0 %2609
        %2611 = vadd.xlane.f32.xlu0 %v2381
        %v2612 = vpop.xlane.xlu0 %2611
        %2613 = vadd.xlane.f32.xlu0 %v2382
        %v2614 = vpop.xlane.xlu0 %2613
        %2615 = vadd.xlane.f32.xlu0 %v2383
        %v2616 = vpop.xlane.xlu0 %2615
        %2617 = vadd.xlane.f32.xlu0 %v2384
        %v2618 = vpop.xlane.xlu0 %2617
        %2619 = vadd.xlane.f32.xlu0 %v2385
        %v2620 = vpop.xlane.xlu0 %2619
        %2621 = vadd.xlane.f32.xlu0 %v2386
        %v2622 = vpop.xlane.xlu0 %2621
        %2623 = vadd.xlane.f32.xlu0 %v2387
        %v2624 = vpop.xlane.xlu0 %2623
        %2625 = vadd.xlane.f32.xlu0 %v2388
        %v2626 = vpop.xlane.xlu0 %2625
        %2627 = vadd.xlane.f32.xlu0 %v2389
        %v2628 = vpop.xlane.xlu0 %2627
        %2629 = vadd.xlane.f32.xlu0 %v2390
        %v2630 = vpop.xlane.xlu0 %2629
        %2631 = vadd.xlane.f32.xlu0 %v2391
        %v2632 = vpop.xlane.xlu0 %2631
        %2633 = vadd.xlane.f32.xlu0 %v2392
        %v2634 = vpop.xlane.xlu0 %2633
        %2635 = vadd.xlane.f32.xlu0 %v2393
        %v2636 = vpop.xlane.xlu0 %2635
        %2637 = vadd.xlane.f32.xlu0 %v2394
        %v2638 = vpop.xlane.xlu0 %2637
        %2639 = vadd.xlane.f32.xlu0 %v2395
        %v2640 = vpop.xlane.xlu0 %2639
        %2641 = vadd.xlane.f32.xlu0 %v2396
        %v2642 = vpop.xlane.xlu0 %2641
        %2643 = vadd.xlane.f32.xlu0 %v2397
        %v2644 = vpop.xlane.xlu0 %2643
        %2645 = vadd.xlane.f32.xlu0 %v2398
        %v2646 = vpop.xlane.xlu0 %2645
        %2647 = vadd.xlane.f32.xlu0 %v2399
        %v2648 = vpop.xlane.xlu0 %2647
        %2649 = vadd.xlane.f32.xlu0 %v2400
        %v2650 = vpop.xlane.xlu0 %2649
        %2651 = vadd.xlane.f32.xlu0 %v2401
        %v2652 = vpop.xlane.xlu0 %2651
        %2653 = vadd.xlane.f32.xlu0 %v2402
        %v2654 = vpop.xlane.xlu0 %2653
        %2655 = vadd.xlane.f32.xlu0 %v2403
        %v2656 = vpop.xlane.xlu0 %2655
        %2657 = vadd.xlane.f32.xlu0 %v2404
        %v2658 = vpop.xlane.xlu0 %2657
        %2659 = vadd.xlane.f32.xlu0 %v2405
        %v2660 = vpop.xlane.xlu0 %2659
        %2661 = vadd.xlane.f32.xlu0 %v2406
        %v2662 = vpop.xlane.xlu0 %2661
        %v2663 = vld [vmem:[#allocation3] sm:$0xff]
        %v2792 = vlaneseq
        %v2793 = vand.u32 %v2792, 127
        %v2794 = vlaneseq
        %v2795 = vshrl.u32 %v2794, 7
        %v2796 = vsub.s32 %v2793, %v2795
        %v2797 = vrot.slane %v2408, %v2796
        %v2798 = vadd.s32 %v2793, 4294967288
        %v2799 = vlaneseq
        %v2800 = vshrl.u32 %v2799, 7
        %v2801 = vsub.s32 %v2798, %v2800
        %v2802 = vrot.slane %v2410, %v2801
        %vm2803 = vcmask 130112
        %v2804 = vsel %vm2803, %v2802, %v2797
        %v2805 = vadd.s32 %v2793, 4294967280
        %v2806 = vlaneseq
        %v2807 = vshrl.u32 %v2806, 7
        %v2808 = vsub.s32 %v2805, %v2807
        %v2809 = vrot.slane %v2412, %v2808
        %vm2810 = vcmask 195712
        %v2811 = vsel %vm2810, %v2809, %v2804
        %v2812 = vadd.s32 %v2793, 4294967272
        %v2813 = vlaneseq
        %v2814 = vshrl.u32 %v2813, 7
        %v2815 = vsub.s32 %v2812, %v2814
        %v2816 = vrot.slane %v2414, %v2815
        %vm2817 = vcmask 261312
        %v2818 = vsel %vm2817, %v2816, %v2811
        %v2819 = vadd.s32 %v2793, 4294967264
        %v2820 = vlaneseq
        %v2821 = vshrl.u32 %v2820, 7
        %v2822 = vsub.s32 %v2819, %v2821
        %v2823 = vrot.slane %v2416, %v2822
        %vm2824 = vcmask 326912
        %v2825 = vsel %vm2824, %v2823, %v2818
        %v2826 = vadd.s32 %v2793, 4294967256
        %v2827 = vlaneseq
        %v2828 = vshrl.u32 %v2827, 7
        %v2829 = vsub.s32 %v2826, %v2828
        %v2830 = vrot.slane %v2418, %v2829
        %vm2831 = vcmask 392512
        %v2832 = vsel %vm2831, %v2830, %v2825
        %v2833 = vadd.s32 %v2793, 4294967248
        %v2834 = vlaneseq
        %v2835 = vshrl.u32 %v2834, 7
        %v2836 = vsub.s32 %v2833, %v2835
        %v2837 = vrot.slane %v2420, %v2836
        %vm2838 = vcmask 458112
        %v2839 = vsel %vm2838, %v2837, %v2832
        %v2840 = vadd.s32 %v2793, 4294967240
        %v2841 = vlaneseq
        %v2842 = vshrl.u32 %v2841, 7
        %v2843 = vsub.s32 %v2840, %v2842
        %v2844 = vrot.slane %v2422, %v2843
        %vm2845 = vcmask 523712
        %v2846 = vsel %vm2845, %v2844, %v2839
        %v2847 = vadd.s32 %v2793, 4294967232
        %v2848 = vlaneseq
        %v2849 = vshrl.u32 %v2848, 7
        %v2850 = vsub.s32 %v2847, %v2849
        %v2851 = vrot.slane %v2424, %v2850
        %vm2852 = vcmask 589312
        %v2853 = vsel %vm2852, %v2851, %v2846
        %v2854 = vadd.s32 %v2793, 4294967224
        %v2855 = vlaneseq
        %v2856 = vshrl.u32 %v2855, 7
        %v2857 = vsub.s32 %v2854, %v2856
        %v2858 = vrot.slane %v2426, %v2857
        %vm2859 = vcmask 654912
        %v2860 = vsel %vm2859, %v2858, %v2853
        %v2861 = vadd.s32 %v2793, 4294967216
        %v2862 = vlaneseq
        %v2863 = vshrl.u32 %v2862, 7
        %v2864 = vsub.s32 %v2861, %v2863
        %v2865 = vrot.slane %v2428, %v2864
        %vm2866 = vcmask 720512
        %v2867 = vsel %vm2866, %v2865, %v2860
        %v2868 = vadd.s32 %v2793, 4294967208
        %v2869 = vlaneseq
        %v2870 = vshrl.u32 %v2869, 7
        %v2871 = vsub.s32 %v2868, %v2870
        %v2872 = vrot.slane %v2430, %v2871
        %vm2873 = vcmask 786112
        %v2874 = vsel %vm2873, %v2872, %v2867
        %v2875 = vadd.s32 %v2793, 4294967200
        %v2876 = vlaneseq
        %v2877 = vshrl.u32 %v2876, 7
        %v2878 = vsub.s32 %v2875, %v2877
        %v2879 = vrot.slane %v2432, %v2878
        %vm2880 = vcmask 851712
        %v2881 = vsel %vm2880, %v2879, %v2874
        %v2882 = vadd.s32 %v2793, 4294967192
        %v2883 = vlaneseq
        %v2884 = vshrl.u32 %v2883, 7
        %v2885 = vsub.s32 %v2882, %v2884
        %v2886 = vrot.slane %v2434, %v2885
        %vm2887 = vcmask 917312
        %v2888 = vsel %vm2887, %v2886, %v2881
        %v2889 = vadd.s32 %v2793, 4294967184
        %v2890 = vlaneseq
        %v2891 = vshrl.u32 %v2890, 7
        %v2892 = vsub.s32 %v2889, %v2891
        %v2893 = vrot.slane %v2436, %v2892
        %vm2894 = vcmask 982912
        %v2895 = vsel %vm2894, %v2893, %v2888
        %v2896 = vadd.s32 %v2793, 4294967176
        %v2897 = vlaneseq
        %v2898 = vshrl.u32 %v2897, 7
        %v2899 = vsub.s32 %v2896, %v2898
        %v2900 = vrot.slane %v2438, %v2899
        %vm2901 = vcmask 1048512
        %v2902 = vsel %vm2901, %v2900, %v2895
        %v2903 = vlaneseq
        %v2904 = vshrl.u32 %v2903, 7
        %v2905 = vsub.s32 %v2793, %v2904
        %v2906 = vrot.slane %v2440, %v2905
        %v2907 = vlaneseq
        %v2908 = vshrl.u32 %v2907, 7
        %v2909 = vsub.s32 %v2798, %v2908
        %v2910 = vrot.slane %v2442, %v2909
        %v2911 = vsel %vm2803, %v2910, %v2906
        %v2912 = vlaneseq
        %v2913 = vshrl.u32 %v2912, 7
        %v2914 = vsub.s32 %v2805, %v2913
        %v2915 = vrot.slane %v2444, %v2914
        %v2916 = vsel %vm2810, %v2915, %v2911
        %v2917 = vlaneseq
        %v2918 = vshrl.u32 %v2917, 7
        %v2919 = vsub.s32 %v2812, %v2918
        %v2920 = vrot.slane %v2446, %v2919
        %v2921 = vsel %vm2817, %v2920, %v2916
        %v2922 = vlaneseq
        %v2923 = vshrl.u32 %v2922, 7
        %v2924 = vsub.s32 %v2819, %v2923
        %v2925 = vrot.slane %v2448, %v2924
        %v2926 = vsel %vm2824, %v2925, %v2921
        %v2927 = vlaneseq
        %v2928 = vshrl.u32 %v2927, 7
        %v2929 = vsub.s32 %v2826, %v2928
        %v2930 = vrot.slane %v2450, %v2929
        %v2931 = vsel %vm2831, %v2930, %v2926
        %v2932 = vlaneseq
        %v2933 = vshrl.u32 %v2932, 7
        %v2934 = vsub.s32 %v2833, %v2933
        %v2935 = vrot.slane %v2452, %v2934
        %v2936 = vsel %vm2838, %v2935, %v2931
        %v2937 = vlaneseq
        %v2938 = vshrl.u32 %v2937, 7
        %v2939 = vsub.s32 %v2840, %v2938
        %v2940 = vrot.slane %v2454, %v2939
        %v2941 = vsel %vm2845, %v2940, %v2936
        %v2942 = vlaneseq
        %v2943 = vshrl.u32 %v2942, 7
        %v2944 = vsub.s32 %v2847, %v2943
        %v2945 = vrot.slane %v2456, %v2944
        %v2946 = vsel %vm2852, %v2945, %v2941
        %v2947 = vlaneseq
        %v2948 = vshrl.u32 %v2947, 7
        %v2949 = vsub.s32 %v2854, %v2948
        %v2950 = vrot.slane %v2458, %v2949
        %v2951 = vsel %vm2859, %v2950, %v2946
        %v2952 = vlaneseq
        %v2953 = vshrl.u32 %v2952, 7
        %v2954 = vsub.s32 %v2861, %v2953
        %v2955 = vrot.slane %v2460, %v2954
        %v2956 = vsel %vm2866, %v2955, %v2951
        %v2957 = vlaneseq
        %v2958 = vshrl.u32 %v2957, 7
        %v2959 = vsub.s32 %v2868, %v2958
        %v2960 = vrot.slane %v2462, %v2959
        %v2961 = vsel %vm2873, %v2960, %v2956
        %v2962 = vlaneseq
        %v2963 = vshrl.u32 %v2962, 7
        %v2964 = vsub.s32 %v2875, %v2963
        %v2965 = vrot.slane %v2464, %v2964
        %v2966 = vsel %vm2880, %v2965, %v2961
        %v2967 = vlaneseq
        %v2968 = vshrl.u32 %v2967, 7
        %v2969 = vsub.s32 %v2882, %v2968
        %v2970 = vrot.slane %v2466, %v2969
        %v2971 = vsel %vm2887, %v2970, %v2966
        %v2972 = vlaneseq
        %v2973 = vshrl.u32 %v2972, 7
        %v2974 = vsub.s32 %v2889, %v2973
        %v2975 = vrot.slane %v2468, %v2974
        %v2976 = vsel %vm2894, %v2975, %v2971
        %v2977 = vlaneseq
        %v2978 = vshrl.u32 %v2977, 7
        %v2979 = vsub.s32 %v2896, %v2978
        %v2980 = vrot.slane %v2470, %v2979
        %v2981 = vsel %vm2901, %v2980, %v2976
        %v2982 = vlaneseq
        %v2983 = vshrl.u32 %v2982, 7
        %v2984 = vsub.s32 %v2793, %v2983
        %v2985 = vrot.slane %v2472, %v2984
        %v2986 = vlaneseq
        %v2987 = vshrl.u32 %v2986, 7
        %v2988 = vsub.s32 %v2798, %v2987
        %v2989 = vrot.slane %v2474, %v2988
        %v2990 = vsel %vm2803, %v2989, %v2985
        %v2991 = vlaneseq
        %v2992 = vshrl.u32 %v2991, 7
        %v2993 = vsub.s32 %v2805, %v2992
        %v2994 = vrot.slane %v2476, %v2993
        %v2995 = vsel %vm2810, %v2994, %v2990
        %v2996 = vlaneseq
        %v2997 = vshrl.u32 %v2996, 7
        %v2998 = vsub.s32 %v2812, %v2997
        %v2999 = vrot.slane %v2478, %v2998
        %v3000 = vsel %vm2817, %v2999, %v2995
        %v3001 = vlaneseq
        %v3002 = vshrl.u32 %v3001, 7
        %v3003 = vsub.s32 %v2819, %v3002
        %v3004 = vrot.slane %v2480, %v3003
        %v3005 = vsel %vm2824, %v3004, %v3000
        %v3006 = vlaneseq
        %v3007 = vshrl.u32 %v3006, 7
        %v3008 = vsub.s32 %v2826, %v3007
        %v3009 = vrot.slane %v2482, %v3008
        %v3010 = vsel %vm2831, %v3009, %v3005
        %v3011 = vlaneseq
        %v3012 = vshrl.u32 %v3011, 7
        %v3013 = vsub.s32 %v2833, %v3012
        %v3014 = vrot.slane %v2484, %v3013
        %v3015 = vsel %vm2838, %v3014, %v3010
        %v3016 = vlaneseq
        %v3017 = vshrl.u32 %v3016, 7
        %v3018 = vsub.s32 %v2840, %v3017
        %v3019 = vrot.slane %v2486, %v3018
        %v3020 = vsel %vm2845, %v3019, %v3015
        %v3021 = vlaneseq
        %v3022 = vshrl.u32 %v3021, 7
        %v3023 = vsub.s32 %v2847, %v3022
        %v3024 = vrot.slane %v2488, %v3023
        %v3025 = vsel %vm2852, %v3024, %v3020
        %v3026 = vlaneseq
        %v3027 = vshrl.u32 %v3026, 7
        %v3028 = vsub.s32 %v2854, %v3027
        %v3029 = vrot.slane %v2490, %v3028
        %v3030 = vsel %vm2859, %v3029, %v3025
        %v3031 = vlaneseq
        %v3032 = vshrl.u32 %v3031, 7
        %v3033 = vsub.s32 %v2861, %v3032
        %v3034 = vrot.slane %v2492, %v3033
        %v3035 = vsel %vm2866, %v3034, %v3030
        %v3036 = vlaneseq
        %v3037 = vshrl.u32 %v3036, 7
        %v3038 = vsub.s32 %v2868, %v3037
        %v3039 = vrot.slane %v2494, %v3038
        %v3040 = vsel %vm2873, %v3039, %v3035
        %v3041 = vlaneseq
        %v3042 = vshrl.u32 %v3041, 7
        %v3043 = vsub.s32 %v2875, %v3042
        %v3044 = vrot.slane %v2496, %v3043
        %v3045 = vsel %vm2880, %v3044, %v3040
        %v3046 = vlaneseq
        %v3047 = vshrl.u32 %v3046, 7
        %v3048 = vsub.s32 %v2882, %v3047
        %v3049 = vrot.slane %v2498, %v3048
        %v3050 = vsel %vm2887, %v3049, %v3045
        %v3051 = vlaneseq
        %v3052 = vshrl.u32 %v3051, 7
        %v3053 = vsub.s32 %v2889, %v3052
        %v3054 = vrot.slane %v2500, %v3053
        %v3055 = vsel %vm2894, %v3054, %v3050
        %v3056 = vlaneseq
        %v3057 = vshrl.u32 %v3056, 7
        %v3058 = vsub.s32 %v2896, %v3057
        %v3059 = vrot.slane %v2502, %v3058
        %v3060 = vsel %vm2901, %v3059, %v3055
        %v3061 = vlaneseq
        %v3062 = vshrl.u32 %v3061, 7
        %v3063 = vsub.s32 %v2793, %v3062
        %v3064 = vrot.slane %v2504, %v3063
        %v3065 = vlaneseq
        %v3066 = vshrl.u32 %v3065, 7
        %v3067 = vsub.s32 %v2798, %v3066
        %v3068 = vrot.slane %v2506, %v3067
        %v3069 = vsel %vm2803, %v3068, %v3064
        %v3070 = vlaneseq
        %v3071 = vshrl.u32 %v3070, 7
        %v3072 = vsub.s32 %v2805, %v3071
        %v3073 = vrot.slane %v2508, %v3072
        %v3074 = vsel %vm2810, %v3073, %v3069
        %v3075 = vlaneseq
        %v3076 = vshrl.u32 %v3075, 7
        %v3077 = vsub.s32 %v2812, %v3076
        %v3078 = vrot.slane %v2510, %v3077
        %v3079 = vsel %vm2817, %v3078, %v3074
        %v3080 = vlaneseq
        %v3081 = vshrl.u32 %v3080, 7
        %v3082 = vsub.s32 %v2819, %v3081
        %v3083 = vrot.slane %v2512, %v3082
        %v3084 = vsel %vm2824, %v3083, %v3079
        %v3085 = vlaneseq
        %v3086 = vshrl.u32 %v3085, 7
        %v3087 = vsub.s32 %v2826, %v3086
        %v3088 = vrot.slane %v2514, %v3087
        %v3089 = vsel %vm2831, %v3088, %v3084
        %v3090 = vlaneseq
        %v3091 = vshrl.u32 %v3090, 7
        %v3092 = vsub.s32 %v2833, %v3091
        %v3093 = vrot.slane %v2516, %v3092
        %v3094 = vsel %vm2838, %v3093, %v3089
        %v3095 = vlaneseq
        %v3096 = vshrl.u32 %v3095, 7
        %v3097 = vsub.s32 %v2840, %v3096
        %v3098 = vrot.slane %v2518, %v3097
        %v3099 = vsel %vm2845, %v3098, %v3094
        %v3100 = vlaneseq
        %v3101 = vshrl.u32 %v3100, 7
        %v3102 = vsub.s32 %v2847, %v3101
        %v3103 = vrot.slane %v2520, %v3102
        %v3104 = vsel %vm2852, %v3103, %v3099
        %v3105 = vlaneseq
        %v3106 = vshrl.u32 %v3105, 7
        %v3107 = vsub.s32 %v2854, %v3106
        %v3108 = vrot.slane %v2522, %v3107
        %v3109 = vsel %vm2859, %v3108, %v3104
        %v3110 = vlaneseq
        %v3111 = vshrl.u32 %v3110, 7
        %v3112 = vsub.s32 %v2861, %v3111
        %v3113 = vrot.slane %v2524, %v3112
        %v3114 = vsel %vm2866, %v3113, %v3109
        %v3115 = vlaneseq
        %v3116 = vshrl.u32 %v3115, 7
        %v3117 = vsub.s32 %v2868, %v3116
        %v3118 = vrot.slane %v2526, %v3117
        %v3119 = vsel %vm2873, %v3118, %v3114
        %v3120 = vlaneseq
        %v3121 = vshrl.u32 %v3120, 7
        %v3122 = vsub.s32 %v2875, %v3121
        %v3123 = vrot.slane %v2528, %v3122
        %v3124 = vsel %vm2880, %v3123, %v3119
        %v3125 = vlaneseq
        %v3126 = vshrl.u32 %v3125, 7
        %v3127 = vsub.s32 %v2882, %v3126
        %v3128 = vrot.slane %v2530, %v3127
        %v3129 = vsel %vm2887, %v3128, %v3124
        %v3130 = vlaneseq
        %v3131 = vshrl.u32 %v3130, 7
        %v3132 = vsub.s32 %v2889, %v3131
        %v3133 = vrot.slane %v2532, %v3132
        %v3134 = vsel %vm2894, %v3133, %v3129
        %v3135 = vlaneseq
        %v3136 = vshrl.u32 %v3135, 7
        %v3137 = vsub.s32 %v2896, %v3136
        %v3138 = vrot.slane %v2534, %v3137
        %v3139 = vsel %vm2901, %v3138, %v3134
        %v3140 = vlaneseq
        %v3141 = vshrl.u32 %v3140, 7
        %v3142 = vsub.s32 %v2793, %v3141
        %v3143 = vrot.slane %v2536, %v3142
        %v3144 = vlaneseq
        %v3145 = vshrl.u32 %v3144, 7
        %v3146 = vsub.s32 %v2798, %v3145
        %v3147 = vrot.slane %v2538, %v3146
        %v3148 = vsel %vm2803, %v3147, %v3143
        %v3149 = vlaneseq
        %v3150 = vshrl.u32 %v3149, 7
        %v3151 = vsub.s32 %v2805, %v3150
        %v3152 = vrot.slane %v2540, %v3151
        %v3153 = vsel %vm2810, %v3152, %v3148
        %v3154 = vlaneseq
        %v3155 = vshrl.u32 %v3154, 7
        %v3156 = vsub.s32 %v2812, %v3155
        %v3157 = vrot.slane %v2542, %v3156
        %v3158 = vsel %vm2817, %v3157, %v3153
        %v3159 = vlaneseq
        %v3160 = vshrl.u32 %v3159, 7
        %v3161 = vsub.s32 %v2819, %v3160
        %v3162 = vrot.slane %v2544, %v3161
        %v3163 = vsel %vm2824, %v3162, %v3158
        %v3164 = vlaneseq
        %v3165 = vshrl.u32 %v3164, 7
        %v3166 = vsub.s32 %v2826, %v3165
        %v3167 = vrot.slane %v2546, %v3166
        %v3168 = vsel %vm2831, %v3167, %v3163
        %v3169 = vlaneseq
        %v3170 = vshrl.u32 %v3169, 7
        %v3171 = vsub.s32 %v2833, %v3170
        %v3172 = vrot.slane %v2548, %v3171
        %v3173 = vsel %vm2838, %v3172, %v3168
        %v3174 = vlaneseq
        %v3175 = vshrl.u32 %v3174, 7
        %v3176 = vsub.s32 %v2840, %v3175
        %v3177 = vrot.slane %v2550, %v3176
        %v3178 = vsel %vm2845, %v3177, %v3173
        %v3179 = vlaneseq
        %v3180 = vshrl.u32 %v3179, 7
        %v3181 = vsub.s32 %v2847, %v3180
        %v3182 = vrot.slane %v2552, %v3181
        %v3183 = vsel %vm2852, %v3182, %v3178
        %v3184 = vlaneseq
        %v3185 = vshrl.u32 %v3184, 7
        %v3186 = vsub.s32 %v2854, %v3185
        %v3187 = vrot.slane %v2554, %v3186
        %v3188 = vsel %vm2859, %v3187, %v3183
        %v3189 = vlaneseq
        %v3190 = vshrl.u32 %v3189, 7
        %v3191 = vsub.s32 %v2861, %v3190
        %v3192 = vrot.slane %v2556, %v3191
        %v3193 = vsel %vm2866, %v3192, %v3188
        %v3194 = vlaneseq
        %v3195 = vshrl.u32 %v3194, 7
        %v3196 = vsub.s32 %v2868, %v3195
        %v3197 = vrot.slane %v2558, %v3196
        %v3198 = vsel %vm2873, %v3197, %v3193
        %v3199 = vlaneseq
        %v3200 = vshrl.u32 %v3199, 7
        %v3201 = vsub.s32 %v2875, %v3200
        %v3202 = vrot.slane %v2560, %v3201
        %v3203 = vsel %vm2880, %v3202, %v3198
        %v3204 = vlaneseq
        %v3205 = vshrl.u32 %v3204, 7
        %v3206 = vsub.s32 %v2882, %v3205
        %v3207 = vrot.slane %v2562, %v3206
        %v3208 = vsel %vm2887, %v3207, %v3203
        %v3209 = vlaneseq
        %v3210 = vshrl.u32 %v3209, 7
        %v3211 = vsub.s32 %v2889, %v3210
        %v3212 = vrot.slane %v2564, %v3211
        %v3213 = vsel %vm2894, %v3212, %v3208
        %v3214 = vlaneseq
        %v3215 = vshrl.u32 %v3214, 7
        %v3216 = vsub.s32 %v2896, %v3215
        %v3217 = vrot.slane %v2566, %v3216
        %v3218 = vsel %vm2901, %v3217, %v3213
        %v3219 = vlaneseq
        %v3220 = vshrl.u32 %v3219, 7
        %v3221 = vsub.s32 %v2793, %v3220
        %v3222 = vrot.slane %v2568, %v3221
        %v3223 = vlaneseq
        %v3224 = vshrl.u32 %v3223, 7
        %v3225 = vsub.s32 %v2798, %v3224
        %v3226 = vrot.slane %v2570, %v3225
        %v3227 = vsel %vm2803, %v3226, %v3222
        %v3228 = vlaneseq
        %v3229 = vshrl.u32 %v3228, 7
        %v3230 = vsub.s32 %v2805, %v3229
        %v3231 = vrot.slane %v2572, %v3230
        %v3232 = vsel %vm2810, %v3231, %v3227
        %v3233 = vlaneseq
        %v3234 = vshrl.u32 %v3233, 7
        %v3235 = vsub.s32 %v2812, %v3234
        %v3236 = vrot.slane %v2574, %v3235
        %v3237 = vsel %vm2817, %v3236, %v3232
        %v3238 = vlaneseq
        %v3239 = vshrl.u32 %v3238, 7
        %v3240 = vsub.s32 %v2819, %v3239
        %v3241 = vrot.slane %v2576, %v3240
        %v3242 = vsel %vm2824, %v3241, %v3237
        %v3243 = vlaneseq
        %v3244 = vshrl.u32 %v3243, 7
        %v3245 = vsub.s32 %v2826, %v3244
        %v3246 = vrot.slane %v2578, %v3245
        %v3247 = vsel %vm2831, %v3246, %v3242
        %v3248 = vlaneseq
        %v3249 = vshrl.u32 %v3248, 7
        %v3250 = vsub.s32 %v2833, %v3249
        %v3251 = vrot.slane %v2580, %v3250
        %v3252 = vsel %vm2838, %v3251, %v3247
        %v3253 = vlaneseq
        %v3254 = vshrl.u32 %v3253, 7
        %v3255 = vsub.s32 %v2840, %v3254
        %v3256 = vrot.slane %v2582, %v3255
        %v3257 = vsel %vm2845, %v3256, %v3252
        %v3258 = vlaneseq
        %v3259 = vshrl.u32 %v3258, 7
        %v3260 = vsub.s32 %v2847, %v3259
        %v3261 = vrot.slane %v2584, %v3260
        %v3262 = vsel %vm2852, %v3261, %v3257
        %v3263 = vlaneseq
        %v3264 = vshrl.u32 %v3263, 7
        %v3265 = vsub.s32 %v2854, %v3264
        %v3266 = vrot.slane %v2586, %v3265
        %v3267 = vsel %vm2859, %v3266, %v3262
        %v3268 = vlaneseq
        %v3269 = vshrl.u32 %v3268, 7
        %v3270 = vsub.s32 %v2861, %v3269
        %v3271 = vrot.slane %v2588, %v3270
        %v3272 = vsel %vm2866, %v3271, %v3267
        %v3273 = vlaneseq
        %v3274 = vshrl.u32 %v3273, 7
        %v3275 = vsub.s32 %v2868, %v3274
        %v3276 = vrot.slane %v2590, %v3275
        %v3277 = vsel %vm2873, %v3276, %v3272
        %v3278 = vlaneseq
        %v3279 = vshrl.u32 %v3278, 7
        %v3280 = vsub.s32 %v2875, %v3279
        %v3281 = vrot.slane %v2592, %v3280
        %v3282 = vsel %vm2880, %v3281, %v3277
        %v3283 = vlaneseq
        %v3284 = vshrl.u32 %v3283, 7
        %v3285 = vsub.s32 %v2882, %v3284
        %v3286 = vrot.slane %v2594, %v3285
        %v3287 = vsel %vm2887, %v3286, %v3282
        %v3288 = vlaneseq
        %v3289 = vshrl.u32 %v3288, 7
        %v3290 = vsub.s32 %v2889, %v3289
        %v3291 = vrot.slane %v2596, %v3290
        %v3292 = vsel %vm2894, %v3291, %v3287
        %v3293 = vlaneseq
        %v3294 = vshrl.u32 %v3293, 7
        %v3295 = vsub.s32 %v2896, %v3294
        %v3296 = vrot.slane %v2598, %v3295
        %v3297 = vsel %vm2901, %v3296, %v3292
        %v3298 = vlaneseq
        %v3299 = vshrl.u32 %v3298, 7
        %v3300 = vsub.s32 %v2793, %v3299
        %v3301 = vrot.slane %v2600, %v3300
        %v3302 = vlaneseq
        %v3303 = vshrl.u32 %v3302, 7
        %v3304 = vsub.s32 %v2798, %v3303
        %v3305 = vrot.slane %v2602, %v3304
        %v3306 = vsel %vm2803, %v3305, %v3301
        %v3307 = vlaneseq
        %v3308 = vshrl.u32 %v3307, 7
        %v3309 = vsub.s32 %v2805, %v3308
        %v3310 = vrot.slane %v2604, %v3309
        %v3311 = vsel %vm2810, %v3310, %v3306
        %v3312 = vlaneseq
        %v3313 = vshrl.u32 %v3312, 7
        %v3314 = vsub.s32 %v2812, %v3313
        %v3315 = vrot.slane %v2606, %v3314
        %v3316 = vsel %vm2817, %v3315, %v3311
        %v3317 = vlaneseq
        %v3318 = vshrl.u32 %v3317, 7
        %v3319 = vsub.s32 %v2819, %v3318
        %v3320 = vrot.slane %v2608, %v3319
        %v3321 = vsel %vm2824, %v3320, %v3316
        %v3322 = vlaneseq
        %v3323 = vshrl.u32 %v3322, 7
        %v3324 = vsub.s32 %v2826, %v3323
        %v3325 = vrot.slane %v2610, %v3324
        %v3326 = vsel %vm2831, %v3325, %v3321
        %v3327 = vlaneseq
        %v3328 = vshrl.u32 %v3327, 7
        %v3329 = vsub.s32 %v2833, %v3328
        %v3330 = vrot.slane %v2612, %v3329
        %v3331 = vsel %vm2838, %v3330, %v3326
        %v3332 = vlaneseq
        %v3333 = vshrl.u32 %v3332, 7
        %v3334 = vsub.s32 %v2840, %v3333
        %v3335 = vrot.slane %v2614, %v3334
        %v3336 = vsel %vm2845, %v3335, %v3331
        %v3337 = vlaneseq
        %v3338 = vshrl.u32 %v3337, 7
        %v3339 = vsub.s32 %v2847, %v3338
        %v3340 = vrot.slane %v2616, %v3339
        %v3341 = vsel %vm2852, %v3340, %v3336
        %v3342 = vlaneseq
        %v3343 = vshrl.u32 %v3342, 7
        %v3344 = vsub.s32 %v2854, %v3343
        %v3345 = vrot.slane %v2618, %v3344
        %v3346 = vsel %vm2859, %v3345, %v3341
        %v3347 = vlaneseq
        %v3348 = vshrl.u32 %v3347, 7
        %v3349 = vsub.s32 %v2861, %v3348
        %v3350 = vrot.slane %v2620, %v3349
        %v3351 = vsel %vm2866, %v3350, %v3346
        %v3352 = vlaneseq
        %v3353 = vshrl.u32 %v3352, 7
        %v3354 = vsub.s32 %v2868, %v3353
        %v3355 = vrot.slane %v2622, %v3354
        %v3356 = vsel %vm2873, %v3355, %v3351
        %v3357 = vlaneseq
        %v3358 = vshrl.u32 %v3357, 7
        %v3359 = vsub.s32 %v2875, %v3358
        %v3360 = vrot.slane %v2624, %v3359
        %v3361 = vsel %vm2880, %v3360, %v3356
        %v3362 = vlaneseq
        %v3363 = vshrl.u32 %v3362, 7
        %v3364 = vsub.s32 %v2882, %v3363
        %v3365 = vrot.slane %v2626, %v3364
        %v3366 = vsel %vm2887, %v3365, %v3361
        %v3367 = vlaneseq
        %v3368 = vshrl.u32 %v3367, 7
        %v3369 = vsub.s32 %v2889, %v3368
        %v3370 = vrot.slane %v2628, %v3369
        %v3371 = vsel %vm2894, %v3370, %v3366
        %v3372 = vlaneseq
        %v3373 = vshrl.u32 %v3372, 7
        %v3374 = vsub.s32 %v2896, %v3373
        %v3375 = vrot.slane %v2630, %v3374
        %v3376 = vsel %vm2901, %v3375, %v3371
        %v3377 = vlaneseq
        %v3378 = vshrl.u32 %v3377, 7
        %v3379 = vsub.s32 %v2793, %v3378
        %v3380 = vrot.slane %v2632, %v3379
        %v3381 = vlaneseq
        %v3382 = vshrl.u32 %v3381, 7
        %v3383 = vsub.s32 %v2798, %v3382
        %v3384 = vrot.slane %v2634, %v3383
        %v3385 = vsel %vm2803, %v3384, %v3380
        %v3386 = vlaneseq
        %v3387 = vshrl.u32 %v3386, 7
        %v3388 = vsub.s32 %v2805, %v3387
        %v3389 = vrot.slane %v2636, %v3388
        %v3390 = vsel %vm2810, %v3389, %v3385
        %v3391 = vlaneseq
        %v3392 = vshrl.u32 %v3391, 7
        %v3393 = vsub.s32 %v2812, %v3392
        %v3394 = vrot.slane %v2638, %v3393
        %v3395 = vsel %vm2817, %v3394, %v3390
        %v3396 = vlaneseq
        %v3397 = vshrl.u32 %v3396, 7
        %v3398 = vsub.s32 %v2819, %v3397
        %v3399 = vrot.slane %v2640, %v3398
        %v3400 = vsel %vm2824, %v3399, %v3395
        %v3401 = vlaneseq
        %v3402 = vshrl.u32 %v3401, 7
        %v3403 = vsub.s32 %v2826, %v3402
        %v3404 = vrot.slane %v2642, %v3403
        %v3405 = vsel %vm2831, %v3404, %v3400
        %v3406 = vlaneseq
        %v3407 = vshrl.u32 %v3406, 7
        %v3408 = vsub.s32 %v2833, %v3407
        %v3409 = vrot.slane %v2644, %v3408
        %v3410 = vsel %vm2838, %v3409, %v3405
        %v3411 = vlaneseq
        %v3412 = vshrl.u32 %v3411, 7
        %v3413 = vsub.s32 %v2840, %v3412
        %v3414 = vrot.slane %v2646, %v3413
        %v3415 = vsel %vm2845, %v3414, %v3410
        %v3416 = vlaneseq
        %v3417 = vshrl.u32 %v3416, 7
        %v3418 = vsub.s32 %v2847, %v3417
        %v3419 = vrot.slane %v2648, %v3418
        %v3420 = vsel %vm2852, %v3419, %v3415
        %v3421 = vlaneseq
        %v3422 = vshrl.u32 %v3421, 7
        %v3423 = vsub.s32 %v2854, %v3422
        %v3424 = vrot.slane %v2650, %v3423
        %v3425 = vsel %vm2859, %v3424, %v3420
        %v3426 = vlaneseq
        %v3427 = vshrl.u32 %v3426, 7
        %v3428 = vsub.s32 %v2861, %v3427
        %v3429 = vrot.slane %v2652, %v3428
        %v3430 = vsel %vm2866, %v3429, %v3425
        %v3431 = vlaneseq
        %v3432 = vshrl.u32 %v3431, 7
        %v3433 = vsub.s32 %v2868, %v3432
        %v3434 = vrot.slane %v2654, %v3433
        %v3435 = vsel %vm2873, %v3434, %v3430
        %v3436 = vlaneseq
        %v3437 = vshrl.u32 %v3436, 7
        %v3438 = vsub.s32 %v2875, %v3437
        %v3439 = vrot.slane %v2656, %v3438
        %v3440 = vsel %vm2880, %v3439, %v3435
        %v3441 = vlaneseq
        %v3442 = vshrl.u32 %v3441, 7
        %v3443 = vsub.s32 %v2882, %v3442
        %v3444 = vrot.slane %v2658, %v3443
        %v3445 = vsel %vm2887, %v3444, %v3440
        %v3446 = vlaneseq
        %v3447 = vshrl.u32 %v3446, 7
        %v3448 = vsub.s32 %v2889, %v3447
        %v3449 = vrot.slane %v2660, %v3448
        %v3450 = vsel %vm2894, %v3449, %v3445
        %v3451 = vlaneseq
        %v3452 = vshrl.u32 %v3451, 7
        %v3453 = vsub.s32 %v2896, %v3452
        %v3454 = vrot.slane %v2662, %v3453
        %v3455 = vsel %vm2901, %v3454, %v3450
        %vm3456 = vcmask 1041409
        %v3457 = vsel %vm3456, %v2981, %v2902
        %vm3458 = vcmask 1042434
        %v3459 = vsel %vm3458, %v3060, %v3457
        %vm3460 = vcmask 1043459
        %v3461 = vsel %vm3460, %v3139, %v3459
        %vm3462 = vcmask 1044484
        %v3463 = vsel %vm3462, %v3218, %v3461
        %vm3464 = vcmask 1045509
        %v3465 = vsel %vm3464, %v3297, %v3463
        %vm3466 = vcmask 1046534
        %v3467 = vsel %vm3466, %v3376, %v3465
        %vm3468 = vcmask 1047559
        %v3469 = vsel %vm3468, %v3455, %v3467
        %3471 = vmax.xlane.f32.xlu0 %v3469
        %v3472 = vpop.xlane.xlu0 %3471
        %v3473 = vmax.f32 %v2663, %v3472
        %v3474 = vsub.f32 %v2663, %v3473
        %v3475 = vmul.f32 %v3474, 1.442695
        %v3476 = vpow.pop %v3475
        %3478 = vset.pattern.permute.xlu0 0
        %3479 = vperm.xlu0 %3478, %v3473
        %v3480 = vpop.permute.xlu0 %3479
        %v3481 = vlaneseq
        %v3482 = vshrl.u32 %v3481, 7
        %v3483 = vsub.s32 0, %v3482
        %v3484 = vrot.slane %v3480, %v3483
        %v3485 = vlaneseq
        %v3486 = vshrl.u32 %v3485, 7
        %v3487 = vsub.s32 1, %v3486
        %v3488 = vrot.slane %v3480, %v3487
        %v3489 = vlaneseq
        %v3490 = vshrl.u32 %v3489, 7
        %v3491 = vsub.s32 2, %v3490
        %v3492 = vrot.slane %v3480, %v3491
        %v3493 = vlaneseq
        %v3494 = vshrl.u32 %v3493, 7
        %v3495 = vsub.s32 3, %v3494
        %v3496 = vrot.slane %v3480, %v3495
        %v3497 = vlaneseq
        %v3498 = vshrl.u32 %v3497, 7
        %v3499 = vsub.s32 4, %v3498
        %v3500 = vrot.slane %v3480, %v3499
        %v3501 = vlaneseq
        %v3502 = vshrl.u32 %v3501, 7
        %v3503 = vsub.s32 5, %v3502
        %v3504 = vrot.slane %v3480, %v3503
        %v3505 = vlaneseq
        %v3506 = vshrl.u32 %v3505, 7
        %v3507 = vsub.s32 6, %v3506
        %v3508 = vrot.slane %v3480, %v3507
        %v3509 = vlaneseq
        %v3510 = vshrl.u32 %v3509, 7
        %v3511 = vsub.s32 7, %v3510
        %v3512 = vrot.slane %v3480, %v3511
        %v3521 = vsub.f32 %v2408, %v3484
        %v3522 = vsub.f32 %v2410, %v3484
        %v3523 = vsub.f32 %v2412, %v3484
        %v3524 = vsub.f32 %v2414, %v3484
        %v3525 = vsub.f32 %v2416, %v3484
        %v3526 = vsub.f32 %v2418, %v3484
        %v3527 = vsub.f32 %v2420, %v3484
        %v3528 = vsub.f32 %v2422, %v3484
        %v3529 = vsub.f32 %v2424, %v3484
        %v3530 = vsub.f32 %v2426, %v3484
        %v3531 = vsub.f32 %v2428, %v3484
        %v3532 = vsub.f32 %v2430, %v3484
        %v3533 = vsub.f32 %v2432, %v3484
        %v3534 = vsub.f32 %v2434, %v3484
        %v3535 = vsub.f32 %v2436, %v3484
        %v3536 = vsub.f32 %v2438, %v3484
        %v3537 = vsub.f32 %v2440, %v3488
        %v3538 = vsub.f32 %v2442, %v3488
        %v3539 = vsub.f32 %v2444, %v3488
        %v3540 = vsub.f32 %v2446, %v3488
        %v3541 = vsub.f32 %v2448, %v3488
        %v3542 = vsub.f32 %v2450, %v3488
        %v3543 = vsub.f32 %v2452, %v3488
        %v3544 = vsub.f32 %v2454, %v3488
        %v3545 = vsub.f32 %v2456, %v3488
        %v3546 = vsub.f32 %v2458, %v3488
        %v3547 = vsub.f32 %v2460, %v3488
        %v3548 = vsub.f32 %v2462, %v3488
        %v3549 = vsub.f32 %v2464, %v3488
        %v3550 = vsub.f32 %v2466, %v3488
        %v3551 = vsub.f32 %v2468, %v3488
        %v3552 = vsub.f32 %v2470, %v3488
        %v3553 = vsub.f32 %v2472, %v3492
        %v3554 = vsub.f32 %v2474, %v3492
        %v3555 = vsub.f32 %v2476, %v3492
        %v3556 = vsub.f32 %v2478, %v3492
        %v3557 = vsub.f32 %v2480, %v3492
        %v3558 = vsub.f32 %v2482, %v3492
        %v3559 = vsub.f32 %v2484, %v3492
        %v3560 = vsub.f32 %v2486, %v3492
        %v3561 = vsub.f32 %v2488, %v3492
        %v3562 = vsub.f32 %v2490, %v3492
        %v3563 = vsub.f32 %v2492, %v3492
        %v3564 = vsub.f32 %v2494, %v3492
        %v3565 = vsub.f32 %v2496, %v3492
        %v3566 = vsub.f32 %v2498, %v3492
        %v3567 = vsub.f32 %v2500, %v3492
        %v3568 = vsub.f32 %v2502, %v3492
        %v3569 = vsub.f32 %v2504, %v3496
        %v3570 = vsub.f32 %v2506, %v3496
        %v3571 = vsub.f32 %v2508, %v3496
        %v3572 = vsub.f32 %v2510, %v3496
        %v3573 = vsub.f32 %v2512, %v3496
        %v3574 = vsub.f32 %v2514, %v3496
        %v3575 = vsub.f32 %v2516, %v3496
        %v3576 = vsub.f32 %v2518, %v3496
        %v3577 = vsub.f32 %v2520, %v3496
        %v3578 = vsub.f32 %v2522, %v3496
        %v3579 = vsub.f32 %v2524, %v3496
        %v3580 = vsub.f32 %v2526, %v3496
        %v3581 = vsub.f32 %v2528, %v3496
        %v3582 = vsub.f32 %v2530, %v3496
        %v3583 = vsub.f32 %v2532, %v3496
        %v3584 = vsub.f32 %v2534, %v3496
        %v3585 = vsub.f32 %v2536, %v3500
        %v3586 = vsub.f32 %v2538, %v3500
        %v3587 = vsub.f32 %v2540, %v3500
        %v3588 = vsub.f32 %v2542, %v3500
        %v3589 = vsub.f32 %v2544, %v3500
        %v3590 = vsub.f32 %v2546, %v3500
        %v3591 = vsub.f32 %v2548, %v3500
        %v3592 = vsub.f32 %v2550, %v3500
        %v3593 = vsub.f32 %v2552, %v3500
        %v3594 = vsub.f32 %v2554, %v3500
        %v3595 = vsub.f32 %v2556, %v3500
        %v3596 = vsub.f32 %v2558, %v3500
        %v3597 = vsub.f32 %v2560, %v3500
        %v3598 = vsub.f32 %v2562, %v3500
        %v3599 = vsub.f32 %v2564, %v3500
        %v3600 = vsub.f32 %v2566, %v3500
        %v3601 = vsub.f32 %v2568, %v3504
        %v3602 = vsub.f32 %v2570, %v3504
        %v3603 = vsub.f32 %v2572, %v3504
        %v3604 = vsub.f32 %v2574, %v3504
        %v3605 = vsub.f32 %v2576, %v3504
        %v3606 = vsub.f32 %v2578, %v3504
        %v3607 = vsub.f32 %v2580, %v3504
        %v3608 = vsub.f32 %v2582, %v3504
        %v3609 = vsub.f32 %v2584, %v3504
        %v3610 = vsub.f32 %v2586, %v3504
        %v3611 = vsub.f32 %v2588, %v3504
        %v3612 = vsub.f32 %v2590, %v3504
        %v3613 = vsub.f32 %v2592, %v3504
        %v3614 = vsub.f32 %v2594, %v3504
        %v3615 = vsub.f32 %v2596, %v3504
        %v3616 = vsub.f32 %v2598, %v3504
        %v3617 = vsub.f32 %v2600, %v3508
        %v3618 = vsub.f32 %v2602, %v3508
        %v3619 = vsub.f32 %v2604, %v3508
        %v3620 = vsub.f32 %v2606, %v3508
        %v3621 = vsub.f32 %v2608, %v3508
        %v3622 = vsub.f32 %v2610, %v3508
        %v3623 = vsub.f32 %v2612, %v3508
        %v3624 = vsub.f32 %v2614, %v3508
        %v3625 = vsub.f32 %v2616, %v3508
        %v3626 = vsub.f32 %v2618, %v3508
        %v3627 = vsub.f32 %v2620, %v3508
        %v3628 = vsub.f32 %v2622, %v3508
        %v3629 = vsub.f32 %v2624, %v3508
        %v3630 = vsub.f32 %v2626, %v3508
        %v3631 = vsub.f32 %v2628, %v3508
        %v3632 = vsub.f32 %v2630, %v3508
        %v3633 = vsub.f32 %v2632, %v3512
        %v3634 = vsub.f32 %v2634, %v3512
        %v3635 = vsub.f32 %v2636, %v3512
        %v3636 = vsub.f32 %v2638, %v3512
        %v3637 = vsub.f32 %v2640, %v3512
        %v3638 = vsub.f32 %v2642, %v3512
        %v3639 = vsub.f32 %v2644, %v3512
        %v3640 = vsub.f32 %v2646, %v3512
        %v3641 = vsub.f32 %v2648, %v3512
        %v3642 = vsub.f32 %v2650, %v3512
        %v3643 = vsub.f32 %v2652, %v3512
        %v3644 = vsub.f32 %v2654, %v3512
        %v3645 = vsub.f32 %v2656, %v3512
        %v3646 = vsub.f32 %v2658, %v3512
        %v3647 = vsub.f32 %v2660, %v3512
        %v3648 = vsub.f32 %v2662, %v3512
        %v3649 = vmul.f32 %v3521, 1.442695
        %v3650 = vpow.pop %v3649
        %v3651 = vmul.f32 %v3522, 1.442695
        %v3652 = vpow.pop %v3651
        %v3653 = vmul.f32 %v3523, 1.442695
        %v3654 = vpow.pop %v3653
        %v3655 = vmul.f32 %v3524, 1.442695
        %v3656 = vpow.pop %v3655
        %v3657 = vmul.f32 %v3525, 1.442695
        %v3658 = vpow.pop %v3657
        %v3659 = vmul.f32 %v3526, 1.442695
        %v3660 = vpow.pop %v3659
        %v3661 = vmul.f32 %v3527, 1.442695
        %v3662 = vpow.pop %v3661
        %v3663 = vmul.f32 %v3528, 1.442695
        %v3664 = vpow.pop %v3663
        %v3665 = vmul.f32 %v3529, 1.442695
        %v3666 = vpow.pop %v3665
        %v3667 = vmul.f32 %v3530, 1.442695
        %v3668 = vpow.pop %v3667
        %v3669 = vmul.f32 %v3531, 1.442695
        %v3670 = vpow.pop %v3669
        %v3671 = vmul.f32 %v3532, 1.442695
        %v3672 = vpow.pop %v3671
        %v3673 = vmul.f32 %v3533, 1.442695
        %v3674 = vpow.pop %v3673
        %v3675 = vmul.f32 %v3534, 1.442695
        %v3676 = vpow.pop %v3675
        %v3677 = vmul.f32 %v3535, 1.442695
        %v3678 = vpow.pop %v3677
        %v3679 = vmul.f32 %v3536, 1.442695
        %v3680 = vpow.pop %v3679
        %v3681 = vmul.f32 %v3537, 1.442695
        %v3682 = vpow.pop %v3681
        %v3683 = vmul.f32 %v3538, 1.442695
        %v3684 = vpow.pop %v3683
        %v3685 = vmul.f32 %v3539, 1.442695
        %v3686 = vpow.pop %v3685
        %v3687 = vmul.f32 %v3540, 1.442695
        %v3688 = vpow.pop %v3687
        %v3689 = vmul.f32 %v3541, 1.442695
        %v3690 = vpow.pop %v3689
        %v3691 = vmul.f32 %v3542, 1.442695
        %v3692 = vpow.pop %v3691
        %v3693 = vmul.f32 %v3543, 1.442695
        %v3694 = vpow.pop %v3693
        %v3695 = vmul.f32 %v3544, 1.442695
        %v3696 = vpow.pop %v3695
        %v3697 = vmul.f32 %v3545, 1.442695
        %v3698 = vpow.pop %v3697
        %v3699 = vmul.f32 %v3546, 1.442695
        %v3700 = vpow.pop %v3699
        %v3701 = vmul.f32 %v3547, 1.442695
        %v3702 = vpow.pop %v3701
        %v3703 = vmul.f32 %v3548, 1.442695
        %v3704 = vpow.pop %v3703
        %v3705 = vmul.f32 %v3549, 1.442695
        %v3706 = vpow.pop %v3705
        %v3707 = vmul.f32 %v3550, 1.442695
        %v3708 = vpow.pop %v3707
        %v3709 = vmul.f32 %v3551, 1.442695
        %v3710 = vpow.pop %v3709
        %v3711 = vmul.f32 %v3552, 1.442695
        %v3712 = vpow.pop %v3711
        %v3713 = vmul.f32 %v3553, 1.442695
        %v3714 = vpow.pop %v3713
        %v3715 = vmul.f32 %v3554, 1.442695
        %v3716 = vpow.pop %v3715
        %v3717 = vmul.f32 %v3555, 1.442695
        %v3718 = vpow.pop %v3717
        %v3719 = vmul.f32 %v3556, 1.442695
        %v3720 = vpow.pop %v3719
        %v3721 = vmul.f32 %v3557, 1.442695
        %v3722 = vpow.pop %v3721
        %v3723 = vmul.f32 %v3558, 1.442695
        %v3724 = vpow.pop %v3723
        %v3725 = vmul.f32 %v3559, 1.442695
        %v3726 = vpow.pop %v3725
        %v3727 = vmul.f32 %v3560, 1.442695
        %v3728 = vpow.pop %v3727
        %v3729 = vmul.f32 %v3561, 1.442695
        %v3730 = vpow.pop %v3729
        %v3731 = vmul.f32 %v3562, 1.442695
        %v3732 = vpow.pop %v3731
        %v3733 = vmul.f32 %v3563, 1.442695
        %v3734 = vpow.pop %v3733
        %v3735 = vmul.f32 %v3564, 1.442695
        %v3736 = vpow.pop %v3735
        %v3737 = vmul.f32 %v3565, 1.442695
        %v3738 = vpow.pop %v3737
        %v3739 = vmul.f32 %v3566, 1.442695
        %v3740 = vpow.pop %v3739
        %v3741 = vmul.f32 %v3567, 1.442695
        %v3742 = vpow.pop %v3741
        %v3743 = vmul.f32 %v3568, 1.442695
        %v3744 = vpow.pop %v3743
        %v3745 = vmul.f32 %v3569, 1.442695
        %v3746 = vpow.pop %v3745
        %v3747 = vmul.f32 %v3570, 1.442695
        %v3748 = vpow.pop %v3747
        %v3749 = vmul.f32 %v3571, 1.442695
        %v3750 = vpow.pop %v3749
        %v3751 = vmul.f32 %v3572, 1.442695
        %v3752 = vpow.pop %v3751
        %v3753 = vmul.f32 %v3573, 1.442695
        %v3754 = vpow.pop %v3753
        %v3755 = vmul.f32 %v3574, 1.442695
        %v3756 = vpow.pop %v3755
        %v3757 = vmul.f32 %v3575, 1.442695
        %v3758 = vpow.pop %v3757
        %v3759 = vmul.f32 %v3576, 1.442695
        %v3760 = vpow.pop %v3759
        %v3761 = vmul.f32 %v3577, 1.442695
        %v3762 = vpow.pop %v3761
        %v3763 = vmul.f32 %v3578, 1.442695
        %v3764 = vpow.pop %v3763
        %v3765 = vmul.f32 %v3579, 1.442695
        %v3766 = vpow.pop %v3765
        %v3767 = vmul.f32 %v3580, 1.442695
        %v3768 = vpow.pop %v3767
        %v3769 = vmul.f32 %v3581, 1.442695
        %v3770 = vpow.pop %v3769
        %v3771 = vmul.f32 %v3582, 1.442695
        %v3772 = vpow.pop %v3771
        %v3773 = vmul.f32 %v3583, 1.442695
        %v3774 = vpow.pop %v3773
        %v3775 = vmul.f32 %v3584, 1.442695
        %v3776 = vpow.pop %v3775
        %v3777 = vmul.f32 %v3585, 1.442695
        %v3778 = vpow.pop %v3777
        %v3779 = vmul.f32 %v3586, 1.442695
        %v3780 = vpow.pop %v3779
        %v3781 = vmul.f32 %v3587, 1.442695
        %v3782 = vpow.pop %v3781
        %v3783 = vmul.f32 %v3588, 1.442695
        %v3784 = vpow.pop %v3783
        %v3785 = vmul.f32 %v3589, 1.442695
        %v3786 = vpow.pop %v3785
        %v3787 = vmul.f32 %v3590, 1.442695
        %v3788 = vpow.pop %v3787
        %v3789 = vmul.f32 %v3591, 1.442695
        %v3790 = vpow.pop %v3789
        %v3791 = vmul.f32 %v3592, 1.442695
        %v3792 = vpow.pop %v3791
        %v3793 = vmul.f32 %v3593, 1.442695
        %v3794 = vpow.pop %v3793
        %v3795 = vmul.f32 %v3594, 1.442695
        %v3796 = vpow.pop %v3795
        %v3797 = vmul.f32 %v3595, 1.442695
        %v3798 = vpow.pop %v3797
        %v3799 = vmul.f32 %v3596, 1.442695
        %v3800 = vpow.pop %v3799
        %v3801 = vmul.f32 %v3597, 1.442695
        %v3802 = vpow.pop %v3801
        %v3803 = vmul.f32 %v3598, 1.442695
        %v3804 = vpow.pop %v3803
        %v3805 = vmul.f32 %v3599, 1.442695
        %v3806 = vpow.pop %v3805
        %v3807 = vmul.f32 %v3600, 1.442695
        %v3808 = vpow.pop %v3807
        %v3809 = vmul.f32 %v3601, 1.442695
        %v3810 = vpow.pop %v3809
        %v3811 = vmul.f32 %v3602, 1.442695
        %v3812 = vpow.pop %v3811
        %v3813 = vmul.f32 %v3603, 1.442695
        %v3814 = vpow.pop %v3813
        %v3815 = vmul.f32 %v3604, 1.442695
        %v3816 = vpow.pop %v3815
        %v3817 = vmul.f32 %v3605, 1.442695
        %v3818 = vpow.pop %v3817
        %v3819 = vmul.f32 %v3606, 1.442695
        %v3820 = vpow.pop %v3819
        %v3821 = vmul.f32 %v3607, 1.442695
        %v3822 = vpow.pop %v3821
        %v3823 = vmul.f32 %v3608, 1.442695
        %v3824 = vpow.pop %v3823
        %v3825 = vmul.f32 %v3609, 1.442695
        %v3826 = vpow.pop %v3825
        %v3827 = vmul.f32 %v3610, 1.442695
        %v3828 = vpow.pop %v3827
        %v3829 = vmul.f32 %v3611, 1.442695
        %v3830 = vpow.pop %v3829
        %v3831 = vmul.f32 %v3612, 1.442695
        %v3832 = vpow.pop %v3831
        %v3833 = vmul.f32 %v3613, 1.442695
        %v3834 = vpow.pop %v3833
        %v3835 = vmul.f32 %v3614, 1.442695
        %v3836 = vpow.pop %v3835
        %v3837 = vmul.f32 %v3615, 1.442695
        %v3838 = vpow.pop %v3837
        %v3839 = vmul.f32 %v3616, 1.442695
        %v3840 = vpow.pop %v3839
        %v3841 = vmul.f32 %v3617, 1.442695
        %v3842 = vpow.pop %v3841
        %v3843 = vmul.f32 %v3618, 1.442695
        %v3844 = vpow.pop %v3843
        %v3845 = vmul.f32 %v3619, 1.442695
        %v3846 = vpow.pop %v3845
        %v3847 = vmul.f32 %v3620, 1.442695
        %v3848 = vpow.pop %v3847
        %v3849 = vmul.f32 %v3621, 1.442695
        %v3850 = vpow.pop %v3849
        %v3851 = vmul.f32 %v3622, 1.442695
        %v3852 = vpow.pop %v3851
        %v3853 = vmul.f32 %v3623, 1.442695
        %v3854 = vpow.pop %v3853
        %v3855 = vmul.f32 %v3624, 1.442695
        %v3856 = vpow.pop %v3855
        %v3857 = vmul.f32 %v3625, 1.442695
        %v3858 = vpow.pop %v3857
        %v3859 = vmul.f32 %v3626, 1.442695
        %v3860 = vpow.pop %v3859
        %v3861 = vmul.f32 %v3627, 1.442695
        %v3862 = vpow.pop %v3861
        %v3863 = vmul.f32 %v3628, 1.442695
        %v3864 = vpow.pop %v3863
        %v3865 = vmul.f32 %v3629, 1.442695
        %v3866 = vpow.pop %v3865
        %v3867 = vmul.f32 %v3630, 1.442695
        %v3868 = vpow.pop %v3867
        %v3869 = vmul.f32 %v3631, 1.442695
        %v3870 = vpow.pop %v3869
        %v3871 = vmul.f32 %v3632, 1.442695
        %v3872 = vpow.pop %v3871
        %v3873 = vmul.f32 %v3633, 1.442695
        %v3874 = vpow.pop %v3873
        %v3875 = vmul.f32 %v3634, 1.442695
        %v3876 = vpow.pop %v3875
        %v3877 = vmul.f32 %v3635, 1.442695
        %v3878 = vpow.pop %v3877
        %v3879 = vmul.f32 %v3636, 1.442695
        %v3880 = vpow.pop %v3879
        %v3881 = vmul.f32 %v3637, 1.442695
        %v3882 = vpow.pop %v3881
        %v3883 = vmul.f32 %v3638, 1.442695
        %v3884 = vpow.pop %v3883
        %v3885 = vmul.f32 %v3639, 1.442695
        %v3886 = vpow.pop %v3885
        %v3887 = vmul.f32 %v3640, 1.442695
        %v3888 = vpow.pop %v3887
        %v3889 = vmul.f32 %v3641, 1.442695
        %v3890 = vpow.pop %v3889
        %v3891 = vmul.f32 %v3642, 1.442695
        %v3892 = vpow.pop %v3891
        %v3893 = vmul.f32 %v3643, 1.442695
        %v3894 = vpow.pop %v3893
        %v3895 = vmul.f32 %v3644, 1.442695
        %v3896 = vpow.pop %v3895
        %v3897 = vmul.f32 %v3645, 1.442695
        %v3898 = vpow.pop %v3897
        %v3899 = vmul.f32 %v3646, 1.442695
        %v3900 = vpow.pop %v3899
        %v3901 = vmul.f32 %v3647, 1.442695
        %v3902 = vpow.pop %v3901
        %v3903 = vmul.f32 %v3648, 1.442695
        %v3904 = vpow.pop %v3903
        %v3905 = vld [vmem:[#allocation4] sm:$0xff]
        %v3906 = vmul.f32 %v3476, %v3905
        %4035 = vset.pattern.permute.xlu0 0
        %4036 = vperm.xlu0 %4035, %v3650
        %v4037 = vpop.permute.xlu0 %4036
        %4038 = vset.pattern.permute.xlu0 0
        %4039 = vperm.xlu0 %4038, %v3652
        %v4040 = vpop.permute.xlu0 %4039
        %4041 = vset.pattern.permute.xlu0 0
        %4042 = vperm.xlu0 %4041, %v3654
        %v4043 = vpop.permute.xlu0 %4042
        %4044 = vset.pattern.permute.xlu0 0
        %4045 = vperm.xlu0 %4044, %v3656
        %v4046 = vpop.permute.xlu0 %4045
        %4047 = vset.pattern.permute.xlu0 0
        %4048 = vperm.xlu0 %4047, %v3658
        %v4049 = vpop.permute.xlu0 %4048
        %4050 = vset.pattern.permute.xlu0 0
        %4051 = vperm.xlu0 %4050, %v3660
        %v4052 = vpop.permute.xlu0 %4051
        %4053 = vset.pattern.permute.xlu0 0
        %4054 = vperm.xlu0 %4053, %v3662
        %v4055 = vpop.permute.xlu0 %4054
        %4056 = vset.pattern.permute.xlu0 0
        %4057 = vperm.xlu0 %4056, %v3664
        %v4058 = vpop.permute.xlu0 %4057
        %4059 = vset.pattern.permute.xlu0 0
        %4060 = vperm.xlu0 %4059, %v3666
        %v4061 = vpop.permute.xlu0 %4060
        %4062 = vset.pattern.permute.xlu0 0
        %4063 = vperm.xlu0 %4062, %v3668
        %v4064 = vpop.permute.xlu0 %4063
        %4065 = vset.pattern.permute.xlu0 0
        %4066 = vperm.xlu0 %4065, %v3670
        %v4067 = vpop.permute.xlu0 %4066
        %4068 = vset.pattern.permute.xlu0 0
        %4069 = vperm.xlu0 %4068, %v3672
        %v4070 = vpop.permute.xlu0 %4069
        %4071 = vset.pattern.permute.xlu0 0
        %4072 = vperm.xlu0 %4071, %v3674
        %v4073 = vpop.permute.xlu0 %4072
        %4074 = vset.pattern.permute.xlu0 0
        %4075 = vperm.xlu0 %4074, %v3676
        %v4076 = vpop.permute.xlu0 %4075
        %4077 = vset.pattern.permute.xlu0 0
        %4078 = vperm.xlu0 %4077, %v3678
        %v4079 = vpop.permute.xlu0 %4078
        %4080 = vset.pattern.permute.xlu0 0
        %4081 = vperm.xlu0 %4080, %v3680
        %v4082 = vpop.permute.xlu0 %4081
        %4083 = vset.pattern.permute.xlu0 0
        %4084 = vperm.xlu0 %4083, %v3682
        %v4085 = vpop.permute.xlu0 %4084
        %4086 = vset.pattern.permute.xlu0 0
        %4087 = vperm.xlu0 %4086, %v3684
        %v4088 = vpop.permute.xlu0 %4087
        %4089 = vset.pattern.permute.xlu0 0
        %4090 = vperm.xlu0 %4089, %v3686
        %v4091 = vpop.permute.xlu0 %4090
        %4092 = vset.pattern.permute.xlu0 0
        %4093 = vperm.xlu0 %4092, %v3688
        %v4094 = vpop.permute.xlu0 %4093
        %4095 = vset.pattern.permute.xlu0 0
        %4096 = vperm.xlu0 %4095, %v3690
        %v4097 = vpop.permute.xlu0 %4096
        %4098 = vset.pattern.permute.xlu0 0
        %4099 = vperm.xlu0 %4098, %v3692
        %v4100 = vpop.permute.xlu0 %4099
        %4101 = vset.pattern.permute.xlu0 0
        %4102 = vperm.xlu0 %4101, %v3694
        %v4103 = vpop.permute.xlu0 %4102
        %4104 = vset.pattern.permute.xlu0 0
        %4105 = vperm.xlu0 %4104, %v3696
        %v4106 = vpop.permute.xlu0 %4105
        %4107 = vset.pattern.permute.xlu0 0
        %4108 = vperm.xlu0 %4107, %v3698
        %v4109 = vpop.permute.xlu0 %4108
        %4110 = vset.pattern.permute.xlu0 0
        %4111 = vperm.xlu0 %4110, %v3700
        %v4112 = vpop.permute.xlu0 %4111
        %4113 = vset.pattern.permute.xlu0 0
        %4114 = vperm.xlu0 %4113, %v3702
        %v4115 = vpop.permute.xlu0 %4114
        %4116 = vset.pattern.permute.xlu0 0
        %4117 = vperm.xlu0 %4116, %v3704
        %v4118 = vpop.permute.xlu0 %4117
        %4119 = vset.pattern.permute.xlu0 0
        %4120 = vperm.xlu0 %4119, %v3706
        %v4121 = vpop.permute.xlu0 %4120
        %4122 = vset.pattern.permute.xlu0 0
        %4123 = vperm.xlu0 %4122, %v3708
        %v4124 = vpop.permute.xlu0 %4123
        %4125 = vset.pattern.permute.xlu0 0
        %4126 = vperm.xlu0 %4125, %v3710
        %v4127 = vpop.permute.xlu0 %4126
        %4128 = vset.pattern.permute.xlu0 0
        %4129 = vperm.xlu0 %4128, %v3712
        %v4130 = vpop.permute.xlu0 %4129
        %4131 = vset.pattern.permute.xlu0 0
        %4132 = vperm.xlu0 %4131, %v3714
        %v4133 = vpop.permute.xlu0 %4132
        %4134 = vset.pattern.permute.xlu0 0
        %4135 = vperm.xlu0 %4134, %v3716
        %v4136 = vpop.permute.xlu0 %4135
        %4137 = vset.pattern.permute.xlu0 0
        %4138 = vperm.xlu0 %4137, %v3718
        %v4139 = vpop.permute.xlu0 %4138
        %4140 = vset.pattern.permute.xlu0 0
        %4141 = vperm.xlu0 %4140, %v3720
        %v4142 = vpop.permute.xlu0 %4141
        %4143 = vset.pattern.permute.xlu0 0
        %4144 = vperm.xlu0 %4143, %v3722
        %v4145 = vpop.permute.xlu0 %4144
        %4146 = vset.pattern.permute.xlu0 0
        %4147 = vperm.xlu0 %4146, %v3724
        %v4148 = vpop.permute.xlu0 %4147
        %4149 = vset.pattern.permute.xlu0 0
        %4150 = vperm.xlu0 %4149, %v3726
        %v4151 = vpop.permute.xlu0 %4150
        %4152 = vset.pattern.permute.xlu0 0
        %4153 = vperm.xlu0 %4152, %v3728
        %v4154 = vpop.permute.xlu0 %4153
        %4155 = vset.pattern.permute.xlu0 0
        %4156 = vperm.xlu0 %4155, %v3730
        %v4157 = vpop.permute.xlu0 %4156
        %4158 = vset.pattern.permute.xlu0 0
        %4159 = vperm.xlu0 %4158, %v3732
        %v4160 = vpop.permute.xlu0 %4159
        %4161 = vset.pattern.permute.xlu0 0
        %4162 = vperm.xlu0 %4161, %v3734
        %v4163 = vpop.permute.xlu0 %4162
        %4164 = vset.pattern.permute.xlu0 0
        %4165 = vperm.xlu0 %4164, %v3736
        %v4166 = vpop.permute.xlu0 %4165
        %4167 = vset.pattern.permute.xlu0 0
        %4168 = vperm.xlu0 %4167, %v3738
        %v4169 = vpop.permute.xlu0 %4168
        %4170 = vset.pattern.permute.xlu0 0
        %4171 = vperm.xlu0 %4170, %v3740
        %v4172 = vpop.permute.xlu0 %4171
        %4173 = vset.pattern.permute.xlu0 0
        %4174 = vperm.xlu0 %4173, %v3742
        %v4175 = vpop.permute.xlu0 %4174
        %4176 = vset.pattern.permute.xlu0 0
        %4177 = vperm.xlu0 %4176, %v3744
        %v4178 = vpop.permute.xlu0 %4177
        %4179 = vset.pattern.permute.xlu0 0
        %4180 = vperm.xlu0 %4179, %v3746
        %v4181 = vpop.permute.xlu0 %4180
        %4182 = vset.pattern.permute.xlu0 0
        %4183 = vperm.xlu0 %4182, %v3748
        %v4184 = vpop.permute.xlu0 %4183
        %4185 = vset.pattern.permute.xlu0 0
        %4186 = vperm.xlu0 %4185, %v3750
        %v4187 = vpop.permute.xlu0 %4186
        %4188 = vset.pattern.permute.xlu0 0
        %4189 = vperm.xlu0 %4188, %v3752
        %v4190 = vpop.permute.xlu0 %4189
        %4191 = vset.pattern.permute.xlu0 0
        %4192 = vperm.xlu0 %4191, %v3754
        %v4193 = vpop.permute.xlu0 %4192
        %4194 = vset.pattern.permute.xlu0 0
        %4195 = vperm.xlu0 %4194, %v3756
        %v4196 = vpop.permute.xlu0 %4195
        %4197 = vset.pattern.permute.xlu0 0
        %4198 = vperm.xlu0 %4197, %v3758
        %v4199 = vpop.permute.xlu0 %4198
        %4200 = vset.pattern.permute.xlu0 0
        %4201 = vperm.xlu0 %4200, %v3760
        %v4202 = vpop.permute.xlu0 %4201
        %4203 = vset.pattern.permute.xlu0 0
        %4204 = vperm.xlu0 %4203, %v3762
        %v4205 = vpop.permute.xlu0 %4204
        %4206 = vset.pattern.permute.xlu0 0
        %4207 = vperm.xlu0 %4206, %v3764
        %v4208 = vpop.permute.xlu0 %4207
        %4209 = vset.pattern.permute.xlu0 0
        %4210 = vperm.xlu0 %4209, %v3766
        %v4211 = vpop.permute.xlu0 %4210
        %4212 = vset.pattern.permute.xlu0 0
        %4213 = vperm.xlu0 %4212, %v3768
        %v4214 = vpop.permute.xlu0 %4213
        %4215 = vset.pattern.permute.xlu0 0
        %4216 = vperm.xlu0 %4215, %v3770
        %v4217 = vpop.permute.xlu0 %4216
        %4218 = vset.pattern.permute.xlu0 0
        %4219 = vperm.xlu0 %4218, %v3772
        %v4220 = vpop.permute.xlu0 %4219
        %4221 = vset.pattern.permute.xlu0 0
        %4222 = vperm.xlu0 %4221, %v3774
        %v4223 = vpop.permute.xlu0 %4222
        %4224 = vset.pattern.permute.xlu0 0
        %4225 = vperm.xlu0 %4224, %v3776
        %v4226 = vpop.permute.xlu0 %4225
        %4227 = vset.pattern.permute.xlu0 0
        %4228 = vperm.xlu0 %4227, %v3778
        %v4229 = vpop.permute.xlu0 %4228
        %4230 = vset.pattern.permute.xlu0 0
        %4231 = vperm.xlu0 %4230, %v3780
        %v4232 = vpop.permute.xlu0 %4231
        %4233 = vset.pattern.permute.xlu0 0
        %4234 = vperm.xlu0 %4233, %v3782
        %v4235 = vpop.permute.xlu0 %4234
        %4236 = vset.pattern.permute.xlu0 0
        %4237 = vperm.xlu0 %4236, %v3784
        %v4238 = vpop.permute.xlu0 %4237
        %4239 = vset.pattern.permute.xlu0 0
        %4240 = vperm.xlu0 %4239, %v3786
        %v4241 = vpop.permute.xlu0 %4240
        %4242 = vset.pattern.permute.xlu0 0
        %4243 = vperm.xlu0 %4242, %v3788
        %v4244 = vpop.permute.xlu0 %4243
        %4245 = vset.pattern.permute.xlu0 0
        %4246 = vperm.xlu0 %4245, %v3790
        %v4247 = vpop.permute.xlu0 %4246
        %4248 = vset.pattern.permute.xlu0 0
        %4249 = vperm.xlu0 %4248, %v3792
        %v4250 = vpop.permute.xlu0 %4249
        %4251 = vset.pattern.permute.xlu0 0
        %4252 = vperm.xlu0 %4251, %v3794
        %v4253 = vpop.permute.xlu0 %4252
        %4254 = vset.pattern.permute.xlu0 0
        %4255 = vperm.xlu0 %4254, %v3796
        %v4256 = vpop.permute.xlu0 %4255
        %4257 = vset.pattern.permute.xlu0 0
        %4258 = vperm.xlu0 %4257, %v3798
        %v4259 = vpop.permute.xlu0 %4258
        %4260 = vset.pattern.permute.xlu0 0
        %4261 = vperm.xlu0 %4260, %v3800
        %v4262 = vpop.permute.xlu0 %4261
        %4263 = vset.pattern.permute.xlu0 0
        %4264 = vperm.xlu0 %4263, %v3802
        %v4265 = vpop.permute.xlu0 %4264
        %4266 = vset.pattern.permute.xlu0 0
        %4267 = vperm.xlu0 %4266, %v3804
        %v4268 = vpop.permute.xlu0 %4267
        %4269 = vset.pattern.permute.xlu0 0
        %4270 = vperm.xlu0 %4269, %v3806
        %v4271 = vpop.permute.xlu0 %4270
        %4272 = vset.pattern.permute.xlu0 0
        %4273 = vperm.xlu0 %4272, %v3808
        %v4274 = vpop.permute.xlu0 %4273
        %4275 = vset.pattern.permute.xlu0 0
        %4276 = vperm.xlu0 %4275, %v3810
        %v4277 = vpop.permute.xlu0 %4276
        %4278 = vset.pattern.permute.xlu0 0
        %4279 = vperm.xlu0 %4278, %v3812
        %v4280 = vpop.permute.xlu0 %4279
        %4281 = vset.pattern.permute.xlu0 0
        %4282 = vperm.xlu0 %4281, %v3814
        %v4283 = vpop.permute.xlu0 %4282
        %4284 = vset.pattern.permute.xlu0 0
        %4285 = vperm.xlu0 %4284, %v3816
        %v4286 = vpop.permute.xlu0 %4285
        %4287 = vset.pattern.permute.xlu0 0
        %4288 = vperm.xlu0 %4287, %v3818
        %v4289 = vpop.permute.xlu0 %4288
        %4290 = vset.pattern.permute.xlu0 0
        %4291 = vperm.xlu0 %4290, %v3820
        %v4292 = vpop.permute.xlu0 %4291
        %4293 = vset.pattern.permute.xlu0 0
        %4294 = vperm.xlu0 %4293, %v3822
        %v4295 = vpop.permute.xlu0 %4294
        %4296 = vset.pattern.permute.xlu0 0
        %4297 = vperm.xlu0 %4296, %v3824
        %v4298 = vpop.permute.xlu0 %4297
        %4299 = vset.pattern.permute.xlu0 0
        %4300 = vperm.xlu0 %4299, %v3826
        %v4301 = vpop.permute.xlu0 %4300
        %4302 = vset.pattern.permute.xlu0 0
        %4303 = vperm.xlu0 %4302, %v3828
        %v4304 = vpop.permute.xlu0 %4303
        %4305 = vset.pattern.permute.xlu0 0
        %4306 = vperm.xlu0 %4305, %v3830
        %v4307 = vpop.permute.xlu0 %4306
        %4308 = vset.pattern.permute.xlu0 0
        %4309 = vperm.xlu0 %4308, %v3832
        %v4310 = vpop.permute.xlu0 %4309
        %4311 = vset.pattern.permute.xlu0 0
        %4312 = vperm.xlu0 %4311, %v3834
        %v4313 = vpop.permute.xlu0 %4312
        %4314 = vset.pattern.permute.xlu0 0
        %4315 = vperm.xlu0 %4314, %v3836
        %v4316 = vpop.permute.xlu0 %4315
        %4317 = vset.pattern.permute.xlu0 0
        %4318 = vperm.xlu0 %4317, %v3838
        %v4319 = vpop.permute.xlu0 %4318
        %4320 = vset.pattern.permute.xlu0 0
        %4321 = vperm.xlu0 %4320, %v3840
        %v4322 = vpop.permute.xlu0 %4321
        %4323 = vset.pattern.permute.xlu0 0
        %4324 = vperm.xlu0 %4323, %v3842
        %v4325 = vpop.permute.xlu0 %4324
        %4326 = vset.pattern.permute.xlu0 0
        %4327 = vperm.xlu0 %4326, %v3844
        %v4328 = vpop.permute.xlu0 %4327
        %4329 = vset.pattern.permute.xlu0 0
        %4330 = vperm.xlu0 %4329, %v3846
        %v4331 = vpop.permute.xlu0 %4330
        %4332 = vset.pattern.permute.xlu0 0
        %4333 = vperm.xlu0 %4332, %v3848
        %v4334 = vpop.permute.xlu0 %4333
        %4335 = vset.pattern.permute.xlu0 0
        %4336 = vperm.xlu0 %4335, %v3850
        %v4337 = vpop.permute.xlu0 %4336
        %4338 = vset.pattern.permute.xlu0 0
        %4339 = vperm.xlu0 %4338, %v3852
        %v4340 = vpop.permute.xlu0 %4339
        %4341 = vset.pattern.permute.xlu0 0
        %4342 = vperm.xlu0 %4341, %v3854
        %v4343 = vpop.permute.xlu0 %4342
        %4344 = vset.pattern.permute.xlu0 0
        %4345 = vperm.xlu0 %4344, %v3856
        %v4346 = vpop.permute.xlu0 %4345
        %4347 = vset.pattern.permute.xlu0 0
        %4348 = vperm.xlu0 %4347, %v3858
        %v4349 = vpop.permute.xlu0 %4348
        %4350 = vset.pattern.permute.xlu0 0
        %4351 = vperm.xlu0 %4350, %v3860
        %v4352 = vpop.permute.xlu0 %4351
        %4353 = vset.pattern.permute.xlu0 0
        %4354 = vperm.xlu0 %4353, %v3862
        %v4355 = vpop.permute.xlu0 %4354
        %4356 = vset.pattern.permute.xlu0 0
        %4357 = vperm.xlu0 %4356, %v3864
        %v4358 = vpop.permute.xlu0 %4357
        %4359 = vset.pattern.permute.xlu0 0
        %4360 = vperm.xlu0 %4359, %v3866
        %v4361 = vpop.permute.xlu0 %4360
        %4362 = vset.pattern.permute.xlu0 0
        %4363 = vperm.xlu0 %4362, %v3868
        %v4364 = vpop.permute.xlu0 %4363
        %4365 = vset.pattern.permute.xlu0 0
        %4366 = vperm.xlu0 %4365, %v3870
        %v4367 = vpop.permute.xlu0 %4366
        %4368 = vset.pattern.permute.xlu0 0
        %4369 = vperm.xlu0 %4368, %v3872
        %v4370 = vpop.permute.xlu0 %4369
        %4371 = vset.pattern.permute.xlu0 0
        %4372 = vperm.xlu0 %4371, %v3874
        %v4373 = vpop.permute.xlu0 %4372
        %4374 = vset.pattern.permute.xlu0 0
        %4375 = vperm.xlu0 %4374, %v3876
        %v4376 = vpop.permute.xlu0 %4375
        %4377 = vset.pattern.permute.xlu0 0
        %4378 = vperm.xlu0 %4377, %v3878
        %v4379 = vpop.permute.xlu0 %4378
        %4380 = vset.pattern.permute.xlu0 0
        %4381 = vperm.xlu0 %4380, %v3880
        %v4382 = vpop.permute.xlu0 %4381
        %4383 = vset.pattern.permute.xlu0 0
        %4384 = vperm.xlu0 %4383, %v3882
        %v4385 = vpop.permute.xlu0 %4384
        %4386 = vset.pattern.permute.xlu0 0
        %4387 = vperm.xlu0 %4386, %v3884
        %v4388 = vpop.permute.xlu0 %4387
        %4389 = vset.pattern.permute.xlu0 0
        %4390 = vperm.xlu0 %4389, %v3886
        %v4391 = vpop.permute.xlu0 %4390
        %4392 = vset.pattern.permute.xlu0 0
        %4393 = vperm.xlu0 %4392, %v3888
        %v4394 = vpop.permute.xlu0 %4393
        %4395 = vset.pattern.permute.xlu0 0
        %4396 = vperm.xlu0 %4395, %v3890
        %v4397 = vpop.permute.xlu0 %4396
        %4398 = vset.pattern.permute.xlu0 0
        %4399 = vperm.xlu0 %4398, %v3892
        %v4400 = vpop.permute.xlu0 %4399
        %4401 = vset.pattern.permute.xlu0 0
        %4402 = vperm.xlu0 %4401, %v3894
        %v4403 = vpop.permute.xlu0 %4402
        %4404 = vset.pattern.permute.xlu0 0
        %4405 = vperm.xlu0 %4404, %v3896
        %v4406 = vpop.permute.xlu0 %4405
        %4407 = vset.pattern.permute.xlu0 0
        %4408 = vperm.xlu0 %4407, %v3898
        %v4409 = vpop.permute.xlu0 %4408
        %4410 = vset.pattern.permute.xlu0 0
        %4411 = vperm.xlu0 %4410, %v3900
        %v4412 = vpop.permute.xlu0 %4411
        %4413 = vset.pattern.permute.xlu0 0
        %4414 = vperm.xlu0 %4413, %v3902
        %v4415 = vpop.permute.xlu0 %4414
        %4416 = vset.pattern.permute.xlu0 0
        %4417 = vperm.xlu0 %4416, %v3904
        %v4418 = vpop.permute.xlu0 %4417
        %v4419 = vlaneseq
        %v4420 = vshrl.u32 %v4419, 7
        %v4421 = vsub.s32 %v2793, %v4420
        %v4422 = vrot.slane %v4037, %v4421
        %v4423 = vlaneseq
        %v4424 = vshrl.u32 %v4423, 7
        %v4425 = vsub.s32 %v2798, %v4424
        %v4426 = vrot.slane %v4040, %v4425
        %v4427 = vsel %vm2803, %v4426, %v4422
        %v4428 = vlaneseq
        %v4429 = vshrl.u32 %v4428, 7
        %v4430 = vsub.s32 %v2805, %v4429
        %v4431 = vrot.slane %v4043, %v4430
        %v4432 = vsel %vm2810, %v4431, %v4427
        %v4433 = vlaneseq
        %v4434 = vshrl.u32 %v4433, 7
        %v4435 = vsub.s32 %v2812, %v4434
        %v4436 = vrot.slane %v4046, %v4435
        %v4437 = vsel %vm2817, %v4436, %v4432
        %v4438 = vlaneseq
        %v4439 = vshrl.u32 %v4438, 7
        %v4440 = vsub.s32 %v2819, %v4439
        %v4441 = vrot.slane %v4049, %v4440
        %v4442 = vsel %vm2824, %v4441, %v4437
        %v4443 = vlaneseq
        %v4444 = vshrl.u32 %v4443, 7
        %v4445 = vsub.s32 %v2826, %v4444
        %v4446 = vrot.slane %v4052, %v4445
        %v4447 = vsel %vm2831, %v4446, %v4442
        %v4448 = vlaneseq
        %v4449 = vshrl.u32 %v4448, 7
        %v4450 = vsub.s32 %v2833, %v4449
        %v4451 = vrot.slane %v4055, %v4450
        %v4452 = vsel %vm2838, %v4451, %v4447
        %v4453 = vlaneseq
        %v4454 = vshrl.u32 %v4453, 7
        %v4455 = vsub.s32 %v2840, %v4454
        %v4456 = vrot.slane %v4058, %v4455
        %v4457 = vsel %vm2845, %v4456, %v4452
        %v4458 = vlaneseq
        %v4459 = vshrl.u32 %v4458, 7
        %v4460 = vsub.s32 %v2847, %v4459
        %v4461 = vrot.slane %v4061, %v4460
        %v4462 = vsel %vm2852, %v4461, %v4457
        %v4463 = vlaneseq
        %v4464 = vshrl.u32 %v4463, 7
        %v4465 = vsub.s32 %v2854, %v4464
        %v4466 = vrot.slane %v4064, %v4465
        %v4467 = vsel %vm2859, %v4466, %v4462
        %v4468 = vlaneseq
        %v4469 = vshrl.u32 %v4468, 7
        %v4470 = vsub.s32 %v2861, %v4469
        %v4471 = vrot.slane %v4067, %v4470
        %v4472 = vsel %vm2866, %v4471, %v4467
        %v4473 = vlaneseq
        %v4474 = vshrl.u32 %v4473, 7
        %v4475 = vsub.s32 %v2868, %v4474
        %v4476 = vrot.slane %v4070, %v4475
        %v4477 = vsel %vm2873, %v4476, %v4472
        %v4478 = vlaneseq
        %v4479 = vshrl.u32 %v4478, 7
        %v4480 = vsub.s32 %v2875, %v4479
        %v4481 = vrot.slane %v4073, %v4480
        %v4482 = vsel %vm2880, %v4481, %v4477
        %v4483 = vlaneseq
        %v4484 = vshrl.u32 %v4483, 7
        %v4485 = vsub.s32 %v2882, %v4484
        %v4486 = vrot.slane %v4076, %v4485
        %v4487 = vsel %vm2887, %v4486, %v4482
        %v4488 = vlaneseq
        %v4489 = vshrl.u32 %v4488, 7
        %v4490 = vsub.s32 %v2889, %v4489
        %v4491 = vrot.slane %v4079, %v4490
        %v4492 = vsel %vm2894, %v4491, %v4487
        %v4493 = vlaneseq
        %v4494 = vshrl.u32 %v4493, 7
        %v4495 = vsub.s32 %v2896, %v4494
        %v4496 = vrot.slane %v4082, %v4495
        %v4497 = vsel %vm2901, %v4496, %v4492
        %v4498 = vlaneseq
        %v4499 = vshrl.u32 %v4498, 7
        %v4500 = vsub.s32 %v2793, %v4499
        %v4501 = vrot.slane %v4085, %v4500
        %v4502 = vlaneseq
        %v4503 = vshrl.u32 %v4502, 7
        %v4504 = vsub.s32 %v2798, %v4503
        %v4505 = vrot.slane %v4088, %v4504
        %v4506 = vsel %vm2803, %v4505, %v4501
        %v4507 = vlaneseq
        %v4508 = vshrl.u32 %v4507, 7
        %v4509 = vsub.s32 %v2805, %v4508
        %v4510 = vrot.slane %v4091, %v4509
        %v4511 = vsel %vm2810, %v4510, %v4506
        %v4512 = vlaneseq
        %v4513 = vshrl.u32 %v4512, 7
        %v4514 = vsub.s32 %v2812, %v4513
        %v4515 = vrot.slane %v4094, %v4514
        %v4516 = vsel %vm2817, %v4515, %v4511
        %v4517 = vlaneseq
        %v4518 = vshrl.u32 %v4517, 7
        %v4519 = vsub.s32 %v2819, %v4518
        %v4520 = vrot.slane %v4097, %v4519
        %v4521 = vsel %vm2824, %v4520, %v4516
        %v4522 = vlaneseq
        %v4523 = vshrl.u32 %v4522, 7
        %v4524 = vsub.s32 %v2826, %v4523
        %v4525 = vrot.slane %v4100, %v4524
        %v4526 = vsel %vm2831, %v4525, %v4521
        %v4527 = vlaneseq
        %v4528 = vshrl.u32 %v4527, 7
        %v4529 = vsub.s32 %v2833, %v4528
        %v4530 = vrot.slane %v4103, %v4529
        %v4531 = vsel %vm2838, %v4530, %v4526
        %v4532 = vlaneseq
        %v4533 = vshrl.u32 %v4532, 7
        %v4534 = vsub.s32 %v2840, %v4533
        %v4535 = vrot.slane %v4106, %v4534
        %v4536 = vsel %vm2845, %v4535, %v4531
        %v4537 = vlaneseq
        %v4538 = vshrl.u32 %v4537, 7
        %v4539 = vsub.s32 %v2847, %v4538
        %v4540 = vrot.slane %v4109, %v4539
        %v4541 = vsel %vm2852, %v4540, %v4536
        %v4542 = vlaneseq
        %v4543 = vshrl.u32 %v4542, 7
        %v4544 = vsub.s32 %v2854, %v4543
        %v4545 = vrot.slane %v4112, %v4544
        %v4546 = vsel %vm2859, %v4545, %v4541
        %v4547 = vlaneseq
        %v4548 = vshrl.u32 %v4547, 7
        %v4549 = vsub.s32 %v2861, %v4548
        %v4550 = vrot.slane %v4115, %v4549
        %v4551 = vsel %vm2866, %v4550, %v4546
        %v4552 = vlaneseq
        %v4553 = vshrl.u32 %v4552, 7
        %v4554 = vsub.s32 %v2868, %v4553
        %v4555 = vrot.slane %v4118, %v4554
        %v4556 = vsel %vm2873, %v4555, %v4551
        %v4557 = vlaneseq
        %v4558 = vshrl.u32 %v4557, 7
        %v4559 = vsub.s32 %v2875, %v4558
        %v4560 = vrot.slane %v4121, %v4559
        %v4561 = vsel %vm2880, %v4560, %v4556
        %v4562 = vlaneseq
        %v4563 = vshrl.u32 %v4562, 7
        %v4564 = vsub.s32 %v2882, %v4563
        %v4565 = vrot.slane %v4124, %v4564
        %v4566 = vsel %vm2887, %v4565, %v4561
        %v4567 = vlaneseq
        %v4568 = vshrl.u32 %v4567, 7
        %v4569 = vsub.s32 %v2889, %v4568
        %v4570 = vrot.slane %v4127, %v4569
        %v4571 = vsel %vm2894, %v4570, %v4566
        %v4572 = vlaneseq
        %v4573 = vshrl.u32 %v4572, 7
        %v4574 = vsub.s32 %v2896, %v4573
        %v4575 = vrot.slane %v4130, %v4574
        %v4576 = vsel %vm2901, %v4575, %v4571
        %v4577 = vlaneseq
        %v4578 = vshrl.u32 %v4577, 7
        %v4579 = vsub.s32 %v2793, %v4578
        %v4580 = vrot.slane %v4133, %v4579
        %v4581 = vlaneseq
        %v4582 = vshrl.u32 %v4581, 7
        %v4583 = vsub.s32 %v2798, %v4582
        %v4584 = vrot.slane %v4136, %v4583
        %v4585 = vsel %vm2803, %v4584, %v4580
        %v4586 = vlaneseq
        %v4587 = vshrl.u32 %v4586, 7
        %v4588 = vsub.s32 %v2805, %v4587
        %v4589 = vrot.slane %v4139, %v4588
        %v4590 = vsel %vm2810, %v4589, %v4585
        %v4591 = vlaneseq
        %v4592 = vshrl.u32 %v4591, 7
        %v4593 = vsub.s32 %v2812, %v4592
        %v4594 = vrot.slane %v4142, %v4593
        %v4595 = vsel %vm2817, %v4594, %v4590
        %v4596 = vlaneseq
        %v4597 = vshrl.u32 %v4596, 7
        %v4598 = vsub.s32 %v2819, %v4597
        %v4599 = vrot.slane %v4145, %v4598
        %v4600 = vsel %vm2824, %v4599, %v4595
        %v4601 = vlaneseq
        %v4602 = vshrl.u32 %v4601, 7
        %v4603 = vsub.s32 %v2826, %v4602
        %v4604 = vrot.slane %v4148, %v4603
        %v4605 = vsel %vm2831, %v4604, %v4600
        %v4606 = vlaneseq
        %v4607 = vshrl.u32 %v4606, 7
        %v4608 = vsub.s32 %v2833, %v4607
        %v4609 = vrot.slane %v4151, %v4608
        %v4610 = vsel %vm2838, %v4609, %v4605
        %v4611 = vlaneseq
        %v4612 = vshrl.u32 %v4611, 7
        %v4613 = vsub.s32 %v2840, %v4612
        %v4614 = vrot.slane %v4154, %v4613
        %v4615 = vsel %vm2845, %v4614, %v4610
        %v4616 = vlaneseq
        %v4617 = vshrl.u32 %v4616, 7
        %v4618 = vsub.s32 %v2847, %v4617
        %v4619 = vrot.slane %v4157, %v4618
        %v4620 = vsel %vm2852, %v4619, %v4615
        %v4621 = vlaneseq
        %v4622 = vshrl.u32 %v4621, 7
        %v4623 = vsub.s32 %v2854, %v4622
        %v4624 = vrot.slane %v4160, %v4623
        %v4625 = vsel %vm2859, %v4624, %v4620
        %v4626 = vlaneseq
        %v4627 = vshrl.u32 %v4626, 7
        %v4628 = vsub.s32 %v2861, %v4627
        %v4629 = vrot.slane %v4163, %v4628
        %v4630 = vsel %vm2866, %v4629, %v4625
        %v4631 = vlaneseq
        %v4632 = vshrl.u32 %v4631, 7
        %v4633 = vsub.s32 %v2868, %v4632
        %v4634 = vrot.slane %v4166, %v4633
        %v4635 = vsel %vm2873, %v4634, %v4630
        %v4636 = vlaneseq
        %v4637 = vshrl.u32 %v4636, 7
        %v4638 = vsub.s32 %v2875, %v4637
        %v4639 = vrot.slane %v4169, %v4638
        %v4640 = vsel %vm2880, %v4639, %v4635
        %v4641 = vlaneseq
        %v4642 = vshrl.u32 %v4641, 7
        %v4643 = vsub.s32 %v2882, %v4642
        %v4644 = vrot.slane %v4172, %v4643
        %v4645 = vsel %vm2887, %v4644, %v4640
        %v4646 = vlaneseq
        %v4647 = vshrl.u32 %v4646, 7
        %v4648 = vsub.s32 %v2889, %v4647
        %v4649 = vrot.slane %v4175, %v4648
        %v4650 = vsel %vm2894, %v4649, %v4645
        %v4651 = vlaneseq
        %v4652 = vshrl.u32 %v4651, 7
        %v4653 = vsub.s32 %v2896, %v4652
        %v4654 = vrot.slane %v4178, %v4653
        %v4655 = vsel %vm2901, %v4654, %v4650
        %v4656 = vlaneseq
        %v4657 = vshrl.u32 %v4656, 7
        %v4658 = vsub.s32 %v2793, %v4657
        %v4659 = vrot.slane %v4181, %v4658
        %v4660 = vlaneseq
        %v4661 = vshrl.u32 %v4660, 7
        %v4662 = vsub.s32 %v2798, %v4661
        %v4663 = vrot.slane %v4184, %v4662
        %v4664 = vsel %vm2803, %v4663, %v4659
        %v4665 = vlaneseq
        %v4666 = vshrl.u32 %v4665, 7
        %v4667 = vsub.s32 %v2805, %v4666
        %v4668 = vrot.slane %v4187, %v4667
        %v4669 = vsel %vm2810, %v4668, %v4664
        %v4670 = vlaneseq
        %v4671 = vshrl.u32 %v4670, 7
        %v4672 = vsub.s32 %v2812, %v4671
        %v4673 = vrot.slane %v4190, %v4672
        %v4674 = vsel %vm2817, %v4673, %v4669
        %v4675 = vlaneseq
        %v4676 = vshrl.u32 %v4675, 7
        %v4677 = vsub.s32 %v2819, %v4676
        %v4678 = vrot.slane %v4193, %v4677
        %v4679 = vsel %vm2824, %v4678, %v4674
        %v4680 = vlaneseq
        %v4681 = vshrl.u32 %v4680, 7
        %v4682 = vsub.s32 %v2826, %v4681
        %v4683 = vrot.slane %v4196, %v4682
        %v4684 = vsel %vm2831, %v4683, %v4679
        %v4685 = vlaneseq
        %v4686 = vshrl.u32 %v4685, 7
        %v4687 = vsub.s32 %v2833, %v4686
        %v4688 = vrot.slane %v4199, %v4687
        %v4689 = vsel %vm2838, %v4688, %v4684
        %v4690 = vlaneseq
        %v4691 = vshrl.u32 %v4690, 7
        %v4692 = vsub.s32 %v2840, %v4691
        %v4693 = vrot.slane %v4202, %v4692
        %v4694 = vsel %vm2845, %v4693, %v4689
        %v4695 = vlaneseq
        %v4696 = vshrl.u32 %v4695, 7
        %v4697 = vsub.s32 %v2847, %v4696
        %v4698 = vrot.slane %v4205, %v4697
        %v4699 = vsel %vm2852, %v4698, %v4694
        %v4700 = vlaneseq
        %v4701 = vshrl.u32 %v4700, 7
        %v4702 = vsub.s32 %v2854, %v4701
        %v4703 = vrot.slane %v4208, %v4702
        %v4704 = vsel %vm2859, %v4703, %v4699
        %v4705 = vlaneseq
        %v4706 = vshrl.u32 %v4705, 7
        %v4707 = vsub.s32 %v2861, %v4706
        %v4708 = vrot.slane %v4211, %v4707
        %v4709 = vsel %vm2866, %v4708, %v4704
        %v4710 = vlaneseq
        %v4711 = vshrl.u32 %v4710, 7
        %v4712 = vsub.s32 %v2868, %v4711
        %v4713 = vrot.slane %v4214, %v4712
        %v4714 = vsel %vm2873, %v4713, %v4709
        %v4715 = vlaneseq
        %v4716 = vshrl.u32 %v4715, 7
        %v4717 = vsub.s32 %v2875, %v4716
        %v4718 = vrot.slane %v4217, %v4717
        %v4719 = vsel %vm2880, %v4718, %v4714
        %v4720 = vlaneseq
        %v4721 = vshrl.u32 %v4720, 7
        %v4722 = vsub.s32 %v2882, %v4721
        %v4723 = vrot.slane %v4220, %v4722
        %v4724 = vsel %vm2887, %v4723, %v4719
        %v4725 = vlaneseq
        %v4726 = vshrl.u32 %v4725, 7
        %v4727 = vsub.s32 %v2889, %v4726
        %v4728 = vrot.slane %v4223, %v4727
        %v4729 = vsel %vm2894, %v4728, %v4724
        %v4730 = vlaneseq
        %v4731 = vshrl.u32 %v4730, 7
        %v4732 = vsub.s32 %v2896, %v4731
        %v4733 = vrot.slane %v4226, %v4732
        %v4734 = vsel %vm2901, %v4733, %v4729
        %v4735 = vlaneseq
        %v4736 = vshrl.u32 %v4735, 7
        %v4737 = vsub.s32 %v2793, %v4736
        %v4738 = vrot.slane %v4229, %v4737
        %v4739 = vlaneseq
        %v4740 = vshrl.u32 %v4739, 7
        %v4741 = vsub.s32 %v2798, %v4740
        %v4742 = vrot.slane %v4232, %v4741
        %v4743 = vsel %vm2803, %v4742, %v4738
        %v4744 = vlaneseq
        %v4745 = vshrl.u32 %v4744, 7
        %v4746 = vsub.s32 %v2805, %v4745
        %v4747 = vrot.slane %v4235, %v4746
        %v4748 = vsel %vm2810, %v4747, %v4743
        %v4749 = vlaneseq
        %v4750 = vshrl.u32 %v4749, 7
        %v4751 = vsub.s32 %v2812, %v4750
        %v4752 = vrot.slane %v4238, %v4751
        %v4753 = vsel %vm2817, %v4752, %v4748
        %v4754 = vlaneseq
        %v4755 = vshrl.u32 %v4754, 7
        %v4756 = vsub.s32 %v2819, %v4755
        %v4757 = vrot.slane %v4241, %v4756
        %v4758 = vsel %vm2824, %v4757, %v4753
        %v4759 = vlaneseq
        %v4760 = vshrl.u32 %v4759, 7
        %v4761 = vsub.s32 %v2826, %v4760
        %v4762 = vrot.slane %v4244, %v4761
        %v4763 = vsel %vm2831, %v4762, %v4758
        %v4764 = vlaneseq
        %v4765 = vshrl.u32 %v4764, 7
        %v4766 = vsub.s32 %v2833, %v4765
        %v4767 = vrot.slane %v4247, %v4766
        %v4768 = vsel %vm2838, %v4767, %v4763
        %v4769 = vlaneseq
        %v4770 = vshrl.u32 %v4769, 7
        %v4771 = vsub.s32 %v2840, %v4770
        %v4772 = vrot.slane %v4250, %v4771
        %v4773 = vsel %vm2845, %v4772, %v4768
        %v4774 = vlaneseq
        %v4775 = vshrl.u32 %v4774, 7
        %v4776 = vsub.s32 %v2847, %v4775
        %v4777 = vrot.slane %v4253, %v4776
        %v4778 = vsel %vm2852, %v4777, %v4773
        %v4779 = vlaneseq
        %v4780 = vshrl.u32 %v4779, 7
        %v4781 = vsub.s32 %v2854, %v4780
        %v4782 = vrot.slane %v4256, %v4781
        %v4783 = vsel %vm2859, %v4782, %v4778
        %v4784 = vlaneseq
        %v4785 = vshrl.u32 %v4784, 7
        %v4786 = vsub.s32 %v2861, %v4785
        %v4787 = vrot.slane %v4259, %v4786
        %v4788 = vsel %vm2866, %v4787, %v4783
        %v4789 = vlaneseq
        %v4790 = vshrl.u32 %v4789, 7
        %v4791 = vsub.s32 %v2868, %v4790
        %v4792 = vrot.slane %v4262, %v4791
        %v4793 = vsel %vm2873, %v4792, %v4788
        %v4794 = vlaneseq
        %v4795 = vshrl.u32 %v4794, 7
        %v4796 = vsub.s32 %v2875, %v4795
        %v4797 = vrot.slane %v4265, %v4796
        %v4798 = vsel %vm2880, %v4797, %v4793
        %v4799 = vlaneseq
        %v4800 = vshrl.u32 %v4799, 7
        %v4801 = vsub.s32 %v2882, %v4800
        %v4802 = vrot.slane %v4268, %v4801
        %v4803 = vsel %vm2887, %v4802, %v4798
        %v4804 = vlaneseq
        %v4805 = vshrl.u32 %v4804, 7
        %v4806 = vsub.s32 %v2889, %v4805
        %v4807 = vrot.slane %v4271, %v4806
        %v4808 = vsel %vm2894, %v4807, %v4803
        %v4809 = vlaneseq
        %v4810 = vshrl.u32 %v4809, 7
        %v4811 = vsub.s32 %v2896, %v4810
        %v4812 = vrot.slane %v4274, %v4811
        %v4813 = vsel %vm2901, %v4812, %v4808
        %v4814 = vlaneseq
        %v4815 = vshrl.u32 %v4814, 7
        %v4816 = vsub.s32 %v2793, %v4815
        %v4817 = vrot.slane %v4277, %v4816
        %v4818 = vlaneseq
        %v4819 = vshrl.u32 %v4818, 7
        %v4820 = vsub.s32 %v2798, %v4819
        %v4821 = vrot.slane %v4280, %v4820
        %v4822 = vsel %vm2803, %v4821, %v4817
        %v4823 = vlaneseq
        %v4824 = vshrl.u32 %v4823, 7
        %v4825 = vsub.s32 %v2805, %v4824
        %v4826 = vrot.slane %v4283, %v4825
        %v4827 = vsel %vm2810, %v4826, %v4822
        %v4828 = vlaneseq
        %v4829 = vshrl.u32 %v4828, 7
        %v4830 = vsub.s32 %v2812, %v4829
        %v4831 = vrot.slane %v4286, %v4830
        %v4832 = vsel %vm2817, %v4831, %v4827
        %v4833 = vlaneseq
        %v4834 = vshrl.u32 %v4833, 7
        %v4835 = vsub.s32 %v2819, %v4834
        %v4836 = vrot.slane %v4289, %v4835
        %v4837 = vsel %vm2824, %v4836, %v4832
        %v4838 = vlaneseq
        %v4839 = vshrl.u32 %v4838, 7
        %v4840 = vsub.s32 %v2826, %v4839
        %v4841 = vrot.slane %v4292, %v4840
        %v4842 = vsel %vm2831, %v4841, %v4837
        %v4843 = vlaneseq
        %v4844 = vshrl.u32 %v4843, 7
        %v4845 = vsub.s32 %v2833, %v4844
        %v4846 = vrot.slane %v4295, %v4845
        %v4847 = vsel %vm2838, %v4846, %v4842
        %v4848 = vlaneseq
        %v4849 = vshrl.u32 %v4848, 7
        %v4850 = vsub.s32 %v2840, %v4849
        %v4851 = vrot.slane %v4298, %v4850
        %v4852 = vsel %vm2845, %v4851, %v4847
        %v4853 = vlaneseq
        %v4854 = vshrl.u32 %v4853, 7
        %v4855 = vsub.s32 %v2847, %v4854
        %v4856 = vrot.slane %v4301, %v4855
        %v4857 = vsel %vm2852, %v4856, %v4852
        %v4858 = vlaneseq
        %v4859 = vshrl.u32 %v4858, 7
        %v4860 = vsub.s32 %v2854, %v4859
        %v4861 = vrot.slane %v4304, %v4860
        %v4862 = vsel %vm2859, %v4861, %v4857
        %v4863 = vlaneseq
        %v4864 = vshrl.u32 %v4863, 7
        %v4865 = vsub.s32 %v2861, %v4864
        %v4866 = vrot.slane %v4307, %v4865
        %v4867 = vsel %vm2866, %v4866, %v4862
        %v4868 = vlaneseq
        %v4869 = vshrl.u32 %v4868, 7
        %v4870 = vsub.s32 %v2868, %v4869
        %v4871 = vrot.slane %v4310, %v4870
        %v4872 = vsel %vm2873, %v4871, %v4867
        %v4873 = vlaneseq
        %v4874 = vshrl.u32 %v4873, 7
        %v4875 = vsub.s32 %v2875, %v4874
        %v4876 = vrot.slane %v4313, %v4875
        %v4877 = vsel %vm2880, %v4876, %v4872
        %v4878 = vlaneseq
        %v4879 = vshrl.u32 %v4878, 7
        %v4880 = vsub.s32 %v2882, %v4879
        %v4881 = vrot.slane %v4316, %v4880
        %v4882 = vsel %vm2887, %v4881, %v4877
        %v4883 = vlaneseq
        %v4884 = vshrl.u32 %v4883, 7
        %v4885 = vsub.s32 %v2889, %v4884
        %v4886 = vrot.slane %v4319, %v4885
        %v4887 = vsel %vm2894, %v4886, %v4882
        %v4888 = vlaneseq
        %v4889 = vshrl.u32 %v4888, 7
        %v4890 = vsub.s32 %v2896, %v4889
        %v4891 = vrot.slane %v4322, %v4890
        %v4892 = vsel %vm2901, %v4891, %v4887
        %v4893 = vlaneseq
        %v4894 = vshrl.u32 %v4893, 7
        %v4895 = vsub.s32 %v2793, %v4894
        %v4896 = vrot.slane %v4325, %v4895
        %v4897 = vlaneseq
        %v4898 = vshrl.u32 %v4897, 7
        %v4899 = vsub.s32 %v2798, %v4898
        %v4900 = vrot.slane %v4328, %v4899
        %v4901 = vsel %vm2803, %v4900, %v4896
        %v4902 = vlaneseq
        %v4903 = vshrl.u32 %v4902, 7
        %v4904 = vsub.s32 %v2805, %v4903
        %v4905 = vrot.slane %v4331, %v4904
        %v4906 = vsel %vm2810, %v4905, %v4901
        %v4907 = vlaneseq
        %v4908 = vshrl.u32 %v4907, 7
        %v4909 = vsub.s32 %v2812, %v4908
        %v4910 = vrot.slane %v4334, %v4909
        %v4911 = vsel %vm2817, %v4910, %v4906
        %v4912 = vlaneseq
        %v4913 = vshrl.u32 %v4912, 7
        %v4914 = vsub.s32 %v2819, %v4913
        %v4915 = vrot.slane %v4337, %v4914
        %v4916 = vsel %vm2824, %v4915, %v4911
        %v4917 = vlaneseq
        %v4918 = vshrl.u32 %v4917, 7
        %v4919 = vsub.s32 %v2826, %v4918
        %v4920 = vrot.slane %v4340, %v4919
        %v4921 = vsel %vm2831, %v4920, %v4916
        %v4922 = vlaneseq
        %v4923 = vshrl.u32 %v4922, 7
        %v4924 = vsub.s32 %v2833, %v4923
        %v4925 = vrot.slane %v4343, %v4924
        %v4926 = vsel %vm2838, %v4925, %v4921
        %v4927 = vlaneseq
        %v4928 = vshrl.u32 %v4927, 7
        %v4929 = vsub.s32 %v2840, %v4928
        %v4930 = vrot.slane %v4346, %v4929
        %v4931 = vsel %vm2845, %v4930, %v4926
        %v4932 = vlaneseq
        %v4933 = vshrl.u32 %v4932, 7
        %v4934 = vsub.s32 %v2847, %v4933
        %v4935 = vrot.slane %v4349, %v4934
        %v4936 = vsel %vm2852, %v4935, %v4931
        %v4937 = vlaneseq
        %v4938 = vshrl.u32 %v4937, 7
        %v4939 = vsub.s32 %v2854, %v4938
        %v4940 = vrot.slane %v4352, %v4939
        %v4941 = vsel %vm2859, %v4940, %v4936
        %v4942 = vlaneseq
        %v4943 = vshrl.u32 %v4942, 7
        %v4944 = vsub.s32 %v2861, %v4943
        %v4945 = vrot.slane %v4355, %v4944
        %v4946 = vsel %vm2866, %v4945, %v4941
        %v4947 = vlaneseq
        %v4948 = vshrl.u32 %v4947, 7
        %v4949 = vsub.s32 %v2868, %v4948
        %v4950 = vrot.slane %v4358, %v4949
        %v4951 = vsel %vm2873, %v4950, %v4946
        %v4952 = vlaneseq
        %v4953 = vshrl.u32 %v4952, 7
        %v4954 = vsub.s32 %v2875, %v4953
        %v4955 = vrot.slane %v4361, %v4954
        %v4956 = vsel %vm2880, %v4955, %v4951
        %v4957 = vlaneseq
        %v4958 = vshrl.u32 %v4957, 7
        %v4959 = vsub.s32 %v2882, %v4958
        %v4960 = vrot.slane %v4364, %v4959
        %v4961 = vsel %vm2887, %v4960, %v4956
        %v4962 = vlaneseq
        %v4963 = vshrl.u32 %v4962, 7
        %v4964 = vsub.s32 %v2889, %v4963
        %v4965 = vrot.slane %v4367, %v4964
        %v4966 = vsel %vm2894, %v4965, %v4961
        %v4967 = vlaneseq
        %v4968 = vshrl.u32 %v4967, 7
        %v4969 = vsub.s32 %v2896, %v4968
        %v4970 = vrot.slane %v4370, %v4969
        %v4971 = vsel %vm2901, %v4970, %v4966
        %v4972 = vlaneseq
        %v4973 = vshrl.u32 %v4972, 7
        %v4974 = vsub.s32 %v2793, %v4973
        %v4975 = vrot.slane %v4373, %v4974
        %v4976 = vlaneseq
        %v4977 = vshrl.u32 %v4976, 7
        %v4978 = vsub.s32 %v2798, %v4977
        %v4979 = vrot.slane %v4376, %v4978
        %v4980 = vsel %vm2803, %v4979, %v4975
        %v4981 = vlaneseq
        %v4982 = vshrl.u32 %v4981, 7
        %v4983 = vsub.s32 %v2805, %v4982
        %v4984 = vrot.slane %v4379, %v4983
        %v4985 = vsel %vm2810, %v4984, %v4980
        %v4986 = vlaneseq
        %v4987 = vshrl.u32 %v4986, 7
        %v4988 = vsub.s32 %v2812, %v4987
        %v4989 = vrot.slane %v4382, %v4988
        %v4990 = vsel %vm2817, %v4989, %v4985
        %v4991 = vlaneseq
        %v4992 = vshrl.u32 %v4991, 7
        %v4993 = vsub.s32 %v2819, %v4992
        %v4994 = vrot.slane %v4385, %v4993
        %v4995 = vsel %vm2824, %v4994, %v4990
        %v4996 = vlaneseq
        %v4997 = vshrl.u32 %v4996, 7
        %v4998 = vsub.s32 %v2826, %v4997
        %v4999 = vrot.slane %v4388, %v4998
        %v5000 = vsel %vm2831, %v4999, %v4995
        %v5001 = vlaneseq
        %v5002 = vshrl.u32 %v5001, 7
        %v5003 = vsub.s32 %v2833, %v5002
        %v5004 = vrot.slane %v4391, %v5003
        %v5005 = vsel %vm2838, %v5004, %v5000
        %v5006 = vlaneseq
        %v5007 = vshrl.u32 %v5006, 7
        %v5008 = vsub.s32 %v2840, %v5007
        %v5009 = vrot.slane %v4394, %v5008
        %v5010 = vsel %vm2845, %v5009, %v5005
        %v5011 = vlaneseq
        %v5012 = vshrl.u32 %v5011, 7
        %v5013 = vsub.s32 %v2847, %v5012
        %v5014 = vrot.slane %v4397, %v5013
        %v5015 = vsel %vm2852, %v5014, %v5010
        %v5016 = vlaneseq
        %v5017 = vshrl.u32 %v5016, 7
        %v5018 = vsub.s32 %v2854, %v5017
        %v5019 = vrot.slane %v4400, %v5018
        %v5020 = vsel %vm2859, %v5019, %v5015
        %v5021 = vlaneseq
        %v5022 = vshrl.u32 %v5021, 7
        %v5023 = vsub.s32 %v2861, %v5022
        %v5024 = vrot.slane %v4403, %v5023
        %v5025 = vsel %vm2866, %v5024, %v5020
        %v5026 = vlaneseq
        %v5027 = vshrl.u32 %v5026, 7
        %v5028 = vsub.s32 %v2868, %v5027
        %v5029 = vrot.slane %v4406, %v5028
        %v5030 = vsel %vm2873, %v5029, %v5025
        %v5031 = vlaneseq
        %v5032 = vshrl.u32 %v5031, 7
        %v5033 = vsub.s32 %v2875, %v5032
        %v5034 = vrot.slane %v4409, %v5033
        %v5035 = vsel %vm2880, %v5034, %v5030
        %v5036 = vlaneseq
        %v5037 = vshrl.u32 %v5036, 7
        %v5038 = vsub.s32 %v2882, %v5037
        %v5039 = vrot.slane %v4412, %v5038
        %v5040 = vsel %vm2887, %v5039, %v5035
        %v5041 = vlaneseq
        %v5042 = vshrl.u32 %v5041, 7
        %v5043 = vsub.s32 %v2889, %v5042
        %v5044 = vrot.slane %v4415, %v5043
        %v5045 = vsel %vm2894, %v5044, %v5040
        %v5046 = vlaneseq
        %v5047 = vshrl.u32 %v5046, 7
        %v5048 = vsub.s32 %v2896, %v5047
        %v5049 = vrot.slane %v4418, %v5048
        %v5050 = vsel %vm2901, %v5049, %v5045
        %v5051 = vsel %vm3456, %v4576, %v4497
        %v5052 = vsel %vm3458, %v4655, %v5051
        %v5053 = vsel %vm3460, %v4734, %v5052
        %v5054 = vsel %vm3462, %v4813, %v5053
        %v5055 = vsel %vm3464, %v4892, %v5054
        %v5056 = vsel %vm3466, %v4971, %v5055
        %v5057 = vsel %vm3468, %v5050, %v5056
        %5059 = vadd.xlane.f32.xlu0 %v5057
        %v5060 = vpop.xlane.xlu0 %5059
        %v5061 = vadd.f32 %v3906, %v5060
        %vm5062 = vcmask 7168
        %5063 = vst.msk [vmem:[#allocation4] sm:$0xff] %vm5062, %v5061
        %5065 = vmatprep.subr.mxu0 %v933
        %5066 = vmatpush1.msra.mxu0 %v932
        %5067 = vmatprep.subr.mxu0 %v935
        %5068 = vmatpush1.msra.mxu0 %v934
        %5069 = vmatprep.subr.mxu0 %v937
        %5070 = vmatpush1.msra.mxu0 %v936
        %5071 = vmatprep.subr.mxu0 %v939
        %5072 = vmatpush1.msra.mxu0 %v938
        %5073 = vmatprep.subr.mxu0 %v941
        %5074 = vmatpush1.msra.mxu0 %v940
        %5075 = vmatprep.subr.mxu0 %v943
        %5076 = vmatpush1.msra.mxu0 %v942
        %5077 = vmatprep.subr.mxu0 %v945
        %5078 = vmatpush1.msra.mxu0 %v944
        %5079 = vmatprep.subr.mxu0 %v947
        %5080 = vmatpush1.msra.mxu0 %v946
        %5081 = vmatprep.subr.mxu0 %v949
        %5082 = vmatpush1.msra.mxu0 %v948
        %5083 = vmatprep.subr.mxu0 %v951
        %5084 = vmatpush1.msra.mxu0 %v950
        %5085 = vmatprep.subr.mxu0 %v953
        %5086 = vmatpush1.msra.mxu0 %v952
        %5087 = vmatprep.subr.mxu0 %v955
        %5088 = vmatpush1.msra.mxu0 %v954
        %5089 = vmatprep.subr.mxu0 %v957
        %5090 = vmatpush1.msra.mxu0 %v956
        %5091 = vmatprep.subr.mxu0 %v959
        %5092 = vmatpush1.msra.mxu0 %v958
        %5093 = vmatprep.subr.mxu0 %v961
        %5094 = vmatpush1.msra.mxu0 %v960
        %5095 = vmatprep.subr.mxu0 %v963
        %5096 = vmatpush1.msra.mxu0 %v962
        %5097 = vmatprep.subr.mxu0 0.0
        %5098 = vmatpush1.msra.mxu0 0.0
        %5099 = vmatprep.subr.mxu0 0.0
        %5100 = vmatpush1.msra.mxu0 0.0
        %5101 = vmatprep.subr.mxu0 0.0
        %5102 = vmatpush1.msra.mxu0 0.0
        %5103 = vmatprep.subr.mxu0 0.0
        %5104 = vmatpush1.msra.mxu0 0.0
        %5105 = vmatprep.subr.mxu0 0.0
        %5106 = vmatpush1.msra.mxu0 0.0
        %5107 = vmatprep.subr.mxu0 0.0
        %5108 = vmatpush1.msra.mxu0 0.0
        %5109 = vmatprep.subr.mxu0 0.0
        %5110 = vmatpush1.msra.mxu0 0.0
        %5111 = vmatprep.subr.mxu0 0.0
        %5112 = vmatpush1.msra.mxu0 0.0
        %5113 = vmatprep.subr.mxu0 0.0
        %5114 = vmatpush1.msra.mxu0 0.0
        %5115 = vmatprep.subr.mxu0 0.0
        %5116 = vmatpush1.msra.mxu0 0.0
        %5117 = vmatprep.subr.mxu0 0.0
        %5118 = vmatpush1.msra.mxu0 0.0
        %5119 = vmatprep.subr.mxu0 0.0
        %5120 = vmatpush1.msra.mxu0 0.0
        %5121 = vmatprep.subr.mxu0 0.0
        %5122 = vmatpush1.msra.mxu0 0.0
        %5123 = vmatprep.subr.mxu0 0.0
        %5124 = vmatpush1.msra.mxu0 0.0
        %5125 = vmatprep.subr.mxu0 0.0
        %5126 = vmatpush1.msra.mxu0 0.0
        %5127 = vmatprep.subr.mxu0 0.0
        %5128 = vmatpush1.msra.mxu0 0.0
        %5129 = vmatprep.mubr.f32.mxu0 0.0
        %5130 = vmatmul.mubr.f32.gmra.mrb[0].mxu0 %v4497
        %v5131 = vpop.f32.mrb[0].mxu0
        %v5132 = vadd.f32 0.0, %v5131
        %v5133 = vpop.f32.mrb[0].mxu0
        %v5134 = vadd.f32 0.0, %v5133
        %5135 = vdwg.mxu0
        %5137 = vmatprep.subr.mxu0 %v965
        %5138 = vmatpush1.msra.mxu0 %v964
        %5139 = vmatprep.subr.mxu0 %v967
        %5140 = vmatpush1.msra.mxu0 %v966
        %5141 = vmatprep.subr.mxu0 %v969
        %5142 = vmatpush1.msra.mxu0 %v968
        %5143 = vmatprep.subr.mxu0 %v971
        %5144 = vmatpush1.msra.mxu0 %v970
        %5145 = vmatprep.subr.mxu0 %v973
        %5146 = vmatpush1.msra.mxu0 %v972
        %5147 = vmatprep.subr.mxu0 %v975
        %5148 = vmatpush1.msra.mxu0 %v974
        %5149 = vmatprep.subr.mxu0 %v977
        %5150 = vmatpush1.msra.mxu0 %v976
        %5151 = vmatprep.subr.mxu0 %v979
        %5152 = vmatpush1.msra.mxu0 %v978
        %5153 = vmatprep.subr.mxu0 %v981
        %5154 = vmatpush1.msra.mxu0 %v980
        %5155 = vmatprep.subr.mxu0 %v983
        %5156 = vmatpush1.msra.mxu0 %v982
        %5157 = vmatprep.subr.mxu0 %v985
        %5158 = vmatpush1.msra.mxu0 %v984
        %5159 = vmatprep.subr.mxu0 %v987
        %5160 = vmatpush1.msra.mxu0 %v986
        %5161 = vmatprep.subr.mxu0 %v989
        %5162 = vmatpush1.msra.mxu0 %v988
        %5163 = vmatprep.subr.mxu0 %v991
        %5164 = vmatpush1.msra.mxu0 %v990
        %5165 = vmatprep.subr.mxu0 %v993
        %5166 = vmatpush1.msra.mxu0 %v992
        %5167 = vmatprep.subr.mxu0 %v995
        %5168 = vmatpush1.msra.mxu0 %v994
        %5169 = vmatprep.subr.mxu0 0.0
        %5170 = vmatpush1.msra.mxu0 0.0
        %5171 = vmatprep.subr.mxu0 0.0
        %5172 = vmatpush1.msra.mxu0 0.0
        %5173 = vmatprep.subr.mxu0 0.0
        %5174 = vmatpush1.msra.mxu0 0.0
        %5175 = vmatprep.subr.mxu0 0.0
        %5176 = vmatpush1.msra.mxu0 0.0
        %5177 = vmatprep.subr.mxu0 0.0
        %5178 = vmatpush1.msra.mxu0 0.0
        %5179 = vmatprep.subr.mxu0 0.0
        %5180 = vmatpush1.msra.mxu0 0.0
        %5181 = vmatprep.subr.mxu0 0.0
        %5182 = vmatpush1.msra.mxu0 0.0
        %5183 = vmatprep.subr.mxu0 0.0
        %5184 = vmatpush1.msra.mxu0 0.0
        %5185 = vmatprep.subr.mxu0 0.0
        %5186 = vmatpush1.msra.mxu0 0.0
        %5187 = vmatprep.subr.mxu0 0.0
        %5188 = vmatpush1.msra.mxu0 0.0
        %5189 = vmatprep.subr.mxu0 0.0
        %5190 = vmatpush1.msra.mxu0 0.0
        %5191 = vmatprep.subr.mxu0 0.0
        %5192 = vmatpush1.msra.mxu0 0.0
        %5193 = vmatprep.subr.mxu0 0.0
        %5194 = vmatpush1.msra.mxu0 0.0
        %5195 = vmatprep.subr.mxu0 0.0
        %5196 = vmatpush1.msra.mxu0 0.0
        %5197 = vmatprep.subr.mxu0 0.0
        %5198 = vmatpush1.msra.mxu0 0.0
        %5199 = vmatprep.subr.mxu0 0.0
        %5200 = vmatpush1.msra.mxu0 0.0
        %5201 = vmatprep.mubr.f32.mxu0 0.0
        %5202 = vmatmul.mubr.f32.gmra.mrb[0].mxu0 %v4576
        %v5203 = vpop.f32.mrb[0].mxu0
        %v5204 = vadd.f32 0.0, %v5203
        %v5205 = vpop.f32.mrb[0].mxu0
        %v5206 = vadd.f32 0.0, %v5205
        %5207 = vdwg.mxu0
        %5209 = vmatprep.subr.mxu0 %v997
        %5210 = vmatpush1.msra.mxu0 %v996
        %5211 = vmatprep.subr.mxu0 %v999
        %5212 = vmatpush1.msra.mxu0 %v998
        %5213 = vmatprep.subr.mxu0 %v1001
        %5214 = vmatpush1.msra.mxu0 %v1000
        %5215 = vmatprep.subr.mxu0 %v1003
        %5216 = vmatpush1.msra.mxu0 %v1002
        %5217 = vmatprep.subr.mxu0 %v1005
        %5218 = vmatpush1.msra.mxu0 %v1004
        %5219 = vmatprep.subr.mxu0 %v1007
        %5220 = vmatpush1.msra.mxu0 %v1006
        %5221 = vmatprep.subr.mxu0 %v1009
        %5222 = vmatpush1.msra.mxu0 %v1008
        %5223 = vmatprep.subr.mxu0 %v1011
        %5224 = vmatpush1.msra.mxu0 %v1010
        %5225 = vmatprep.subr.mxu0 %v1013
        %5226 = vmatpush1.msra.mxu0 %v1012
        %5227 = vmatprep.subr.mxu0 %v1015
        %5228 = vmatpush1.msra.mxu0 %v1014
        %5229 = vmatprep.subr.mxu0 %v1017
        %5230 = vmatpush1.msra.mxu0 %v1016
        %5231 = vmatprep.subr.mxu0 %v1019
        %5232 = vmatpush1.msra.mxu0 %v1018
        %5233 = vmatprep.subr.mxu0 %v1021
        %5234 = vmatpush1.msra.mxu0 %v1020
        %5235 = vmatprep.subr.mxu0 %v1023
        %5236 = vmatpush1.msra.mxu0 %v1022
        %5237 = vmatprep.subr.mxu0 %v1025
        %5238 = vmatpush1.msra.mxu0 %v1024
        %5239 = vmatprep.subr.mxu0 %v1027
        %5240 = vmatpush1.msra.mxu0 %v1026
        %5241 = vmatprep.subr.mxu0 0.0
        %5242 = vmatpush1.msra.mxu0 0.0
        %5243 = vmatprep.subr.mxu0 0.0
        %5244 = vmatpush1.msra.mxu0 0.0
        %5245 = vmatprep.subr.mxu0 0.0
        %5246 = vmatpush1.msra.mxu0 0.0
        %5247 = vmatprep.subr.mxu0 0.0
        %5248 = vmatpush1.msra.mxu0 0.0
        %5249 = vmatprep.subr.mxu0 0.0
        %5250 = vmatpush1.msra.mxu0 0.0
        %5251 = vmatprep.subr.mxu0 0.0
        %5252 = vmatpush1.msra.mxu0 0.0
        %5253 = vmatprep.subr.mxu0 0.0
        %5254 = vmatpush1.msra.mxu0 0.0
        %5255 = vmatprep.subr.mxu0 0.0
        %5256 = vmatpush1.msra.mxu0 0.0
        %5257 = vmatprep.subr.mxu0 0.0
        %5258 = vmatpush1.msra.mxu0 0.0
        %5259 = vmatprep.subr.mxu0 0.0
        %5260 = vmatpush1.msra.mxu0 0.0
        %5261 = vmatprep.subr.mxu0 0.0
        %5262 = vmatpush1.msra.mxu0 0.0
        %5263 = vmatprep.subr.mxu0 0.0
        %5264 = vmatpush1.msra.mxu0 0.0
        %5265 = vmatprep.subr.mxu0 0.0
        %5266 = vmatpush1.msra.mxu0 0.0
        %5267 = vmatprep.subr.mxu0 0.0
        %5268 = vmatpush1.msra.mxu0 0.0
        %5269 = vmatprep.subr.mxu0 0.0
        %5270 = vmatpush1.msra.mxu0 0.0
        %5271 = vmatprep.subr.mxu0 0.0
        %5272 = vmatpush1.msra.mxu0 0.0
        %5273 = vmatprep.mubr.f32.mxu0 0.0
        %5274 = vmatmul.mubr.f32.gmra.mrb[0].mxu0 %v4655
        %v5275 = vpop.f32.mrb[0].mxu0
        %v5276 = vadd.f32 0.0, %v5275
        %v5277 = vpop.f32.mrb[0].mxu0
        %v5278 = vadd.f32 0.0, %v5277
        %5279 = vdwg.mxu0
        %5281 = vmatprep.subr.mxu0 %v1029
        %5282 = vmatpush1.msra.mxu0 %v1028
        %5283 = vmatprep.subr.mxu0 %v1031
        %5284 = vmatpush1.msra.mxu0 %v1030
        %5285 = vmatprep.subr.mxu0 %v1033
        %5286 = vmatpush1.msra.mxu0 %v1032
        %5287 = vmatprep.subr.mxu0 %v1035
        %5288 = vmatpush1.msra.mxu0 %v1034
        %5289 = vmatprep.subr.mxu0 %v1037
        %5290 = vmatpush1.msra.mxu0 %v1036
        %5291 = vmatprep.subr.mxu0 %v1039
        %5292 = vmatpush1.msra.mxu0 %v1038
        %5293 = vmatprep.subr.mxu0 %v1041
        %5294 = vmatpush1.msra.mxu0 %v1040
        %5295 = vmatprep.subr.mxu0 %v1043
        %5296 = vmatpush1.msra.mxu0 %v1042
        %5297 = vmatprep.subr.mxu0 %v1045
        %5298 = vmatpush1.msra.mxu0 %v1044
        %5299 = vmatprep.subr.mxu0 %v1047
        %5300 = vmatpush1.msra.mxu0 %v1046
        %5301 = vmatprep.subr.mxu0 %v1049
        %5302 = vmatpush1.msra.mxu0 %v1048
        %5303 = vmatprep.subr.mxu0 %v1051
        %5304 = vmatpush1.msra.mxu0 %v1050
        %5305 = vmatprep.subr.mxu0 %v1053
        %5306 = vmatpush1.msra.mxu0 %v1052
        %5307 = vmatprep.subr.mxu0 %v1055
        %5308 = vmatpush1.msra.mxu0 %v1054
        %5309 = vmatprep.subr.mxu0 %v1057
        %5310 = vmatpush1.msra.mxu0 %v1056
        %5311 = vmatprep.subr.mxu0 %v1059
        %5312 = vmatpush1.msra.mxu0 %v1058
        %5313 = vmatprep.subr.mxu0 0.0
        %5314 = vmatpush1.msra.mxu0 0.0
        %5315 = vmatprep.subr.mxu0 0.0
        %5316 = vmatpush1.msra.mxu0 0.0
        %5317 = vmatprep.subr.mxu0 0.0
        %5318 = vmatpush1.msra.mxu0 0.0
        %5319 = vmatprep.subr.mxu0 0.0
        %5320 = vmatpush1.msra.mxu0 0.0
        %5321 = vmatprep.subr.mxu0 0.0
        %5322 = vmatpush1.msra.mxu0 0.0
        %5323 = vmatprep.subr.mxu0 0.0
        %5324 = vmatpush1.msra.mxu0 0.0
        %5325 = vmatprep.subr.mxu0 0.0
        %5326 = vmatpush1.msra.mxu0 0.0
        %5327 = vmatprep.subr.mxu0 0.0
        %5328 = vmatpush1.msra.mxu0 0.0
        %5329 = vmatprep.subr.mxu0 0.0
        %5330 = vmatpush1.msra.mxu0 0.0
        %5331 = vmatprep.subr.mxu0 0.0
        %5332 = vmatpush1.msra.mxu0 0.0
        %5333 = vmatprep.subr.mxu0 0.0
        %5334 = vmatpush1.msra.mxu0 0.0
        %5335 = vmatprep.subr.mxu0 0.0
        %5336 = vmatpush1.msra.mxu0 0.0
        %5337 = vmatprep.subr.mxu0 0.0
        %5338 = vmatpush1.msra.mxu0 0.0
        %5339 = vmatprep.subr.mxu0 0.0
        %5340 = vmatpush1.msra.mxu0 0.0
        %5341 = vmatprep.subr.mxu0 0.0
        %5342 = vmatpush1.msra.mxu0 0.0
        %5343 = vmatprep.subr.mxu0 0.0
        %5344 = vmatpush1.msra.mxu0 0.0
        %5345 = vmatprep.mubr.f32.mxu0 0.0
        %5346 = vmatmul.mubr.f32.gmra.mrb[0].mxu0 %v4734
        %v5347 = vpop.f32.mrb[0].mxu0
        %v5348 = vadd.f32 0.0, %v5347
        %v5349 = vpop.f32.mrb[0].mxu0
        %v5350 = vadd.f32 0.0, %v5349
        %5351 = vdwg.mxu0
        %5353 = vmatprep.subr.mxu0 %v1061
        %5354 = vmatpush1.msra.mxu0 %v1060
        %5355 = vmatprep.subr.mxu0 %v1063
        %5356 = vmatpush1.msra.mxu0 %v1062
        %5357 = vmatprep.subr.mxu0 %v1065
        %5358 = vmatpush1.msra.mxu0 %v1064
        %5359 = vmatprep.subr.mxu0 %v1067
        %5360 = vmatpush1.msra.mxu0 %v1066
        %5361 = vmatprep.subr.mxu0 %v1069
        %5362 = vmatpush1.msra.mxu0 %v1068
        %5363 = vmatprep.subr.mxu0 %v1071
        %5364 = vmatpush1.msra.mxu0 %v1070
        %5365 = vmatprep.subr.mxu0 %v1073
        %5366 = vmatpush1.msra.mxu0 %v1072
        %5367 = vmatprep.subr.mxu0 %v1075
        %5368 = vmatpush1.msra.mxu0 %v1074
        %5369 = vmatprep.subr.mxu0 %v1077
        %5370 = vmatpush1.msra.mxu0 %v1076
        %5371 = vmatprep.subr.mxu0 %v1079
        %5372 = vmatpush1.msra.mxu0 %v1078
        %5373 = vmatprep.subr.mxu0 %v1081
        %5374 = vmatpush1.msra.mxu0 %v1080
        %5375 = vmatprep.subr.mxu0 %v1083
        %5376 = vmatpush1.msra.mxu0 %v1082
        %5377 = vmatprep.subr.mxu0 %v1085
        %5378 = vmatpush1.msra.mxu0 %v1084
        %5379 = vmatprep.subr.mxu0 %v1087
        %5380 = vmatpush1.msra.mxu0 %v1086
        %5381 = vmatprep.subr.mxu0 %v1089
        %5382 = vmatpush1.msra.mxu0 %v1088
        %5383 = vmatprep.subr.mxu0 %v1091
        %5384 = vmatpush1.msra.mxu0 %v1090
        %5385 = vmatprep.subr.mxu0 0.0
        %5386 = vmatpush1.msra.mxu0 0.0
        %5387 = vmatprep.subr.mxu0 0.0
        %5388 = vmatpush1.msra.mxu0 0.0
        %5389 = vmatprep.subr.mxu0 0.0
        %5390 = vmatpush1.msra.mxu0 0.0
        %5391 = vmatprep.subr.mxu0 0.0
        %5392 = vmatpush1.msra.mxu0 0.0
        %5393 = vmatprep.subr.mxu0 0.0
        %5394 = vmatpush1.msra.mxu0 0.0
        %5395 = vmatprep.subr.mxu0 0.0
        %5396 = vmatpush1.msra.mxu0 0.0
        %5397 = vmatprep.subr.mxu0 0.0
        %5398 = vmatpush1.msra.mxu0 0.0
        %5399 = vmatprep.subr.mxu0 0.0
        %5400 = vmatpush1.msra.mxu0 0.0
        %5401 = vmatprep.subr.mxu0 0.0
        %5402 = vmatpush1.msra.mxu0 0.0
        %5403 = vmatprep.subr.mxu0 0.0
        %5404 = vmatpush1.msra.mxu0 0.0
        %5405 = vmatprep.subr.mxu0 0.0
        %5406 = vmatpush1.msra.mxu0 0.0
        %5407 = vmatprep.subr.mxu0 0.0
        %5408 = vmatpush1.msra.mxu0 0.0
        %5409 = vmatprep.subr.mxu0 0.0
        %5410 = vmatpush1.msra.mxu0 0.0
        %5411 = vmatprep.subr.mxu0 0.0
        %5412 = vmatpush1.msra.mxu0 0.0
        %5413 = vmatprep.subr.mxu0 0.0
        %5414 = vmatpush1.msra.mxu0 0.0
        %5415 = vmatprep.subr.mxu0 0.0
        %5416 = vmatpush1.msra.mxu0 0.0
        %5417 = vmatprep.mubr.f32.mxu0 0.0
        %5418 = vmatmul.mubr.f32.gmra.mrb[0].mxu0 %v4813
        %v5419 = vpop.f32.mrb[0].mxu0
        %v5420 = vadd.f32 0.0, %v5419
        %v5421 = vpop.f32.mrb[0].mxu0
        %v5422 = vadd.f32 0.0, %v5421
        %5423 = vdwg.mxu0
        %5425 = vmatprep.subr.mxu0 %v1093
        %5426 = vmatpush1.msra.mxu0 %v1092
        %5427 = vmatprep.subr.mxu0 %v1095
        %5428 = vmatpush1.msra.mxu0 %v1094
        %5429 = vmatprep.subr.mxu0 %v1097
        %5430 = vmatpush1.msra.mxu0 %v1096
        %5431 = vmatprep.subr.mxu0 %v1099
        %5432 = vmatpush1.msra.mxu0 %v1098
        %5433 = vmatprep.subr.mxu0 %v1101
        %5434 = vmatpush1.msra.mxu0 %v1100
        %5435 = vmatprep.subr.mxu0 %v1103
        %5436 = vmatpush1.msra.mxu0 %v1102
        %5437 = vmatprep.subr.mxu0 %v1105
        %5438 = vmatpush1.msra.mxu0 %v1104
        %5439 = vmatprep.subr.mxu0 %v1107
        %5440 = vmatpush1.msra.mxu0 %v1106
        %5441 = vmatprep.subr.mxu0 %v1109
        %5442 = vmatpush1.msra.mxu0 %v1108
        %5443 = vmatprep.subr.mxu0 %v1111
        %5444 = vmatpush1.msra.mxu0 %v1110
        %5445 = vmatprep.subr.mxu0 %v1113
        %5446 = vmatpush1.msra.mxu0 %v1112
        %5447 = vmatprep.subr.mxu0 %v1115
        %5448 = vmatpush1.msra.mxu0 %v1114
        %5449 = vmatprep.subr.mxu0 %v1117
        %5450 = vmatpush1.msra.mxu0 %v1116
        %5451 = vmatprep.subr.mxu0 %v1119
        %5452 = vmatpush1.msra.mxu0 %v1118
        %5453 = vmatprep.subr.mxu0 %v1121
        %5454 = vmatpush1.msra.mxu0 %v1120
        %5455 = vmatprep.subr.mxu0 %v1123
        %5456 = vmatpush1.msra.mxu0 %v1122
        %5457 = vmatprep.subr.mxu0 0.0
        %5458 = vmatpush1.msra.mxu0 0.0
        %5459 = vmatprep.subr.mxu0 0.0
        %5460 = vmatpush1.msra.mxu0 0.0
        %5461 = vmatprep.subr.mxu0 0.0
        %5462 = vmatpush1.msra.mxu0 0.0
        %5463 = vmatprep.subr.mxu0 0.0
        %5464 = vmatpush1.msra.mxu0 0.0
        %5465 = vmatprep.subr.mxu0 0.0
        %5466 = vmatpush1.msra.mxu0 0.0
        %5467 = vmatprep.subr.mxu0 0.0
        %5468 = vmatpush1.msra.mxu0 0.0
        %5469 = vmatprep.subr.mxu0 0.0
        %5470 = vmatpush1.msra.mxu0 0.0
        %5471 = vmatprep.subr.mxu0 0.0
        %5472 = vmatpush1.msra.mxu0 0.0
        %5473 = vmatprep.subr.mxu0 0.0
        %5474 = vmatpush1.msra.mxu0 0.0
        %5475 = vmatprep.subr.mxu0 0.0
        %5476 = vmatpush1.msra.mxu0 0.0
        %5477 = vmatprep.subr.mxu0 0.0
        %5478 = vmatpush1.msra.mxu0 0.0
        %5479 = vmatprep.subr.mxu0 0.0
        %5480 = vmatpush1.msra.mxu0 0.0
        %5481 = vmatprep.subr.mxu0 0.0
        %5482 = vmatpush1.msra.mxu0 0.0
        %5483 = vmatprep.subr.mxu0 0.0
        %5484 = vmatpush1.msra.mxu0 0.0
        %5485 = vmatprep.subr.mxu0 0.0
        %5486 = vmatpush1.msra.mxu0 0.0
        %5487 = vmatprep.subr.mxu0 0.0
        %5488 = vmatpush1.msra.mxu0 0.0
        %5489 = vmatprep.mubr.f32.mxu0 0.0
        %5490 = vmatmul.mubr.f32.gmra.mrb[0].mxu0 %v4892
        %v5491 = vpop.f32.mrb[0].mxu0
        %v5492 = vadd.f32 0.0, %v5491
        %v5493 = vpop.f32.mrb[0].mxu0
        %v5494 = vadd.f32 0.0, %v5493
        %5495 = vdwg.mxu0
        %5497 = vmatprep.subr.mxu0 %v1125
        %5498 = vmatpush1.msra.mxu0 %v1124
        %5499 = vmatprep.subr.mxu0 %v1127
        %5500 = vmatpush1.msra.mxu0 %v1126
        %5501 = vmatprep.subr.mxu0 %v1129
        %5502 = vmatpush1.msra.mxu0 %v1128
        %5503 = vmatprep.subr.mxu0 %v1131
        %5504 = vmatpush1.msra.mxu0 %v1130
        %5505 = vmatprep.subr.mxu0 %v1133
        %5506 = vmatpush1.msra.mxu0 %v1132
        %5507 = vmatprep.subr.mxu0 %v1135
        %5508 = vmatpush1.msra.mxu0 %v1134
        %5509 = vmatprep.subr.mxu0 %v1137
        %5510 = vmatpush1.msra.mxu0 %v1136
        %5511 = vmatprep.subr.mxu0 %v1139
        %5512 = vmatpush1.msra.mxu0 %v1138
        %5513 = vmatprep.subr.mxu0 %v1141
        %5514 = vmatpush1.msra.mxu0 %v1140
        %5515 = vmatprep.subr.mxu0 %v1143
        %5516 = vmatpush1.msra.mxu0 %v1142
        %5517 = vmatprep.subr.mxu0 %v1145
        %5518 = vmatpush1.msra.mxu0 %v1144
        %5519 = vmatprep.subr.mxu0 %v1147
        %5520 = vmatpush1.msra.mxu0 %v1146
        %5521 = vmatprep.subr.mxu0 %v1149
        %5522 = vmatpush1.msra.mxu0 %v1148
        %5523 = vmatprep.subr.mxu0 %v1151
        %5524 = vmatpush1.msra.mxu0 %v1150
        %5525 = vmatprep.subr.mxu0 %v1153
        %5526 = vmatpush1.msra.mxu0 %v1152
        %5527 = vmatprep.subr.mxu0 %v1155
        %5528 = vmatpush1.msra.mxu0 %v1154
        %5529 = vmatprep.subr.mxu0 0.0
        %5530 = vmatpush1.msra.mxu0 0.0
        %5531 = vmatprep.subr.mxu0 0.0
        %5532 = vmatpush1.msra.mxu0 0.0
        %5533 = vmatprep.subr.mxu0 0.0
        %5534 = vmatpush1.msra.mxu0 0.0
        %5535 = vmatprep.subr.mxu0 0.0
        %5536 = vmatpush1.msra.mxu0 0.0
        %5537 = vmatprep.subr.mxu0 0.0
        %5538 = vmatpush1.msra.mxu0 0.0
        %5539 = vmatprep.subr.mxu0 0.0
        %5540 = vmatpush1.msra.mxu0 0.0
        %5541 = vmatprep.subr.mxu0 0.0
        %5542 = vmatpush1.msra.mxu0 0.0
        %5543 = vmatprep.subr.mxu0 0.0
        %5544 = vmatpush1.msra.mxu0 0.0
        %5545 = vmatprep.subr.mxu0 0.0
        %5546 = vmatpush1.msra.mxu0 0.0
        %5547 = vmatprep.subr.mxu0 0.0
        %5548 = vmatpush1.msra.mxu0 0.0
        %5549 = vmatprep.subr.mxu0 0.0
        %5550 = vmatpush1.msra.mxu0 0.0
        %5551 = vmatprep.subr.mxu0 0.0
        %5552 = vmatpush1.msra.mxu0 0.0
        %5553 = vmatprep.subr.mxu0 0.0
        %5554 = vmatpush1.msra.mxu0 0.0
        %5555 = vmatprep.subr.mxu0 0.0
        %5556 = vmatpush1.msra.mxu0 0.0
        %5557 = vmatprep.subr.mxu0 0.0
        %5558 = vmatpush1.msra.mxu0 0.0
        %5559 = vmatprep.subr.mxu0 0.0
        %5560 = vmatpush1.msra.mxu0 0.0
        %5561 = vmatprep.mubr.f32.mxu0 0.0
        %5562 = vmatmul.mubr.f32.gmra.mrb[0].mxu0 %v4971
        %v5563 = vpop.f32.mrb[0].mxu0
        %v5564 = vadd.f32 0.0, %v5563
        %v5565 = vpop.f32.mrb[0].mxu0
        %v5566 = vadd.f32 0.0, %v5565
        %5567 = vdwg.mxu0
        %5569 = vmatprep.subr.mxu0 %v1157
        %5570 = vmatpush1.msra.mxu0 %v1156
        %5571 = vmatprep.subr.mxu0 %v1159
        %5572 = vmatpush1.msra.mxu0 %v1158
        %5573 = vmatprep.subr.mxu0 %v1161
        %5574 = vmatpush1.msra.mxu0 %v1160
        %5575 = vmatprep.subr.mxu0 %v1163
        %5576 = vmatpush1.msra.mxu0 %v1162
        %5577 = vmatprep.subr.mxu0 %v1165
        %5578 = vmatpush1.msra.mxu0 %v1164
        %5579 = vmatprep.subr.mxu0 %v1167
        %5580 = vmatpush1.msra.mxu0 %v1166
        %5581 = vmatprep.subr.mxu0 %v1169
        %5582 = vmatpush1.msra.mxu0 %v1168
        %5583 = vmatprep.subr.mxu0 %v1171
        %5584 = vmatpush1.msra.mxu0 %v1170
        %5585 = vmatprep.subr.mxu0 %v1173
        %5586 = vmatpush1.msra.mxu0 %v1172
        %5587 = vmatprep.subr.mxu0 %v1175
        %5588 = vmatpush1.msra.mxu0 %v1174
        %5589 = vmatprep.subr.mxu0 %v1177
        %5590 = vmatpush1.msra.mxu0 %v1176
        %5591 = vmatprep.subr.mxu0 %v1179
        %5592 = vmatpush1.msra.mxu0 %v1178
        %5593 = vmatprep.subr.mxu0 %v1181
        %5594 = vmatpush1.msra.mxu0 %v1180
        %5595 = vmatprep.subr.mxu0 %v1183
        %5596 = vmatpush1.msra.mxu0 %v1182
        %5597 = vmatprep.subr.mxu0 %v1185
        %5598 = vmatpush1.msra.mxu0 %v1184
        %5599 = vmatprep.subr.mxu0 %v1187
        %5600 = vmatpush1.msra.mxu0 %v1186
        %5601 = vmatprep.subr.mxu0 0.0
        %5602 = vmatpush1.msra.mxu0 0.0
        %5603 = vmatprep.subr.mxu0 0.0
        %5604 = vmatpush1.msra.mxu0 0.0
        %5605 = vmatprep.subr.mxu0 0.0
        %5606 = vmatpush1.msra.mxu0 0.0
        %5607 = vmatprep.subr.mxu0 0.0
        %5608 = vmatpush1.msra.mxu0 0.0
        %5609 = vmatprep.subr.mxu0 0.0
        %5610 = vmatpush1.msra.mxu0 0.0
        %5611 = vmatprep.subr.mxu0 0.0
        %5612 = vmatpush1.msra.mxu0 0.0
        %5613 = vmatprep.subr.mxu0 0.0
        %5614 = vmatpush1.msra.mxu0 0.0
        %5615 = vmatprep.subr.mxu0 0.0
        %5616 = vmatpush1.msra.mxu0 0.0
        %5617 = vmatprep.subr.mxu0 0.0
        %5618 = vmatpush1.msra.mxu0 0.0
        %5619 = vmatprep.subr.mxu0 0.0
        %5620 = vmatpush1.msra.mxu0 0.0
        %5621 = vmatprep.subr.mxu0 0.0
        %5622 = vmatpush1.msra.mxu0 0.0
        %5623 = vmatprep.subr.mxu0 0.0
        %5624 = vmatpush1.msra.mxu0 0.0
        %5625 = vmatprep.subr.mxu0 0.0
        %5626 = vmatpush1.msra.mxu0 0.0
        %5627 = vmatprep.subr.mxu0 0.0
        %5628 = vmatpush1.msra.mxu0 0.0
        %5629 = vmatprep.subr.mxu0 0.0
        %5630 = vmatpush1.msra.mxu0 0.0
        %5631 = vmatprep.subr.mxu0 0.0
        %5632 = vmatpush1.msra.mxu0 0.0
        %5633 = vmatprep.mubr.f32.mxu0 0.0
        %5634 = vmatmul.mubr.f32.gmra.mrb[0].mxu0 %v5050
        %v5635 = vpop.f32.mrb[0].mxu0
        %v5636 = vadd.f32 0.0, %v5635
        %v5637 = vpop.f32.mrb[0].mxu0
        %v5638 = vadd.f32 0.0, %v5637
        %5639 = vdwg.mxu0
        %v5640 = vld [vmem:[#allocation5] sm:$0xff]
        %v5641 = vld [vmem:[#allocation5 + $0x8] sm:$0xff]
        %5643 = vset.pattern.permute.xlu0 0
        %5644 = vperm.xlu0 %5643, %v3476
        %v5645 = vpop.permute.xlu0 %5644
        %v5647 = vmul.f32 %v5645, %v5640
        %v5648 = vmul.f32 %v5645, %v5641
        %v5665 = vrot.slane %v5204, 7
        %v5666 = vsel %vm3456, %v5665, %v5132
        %v5667 = vrot.slane %v5276, 6
        %v5668 = vsel %vm3458, %v5667, %v5666
        %v5669 = vrot.slane %v5348, 5
        %v5670 = vsel %vm3460, %v5669, %v5668
        %v5671 = vrot.slane %v5420, 4
        %v5672 = vsel %vm3462, %v5671, %v5670
        %v5673 = vrot.slane %v5492, 3
        %v5674 = vsel %vm3464, %v5673, %v5672
        %v5675 = vrot.slane %v5564, 2
        %v5676 = vsel %vm3466, %v5675, %v5674
        %v5677 = vrot.slane %v5636, 1
        %v5678 = vsel %vm3468, %v5677, %v5676
        %v5679 = vrot.slane %v5206, 7
        %v5680 = vsel %vm3456, %v5679, %v5134
        %v5681 = vrot.slane %v5278, 6
        %v5682 = vsel %vm3458, %v5681, %v5680
        %v5683 = vrot.slane %v5350, 5
        %v5684 = vsel %vm3460, %v5683, %v5682
        %v5685 = vrot.slane %v5422, 4
        %v5686 = vsel %vm3462, %v5685, %v5684
        %v5687 = vrot.slane %v5494, 3
        %v5688 = vsel %vm3464, %v5687, %v5686
        %v5689 = vrot.slane %v5566, 2
        %v5690 = vsel %vm3466, %v5689, %v5688
        %v5691 = vrot.slane %v5638, 1
        %v5692 = vsel %vm3468, %v5691, %v5690
        %v5695 = vadd.f32 %v5647, %v5678
        %v5696 = vadd.f32 %v5648, %v5692
        %5697 = vst [vmem:[#allocation5] sm:$0xff] %v5695
        %5698 = vst [vmem:[#allocation5 + $0x8] sm:$0xff] %v5696
        %5699 = vst.msk [vmem:[#allocation3] sm:$0xff] %vm5062, %v3473
        %p5700 = scmp.eq.s32.totalorder %s37, 1
        // Predicated region
        $region125: #{decoder_forward.1} parent=71 // pred_check
          %p5701 = pneg %p5700
        $region126: #{decoder_forward.1} parent=71 // pred_check_branch
          %5703 = sbr.rel (%p5701) target = $region128
        $region127: #{decoder_forward.1} parent=71 // pred_region
          %v5704 = vld [vmem:[#allocation4] sm:$0xff]
          %v5705 = vrcp.pop %v5704
          %v5706 = vld [vmem:[#allocation5] sm:$0xff]
          %v5707 = vld [vmem:[#allocation5 + $0x8] sm:$0xff]
          %5709 = vset.pattern.permute.xlu0 0
          %5710 = vperm.xlu0 %5709, %v5705
          %v5711 = vpop.permute.xlu0 %5710
          %v5713 = vmul.f32 %v5706, %v5711
          %v5714 = vmul.f32 %v5707, %v5711
          %v5715 = vld [vmem:[#allocation6] sm:$0xff]
          %v5716 = vld [vmem:[#allocation6 + $0x8] sm:$0xff]
          %v5717 = vld [vmem:[#allocation6 + $0x10] sm:$0xff]
          %v5718 = vld [vmem:[#allocation19] sm:$0xff]
          %v5719 = vld [vmem:[#allocation19 + $0x8] sm:$0xff]
          %v5720 = vld [vmem:[#allocation19 + $0x10] sm:$0xff]
          %v5721 = vld [vmem:[#allocation19 + $0x18] sm:$0xff]
          %v5722 = vld [vmem:[#allocation19 + $0x20] sm:$0xff]
          %v5723 = vld [vmem:[#allocation19 + $0x28] sm:$0xff]
          %v5724 = vld [vmem:[#allocation19 + $0x30] sm:$0xff]
          %v5725 = vld [vmem:[#allocation19 + $0x38] sm:$0xff]
          %v5726 = vld [vmem:[#allocation19 + $0x40] sm:$0xff]
          %v5727 = vld [vmem:[#allocation19 + $0x48] sm:$0xff]
          %v5728 = vld [vmem:[#allocation19 + $0x50] sm:$0xff]
          %v5729 = vld [vmem:[#allocation19 + $0x58] sm:$0xff]
          %v5730 = vld [vmem:[#allocation19 + $0x60] sm:$0xff]
          %v5731 = vld [vmem:[#allocation19 + $0x68] sm:$0xff]
          %v5732 = vld [vmem:[#allocation19 + $0x70] sm:$0xff]
          %v5733 = vld [vmem:[#allocation19 + $0x78] sm:$0xff]
          %v5734 = vld [vmem:[#allocation19 + $0x80] sm:$0xff]
          %v5735 = vld [vmem:[#allocation19 + $0x88] sm:$0xff]
          %v5736 = vld [vmem:[#allocation19 + $0x90] sm:$0xff]
          %v5737 = vld [vmem:[#allocation19 + $0x98] sm:$0xff]
          %v5738 = vld [vmem:[#allocation19 + $0xa0] sm:$0xff]
          %v5739 = vld [vmem:[#allocation19 + $0xa8] sm:$0xff]
          %v5740 = vld [vmem:[#allocation19 + $0xb0] sm:$0xff]
          %v5741 = vld [vmem:[#allocation19 + $0xb8] sm:$0xff]
          %v5742 = vld [vmem:[#allocation19 + $0xc0] sm:$0xff]
          %v5743 = vld [vmem:[#allocation19 + $0xc8] sm:$0xff]
          %v5744 = vld [vmem:[#allocation19 + $0xd0] sm:$0xff]
          %v5745 = vld [vmem:[#allocation19 + $0xd8] sm:$0xff]
          %v5746 = vld [vmem:[#allocation19 + $0xe0] sm:$0xff]
          %v5747 = vld [vmem:[#allocation19 + $0xe8] sm:$0xff]
          %v5748 = vld [vmem:[#allocation19 + $0xf0] sm:$0xff]
          %v5749 = vld [vmem:[#allocation19 + $0xf8] sm:$0xff]
          %v5750 = vld [vmem:[#allocation19 + $0x100] sm:$0xff]
          %v5751 = vld [vmem:[#allocation19 + $0x108] sm:$0xff]
          %v5752 = vld [vmem:[#allocation19 + $0x110] sm:$0xff]
          %v5753 = vld [vmem:[#allocation19 + $0x118] sm:$0xff]
          %v5754 = vld [vmem:[#allocation19 + $0x120] sm:$0xff]
          %v5755 = vld [vmem:[#allocation19 + $0x128] sm:$0xff]
          %v5756 = vld [vmem:[#allocation19 + $0x130] sm:$0xff]
          %v5757 = vld [vmem:[#allocation19 + $0x138] sm:$0xff]
          %v5758 = vld [vmem:[#allocation19 + $0x140] sm:$0xff]
          %v5759 = vld [vmem:[#allocation19 + $0x148] sm:$0xff]
          %v5760 = vld [vmem:[#allocation19 + $0x150] sm:$0xff]
          %v5761 = vld [vmem:[#allocation19 + $0x158] sm:$0xff]
          %v5762 = vld [vmem:[#allocation19 + $0x160] sm:$0xff]
          %v5763 = vld [vmem:[#allocation19 + $0x168] sm:$0xff]
          %v5764 = vld [vmem:[#allocation19 + $0x170] sm:$0xff]
          %v5765 = vld [vmem:[#allocation19 + $0x178] sm:$0xff]
          %v5766 = vld [vmem:[#allocation19 + $0x180] sm:$0xff]
          %v5767 = vld [vmem:[#allocation19 + $0x188] sm:$0xff]
          %v5768 = vld [vmem:[#allocation19 + $0x190] sm:$0xff]
          %v5769 = vld [vmem:[#allocation19 + $0x198] sm:$0xff]
          %v5770 = vld [vmem:[#allocation19 + $0x1a0] sm:$0xff]
          %v5771 = vld [vmem:[#allocation19 + $0x1a8] sm:$0xff]
          %v5772 = vld [vmem:[#allocation19 + $0x1b0] sm:$0xff]
          %v5773 = vld [vmem:[#allocation19 + $0x1b8] sm:$0xff]
          %v5774 = vld [vmem:[#allocation19 + $0x1c0] sm:$0xff]
          %v5775 = vld [vmem:[#allocation19 + $0x1c8] sm:$0xff]
          %v5776 = vld [vmem:[#allocation19 + $0x1d0] sm:$0xff]
          %v5777 = vld [vmem:[#allocation19 + $0x1d8] sm:$0xff]
          %v5778 = vld [vmem:[#allocation19 + $0x1e0] sm:$0xff]
          %v5779 = vld [vmem:[#allocation19 + $0x1e8] sm:$0xff]
          %v5780 = vld [vmem:[#allocation19 + $0x1f0] sm:$0xff]
          %v5781 = vld [vmem:[#allocation19 + $0x1f8] sm:$0xff]
          %v5782 = vld [vmem:[#allocation19 + $0x200] sm:$0xff]
          %v5783 = vld [vmem:[#allocation19 + $0x208] sm:$0xff]
          %v5784 = vld [vmem:[#allocation19 + $0x210] sm:$0xff]
          %v5785 = vld [vmem:[#allocation19 + $0x218] sm:$0xff]
          %v5786 = vld [vmem:[#allocation19 + $0x220] sm:$0xff]
          %v5787 = vld [vmem:[#allocation19 + $0x228] sm:$0xff]
          %v5788 = vld [vmem:[#allocation19 + $0x230] sm:$0xff]
          %v5789 = vld [vmem:[#allocation19 + $0x238] sm:$0xff]
          %v5790 = vld [vmem:[#allocation19 + $0x240] sm:$0xff]
          %v5791 = vld [vmem:[#allocation19 + $0x248] sm:$0xff]
          %v5792 = vld [vmem:[#allocation19 + $0x250] sm:$0xff]
          %v5793 = vld [vmem:[#allocation19 + $0x258] sm:$0xff]
          %v5794 = vld [vmem:[#allocation19 + $0x260] sm:$0xff]
          %v5795 = vld [vmem:[#allocation19 + $0x268] sm:$0xff]
          %v5796 = vld [vmem:[#allocation19 + $0x270] sm:$0xff]
          %v5797 = vld [vmem:[#allocation19 + $0x278] sm:$0xff]
          %v5798 = vld [vmem:[#allocation19 + $0x280] sm:$0xff]
          %v5799 = vld [vmem:[#allocation19 + $0x288] sm:$0xff]
          %v5800 = vld [vmem:[#allocation19 + $0x290] sm:$0xff]
          %v5801 = vld [vmem:[#allocation19 + $0x298] sm:$0xff]
          %v5802 = vld [vmem:[#allocation19 + $0x2a0] sm:$0xff]
          %v5803 = vld [vmem:[#allocation19 + $0x2a8] sm:$0xff]
          %v5804 = vld [vmem:[#allocation19 + $0x2b0] sm:$0xff]
          %v5805 = vld [vmem:[#allocation19 + $0x2b8] sm:$0xff]
          %v5806 = vld [vmem:[#allocation19 + $0x2c0] sm:$0xff]
          %v5807 = vld [vmem:[#allocation19 + $0x2c8] sm:$0xff]
          %v5808 = vld [vmem:[#allocation19 + $0x2d0] sm:$0xff]
          %v5809 = vld [vmem:[#allocation19 + $0x2d8] sm:$0xff]
          %v5810 = vld [vmem:[#allocation19 + $0x2e0] sm:$0xff]
          %v5811 = vld [vmem:[#allocation19 + $0x2e8] sm:$0xff]
          %v5812 = vld [vmem:[#allocation19 + $0x2f0] sm:$0xff]
          %v5813 = vld [vmem:[#allocation19 + $0x2f8] sm:$0xff]
          %5814 = vmatprep.subr.mxu0 %v5719
          %5815 = vmatpush1.msra.mxu0 %v5718
          %5816 = vmatprep.subr.mxu0 %v5722
          %5817 = vmatpush1.msra.mxu0 %v5721
          %5818 = vmatprep.subr.mxu0 %v5725
          %5819 = vmatpush1.msra.mxu0 %v5724
          %5820 = vmatprep.subr.mxu0 %v5728
          %5821 = vmatpush1.msra.mxu0 %v5727
          %5822 = vmatprep.subr.mxu0 %v5731
          %5823 = vmatpush1.msra.mxu0 %v5730
          %5824 = vmatprep.subr.mxu0 %v5734
          %5825 = vmatpush1.msra.mxu0 %v5733
          %5826 = vmatprep.subr.mxu0 %v5737
          %5827 = vmatpush1.msra.mxu0 %v5736
          %5828 = vmatprep.subr.mxu0 %v5740
          %5829 = vmatpush1.msra.mxu0 %v5739
          %5830 = vmatprep.subr.mxu0 %v5743
          %5831 = vmatpush1.msra.mxu0 %v5742
          %5832 = vmatprep.subr.mxu0 %v5746
          %5833 = vmatpush1.msra.mxu0 %v5745
          %5834 = vmatprep.subr.mxu0 %v5749
          %5835 = vmatpush1.msra.mxu0 %v5748
          %5836 = vmatprep.subr.mxu0 %v5752
          %5837 = vmatpush1.msra.mxu0 %v5751
          %5838 = vmatprep.subr.mxu0 %v5755
          %5839 = vmatpush1.msra.mxu0 %v5754
          %5840 = vmatprep.subr.mxu0 %v5758
          %5841 = vmatpush1.msra.mxu0 %v5757
          %5842 = vmatprep.subr.mxu0 %v5761
          %5843 = vmatpush1.msra.mxu0 %v5760
          %5844 = vmatprep.subr.mxu0 %v5764
          %5845 = vmatpush1.msra.mxu0 %v5763
          %5846 = vmatprep.subr.mxu0 %v5767
          %5847 = vmatpush1.msra.mxu0 %v5766
          %5848 = vmatprep.subr.mxu0 %v5770
          %5849 = vmatpush1.msra.mxu0 %v5769
          %5850 = vmatprep.subr.mxu0 %v5773
          %5851 = vmatpush1.msra.mxu0 %v5772
          %5852 = vmatprep.subr.mxu0 %v5776
          %5853 = vmatpush1.msra.mxu0 %v5775
          %5854 = vmatprep.subr.mxu0 %v5779
          %5855 = vmatpush1.msra.mxu0 %v5778
          %5856 = vmatprep.subr.mxu0 %v5782
          %5857 = vmatpush1.msra.mxu0 %v5781
          %5858 = vmatprep.subr.mxu0 %v5785
          %5859 = vmatpush1.msra.mxu0 %v5784
          %5860 = vmatprep.subr.mxu0 %v5788
          %5861 = vmatpush1.msra.mxu0 %v5787
          %5862 = vmatprep.subr.mxu0 %v5791
          %5863 = vmatpush1.msra.mxu0 %v5790
          %5864 = vmatprep.subr.mxu0 %v5794
          %5865 = vmatpush1.msra.mxu0 %v5793
          %5866 = vmatprep.subr.mxu0 %v5797
          %5867 = vmatpush1.msra.mxu0 %v5796
          %5868 = vmatprep.subr.mxu0 %v5800
          %5869 = vmatpush1.msra.mxu0 %v5799
          %5870 = vmatprep.subr.mxu0 %v5803
          %5871 = vmatpush1.msra.mxu0 %v5802
          %5872 = vmatprep.subr.mxu0 %v5806
          %5873 = vmatpush1.msra.mxu0 %v5805
          %5874 = vmatprep.subr.mxu0 %v5809
          %5875 = vmatpush1.msra.mxu0 %v5808
          %5876 = vmatprep.subr.mxu0 %v5812
          %5877 = vmatpush1.msra.mxu0 %v5811
          %5878 = vmatprep.mubr.f32.mxu0 %v5714
          %5879 = vmatmul.mubr.f32.gmra.mrb[0].mxu0 %v5713
          %v5880 = vpop.f32.mrb[0].mxu0
          %v5881 = vadd.f32 0.0, %v5880
          %v5882 = vpop.f32.mrb[0].mxu0
          %v5883 = vadd.f32 0.0, %v5882
          %5884 = vdwg.mxu0
          %5885 = vmatprep.subr.mxu0 0.0
          %5886 = vmatpush1.msra.mxu0 %v5720
          %5887 = vmatprep.subr.mxu0 0.0
          %5888 = vmatpush1.msra.mxu0 %v5723
          %5889 = vmatprep.subr.mxu0 0.0
          %5890 = vmatpush1.msra.mxu0 %v5726
          %5891 = vmatprep.subr.mxu0 0.0
          %5892 = vmatpush1.msra.mxu0 %v5729
          %5893 = vmatprep.subr.mxu0 0.0
          %5894 = vmatpush1.msra.mxu0 %v5732
          %5895 = vmatprep.subr.mxu0 0.0
          %5896 = vmatpush1.msra.mxu0 %v5735
          %5897 = vmatprep.subr.mxu0 0.0
          %5898 = vmatpush1.msra.mxu0 %v5738
          %5899 = vmatprep.subr.mxu0 0.0
          %5900 = vmatpush1.msra.mxu0 %v5741
          %5901 = vmatprep.subr.mxu0 0.0
          %5902 = vmatpush1.msra.mxu0 %v5744
          %5903 = vmatprep.subr.mxu0 0.0
          %5904 = vmatpush1.msra.mxu0 %v5747
          %5905 = vmatprep.subr.mxu0 0.0
          %5906 = vmatpush1.msra.mxu0 %v5750
          %5907 = vmatprep.subr.mxu0 0.0
          %5908 = vmatpush1.msra.mxu0 %v5753
          %5909 = vmatprep.subr.mxu0 0.0
          %5910 = vmatpush1.msra.mxu0 %v5756
          %5911 = vmatprep.subr.mxu0 0.0
          %5912 = vmatpush1.msra.mxu0 %v5759
          %5913 = vmatprep.subr.mxu0 0.0
          %5914 = vmatpush1.msra.mxu0 %v5762
          %5915 = vmatprep.subr.mxu0 0.0
          %5916 = vmatpush1.msra.mxu0 %v5765
          %5917 = vmatprep.subr.mxu0 0.0
          %5918 = vmatpush1.msra.mxu0 %v5768
          %5919 = vmatprep.subr.mxu0 0.0
          %5920 = vmatpush1.msra.mxu0 %v5771
          %5921 = vmatprep.subr.mxu0 0.0
          %5922 = vmatpush1.msra.mxu0 %v5774
          %5923 = vmatprep.subr.mxu0 0.0
          %5924 = vmatpush1.msra.mxu0 %v5777
          %5925 = vmatprep.subr.mxu0 0.0
          %5926 = vmatpush1.msra.mxu0 %v5780
          %5927 = vmatprep.subr.mxu0 0.0
          %5928 = vmatpush1.msra.mxu0 %v5783
          %5929 = vmatprep.subr.mxu0 0.0
          %5930 = vmatpush1.msra.mxu0 %v5786
          %5931 = vmatprep.subr.mxu0 0.0
          %5932 = vmatpush1.msra.mxu0 %v5789
          %5933 = vmatprep.subr.mxu0 0.0
          %5934 = vmatpush1.msra.mxu0 %v5792
          %5935 = vmatprep.subr.mxu0 0.0
          %5936 = vmatpush1.msra.mxu0 %v5795
          %5937 = vmatprep.subr.mxu0 0.0
          %5938 = vmatpush1.msra.mxu0 %v5798
          %5939 = vmatprep.subr.mxu0 0.0
          %5940 = vmatpush1.msra.mxu0 %v5801
          %5941 = vmatprep.subr.mxu0 0.0
          %5942 = vmatpush1.msra.mxu0 %v5804
          %5943 = vmatprep.subr.mxu0 0.0
          %5944 = vmatpush1.msra.mxu0 %v5807
          %5945 = vmatprep.subr.mxu0 0.0
          %5946 = vmatpush1.msra.mxu0 %v5810
          %5947 = vmatprep.subr.mxu0 0.0
          %5948 = vmatpush1.msra.mxu0 %v5813
          %5949 = vmatprep.mubr.f32.mxu0 %v5714
          %5950 = vmatmul.mubr.f32.gmra.mrb[0].mxu0 %v5713
          %v5951 = vpop.f32.mrb[0].mxu0
          %v5952 = vadd.f32 0.0, %v5951
          %v5953 = vpop.f32.mrb[0].mxu0
          %5954 = vdwg.mxu0
          %v5955 = vadd.f32 %v5715, %v5881
          %v5956 = vadd.f32 %v5716, %v5883
          %v5957 = vadd.f32 %v5717, %v5952
          %v5958 = vxor.u32 %v5955, 2147483648
          %v5959 = vmul.f32 %v5958, 1.442695
          %v5960 = vpow.pop %v5959
          %v5961 = vadd.f32 %v5960, 1.0
          %v5962 = vrcp.pop %v5961
          %v5963 = vmul.f32 1.0, %v5962
          %v5964 = vtanh.pop %v5956
          %v5965 = vxor.u32 %v5957, 2147483648
          %v5966 = vmul.f32 %v5965, 1.442695
          %v5967 = vpow.pop %v5966
          %v5968 = vadd.f32 %v5967, 1.0
          %v5969 = vrcp.pop %v5968
          %v5970 = vmul.f32 1.0, %v5969
          %v5971 = vmul.f32 %v5963, %v5964
          %v5972 = vtanh.pop %v5971
          %v5973 = vmul.f32 %v5970, %v5972
          %5974 = vst [vmem:[#allocation28] sm:$0xff] %v5973
          %v5975 = vld [vmem:[#allocation22] sm:$0xff]
          %v5976 = vld [vmem:[#allocation22 + $0x8] sm:$0xff]
          %v5977 = vld [vmem:[#allocation22 + $0x10] sm:$0xff]
          %v5978 = vld [vmem:[#allocation22 + $0x18] sm:$0xff]
          %v5979 = vld [vmem:[#allocation22 + $0x20] sm:$0xff]
          %v5980 = vld [vmem:[#allocation22 + $0x28] sm:$0xff]
          %v5981 = vld [vmem:[#allocation22 + $0x30] sm:$0xff]
          %v5982 = vld [vmem:[#allocation22 + $0x38] sm:$0xff]
          %v5983 = vld [vmem:[#allocation22 + $0x40] sm:$0xff]
          %v5984 = vld [vmem:[#allocation22 + $0x48] sm:$0xff]
          %v5985 = vld [vmem:[#allocation22 + $0x50] sm:$0xff]
          %v5986 = vld [vmem:[#allocation22 + $0x58] sm:$0xff]
          %v5987 = vld [vmem:[#allocation22 + $0x60] sm:$0xff]
          %v5988 = vld [vmem:[#allocation22 + $0x68] sm:$0xff]
          %v5989 = vld [vmem:[#allocation22 + $0x70] sm:$0xff]
          %v5990 = vld [vmem:[#allocation22 + $0x78] sm:$0xff]
          %v5991 = vld [vmem:[#allocation22 + $0x80] sm:$0xff]
          %v5992 = vld [vmem:[#allocation22 + $0x88] sm:$0xff]
          %v5993 = vld [vmem:[#allocation22 + $0x90] sm:$0xff]
          %v5994 = vld [vmem:[#allocation22 + $0x98] sm:$0xff]
          %v5995 = vld [vmem:[#allocation22 + $0xa0] sm:$0xff]
          %v5996 = vld [vmem:[#allocation22 + $0xa8] sm:$0xff]
          %v5997 = vld [vmem:[#allocation22 + $0xb0] sm:$0xff]
          %v5998 = vld [vmem:[#allocation22 + $0xb8] sm:$0xff]
          %v5999 = vld [vmem:[#allocation22 + $0xc0] sm:$0xff]
          %v6000 = vld [vmem:[#allocation22 + $0xc8] sm:$0xff]
          %v6001 = vld [vmem:[#allocation22 + $0xd0] sm:$0xff]
          %v6002 = vld [vmem:[#allocation22 + $0xd8] sm:$0xff]
          %v6003 = vld [vmem:[#allocation22 + $0xe0] sm:$0xff]
          %v6004 = vld [vmem:[#allocation22 + $0xe8] sm:$0xff]
          %v6005 = vld [vmem:[#allocation22 + $0xf0] sm:$0xff]
          %v6006 = vld [vmem:[#allocation22 + $0xf8] sm:$0xff]
          %v6007 = vld [vmem:[#allocation24] sm:$0xff]
          %v6008 = vld [vmem:[#allocation24 + $0x8] sm:$0xff]
          %v6009 = vld [vmem:[#allocation24 + $0x10] sm:$0xff]
          %v6010 = vld [vmem:[#allocation24 + $0x18] sm:$0xff]
          %v6011 = vld [vmem:[#allocation24 + $0x20] sm:$0xff]
          %v6012 = vld [vmem:[#allocation24 + $0x28] sm:$0xff]
          %v6013 = vld [vmem:[#allocation24 + $0x30] sm:$0xff]
          %v6014 = vld [vmem:[#allocation24 + $0x38] sm:$0xff]
          %v6015 = vld [vmem:[#allocation24 + $0x40] sm:$0xff]
          %v6016 = vld [vmem:[#allocation24 + $0x48] sm:$0xff]
          %v6017 = vld [vmem:[#allocation24 + $0x50] sm:$0xff]
          %v6018 = vld [vmem:[#allocation24 + $0x58] sm:$0xff]
          %v6019 = vld [vmem:[#allocation24 + $0x60] sm:$0xff]
          %v6020 = vld [vmem:[#allocation24 + $0x68] sm:$0xff]
          %v6021 = vld [vmem:[#allocation24 + $0x70] sm:$0xff]
          %v6022 = vld [vmem:[#allocation24 + $0x78] sm:$0xff]
          %v6023 = vld [vmem:[#allocation24 + $0x80] sm:$0xff]
          %v6024 = vld [vmem:[#allocation24 + $0x88] sm:$0xff]
          %v6025 = vld [vmem:[#allocation24 + $0x90] sm:$0xff]
          %v6026 = vld [vmem:[#allocation24 + $0x98] sm:$0xff]
          %v6027 = vld [vmem:[#allocation24 + $0xa0] sm:$0xff]
          %v6028 = vld [vmem:[#allocation24 + $0xa8] sm:$0xff]
          %v6029 = vld [vmem:[#allocation24 + $0xb0] sm:$0xff]
          %v6030 = vld [vmem:[#allocation24 + $0xb8] sm:$0xff]
          %v6031 = vld [vmem:[#allocation24 + $0xc0] sm:$0xff]
          %v6032 = vld [vmem:[#allocation24 + $0xc8] sm:$0xff]
          %v6033 = vld [vmem:[#allocation24 + $0xd0] sm:$0xff]
          %v6034 = vld [vmem:[#allocation24 + $0xd8] sm:$0xff]
          %v6035 = vld [vmem:[#allocation24 + $0xe0] sm:$0xff]
          %v6036 = vld [vmem:[#allocation24 + $0xe8] sm:$0xff]
          %v6037 = vld [vmem:[#allocation24 + $0xf0] sm:$0xff]
          %v6038 = vld [vmem:[#allocation24 + $0xf8] sm:$0xff]
          %v6039 = vld [vmem:[#allocation24 + $0x100] sm:$0xff]
          %v6040 = vld [vmem:[#allocation24 + $0x108] sm:$0xff]
          %v6041 = vld [vmem:[#allocation24 + $0x110] sm:$0xff]
          %v6042 = vld [vmem:[#allocation24 + $0x118] sm:$0xff]
          %v6043 = vld [vmem:[#allocation24 + $0x120] sm:$0xff]
          %v6044 = vld [vmem:[#allocation24 + $0x128] sm:$0xff]
          %v6045 = vld [vmem:[#allocation24 + $0x130] sm:$0xff]
          %v6046 = vld [vmem:[#allocation24 + $0x138] sm:$0xff]
          %v6047 = vld [vmem:[#allocation24 + $0x140] sm:$0xff]
          %v6048 = vld [vmem:[#allocation24 + $0x148] sm:$0xff]
          %v6049 = vld [vmem:[#allocation24 + $0x150] sm:$0xff]
          %v6050 = vld [vmem:[#allocation24 + $0x158] sm:$0xff]
          %v6051 = vld [vmem:[#allocation24 + $0x160] sm:$0xff]
          %v6052 = vld [vmem:[#allocation24 + $0x168] sm:$0xff]
          %v6053 = vld [vmem:[#allocation24 + $0x170] sm:$0xff]
          %v6054 = vld [vmem:[#allocation24 + $0x178] sm:$0xff]
          %v6055 = vld [vmem:[#allocation24 + $0x180] sm:$0xff]
          %v6056 = vld [vmem:[#allocation24 + $0x188] sm:$0xff]
          %v6057 = vld [vmem:[#allocation24 + $0x190] sm:$0xff]
          %v6058 = vld [vmem:[#allocation24 + $0x198] sm:$0xff]
          %v6059 = vld [vmem:[#allocation24 + $0x1a0] sm:$0xff]
          %v6060 = vld [vmem:[#allocation24 + $0x1a8] sm:$0xff]
          %v6061 = vld [vmem:[#allocation24 + $0x1b0] sm:$0xff]
          %v6062 = vld [vmem:[#allocation24 + $0x1b8] sm:$0xff]
          %v6063 = vld [vmem:[#allocation24 + $0x1c0] sm:$0xff]
          %v6064 = vld [vmem:[#allocation24 + $0x1c8] sm:$0xff]
          %v6065 = vld [vmem:[#allocation24 + $0x1d0] sm:$0xff]
          %v6066 = vld [vmem:[#allocation24 + $0x1d8] sm:$0xff]
          %v6067 = vld [vmem:[#allocation24 + $0x1e0] sm:$0xff]
          %v6068 = vld [vmem:[#allocation24 + $0x1e8] sm:$0xff]
          %v6069 = vld [vmem:[#allocation24 + $0x1f0] sm:$0xff]
          %v6070 = vld [vmem:[#allocation24 + $0x1f8] sm:$0xff]
          %6071 = vmatprep.subr.mxu0 %v6008
          %6072 = vmatpush1.msra.mxu0 %v6007
          %6073 = vmatprep.subr.mxu0 %v6010
          %6074 = vmatpush1.msra.mxu0 %v6009
          %6075 = vmatprep.subr.mxu0 %v6012
          %6076 = vmatpush1.msra.mxu0 %v6011
          %6077 = vmatprep.subr.mxu0 %v6014
          %6078 = vmatpush1.msra.mxu0 %v6013
          %6079 = vmatprep.subr.mxu0 %v6016
          %6080 = vmatpush1.msra.mxu0 %v6015
          %6081 = vmatprep.subr.mxu0 %v6018
          %6082 = vmatpush1.msra.mxu0 %v6017
          %6083 = vmatprep.subr.mxu0 %v6020
          %6084 = vmatpush1.msra.mxu0 %v6019
          %6085 = vmatprep.subr.mxu0 %v6022
          %6086 = vmatpush1.msra.mxu0 %v6021
          %6087 = vmatprep.subr.mxu0 %v6024
          %6088 = vmatpush1.msra.mxu0 %v6023
          %6089 = vmatprep.subr.mxu0 %v6026
          %6090 = vmatpush1.msra.mxu0 %v6025
          %6091 = vmatprep.subr.mxu0 %v6028
          %6092 = vmatpush1.msra.mxu0 %v6027
          %6093 = vmatprep.subr.mxu0 %v6030
          %6094 = vmatpush1.msra.mxu0 %v6029
          %6095 = vmatprep.subr.mxu0 %v6032
          %6096 = vmatpush1.msra.mxu0 %v6031
          %6097 = vmatprep.subr.mxu0 %v6034
          %6098 = vmatpush1.msra.mxu0 %v6033
          %6099 = vmatprep.subr.mxu0 %v6036
          %6100 = vmatpush1.msra.mxu0 %v6035
          %6101 = vmatprep.subr.mxu0 %v6038
          %6102 = vmatpush1.msra.mxu0 %v6037
          %6103 = vmatprep.subr.mxu0 %v6040
          %6104 = vmatpush1.msra.mxu0 %v6039
          %6105 = vmatprep.subr.mxu0 %v6042
          %6106 = vmatpush1.msra.mxu0 %v6041
          %6107 = vmatprep.subr.mxu0 %v6044
          %6108 = vmatpush1.msra.mxu0 %v6043
          %6109 = vmatprep.subr.mxu0 %v6046
          %6110 = vmatpush1.msra.mxu0 %v6045
          %6111 = vmatprep.subr.mxu0 %v6048
          %6112 = vmatpush1.msra.mxu0 %v6047
          %6113 = vmatprep.subr.mxu0 %v6050
          %6114 = vmatpush1.msra.mxu0 %v6049
          %6115 = vmatprep.subr.mxu0 %v6052
          %6116 = vmatpush1.msra.mxu0 %v6051
          %6117 = vmatprep.subr.mxu0 %v6054
          %6118 = vmatpush1.msra.mxu0 %v6053
          %6119 = vmatprep.subr.mxu0 %v6056
          %6120 = vmatpush1.msra.mxu0 %v6055
          %6121 = vmatprep.subr.mxu0 %v6058
          %6122 = vmatpush1.msra.mxu0 %v6057
          %6123 = vmatprep.subr.mxu0 %v6060
          %6124 = vmatpush1.msra.mxu0 %v6059
          %6125 = vmatprep.subr.mxu0 %v6062
          %6126 = vmatpush1.msra.mxu0 %v6061
          %6127 = vmatprep.subr.mxu0 %v6064
          %6128 = vmatpush1.msra.mxu0 %v6063
          %6129 = vmatprep.subr.mxu0 %v6066
          %6130 = vmatpush1.msra.mxu0 %v6065
          %6131 = vmatprep.subr.mxu0 %v6068
          %6132 = vmatpush1.msra.mxu0 %v6067
          %6133 = vmatprep.subr.mxu0 %v6070
          %6134 = vmatpush1.msra.mxu0 %v6069
          %6135 = vmatprep.mubr.f32.mxu0 %v5714
          %6136 = vmatmul.mubr.f32.gmra.mrb[0].mxu0 %v5713
          %v6137 = vpop.f32.mrb[0].mxu0
          %v6138 = vadd.f32 0.0, %v6137
          %v6139 = vpop.f32.mrb[0].mxu0
          %v6140 = vadd.f32 0.0, %v6139
          %6141 = vdwg.mxu0
          %6142 = vmatprep.subr.mxu0 %v5976
          %6143 = vmatpush1.msra.mxu0 %v5975
          %6144 = vmatprep.subr.mxu0 %v5978
          %6145 = vmatpush1.msra.mxu0 %v5977
          %6146 = vmatprep.subr.mxu0 %v5980
          %6147 = vmatpush1.msra.mxu0 %v5979
          %6148 = vmatprep.subr.mxu0 %v5982
          %6149 = vmatpush1.msra.mxu0 %v5981
          %6150 = vmatprep.subr.mxu0 %v5984
          %6151 = vmatpush1.msra.mxu0 %v5983
          %6152 = vmatprep.subr.mxu0 %v5986
          %6153 = vmatpush1.msra.mxu0 %v5985
          %6154 = vmatprep.subr.mxu0 %v5988
          %6155 = vmatpush1.msra.mxu0 %v5987
          %6156 = vmatprep.subr.mxu0 %v5990
          %6157 = vmatpush1.msra.mxu0 %v5989
          %6158 = vmatprep.subr.mxu0 %v5992
          %6159 = vmatpush1.msra.mxu0 %v5991
          %6160 = vmatprep.subr.mxu0 %v5994
          %6161 = vmatpush1.msra.mxu0 %v5993
          %6162 = vmatprep.subr.mxu0 %v5996
          %6163 = vmatpush1.msra.mxu0 %v5995
          %6164 = vmatprep.subr.mxu0 %v5998
          %6165 = vmatpush1.msra.mxu0 %v5997
          %6166 = vmatprep.subr.mxu0 %v6000
          %6167 = vmatpush1.msra.mxu0 %v5999
          %6168 = vmatprep.subr.mxu0 %v6002
          %6169 = vmatpush1.msra.mxu0 %v6001
          %6170 = vmatprep.subr.mxu0 %v6004
          %6171 = vmatpush1.msra.mxu0 %v6003
          %6172 = vmatprep.subr.mxu0 %v6006
          %6173 = vmatpush1.msra.mxu0 %v6005
          %6174 = vmatprep.subr.mxu0 0.0
          %6175 = vmatpush1.msra.mxu0 0.0
          %6176 = vmatprep.subr.mxu0 0.0
          %6177 = vmatpush1.msra.mxu0 0.0
          %6178 = vmatprep.subr.mxu0 0.0
          %6179 = vmatpush1.msra.mxu0 0.0
          %6180 = vmatprep.subr.mxu0 0.0
          %6181 = vmatpush1.msra.mxu0 0.0
          %6182 = vmatprep.subr.mxu0 0.0
          %6183 = vmatpush1.msra.mxu0 0.0
          %6184 = vmatprep.subr.mxu0 0.0
          %6185 = vmatpush1.msra.mxu0 0.0
          %6186 = vmatprep.subr.mxu0 0.0
          %6187 = vmatpush1.msra.mxu0 0.0
          %6188 = vmatprep.subr.mxu0 0.0
          %6189 = vmatpush1.msra.mxu0 0.0
          %6190 = vmatprep.subr.mxu0 0.0
          %6191 = vmatpush1.msra.mxu0 0.0
          %6192 = vmatprep.subr.mxu0 0.0
          %6193 = vmatpush1.msra.mxu0 0.0
          %6194 = vmatprep.subr.mxu0 0.0
          %6195 = vmatpush1.msra.mxu0 0.0
          %6196 = vmatprep.subr.mxu0 0.0
          %6197 = vmatpush1.msra.mxu0 0.0
          %6198 = vmatprep.subr.mxu0 0.0
          %6199 = vmatpush1.msra.mxu0 0.0
          %6200 = vmatprep.subr.mxu0 0.0
          %6201 = vmatpush1.msra.mxu0 0.0
          %6202 = vmatprep.subr.mxu0 0.0
          %6203 = vmatpush1.msra.mxu0 0.0
          %6204 = vmatprep.subr.mxu0 0.0
          %6205 = vmatpush1.msra.mxu0 0.0
          %6206 = vmatprep.mubr.f32.mxu0 0.0
          %6207 = vmatmul.mubr.f32.gmra.mrb[0].mxu0 %v5973
          %v6208 = vpop.f32.mrb[0].mxu0
          %v6209 = vadd.f32 %v6138, %v6208
          %v6210 = vpop.f32.mrb[0].mxu0
          %v6211 = vadd.f32 %v6140, %v6210
          %6212 = vdwg.mxu0
          %v6213 = vld [vmem:[#allocation25] sm:$0x3]
          %v6215 = vlaneseq
          %v6216 = vshrl.u32 %v6215, 7
          %v6217 = vsub.s32 0, %v6216
          %v6218 = vrot.slane %v6213, %v6217
          %v6219 = vlaneseq
          %v6220 = vshrl.u32 %v6219, 7
          %v6221 = vsub.s32 1, %v6220
          %v6222 = vrot.slane %v6213, %v6221
          %v6225 = vadd.f32 %v6209, %v6218
          %v6226 = vadd.f32 %v6211, %v6222
          %6227 = vst [vmem:[#allocation27] sm:$0xff] %v6225
          %6228 = vst [vmem:[#allocation27 + $0x8] sm:$0xff] %v6226
        $region128: #{decoder_forward.1} parent=71 // pred_fallthru
          _
        // Predicated region
        $region129: #{decoder_forward.1} parent=71 // pred_check
          %p6229 = pneg %p328
        $region130: #{decoder_forward.1} parent=71 // pred_check_branch
          %6231 = sbr.rel (%p6229) target = $region132
        $region131: #{decoder_forward.1} parent=71 // pred_region
          %s6233 = ssub.s32 256, 256
          %6234 = vsyncadd [#allocation9], %s6233
          %s6236 = sshll.u32 [#allocation27], 4
          %s6237 = int_to_ptr.vmem [resolvable:$true] %s6236
          %6239 = dma.vmem_to_hbm [thread:$0]  %s6237, 256, %s13, [#allocation9]
        $region132: #{decoder_forward.1} parent=71 // pred_fallthru
          _
        // Predicated region
        $region133: #{decoder_forward.1} parent=71 // pred_check
          %p6240 = pneg %p349
        $region134: #{decoder_forward.1} parent=71 // pred_check_branch
          %6242 = sbr.rel (%p6240) target = $region136
        $region135: #{decoder_forward.1} parent=71 // pred_region
          %s6244 = ssub.s32 128, 128
          %6245 = vsyncadd [#allocation29], %s6244
          %s6247 = sshll.u32 [#allocation28], 4
          %s6248 = int_to_ptr.vmem [resolvable:$true] %s6247
          %6250 = dma.vmem_to_hbm [thread:$0]  %s6248, 128, %s14, [#allocation29]
        $region136: #{decoder_forward.1} parent=71 // pred_fallthru
          _
        // Predicated region
        $region137: #{decoder_forward.1} parent=71 // pred_check
          %p6251 = pneg %p328
        $region138: #{decoder_forward.1} parent=71 // pred_check_branch
          %6253 = sbr.rel (%p6251) target = $region140
        $region139: #{decoder_forward.1} parent=71 // pred_region
          %6254 = dma.done [#allocation9], 256
        $region140: #{decoder_forward.1} parent=71 // pred_fallthru
          _
        // Predicated region
        $region141: #{decoder_forward.1} parent=71 // pred_check
          %p6255 = pneg %p349
        $region142: #{decoder_forward.1} parent=71 // pred_check_branch
          %6257 = sbr.rel (%p6255) target = $region144
        $region143: #{decoder_forward.1} parent=71 // pred_region
          %6258 = dma.done [#allocation29], 128
        $region144: #{decoder_forward.1} parent=71 // pred_fallthru
          _
      $region72: #{decoder_forward.1} parent=5 // pred_fallthru
        _
      %p6259 = scmp.le.s32.totalorder 2, %s32
      // Predicated region
      $region145: #{decoder_forward.1} parent=5 // pred_check
        %p6260 = pneg %p6259
      $region146: #{decoder_forward.1} parent=5 // pred_check_branch
        %6262 = sbr.rel (%p6260) target = $region148
      $region147: #{decoder_forward.1} parent=5 // pred_region
        %s6263 = ssub.s32 %s32, 2
      $region148: #{decoder_forward.1} parent=5 // pred_fallthru
        _
    $region6: #{decoder_forward.1} parent=1 // loop_footer
      %s36 = sadd.s32 1, %s32
    $region7: #{decoder_forward.1} parent=1 // loop_footer_branch
      %31 = sbr.rel target = $region3
    $region8: #{decoder_forward.1} parent=1 // loop_exit
      _
    %6264 = vsyncpa [#allocation8], 1
    %s6265 = scalar_lea.sflag [#allocation8], 1
    %6266 = vsyncpa %s6265, 1
    %6267 = vsyncpa [#allocation11], 1
    %s6268 = scalar_lea.sflag [#allocation11], 1
    %6269 = vsyncpa %s6268, 1
    %6270 = vsyncpa [#allocation14], 1
    %6271 = vsyncpa [#allocation17], 1
    %6272 = vsyncpa [#allocation20], 1
    %6273 = vsyncpa [#allocation23], 1
    %6274 = vsyncpa [#allocation26], 1
    %6275 = vsyncpa [#allocation9], 1
    %s6276 = scalar_lea.sflag [#allocation9], 1
    %6277 = vsyncpa %s6276, 1
    %6278 = vsyncpa [#allocation29], 1

</llo_original>
